<compile_context>
chip_gen: v7x
topology: tpu7x:2x2x1
jax: 0.10.0
libtpu: 0.0.40
codegen_flags: <defaults>
</compile_context>

<pallas_src>
import math

import jax
import jax.numpy as jnp
from jax.experimental import pallas as pl
from jax.experimental.pallas import tpu as pltpu

# ----------------------------- module-consistent config -----------------------------
D_MODEL    = 32
HEADS      = 4
D_HEAD     = D_MODEL // HEADS
FF_MUL     = 2
FF_DIM     = D_MODEL * FF_MUL
LAYERS     = 2
VOCAB      = 50
SEQ_LEN    = 8
MEM_LEN    = 8                     # mem_len >= seq_len
CMEM_LEN   = 4                     # cmem_len >= mem_len // cmem_ratio
CMEM_RATIO = 4
BATCH      = 2
N_TRACKS   = 4
TC_NEW     = SEQ_LEN // CMEM_RATIO              # rows produced by the conv compression (=2)
L_KV       = CMEM_LEN + MEM_LEN + SEQ_LEN       # key/value length = 20, order [cmem|mem|seq]
J_POS      = 2 * SEQ_LEN + MEM_LEN + CMEM_LEN   # pos_emb length   = 28
HS         = HEADS * SEQ_LEN                    # 32 (head-major rows: r = h*S + s)
BS         = BATCH * SEQ_LEN                    # 16 (batch-major rows: r = b*S + s)
SCALE      = D_HEAD ** -0.5
POS_SCALE  = D_HEAD ** 0.5
LN_EPS     = 1e-5


# ----------------------------------- fused kernel -----------------------------------
def _enc_kernel(x_ref, mask_ref, pe_ref, mem_ref, cmem_ref, ncm_ref, ln_ref,
                wqkvo_ref, wt_ref, w1_ref, b1_ref, w2_ref, b2_ref,
                rep_ref, bm_ref, g_ref,
                xout_ref, xnorm_ref, attnw_ref, loss_ref,
                kv_scr, ctx_scr):
    """One grid step == one track.  Everything stays in VMEM."""

    def _ln(x, g, b):
        mu = jnp.mean(x, axis=-1, keepdims=True)
        xc = x - mu
        var = jnp.mean(xc * xc, axis=-1, keepdims=True)
        return xc * jax.lax.rsqrt(var + LN_EPS) * g + b

    def _dot(a, b):
        return jnp.dot(a, b, preferred_element_type=jnp.float32)

    def _dot_t(a, b):
        # (M, K) x (N, K) -> (M, N), contracting the last dims (no explicit transpose)
        return jax.lax.dot_general(a, b, (((1,), (1,)), ((), ())),
                                   preferred_element_type=jnp.float32)

    def _softmax(x):
        mx = jnp.max(x, axis=-1, keepdims=True)
        e = jnp.exp(x - mx)
        return e * pl.reciprocal(jnp.sum(e, axis=-1, keepdims=True), approx=True)

    rep = rep_ref[...]           # (HS, S)  : rep[h*S+s, s] = 1   (row replication)
    bm = bm_ref[...]             # (HS, D)  : 1 iff column e belongs to the row's head
    g_mat = g_ref[...]           # (S, HS)  : g[s, r] = 1 iff r % S == s  (head collapse)
    pe = pe_ref[0]               # (D, J)   pre-scaled positional table [h*Dh+d, j]
    mask_adds = [mask_ref[0, b] for b in range(BATCH)]   # additive 0/-1e9, (HS, L_KV)

    # per-row shear masks (row r = h*S + s must be shifted left by (S-1) - s)
    rows = jax.lax.broadcasted_iota(jnp.int32, (HS, 1), 0)
    kk = (SEQ_LEN - 1) - (rows & (SEQ_LEN - 1))
    m4 = (kk & 4) > 0
    m2 = (kk & 2) > 0
    m1 = (kk & 1) > 0

    def _shear(fp):
        # fp: (HS, J_POS).  3 binary shift-left steps with shrinking width so that
        # garbage lanes never reach columns [0, L_KV).  Result: (HS, L_KV) with
        # out[r, c] = fp[r, c + (S-1) - (r % S)]  -- the Music-Transformer skew.
        w = J_POS
        x = fp
        for amt, m in ((4, m4), (2, m2), (1, m1)):
            w -= amt
            x = jnp.where(m, x[:, amt:amt + w], x[:, :w])
        return x[:, :L_KV]

    X = x_ref[0]                                         # (BS, D) batch-major slab
    loss_acc = jnp.zeros((HS, D_MODEL), jnp.float32)

    for l in range(LAYERS):
        wall = wqkvo_ref[0, l]                           # (D, 4D) = [wq|wk|wv|wo]
        wqkv = wall[:, 0:3 * D_MODEL]
        wkv = wall[:, D_MODEL:3 * D_MODEL]
        wo = wall[:, 3 * D_MODEL:4 * D_MODEL]
        wtl = wt_ref[0, l]                               # (D, 3D) = [wq.T|wk.T|wv.T]
        g_pre, b_pre = ln_ref[0, l, 0:1, :], ln_ref[0, l, 1:2, :]
        g_n1,  b_n1  = ln_ref[0, l, 2:3, :], ln_ref[0, l, 3:4, :]
        g_ff,  b_ff  = ln_ref[0, l, 4:5, :], ln_ref[0, l, 5:6, :]
        w1 = w1_ref[0, l]
        b1 = b1_ref[0, l]
        w2 = w2_ref[0, l]
        b2 = b2_ref[0, l]
        mem_l = mem_ref[0, l]                            # (B*MEM_LEN, D)
        cmem_l = cmem_ref[0, l]                          # (B*CMEM_LEN, D)
        ncm_l = ncm_ref[0, l]                            # (B*TC_NEW, D)

        # ----- PreNorm + packed projections, both batch samples at once -----
        xn = _ln(X, g_pre, b_pre)                        # (BS, D)
        xnorm_ref[0, l] = xn                             # -> new memory (concat in glue)

        qkv_seq = _dot(xn, wqkv)                         # (BS, 3D) = [q | k | v] of seq rows
        kv_mem = _dot(mem_l, wkv)                        # (B*MEM, 2D)
        kv_cm = _dot(cmem_l, wkv)                        # (B*CMEM, 2D)

        # ----- attention, all heads batched, per batch sample -----
        for b in range(BATCH):
            r0 = b * SEQ_LEN
            q_b = qkv_seq[r0:r0 + SEQ_LEN, 0:D_MODEL]                    # (S, D)

            # projected K/V rows in reference order [cmem | mem | seq]
            kv_scr[0:CMEM_LEN, :] = kv_cm[b * CMEM_LEN:(b + 1) * CMEM_LEN, :]
            kv_scr[CMEM_LEN:CMEM_LEN + MEM_LEN, :] = \
                kv_mem[b * MEM_LEN:(b + 1) * MEM_LEN, :]
            kv_scr[CMEM_LEN + MEM_LEN:L_KV, :] = \
                qkv_seq[r0:r0 + SEQ_LEN, D_MODEL:3 * D_MODEL]
            kv_all = kv_scr[...]                                         # (L_KV, 2D)

            q_exp = _dot(rep, q_b) * bm                                  # (HS, D) block-masked
            scores = _dot_t(q_exp, kv_all[:, 0:D_MODEL]) * SCALE         # (HS, L_KV)
            pos = _shear(_dot(q_exp, pe))                                # (HS, L_KV)
            scores = scores + pos + mask_adds[b]
            attn = _softmax(scores)                                      # (HS, L_KV)
            attnw_ref[0, l, b] = attn                                    # one store per (l,b)

            ctx_full = _dot(attn, kv_all[:, D_MODEL:2 * D_MODEL])        # (HS, D)
            ctx_scr[r0:r0 + SEQ_LEN, :] = _dot(g_mat, ctx_full * bm)     # (S, D) per-head ctx

        # ----- out-proj + norm1 + residual + feed-forward, whole slab -----
        attn_out = _dot(ctx_scr[...], wo)                # (BS, D)
        a_slab = _ln(attn_out + xn, g_n1, b_n1)          # norm1(Wo(attn) + x_norm)
        x_att = a_slab + X                               # Residual adds the raw layer input

        xf = _ln(x_att, g_ff, b_ff)
        hid = _dot(xf, w1) + b1
        hid = 0.5 * hid * (1.0 + jax.lax.erf(hid * (2.0 ** -0.5)))       # exact GELU
        X = _dot(hid, w2) + b2 + x_att

        # ----- attention-reconstruction MSE (uses the raw torch weights == our w.T) -----
        hq = _dot(a_slab, wtl[:, 0:D_MODEL])                             # (BS, D)
        kv_old = _dot(mem_l, wtl[:, D_MODEL:3 * D_MODEL])                # (B*MEM, 2D)
        kv_new = _dot(ncm_l, wtl[:, D_MODEL:3 * D_MODEL])                # (B*TC, 2D)
        for b in range(BATCH):
            r0 = b * SEQ_LEN
            hq_exp = _dot(rep, hq[r0:r0 + SEQ_LEN, :]) * bm              # (HS, D)
            ko = kv_old[b * MEM_LEN:b * MEM_LEN + SEQ_LEN, :]            # old_mem = m[:, :S]
            a1 = _softmax(_dot_t(hq_exp, ko[:, 0:D_MODEL]) * SCALE)      # (HS, S)
            o1 = _dot(a1, ko[:, D_MODEL:2 * D_MODEL])                    # (HS, D)
            kn = kv_new[b * TC_NEW:(b + 1) * TC_NEW, :]                  # (TC, 2D)
            a2 = _softmax(_dot_t(hq_exp, kn[:, 0:D_MODEL]) * SCALE)      # (HS, TC)
            o2 = _dot(a2, kn[:, D_MODEL:2 * D_MODEL])                    # (HS, D)
            diff = (o1 - o2) * bm                                        # keep block-diag only
            loss_acc = loss_acc + diff * diff

    xout_ref[0] = X

    # per-layer MSE mean over B*H*S*Dh elements, then / LAYERS (Encoder.forward)
    tot = jnp.sum(loss_acc, axis=-1, keepdims=True)      # (HS, 1)
    tot = jnp.sum(tot, axis=0, keepdims=True)            # (1, 1)
    inv = 1.0 / float(LAYERS * BATCH * HEADS * SEQ_LEN * D_HEAD)
    loss_ref[0] = tot * inv


def _track_spec(shape):
    nd = len(shape)
    blk = (1,) + tuple(shape[1:])
    return pl.BlockSpec(blk, lambda t, _n=nd: (t,) + (0,) * (_n - 1))


def _const_spec(shape):
    nd = len(shape)
    return pl.BlockSpec(tuple(shape), lambda t, _n=nd: (0,) * _n)


def _encoder_tracks(x0, mask_add, pe_cat, mems_f, cmems_f, ncm_f,
                    ln_params, wqkvo, wt, w1, b1, w2, b2, rep, bmask, gmat):
    out_shapes = (
        jax.ShapeDtypeStruct((N_TRACKS, BS, D_MODEL), jnp.float32),
        jax.ShapeDtypeStruct((N_TRACKS, LAYERS, BS, D_MODEL), jnp.float32),
        jax.ShapeDtypeStruct((N_TRACKS, LAYERS, BATCH, HS, L_KV), jnp.float32),
        jax.ShapeDtypeStruct((N_TRACKS, 1, 1), jnp.float32),
    )
    track_inputs = (x0, mask_add, pe_cat, mems_f, cmems_f, ncm_f,
                    ln_params, wqkvo, wt, w1, b1, w2, b2)
    const_inputs = (rep, bmask, gmat)
    in_specs = ([_track_spec(a.shape) for a in track_inputs]
                + [_const_spec(a.shape) for a in const_inputs])
    return pl.pallas_call(
        _enc_kernel,
        out_shape=out_shapes,
        grid=(N_TRACKS,),
        in_specs=in_specs,
        out_specs=tuple(_track_spec(s.shape) for s in out_shapes),
        scratch_shapes=[pltpu.VMEM((L_KV, 2 * D_MODEL), jnp.float32),
                        pltpu.VMEM((BS, D_MODEL), jnp.float32)],
        compiler_params=pltpu.CompilerParams(dimension_semantics=("parallel",)),
    )(*track_inputs, *const_inputs)


# -------------------------------------- forward --------------------------------------
@jax.jit
def compressive_encoder(params, seq, mask, mems, cmems):
    """seq:(4,B,S) int32, mask:(4,B,S) f32, mems:(4,L,B,MEM,D), cmems:(4,L,B,CMEM,D)."""
    # embedding (gather stays in XLA), folded to a batch-major (B*S, D) slab per track
    x0 = jax.vmap(lambda e, s: jnp.take(e, s, axis=0))(params['embed'], seq)   # (4,B,S,D)
    x0 = x0.reshape(N_TRACKS, BS, D_MODEL)

    # additive attention mask in reference column order [cmem | mem | seq],
    # tiled over heads (rows are head-major h*S + s inside the kernel)
    mask3 = mask[:, :, :, None] * mask[:, :, None, :]                          # (4,B,S,S)
    ones_mc = jnp.ones((N_TRACKS, BATCH, SEQ_LEN, CMEM_LEN + MEM_LEN), jnp.float32)
    mask_full = jnp.concatenate([ones_mc, mask3], axis=-1)                     # (4,B,S,L_KV)
    mask_add = (mask_full - 1.0) * 1e9                                         # 0 / -1e9
    mask_add = jnp.tile(mask_add, (1, 1, HEADS, 1))                            # (4,B,H*S,L_KV)

    # packed, pre-scaled positional table: pe_cat[h*Dh+d, j] = pos_emb[h, j, d] * Dh**0.5
    pe_cat = (jnp.transpose(params['pos_emb'], (0, 1, 3, 2))
              .reshape(N_TRACKS, D_MODEL, J_POS) * POS_SCALE)

    # Conv1d(D, D, k=ratio, stride=ratio) compression of old_mem (input-only work)
    old = mems[..., :SEQ_LEN, :].reshape(N_TRACKS, LAYERS, BATCH, TC_NEW,
                                         CMEM_RATIO * D_MODEL)
    ncm = (jnp.einsum('tlbrk,tlko->tlbro', old, params['conv_w'])
           + params['conv_b'][:, :, None, None, :])                            # (4,L,B,TC,D)

    mems_f = mems.reshape(N_TRACKS, LAYERS, BATCH * MEM_LEN, D_MODEL)
    cmems_f = cmems.reshape(N_TRACKS, LAYERS, BATCH * CMEM_LEN, D_MODEL)
    ncm_f = ncm.reshape(N_TRACKS, LAYERS, BATCH * TC_NEW, D_MODEL)

    # packed projection weights (lane-dense 128-wide) and recon transposes
    wqkvo = jnp.concatenate([params['wq'], params['wk'],
                             params['wv'], params['wo']], axis=-1)             # (4,L,D,4D)
    wt = jnp.concatenate([jnp.swapaxes(params['wq'], -1, -2),
                          jnp.swapaxes(params['wk'], -1, -2),
                          jnp.swapaxes(params['wv'], -1, -2)], axis=-1)        # (4,L,D,3D)
    ln_params = jnp.stack([params['pre_attn_g'], params['pre_attn_b'],
                           params['n1_g'], params['n1_b'],
                           params['pre_ff_g'], params['pre_ff_b']], axis=2)    # (4,L,6,D)
    b1 = params['b1'][:, :, None, :]                                           # (4,L,1,F)
    b2 = params['b2'][:, :, None, :]                                           # (4,L,1,D)

    # small 0/1 constants for batched-head attention
    r_ids = jnp.arange(HS)
    rep = (r_ids[:, None] % SEQ_LEN ==
           jnp.arange(SEQ_LEN)[None, :]).astype(jnp.float32)                   # (HS,S)
    bmask = (r_ids[:, None] // SEQ_LEN ==
             jnp.arange(D_MODEL)[None, :] // D_HEAD).astype(jnp.float32)       # (HS,D)
    gmat = (jnp.arange(SEQ_LEN)[:, None] ==
            (r_ids[None, :] % SEQ_LEN)).astype(jnp.float32)                    # (S,HS)

    x_out, xnorm, attw, loss = _encoder_tracks(
        x0, mask_add, pe_cat, mems_f, cmems_f, ncm_f, ln_params, wqkvo, wt,
        params['w1'], b1, params['w2'], b2, rep, bmask, gmat)

    x_out = x_out.reshape(N_TRACKS, BATCH, SEQ_LEN, D_MODEL)
    xnorm = xnorm.reshape(N_TRACKS, LAYERS, BATCH, SEQ_LEN, D_MODEL)

    # memory updates (pure concatenations of inputs + kernel outputs)
    new_mems = jnp.concatenate([mems, xnorm], axis=3)[..., -MEM_LEN:, :]
    new_cmems = jnp.concatenate([cmems, ncm], axis=3)[..., -CMEM_LEN:, :]

    # attention weights: rows were head-major (h*S + s), columns already [cmem|mem|seq]
    aws = attw.reshape(N_TRACKS, LAYERS, BATCH, HEADS, SEQ_LEN, L_KV)

    latents = jnp.transpose(x_out, (1, 0, 2, 3))                               # (B,4,S,D)
    aux_loss = jnp.mean(loss[:, 0, 0])
    return latents, new_mems, new_cmems, aux_loss, aws


# ------------------------------------- parameters -------------------------------------
def _xavier(key, shape, fan_in, fan_out):
    limit = math.sqrt(6.0 / (fan_in + fan_out))
    return jax.random.uniform(key, shape, jnp.float32, -limit, limit)


def init_params(key):
    ks = jax.random.split(key, 12)
    T, L, D, F, R = N_TRACKS, LAYERS, D_MODEL, FF_DIM, CMEM_RATIO
    p = {}
    p['pos_emb'] = _xavier(ks[0], (T, HEADS, J_POS, D_HEAD), J_POS, D_HEAD)
    p['embed'] = _xavier(ks[1], (T, VOCAB, D), VOCAB, D)
    p['wq'] = _xavier(ks[2], (T, L, D, D), D, D)          # (in, out) layout
    p['wk'] = _xavier(ks[3], (T, L, D, D), D, D)
    p['wv'] = _xavier(ks[4], (T, L, D, D), D, D)
    p['wo'] = _xavier(ks[5], (T, L, D, D), D, D)
    p['w1'] = _xavier(ks[6], (T, L, D, F), D, F)
    p['w2'] = _xavier(ks[7], (T, L, F, D), F, D)
    p['b1'] = jax.random.uniform(ks[8], (T, L, F), jnp.float32, -0.05, 0.05)
    p['b2'] = jax.random.uniform(ks[9], (T, L, D), jnp.float32, -0.05, 0.05)
    # Conv1d weight (out, in, k) -> flattened (k*in, out) to match the
    # reshape(old_mem, (..., ratio*D)) @ W formulation of the strided conv.
    conv = _xavier(ks[10], (T, L, D, D, R), D * R, D * R)
    p['conv_w'] = jnp.transpose(conv, (0, 1, 4, 3, 2)).reshape(T, L, R * D, D)
    p['conv_b'] = jax.random.uniform(ks[11], (T, L, D), jnp.float32, -0.05, 0.05)
    ones = jnp.ones((T, L, D), jnp.float32)
    zeros = jnp.zeros((T, L, D), jnp.float32)
    p['pre_attn_g'], p['pre_attn_b'] = ones, zeros
    p['n1_g'], p['n1_b'] = ones, zeros
    p['pre_ff_g'], p['pre_ff_b'] = ones, zeros
    return p


# ----------------------------------------- main -----------------------------------------
if __name__ == "__main__":
    key = jax.random.PRNGKey(0)
    kp, ks_, km, kc = jax.random.split(key, 4)
    params = init_params(kp)

    seq = jax.random.randint(ks_, (N_TRACKS, BATCH, SEQ_LEN), 0, VOCAB, dtype=jnp.int32)
    mask = jnp.ones((N_TRACKS, BATCH, SEQ_LEN), jnp.float32).at[:, 0, -1].set(0.0)
    mems = 0.02 * jax.random.normal(km, (N_TRACKS, LAYERS, BATCH, MEM_LEN, D_MODEL), jnp.float32)
    cmems = 0.02 * jax.random.normal(kc, (N_TRACKS, LAYERS, BATCH, CMEM_LEN, D_MODEL), jnp.float32)

    latents, mems_o, cmems_o, aux_loss, aws = compressive_encoder(params, seq, mask, mems, cmems)
    jax.block_until_ready((latents, mems_o, cmems_o, aux_loss, aws))

    assert latents.shape == (BATCH, N_TRACKS, SEQ_LEN, D_MODEL)
    assert mems_o.shape == (N_TRACKS, LAYERS, BATCH, MEM_LEN, D_MODEL)
    assert cmems_o.shape == (N_TRACKS, LAYERS, BATCH, CMEM_LEN, D_MODEL)
    assert aws.shape == (N_TRACKS, LAYERS, BATCH, HEADS, SEQ_LEN, L_KV)
    assert aux_loss.shape == ()
    assert bool(jnp.isfinite(aux_loss)) and bool(jnp.all(jnp.isfinite(latents)))
    assert bool(jnp.all(jnp.isfinite(mems_o))) and bool(jnp.all(jnp.isfinite(aws)))
    print("KERNEL_OK")
</pallas_src>

<mosaic_0001>
module attributes {stable_mosaic.version = 11 : i64} {
  func.func @_enc_kernel(%arg0: i32, %arg1: memref<1x16x32xf32, #tpu.memory_space<vmem>>, %arg2: memref<1x2x32x20xf32, #tpu.memory_space<vmem>>, %arg3: memref<1x32x28xf32, #tpu.memory_space<vmem>>, %arg4: memref<1x2x16x32xf32, #tpu.memory_space<vmem>>, %arg5: memref<1x2x8x32xf32, #tpu.memory_space<vmem>>, %arg6: memref<1x2x4x32xf32, #tpu.memory_space<vmem>>, %arg7: memref<1x2x6x32xf32, #tpu.memory_space<vmem>>, %arg8: memref<1x2x32x128xf32, #tpu.memory_space<vmem>>, %arg9: memref<1x2x32x96xf32, #tpu.memory_space<vmem>>, %arg10: memref<1x2x32x64xf32, #tpu.memory_space<vmem>>, %arg11: memref<1x2x1x64xf32, #tpu.memory_space<vmem>>, %arg12: memref<1x2x64x32xf32, #tpu.memory_space<vmem>>, %arg13: memref<1x2x1x32xf32, #tpu.memory_space<vmem>>, %arg14: memref<32x8xf32, #tpu.memory_space<vmem>>, %arg15: memref<32x32xf32, #tpu.memory_space<vmem>>, %arg16: memref<8x32xf32, #tpu.memory_space<vmem>>, %arg17: memref<1x16x32xf32, #tpu.memory_space<vmem>>, %arg18: memref<1x2x16x32xf32, #tpu.memory_space<vmem>>, %arg19: memref<1x2x2x32x20xf32, #tpu.memory_space<vmem>>, %arg20: memref<1x1x1xf32, #tpu.memory_space<vmem>>, %arg21: memref<20x64xf32, #tpu.memory_space<vmem>>, %arg22: memref<16x32xf32, #tpu.memory_space<vmem>>) attributes {dimension_semantics = [#tpu.dimension_semantics<parallel>], iteration_bounds = array<i64: 4>, scalar_prefetch = 0 : i64, scratch_operands = 2 : i64, tpu.core_type = #tpu.core_type<tc>, window_params = [{transform_indices = @transform_0, window_bounds = array<i64: 1, 16, 32>}, {transform_indices = @transform_1, window_bounds = array<i64: 1, 2, 32, 20>}, {transform_indices = @transform_2, window_bounds = array<i64: 1, 32, 28>}, {transform_indices = @transform_3, window_bounds = array<i64: 1, 2, 16, 32>}, {transform_indices = @transform_4, window_bounds = array<i64: 1, 2, 8, 32>}, {transform_indices = @transform_5, window_bounds = array<i64: 1, 2, 4, 32>}, {transform_indices = @transform_6, window_bounds = array<i64: 1, 2, 6, 32>}, {transform_indices = @transform_7, window_bounds = array<i64: 1, 2, 32, 128>}, {transform_indices = @transform_8, window_bounds = array<i64: 1, 2, 32, 96>}, {transform_indices = @transform_9, window_bounds = array<i64: 1, 2, 32, 64>}, {transform_indices = @transform_10, window_bounds = array<i64: 1, 2, 1, 64>}, {transform_indices = @transform_11, window_bounds = array<i64: 1, 2, 64, 32>}, {transform_indices = @transform_12, window_bounds = array<i64: 1, 2, 1, 32>}, {pipeline_mode = #tpu.pipeline_mode<synchronous>, transform_indices = @transform_13, window_bounds = array<i64: 32, 8>}, {pipeline_mode = #tpu.pipeline_mode<synchronous>, transform_indices = @transform_14, window_bounds = array<i64: 32, 32>}, {pipeline_mode = #tpu.pipeline_mode<synchronous>, transform_indices = @transform_15, window_bounds = array<i64: 8, 32>}, {transform_indices = @transform_16, window_bounds = array<i64: 1, 16, 32>}, {transform_indices = @transform_17, window_bounds = array<i64: 1, 2, 16, 32>}, {transform_indices = @transform_18, window_bounds = array<i64: 1, 2, 2, 32, 20>}, {transform_indices = @transform_19, window_bounds = array<i64: 1, 1, 1>}]} {
    %c0 = arith.constant 0 : index
    %c0_0 = arith.constant 0 : index
    %0 = vector.load %arg14[%c0, %c0_0] : memref<32x8xf32, #tpu.memory_space<vmem>>, vector<32x8xf32>
    %c0_1 = arith.constant 0 : index
    %c0_2 = arith.constant 0 : index
    %1 = vector.load %arg15[%c0_1, %c0_2] : memref<32x32xf32, #tpu.memory_space<vmem>>, vector<32x32xf32>
    %c0_3 = arith.constant 0 : index
    %c0_4 = arith.constant 0 : index
    %2 = vector.load %arg16[%c0_3, %c0_4] : memref<8x32xf32, #tpu.memory_space<vmem>>, vector<8x32xf32>
    %c0_5 = arith.constant 0 : index
    %c0_6 = arith.constant 0 : index
    %c0_7 = arith.constant 0 : index
    %3 = vector.load %arg3[%c0_5, %c0_6, %c0_7] : memref<1x32x28xf32, #tpu.memory_space<vmem>>, vector<1x32x28xf32>
    %4 = vector.shape_cast %3 : vector<1x32x28xf32> to vector<32x28xf32>
    %c0_8 = arith.constant 0 : index
    %c0_9 = arith.constant 0 : index
    %c0_10 = arith.constant 0 : index
    %c0_11 = arith.constant 0 : index
    %5 = vector.load %arg2[%c0_8, %c0_9, %c0_10, %c0_11] : memref<1x2x32x20xf32, #tpu.memory_space<vmem>>, vector<1x1x32x20xf32>
    %6 = vector.shape_cast %5 : vector<1x1x32x20xf32> to vector<32x20xf32>
    %c0_12 = arith.constant 0 : index
    %c1 = arith.constant 1 : index
    %c0_13 = arith.constant 0 : index
    %c0_14 = arith.constant 0 : index
    %7 = vector.load %arg2[%c0_12, %c1, %c0_13, %c0_14] : memref<1x2x32x20xf32, #tpu.memory_space<vmem>>, vector<1x1x32x20xf32>
    %8 = vector.shape_cast %7 : vector<1x1x32x20xf32> to vector<32x20xf32>
    %9 = tpu.iota {dimensions = array<i32: 0>} : vector<32x1xi32>
    %c7_i32 = arith.constant 7 : i32
    %10 = vector.broadcast %c7_i32 : i32 to vector<32x1xi32>
    %11 = arith.andi %9, %10 : vector<32x1xi32>
    %c7_i32_15 = arith.constant 7 : i32
    %12 = vector.broadcast %c7_i32_15 : i32 to vector<32x1xi32>
    %13 = arith.subi %12, %11 : vector<32x1xi32>
    %c4_i32 = arith.constant 4 : i32
    %14 = vector.broadcast %c4_i32 : i32 to vector<32x1xi32>
    %15 = arith.andi %13, %14 : vector<32x1xi32>
    %c0_i32 = arith.constant 0 : i32
    %16 = vector.broadcast %c0_i32 : i32 to vector<32x1xi32>
    %17 = arith.cmpi sgt, %15, %16 : vector<32x1xi32>
    %c2_i32 = arith.constant 2 : i32
    %18 = vector.broadcast %c2_i32 : i32 to vector<32x1xi32>
    %19 = arith.andi %13, %18 : vector<32x1xi32>
    %c0_i32_16 = arith.constant 0 : i32
    %20 = vector.broadcast %c0_i32_16 : i32 to vector<32x1xi32>
    %21 = arith.cmpi sgt, %19, %20 : vector<32x1xi32>
    %c1_i32 = arith.constant 1 : i32
    %22 = vector.broadcast %c1_i32 : i32 to vector<32x1xi32>
    %23 = arith.andi %13, %22 : vector<32x1xi32>
    %c0_i32_17 = arith.constant 0 : i32
    %24 = vector.broadcast %c0_i32_17 : i32 to vector<32x1xi32>
    %25 = arith.cmpi sgt, %23, %24 : vector<32x1xi32>
    %c0_18 = arith.constant 0 : index
    %c0_19 = arith.constant 0 : index
    %c0_20 = arith.constant 0 : index
    %26 = vector.load %arg1[%c0_18, %c0_19, %c0_20] : memref<1x16x32xf32, #tpu.memory_space<vmem>>, vector<1x16x32xf32>
    %27 = vector.shape_cast %26 : vector<1x16x32xf32> to vector<16x32xf32>
    %cst = arith.constant 0.000000e+00 : f32
    %28 = vector.broadcast %cst : f32 to vector<32x32xf32>
    %c0_21 = arith.constant 0 : index
    %c0_22 = arith.constant 0 : index
    %c0_23 = arith.constant 0 : index
    %c0_24 = arith.constant 0 : index
    %29 = vector.load %arg8[%c0_21, %c0_22, %c0_23, %c0_24] : memref<1x2x32x128xf32, #tpu.memory_space<vmem>>, vector<1x1x32x128xf32>
    %30 = vector.shape_cast %29 : vector<1x1x32x128xf32> to vector<32x128xf32>
    %31 = vector.extract_strided_slice %30 {offsets = [0, 0], sizes = [32, 96], strides = [1, 1]} : vector<32x128xf32> to vector<32x96xf32>
    %32 = vector.extract_strided_slice %30 {offsets = [0, 32], sizes = [32, 64], strides = [1, 1]} : vector<32x128xf32> to vector<32x64xf32>
    %33 = vector.extract_strided_slice %30 {offsets = [0, 96], sizes = [32, 32], strides = [1, 1]} : vector<32x128xf32> to vector<32x32xf32>
    %c0_25 = arith.constant 0 : index
    %c0_26 = arith.constant 0 : index
    %c0_27 = arith.constant 0 : index
    %c0_28 = arith.constant 0 : index
    %34 = vector.load %arg9[%c0_25, %c0_26, %c0_27, %c0_28] : memref<1x2x32x96xf32, #tpu.memory_space<vmem>>, vector<1x1x32x96xf32>
    %35 = vector.shape_cast %34 : vector<1x1x32x96xf32> to vector<32x96xf32>
    %c0_29 = arith.constant 0 : index
    %c0_30 = arith.constant 0 : index
    %c0_31 = arith.constant 0 : index
    %c0_32 = arith.constant 0 : index
    %36 = vector.load %arg7[%c0_29, %c0_30, %c0_31, %c0_32] : memref<1x2x6x32xf32, #tpu.memory_space<vmem>>, vector<1x1x1x32xf32>
    %37 = vector.shape_cast %36 : vector<1x1x1x32xf32> to vector<1x32xf32>
    %c0_33 = arith.constant 0 : index
    %c0_34 = arith.constant 0 : index
    %c1_35 = arith.constant 1 : index
    %c0_36 = arith.constant 0 : index
    %38 = vector.load %arg7[%c0_33, %c0_34, %c1_35, %c0_36] : memref<1x2x6x32xf32, #tpu.memory_space<vmem>>, vector<1x1x1x32xf32>
    %39 = vector.shape_cast %38 : vector<1x1x1x32xf32> to vector<1x32xf32>
    %c0_37 = arith.constant 0 : index
    %c0_38 = arith.constant 0 : index
    %c2 = arith.constant 2 : index
    %c0_39 = arith.constant 0 : index
    %40 = vector.load %arg7[%c0_37, %c0_38, %c2, %c0_39] : memref<1x2x6x32xf32, #tpu.memory_space<vmem>>, vector<1x1x1x32xf32>
    %41 = vector.shape_cast %40 : vector<1x1x1x32xf32> to vector<1x32xf32>
    %c0_40 = arith.constant 0 : index
    %c0_41 = arith.constant 0 : index
    %c3 = arith.constant 3 : index
    %c0_42 = arith.constant 0 : index
    %42 = vector.load %arg7[%c0_40, %c0_41, %c3, %c0_42] : memref<1x2x6x32xf32, #tpu.memory_space<vmem>>, vector<1x1x1x32xf32>
    %43 = vector.shape_cast %42 : vector<1x1x1x32xf32> to vector<1x32xf32>
    %c0_43 = arith.constant 0 : index
    %c0_44 = arith.constant 0 : index
    %c4 = arith.constant 4 : index
    %c0_45 = arith.constant 0 : index
    %44 = vector.load %arg7[%c0_43, %c0_44, %c4, %c0_45] : memref<1x2x6x32xf32, #tpu.memory_space<vmem>>, vector<1x1x1x32xf32>
    %45 = vector.shape_cast %44 : vector<1x1x1x32xf32> to vector<1x32xf32>
    %c0_46 = arith.constant 0 : index
    %c0_47 = arith.constant 0 : index
    %c5 = arith.constant 5 : index
    %c0_48 = arith.constant 0 : index
    %46 = vector.load %arg7[%c0_46, %c0_47, %c5, %c0_48] : memref<1x2x6x32xf32, #tpu.memory_space<vmem>>, vector<1x1x1x32xf32>
    %47 = vector.shape_cast %46 : vector<1x1x1x32xf32> to vector<1x32xf32>
    %c0_49 = arith.constant 0 : index
    %c0_50 = arith.constant 0 : index
    %c0_51 = arith.constant 0 : index
    %c0_52 = arith.constant 0 : index
    %48 = vector.load %arg10[%c0_49, %c0_50, %c0_51, %c0_52] : memref<1x2x32x64xf32, #tpu.memory_space<vmem>>, vector<1x1x32x64xf32>
    %49 = vector.shape_cast %48 : vector<1x1x32x64xf32> to vector<32x64xf32>
    %c0_53 = arith.constant 0 : index
    %c0_54 = arith.constant 0 : index
    %c0_55 = arith.constant 0 : index
    %c0_56 = arith.constant 0 : index
    %50 = vector.load %arg11[%c0_53, %c0_54, %c0_55, %c0_56] : memref<1x2x1x64xf32, #tpu.memory_space<vmem>>, vector<1x1x1x64xf32>
    %51 = vector.shape_cast %50 : vector<1x1x1x64xf32> to vector<1x64xf32>
    %c0_57 = arith.constant 0 : index
    %c0_58 = arith.constant 0 : index
    %c0_59 = arith.constant 0 : index
    %c0_60 = arith.constant 0 : index
    %52 = vector.load %arg12[%c0_57, %c0_58, %c0_59, %c0_60] : memref<1x2x64x32xf32, #tpu.memory_space<vmem>>, vector<1x1x64x32xf32>
    %53 = vector.shape_cast %52 : vector<1x1x64x32xf32> to vector<64x32xf32>
    %c0_61 = arith.constant 0 : index
    %c0_62 = arith.constant 0 : index
    %c0_63 = arith.constant 0 : index
    %c0_64 = arith.constant 0 : index
    %54 = vector.load %arg13[%c0_61, %c0_62, %c0_63, %c0_64] : memref<1x2x1x32xf32, #tpu.memory_space<vmem>>, vector<1x1x1x32xf32>
    %55 = vector.shape_cast %54 : vector<1x1x1x32xf32> to vector<1x32xf32>
    %c0_65 = arith.constant 0 : index
    %c0_66 = arith.constant 0 : index
    %c0_67 = arith.constant 0 : index
    %c0_68 = arith.constant 0 : index
    %56 = vector.load %arg4[%c0_65, %c0_66, %c0_67, %c0_68] : memref<1x2x16x32xf32, #tpu.memory_space<vmem>>, vector<1x1x16x32xf32>
    %57 = vector.shape_cast %56 : vector<1x1x16x32xf32> to vector<16x32xf32>
    %c0_69 = arith.constant 0 : index
    %c0_70 = arith.constant 0 : index
    %c0_71 = arith.constant 0 : index
    %c0_72 = arith.constant 0 : index
    %58 = vector.load %arg5[%c0_69, %c0_70, %c0_71, %c0_72] : memref<1x2x8x32xf32, #tpu.memory_space<vmem>>, vector<1x1x8x32xf32>
    %59 = vector.shape_cast %58 : vector<1x1x8x32xf32> to vector<8x32xf32>
    %c0_73 = arith.constant 0 : index
    %c0_74 = arith.constant 0 : index
    %c0_75 = arith.constant 0 : index
    %c0_76 = arith.constant 0 : index
    %60 = vector.load %arg6[%c0_73, %c0_74, %c0_75, %c0_76] : memref<1x2x4x32xf32, #tpu.memory_space<vmem>>, vector<1x1x4x32xf32>
    %61 = vector.shape_cast %60 : vector<1x1x4x32xf32> to vector<4x32xf32>
    %cst_77 = arith.constant dense<0.000000e+00> : vector<16xf32>
    %62 = vector.multi_reduction <add>, %27, %cst_77 [1] : vector<16x32xf32> to vector<16xf32>
    %63 = vector.shape_cast %62 : vector<16xf32> to vector<16x1xf32>
    %cst_78 = arith.constant 3.200000e+01 : f32
    %64 = vector.broadcast %cst_78 : f32 to vector<16x1xf32>
    %65 = arith.divf %63, %64 : vector<16x1xf32>
    %66 = vector.broadcast %65 : vector<16x1xf32> to vector<16x32xf32>
    %67 = arith.subf %27, %66 : vector<16x32xf32>
    %68 = arith.mulf %67, %67 : vector<16x32xf32>
    %cst_79 = arith.constant dense<0.000000e+00> : vector<16xf32>
    %69 = vector.multi_reduction <add>, %68, %cst_79 [1] : vector<16x32xf32> to vector<16xf32>
    %70 = vector.shape_cast %69 : vector<16xf32> to vector<16x1xf32>
    %cst_80 = arith.constant 3.200000e+01 : f32
    %71 = vector.broadcast %cst_80 : f32 to vector<16x1xf32>
    %72 = arith.divf %70, %71 : vector<16x1xf32>
    %cst_81 = arith.constant 9.99999974E-6 : f32
    %73 = vector.broadcast %cst_81 : f32 to vector<16x1xf32>
    %74 = arith.addf %72, %73 : vector<16x1xf32>
    %75 = math.rsqrt %74 : vector<16x1xf32>
    %76 = vector.broadcast %75 : vector<16x1xf32> to vector<16x32xf32>
    %77 = arith.mulf %67, %76 : vector<16x32xf32>
    %78 = vector.broadcast %37 : vector<1x32xf32> to vector<16x32xf32>
    %79 = arith.mulf %77, %78 : vector<16x32xf32>
    %80 = vector.broadcast %39 : vector<1x32xf32> to vector<16x32xf32>
    %81 = arith.addf %79, %80 : vector<16x32xf32>
    %c0_82 = arith.constant 0 : index
    %c0_83 = arith.constant 0 : index
    %c0_84 = arith.constant 0 : index
    %c0_85 = arith.constant 0 : index
    %82 = vector.load %arg18[%c0_82, %c0_83, %c0_84, %c0_85] : memref<1x2x16x32xf32, #tpu.memory_space<vmem>>, vector<1x1x16x32xf32>
    %83 = vector.shape_cast %82 : vector<1x1x16x32xf32> to vector<16x32xf32>
    %84 = vector.shape_cast %81 : vector<16x32xf32> to vector<1x1x16x32xf32>
    tpu.vector_store %arg18[%c0_82, %c0_83, %c0_84, %c0_85], %84 {strides = array<i32>} : memref<1x2x16x32xf32, #tpu.memory_space<vmem>>, vector<1x1x16x32xf32>,
    %cst_86 = arith.constant dense<0.000000e+00> : vector<16x96xf32>
    %85 = tpu.matmul %81, %31, %cst_86 {dimension_numbers = #tpu.dot_dimension_numbers<[1], [0], [0], [1], [0, 0, 1, 1], [], []>} : vector<16x32xf32>, vector<32x96xf32>, vector<16x96xf32> -> vector<16x96xf32>
    %cst_87 = arith.constant dense<0.000000e+00> : vector<16x64xf32>
    %86 = tpu.matmul %57, %32, %cst_87 {dimension_numbers = #tpu.dot_dimension_numbers<[1], [0], [0], [1], [0, 0, 1, 1], [], []>} : vector<16x32xf32>, vector<32x64xf32>, vector<16x64xf32> -> vector<16x64xf32>
    %cst_88 = arith.constant dense<0.000000e+00> : vector<8x64xf32>
    %87 = tpu.matmul %59, %32, %cst_88 {dimension_numbers = #tpu.dot_dimension_numbers<[1], [0], [0], [1], [0, 0, 1, 1], [], []>} : vector<8x32xf32>, vector<32x64xf32>, vector<8x64xf32> -> vector<8x64xf32>
    %88 = vector.extract_strided_slice %85 {offsets = [0, 0], sizes = [8, 32], strides = [1, 1]} : vector<16x96xf32> to vector<8x32xf32>
    %89 = vector.extract_strided_slice %87 {offsets = [0, 0], sizes = [4, 64], strides = [1, 1]} : vector<8x64xf32> to vector<4x64xf32>
    %c0_89 = arith.constant 0 : index
    %c0_90 = arith.constant 0 : index
    %90 = vector.load %arg21[%c0_89, %c0_90] : memref<20x64xf32, #tpu.memory_space<vmem>>, vector<4x64xf32>
    tpu.vector_store %arg21[%c0_89, %c0_90], %89 {strides = array<i32>} : memref<20x64xf32, #tpu.memory_space<vmem>>, vector<4x64xf32>,
    %91 = vector.extract_strided_slice %86 {offsets = [0, 0], sizes = [8, 64], strides = [1, 1]} : vector<16x64xf32> to vector<8x64xf32>
    %c4_91 = arith.constant 4 : index
    %c0_92 = arith.constant 0 : index
    %92 = vector.load %arg21[%c4_91, %c0_92] : memref<20x64xf32, #tpu.memory_space<vmem>>, vector<8x64xf32>
    tpu.vector_store %arg21[%c4_91, %c0_92], %91 {strides = array<i32>} : memref<20x64xf32, #tpu.memory_space<vmem>>, vector<8x64xf32>,
    %93 = vector.extract_strided_slice %85 {offsets = [0, 32], sizes = [8, 64], strides = [1, 1]} : vector<16x96xf32> to vector<8x64xf32>
    %c12 = arith.constant 12 : index
    %c0_93 = arith.constant 0 : index
    %94 = vector.load %arg21[%c12, %c0_93] : memref<20x64xf32, #tpu.memory_space<vmem>>, vector<8x64xf32>
    tpu.vector_store %arg21[%c12, %c0_93], %93 {strides = array<i32>} : memref<20x64xf32, #tpu.memory_space<vmem>>, vector<8x64xf32>,
    %c0_94 = arith.constant 0 : index
    %c0_95 = arith.constant 0 : index
    %95 = vector.load %arg21[%c0_94, %c0_95] : memref<20x64xf32, #tpu.memory_space<vmem>>, vector<20x64xf32>
    %cst_96 = arith.constant dense<0.000000e+00> : vector<32x32xf32>
    %96 = tpu.matmul %0, %88, %cst_96 {dimension_numbers = #tpu.dot_dimension_numbers<[1], [0], [0], [1], [0, 0, 1, 1], [], []>} : vector<32x8xf32>, vector<8x32xf32>, vector<32x32xf32> -> vector<32x32xf32>
    %97 = arith.mulf %96, %1 : vector<32x32xf32>
    %98 = vector.extract_strided_slice %95 {offsets = [0, 0], sizes = [20, 32], strides = [1, 1]} : vector<20x64xf32> to vector<20x32xf32>
    %cst_97 = arith.constant dense<0.000000e+00> : vector<32x20xf32>
    %99 = tpu.matmul %97, %98, %cst_97 {dimension_numbers = #tpu.dot_dimension_numbers<[1], [1], [0], [0], [0, 0, 1, 0], [], []>} : vector<32x32xf32>, vector<20x32xf32>, vector<32x20xf32> -> vector<32x20xf32>
    %cst_98 = arith.constant 0.353553385 : f32
    %100 = vector.broadcast %cst_98 : f32 to vector<32x20xf32>
    %101 = arith.mulf %99, %100 : vector<32x20xf32>
    %cst_99 = arith.constant dense<0.000000e+00> : vector<32x28xf32>
    %102 = tpu.matmul %97, %4, %cst_99 {dimension_numbers = #tpu.dot_dimension_numbers<[1], [0], [0], [1], [0, 0, 1, 1], [], []>} : vector<32x32xf32>, vector<32x28xf32>, vector<32x28xf32> -> vector<32x28xf32>
    %103 = vector.extract_strided_slice %102 {offsets = [0, 4], sizes = [32, 24], strides = [1, 1]} : vector<32x28xf32> to vector<32x24xf32>
    %104 = vector.extract_strided_slice %102 {offsets = [0, 0], sizes = [32, 24], strides = [1, 1]} : vector<32x28xf32> to vector<32x24xf32>
    %105 = vector.shape_cast %17 : vector<32x1xi1> to vector<32x1xi1>
    %106 = vector.broadcast %105 : vector<32x1xi1> to vector<32x24xi1>
    %107 = arith.select %106, %103, %104 : vector<32x24xi1>, vector<32x24xf32>
    %108 = vector.extract_strided_slice %107 {offsets = [0, 2], sizes = [32, 22], strides = [1, 1]} : vector<32x24xf32> to vector<32x22xf32>
    %109 = vector.extract_strided_slice %107 {offsets = [0, 0], sizes = [32, 22], strides = [1, 1]} : vector<32x24xf32> to vector<32x22xf32>
    %110 = vector.shape_cast %21 : vector<32x1xi1> to vector<32x1xi1>
    %111 = vector.broadcast %110 : vector<32x1xi1> to vector<32x22xi1>
    %112 = arith.select %111, %108, %109 : vector<32x22xi1>, vector<32x22xf32>
    %113 = vector.extract_strided_slice %112 {offsets = [0, 1], sizes = [32, 21], strides = [1, 1]} : vector<32x22xf32> to vector<32x21xf32>
    %114 = vector.extract_strided_slice %112 {offsets = [0, 0], sizes = [32, 21], strides = [1, 1]} : vector<32x22xf32> to vector<32x21xf32>
    %115 = vector.shape_cast %25 : vector<32x1xi1> to vector<32x1xi1>
    %116 = vector.broadcast %115 : vector<32x1xi1> to vector<32x21xi1>
    %117 = arith.select %116, %113, %114 : vector<32x21xi1>, vector<32x21xf32>
    %118 = vector.extract_strided_slice %117 {offsets = [0, 0], sizes = [32, 20], strides = [1, 1]} : vector<32x21xf32> to vector<32x20xf32>
    %119 = arith.addf %101, %118 : vector<32x20xf32>
    %120 = arith.addf %119, %6 : vector<32x20xf32>
    %cst_100 = arith.constant dense<0xFF800000> : vector<32xf32>
    %121 = vector.multi_reduction <maximumf>, %120, %cst_100 [1] : vector<32x20xf32> to vector<32xf32>
    %122 = vector.shape_cast %121 : vector<32xf32> to vector<32x1xf32>
    %123 = vector.broadcast %122 : vector<32x1xf32> to vector<32x20xf32>
    %124 = arith.subf %120, %123 : vector<32x20xf32>
    %125 = math.exp %124 : vector<32x20xf32>
    %cst_101 = arith.constant dense<0.000000e+00> : vector<32xf32>
    %126 = vector.multi_reduction <add>, %125, %cst_101 [1] : vector<32x20xf32> to vector<32xf32>
    %127 = vector.shape_cast %126 : vector<32xf32> to vector<32x1xf32>
    %128 = tpu.reciprocal %127 {approx = true} : vector<32x1xf32> -> vector<32x1xf32>
    %129 = vector.broadcast %128 : vector<32x1xf32> to vector<32x20xf32>
    %130 = arith.mulf %125, %129 : vector<32x20xf32>
    %c0_102 = arith.constant 0 : index
    %c0_103 = arith.constant 0 : index
    %c0_104 = arith.constant 0 : index
    %c0_105 = arith.constant 0 : index
    %c0_106 = arith.constant 0 : index
    %131 = vector.load %arg19[%c0_102, %c0_103, %c0_104, %c0_105, %c0_106] : memref<1x2x2x32x20xf32, #tpu.memory_space<vmem>>, vector<1x1x1x32x20xf32>
    %132 = vector.shape_cast %131 : vector<1x1x1x32x20xf32> to vector<32x20xf32>
    %133 = vector.shape_cast %130 : vector<32x20xf32> to vector<1x1x1x32x20xf32>
    tpu.vector_store %arg19[%c0_102, %c0_103, %c0_104, %c0_105, %c0_106], %133 {strides = array<i32>} : memref<1x2x2x32x20xf32, #tpu.memory_space<vmem>>, vector<1x1x1x32x20xf32>,
    %134 = vector.extract_strided_slice %95 {offsets = [0, 32], sizes = [20, 32], strides = [1, 1]} : vector<20x64xf32> to vector<20x32xf32>
    %cst_107 = arith.constant dense<0.000000e+00> : vector<32x32xf32>
    %135 = tpu.matmul %130, %134, %cst_107 {dimension_numbers = #tpu.dot_dimension_numbers<[1], [0], [0], [1], [0, 0, 1, 1], [], []>} : vector<32x20xf32>, vector<20x32xf32>, vector<32x32xf32> -> vector<32x32xf32>
    %136 = arith.mulf %135, %1 : vector<32x32xf32>
    %cst_108 = arith.constant dense<0.000000e+00> : vector<8x32xf32>
    %137 = tpu.matmul %2, %136, %cst_108 {dimension_numbers = #tpu.dot_dimension_numbers<[1], [0], [0], [1], [0, 0, 1, 1], [], []>} : vector<8x32xf32>, vector<32x32xf32>, vector<8x32xf32> -> vector<8x32xf32>
    %c0_109 = arith.constant 0 : index
    %c0_110 = arith.constant 0 : index
    %138 = vector.load %arg22[%c0_109, %c0_110] : memref<16x32xf32, #tpu.memory_space<vmem>>, vector<8x32xf32>
    tpu.vector_store %arg22[%c0_109, %c0_110], %137 {strides = array<i32>} : memref<16x32xf32, #tpu.memory_space<vmem>>, vector<8x32xf32>,
    %139 = vector.extract_strided_slice %85 {offsets = [8, 0], sizes = [8, 32], strides = [1, 1]} : vector<16x96xf32> to vector<8x32xf32>
    %140 = vector.extract_strided_slice %87 {offsets = [4, 0], sizes = [4, 64], strides = [1, 1]} : vector<8x64xf32> to vector<4x64xf32>
    %c0_111 = arith.constant 0 : index
    %c0_112 = arith.constant 0 : index
    %141 = vector.load %arg21[%c0_111, %c0_112] : memref<20x64xf32, #tpu.memory_space<vmem>>, vector<4x64xf32>
    tpu.vector_store %arg21[%c0_111, %c0_112], %140 {strides = array<i32>} : memref<20x64xf32, #tpu.memory_space<vmem>>, vector<4x64xf32>,
    %142 = vector.extract_strided_slice %86 {offsets = [8, 0], sizes = [8, 64], strides = [1, 1]} : vector<16x64xf32> to vector<8x64xf32>
    %c4_113 = arith.constant 4 : index
    %c0_114 = arith.constant 0 : index
    %143 = vector.load %arg21[%c4_113, %c0_114] : memref<20x64xf32, #tpu.memory_space<vmem>>, vector<8x64xf32>
    tpu.vector_store %arg21[%c4_113, %c0_114], %142 {strides = array<i32>} : memref<20x64xf32, #tpu.memory_space<vmem>>, vector<8x64xf32>,
    %144 = vector.extract_strided_slice %85 {offsets = [8, 32], sizes = [8, 64], strides = [1, 1]} : vector<16x96xf32> to vector<8x64xf32>
    %c12_115 = arith.constant 12 : index
    %c0_116 = arith.constant 0 : index
    %145 = vector.load %arg21[%c12_115, %c0_116] : memref<20x64xf32, #tpu.memory_space<vmem>>, vector<8x64xf32>
    tpu.vector_store %arg21[%c12_115, %c0_116], %144 {strides = array<i32>} : memref<20x64xf32, #tpu.memory_space<vmem>>, vector<8x64xf32>,
    %c0_117 = arith.constant 0 : index
    %c0_118 = arith.constant 0 : index
    %146 = vector.load %arg21[%c0_117, %c0_118] : memref<20x64xf32, #tpu.memory_space<vmem>>, vector<20x64xf32>
    %cst_119 = arith.constant dense<0.000000e+00> : vector<32x32xf32>
    %147 = tpu.matmul %0, %139, %cst_119 {dimension_numbers = #tpu.dot_dimension_numbers<[1], [0], [0], [1], [0, 0, 1, 1], [], []>} : vector<32x8xf32>, vector<8x32xf32>, vector<32x32xf32> -> vector<32x32xf32>
    %148 = arith.mulf %147, %1 : vector<32x32xf32>
    %149 = vector.extract_strided_slice %146 {offsets = [0, 0], sizes = [20, 32], strides = [1, 1]} : vector<20x64xf32> to vector<20x32xf32>
    %cst_120 = arith.constant dense<0.000000e+00> : vector<32x20xf32>
    %150 = tpu.matmul %148, %149, %cst_120 {dimension_numbers = #tpu.dot_dimension_numbers<[1], [1], [0], [0], [0, 0, 1, 0], [], []>} : vector<32x32xf32>, vector<20x32xf32>, vector<32x20xf32> -> vector<32x20xf32>
    %cst_121 = arith.constant 0.353553385 : f32
    %151 = vector.broadcast %cst_121 : f32 to vector<32x20xf32>
    %152 = arith.mulf %150, %151 : vector<32x20xf32>
    %cst_122 = arith.constant dense<0.000000e+00> : vector<32x28xf32>
    %153 = tpu.matmul %148, %4, %cst_122 {dimension_numbers = #tpu.dot_dimension_numbers<[1], [0], [0], [1], [0, 0, 1, 1], [], []>} : vector<32x32xf32>, vector<32x28xf32>, vector<32x28xf32> -> vector<32x28xf32>
    %154 = vector.extract_strided_slice %153 {offsets = [0, 4], sizes = [32, 24], strides = [1, 1]} : vector<32x28xf32> to vector<32x24xf32>
    %155 = vector.extract_strided_slice %153 {offsets = [0, 0], sizes = [32, 24], strides = [1, 1]} : vector<32x28xf32> to vector<32x24xf32>
    %156 = vector.shape_cast %17 : vector<32x1xi1> to vector<32x1xi1>
    %157 = vector.broadcast %156 : vector<32x1xi1> to vector<32x24xi1>
    %158 = arith.select %157, %154, %155 : vector<32x24xi1>, vector<32x24xf32>
    %159 = vector.extract_strided_slice %158 {offsets = [0, 2], sizes = [32, 22], strides = [1, 1]} : vector<32x24xf32> to vector<32x22xf32>
    %160 = vector.extract_strided_slice %158 {offsets = [0, 0], sizes = [32, 22], strides = [1, 1]} : vector<32x24xf32> to vector<32x22xf32>
    %161 = vector.shape_cast %21 : vector<32x1xi1> to vector<32x1xi1>
    %162 = vector.broadcast %161 : vector<32x1xi1> to vector<32x22xi1>
    %163 = arith.select %162, %159, %160 : vector<32x22xi1>, vector<32x22xf32>
    %164 = vector.extract_strided_slice %163 {offsets = [0, 1], sizes = [32, 21], strides = [1, 1]} : vector<32x22xf32> to vector<32x21xf32>
    %165 = vector.extract_strided_slice %163 {offsets = [0, 0], sizes = [32, 21], strides = [1, 1]} : vector<32x22xf32> to vector<32x21xf32>
    %166 = vector.shape_cast %25 : vector<32x1xi1> to vector<32x1xi1>
    %167 = vector.broadcast %166 : vector<32x1xi1> to vector<32x21xi1>
    %168 = arith.select %167, %164, %165 : vector<32x21xi1>, vector<32x21xf32>
    %169 = vector.extract_strided_slice %168 {offsets = [0, 0], sizes = [32, 20], strides = [1, 1]} : vector<32x21xf32> to vector<32x20xf32>
    %170 = arith.addf %152, %169 : vector<32x20xf32>
    %171 = arith.addf %170, %8 : vector<32x20xf32>
    %cst_123 = arith.constant dense<0xFF800000> : vector<32xf32>
    %172 = vector.multi_reduction <maximumf>, %171, %cst_123 [1] : vector<32x20xf32> to vector<32xf32>
    %173 = vector.shape_cast %172 : vector<32xf32> to vector<32x1xf32>
    %174 = vector.broadcast %173 : vector<32x1xf32> to vector<32x20xf32>
    %175 = arith.subf %171, %174 : vector<32x20xf32>
    %176 = math.exp %175 : vector<32x20xf32>
    %cst_124 = arith.constant dense<0.000000e+00> : vector<32xf32>
    %177 = vector.multi_reduction <add>, %176, %cst_124 [1] : vector<32x20xf32> to vector<32xf32>
    %178 = vector.shape_cast %177 : vector<32xf32> to vector<32x1xf32>
    %179 = tpu.reciprocal %178 {approx = true} : vector<32x1xf32> -> vector<32x1xf32>
    %180 = vector.broadcast %179 : vector<32x1xf32> to vector<32x20xf32>
    %181 = arith.mulf %176, %180 : vector<32x20xf32>
    %c0_125 = arith.constant 0 : index
    %c0_126 = arith.constant 0 : index
    %c1_127 = arith.constant 1 : index
    %c0_128 = arith.constant 0 : index
    %c0_129 = arith.constant 0 : index
    %182 = vector.load %arg19[%c0_125, %c0_126, %c1_127, %c0_128, %c0_129] : memref<1x2x2x32x20xf32, #tpu.memory_space<vmem>>, vector<1x1x1x32x20xf32>
    %183 = vector.shape_cast %182 : vector<1x1x1x32x20xf32> to vector<32x20xf32>
    %184 = vector.shape_cast %181 : vector<32x20xf32> to vector<1x1x1x32x20xf32>
    tpu.vector_store %arg19[%c0_125, %c0_126, %c1_127, %c0_128, %c0_129], %184 {strides = array<i32>} : memref<1x2x2x32x20xf32, #tpu.memory_space<vmem>>, vector<1x1x1x32x20xf32>,
    %185 = vector.extract_strided_slice %146 {offsets = [0, 32], sizes = [20, 32], strides = [1, 1]} : vector<20x64xf32> to vector<20x32xf32>
    %cst_130 = arith.constant dense<0.000000e+00> : vector<32x32xf32>
    %186 = tpu.matmul %181, %185, %cst_130 {dimension_numbers = #tpu.dot_dimension_numbers<[1], [0], [0], [1], [0, 0, 1, 1], [], []>} : vector<32x20xf32>, vector<20x32xf32>, vector<32x32xf32> -> vector<32x32xf32>
    %187 = arith.mulf %186, %1 : vector<32x32xf32>
    %cst_131 = arith.constant dense<0.000000e+00> : vector<8x32xf32>
    %188 = tpu.matmul %2, %187, %cst_131 {dimension_numbers = #tpu.dot_dimension_numbers<[1], [0], [0], [1], [0, 0, 1, 1], [], []>} : vector<8x32xf32>, vector<32x32xf32>, vector<8x32xf32> -> vector<8x32xf32>
    %c8 = arith.constant 8 : index
    %c0_132 = arith.constant 0 : index
    %189 = vector.load %arg22[%c8, %c0_132] : memref<16x32xf32, #tpu.memory_space<vmem>>, vector<8x32xf32>
    tpu.vector_store %arg22[%c8, %c0_132], %188 {strides = array<i32>} : memref<16x32xf32, #tpu.memory_space<vmem>>, vector<8x32xf32>,
    %c0_133 = arith.constant 0 : index
    %c0_134 = arith.constant 0 : index
    %190 = vector.load %arg22[%c0_133, %c0_134] : memref<16x32xf32, #tpu.memory_space<vmem>>, vector<16x32xf32>
    %cst_135 = arith.constant dense<0.000000e+00> : vector<16x32xf32>
    %191 = tpu.matmul %190, %33, %cst_135 {dimension_numbers = #tpu.dot_dimension_numbers<[1], [0], [0], [1], [0, 0, 1, 1], [], []>} : vector<16x32xf32>, vector<32x32xf32>, vector<16x32xf32> -> vector<16x32xf32>
    %192 = arith.addf %191, %81 : vector<16x32xf32>
    %cst_136 = arith.constant dense<0.000000e+00> : vector<16xf32>
    %193 = vector.multi_reduction <add>, %192, %cst_136 [1] : vector<16x32xf32> to vector<16xf32>
    %194 = vector.shape_cast %193 : vector<16xf32> to vector<16x1xf32>
    %cst_137 = arith.constant 3.200000e+01 : f32
    %195 = vector.broadcast %cst_137 : f32 to vector<16x1xf32>
    %196 = arith.divf %194, %195 : vector<16x1xf32>
    %197 = vector.broadcast %196 : vector<16x1xf32> to vector<16x32xf32>
    %198 = arith.subf %192, %197 : vector<16x32xf32>
    %199 = arith.mulf %198, %198 : vector<16x32xf32>
    %cst_138 = arith.constant dense<0.000000e+00> : vector<16xf32>
    %200 = vector.multi_reduction <add>, %199, %cst_138 [1] : vector<16x32xf32> to vector<16xf32>
    %201 = vector.shape_cast %200 : vector<16xf32> to vector<16x1xf32>
    %cst_139 = arith.constant 3.200000e+01 : f32
    %202 = vector.broadcast %cst_139 : f32 to vector<16x1xf32>
    %203 = arith.divf %201, %202 : vector<16x1xf32>
    %cst_140 = arith.constant 9.99999974E-6 : f32
    %204 = vector.broadcast %cst_140 : f32 to vector<16x1xf32>
    %205 = arith.addf %203, %204 : vector<16x1xf32>
    %206 = math.rsqrt %205 : vector<16x1xf32>
    %207 = vector.broadcast %206 : vector<16x1xf32> to vector<16x32xf32>
    %208 = arith.mulf %198, %207 : vector<16x32xf32>
    %209 = vector.broadcast %41 : vector<1x32xf32> to vector<16x32xf32>
    %210 = arith.mulf %208, %209 : vector<16x32xf32>
    %211 = vector.broadcast %43 : vector<1x32xf32> to vector<16x32xf32>
    %212 = arith.addf %210, %211 : vector<16x32xf32>
    %213 = arith.addf %212, %27 : vector<16x32xf32>
    %cst_141 = arith.constant dense<0.000000e+00> : vector<16xf32>
    %214 = vector.multi_reduction <add>, %213, %cst_141 [1] : vector<16x32xf32> to vector<16xf32>
    %215 = vector.shape_cast %214 : vector<16xf32> to vector<16x1xf32>
    %cst_142 = arith.constant 3.200000e+01 : f32
    %216 = vector.broadcast %cst_142 : f32 to vector<16x1xf32>
    %217 = arith.divf %215, %216 : vector<16x1xf32>
    %218 = vector.broadcast %217 : vector<16x1xf32> to vector<16x32xf32>
    %219 = arith.subf %213, %218 : vector<16x32xf32>
    %220 = arith.mulf %219, %219 : vector<16x32xf32>
    %cst_143 = arith.constant dense<0.000000e+00> : vector<16xf32>
    %221 = vector.multi_reduction <add>, %220, %cst_143 [1] : vector<16x32xf32> to vector<16xf32>
    %222 = vector.shape_cast %221 : vector<16xf32> to vector<16x1xf32>
    %cst_144 = arith.constant 3.200000e+01 : f32
    %223 = vector.broadcast %cst_144 : f32 to vector<16x1xf32>
    %224 = arith.divf %222, %223 : vector<16x1xf32>
    %cst_145 = arith.constant 9.99999974E-6 : f32
    %225 = vector.broadcast %cst_145 : f32 to vector<16x1xf32>
    %226 = arith.addf %224, %225 : vector<16x1xf32>
    %227 = math.rsqrt %226 : vector<16x1xf32>
    %228 = vector.broadcast %227 : vector<16x1xf32> to vector<16x32xf32>
    %229 = arith.mulf %219, %228 : vector<16x32xf32>
    %230 = vector.broadcast %45 : vector<1x32xf32> to vector<16x32xf32>
    %231 = arith.mulf %229, %230 : vector<16x32xf32>
    %232 = vector.broadcast %47 : vector<1x32xf32> to vector<16x32xf32>
    %233 = arith.addf %231, %232 : vector<16x32xf32>
    %cst_146 = arith.constant dense<0.000000e+00> : vector<16x64xf32>
    %234 = tpu.matmul %233, %49, %cst_146 {dimension_numbers = #tpu.dot_dimension_numbers<[1], [0], [0], [1], [0, 0, 1, 1], [], []>} : vector<16x32xf32>, vector<32x64xf32>, vector<16x64xf32> -> vector<16x64xf32>
    %235 = vector.broadcast %51 : vector<1x64xf32> to vector<16x64xf32>
    %236 = arith.addf %234, %235 : vector<16x64xf32>
    %cst_147 = arith.constant 5.000000e-01 : f32
    %237 = vector.broadcast %cst_147 : f32 to vector<16x64xf32>
    %238 = arith.mulf %237, %236 : vector<16x64xf32>
    %cst_148 = arith.constant 0.707106769 : f32
    %239 = vector.broadcast %cst_148 : f32 to vector<16x64xf32>
    %240 = arith.mulf %236, %239 : vector<16x64xf32>
    %241 = math.erf %240 : vector<16x64xf32>
    %cst_149 = arith.constant 1.000000e+00 : f32
    %242 = vector.broadcast %cst_149 : f32 to vector<16x64xf32>
    %243 = arith.addf %242, %241 : vector<16x64xf32>
    %244 = arith.mulf %238, %243 : vector<16x64xf32>
    %cst_150 = arith.constant dense<0.000000e+00> : vector<16x32xf32>
    %245 = tpu.matmul %244, %53, %cst_150 {dimension_numbers = #tpu.dot_dimension_numbers<[1], [0], [0], [1], [0, 0, 1, 1], [], []>} : vector<16x64xf32>, vector<64x32xf32>, vector<16x32xf32> -> vector<16x32xf32>
    %246 = vector.broadcast %55 : vector<1x32xf32> to vector<16x32xf32>
    %247 = arith.addf %245, %246 : vector<16x32xf32>
    %248 = arith.addf %247, %213 : vector<16x32xf32>
    %249 = vector.extract_strided_slice %35 {offsets = [0, 0], sizes = [32, 32], strides = [1, 1]} : vector<32x96xf32> to vector<32x32xf32>
    %cst_151 = arith.constant dense<0.000000e+00> : vector<16x32xf32>
    %250 = tpu.matmul %212, %249, %cst_151 {dimension_numbers = #tpu.dot_dimension_numbers<[1], [0], [0], [1], [0, 0, 1, 1], [], []>} : vector<16x32xf32>, vector<32x32xf32>, vector<16x32xf32> -> vector<16x32xf32>
    %251 = vector.extract_strided_slice %35 {offsets = [0, 32], sizes = [32, 64], strides = [1, 1]} : vector<32x96xf32> to vector<32x64xf32>
    %cst_152 = arith.constant dense<0.000000e+00> : vector<16x64xf32>
    %252 = tpu.matmul %57, %251, %cst_152 {dimension_numbers = #tpu.dot_dimension_numbers<[1], [0], [0], [1], [0, 0, 1, 1], [], []>} : vector<16x32xf32>, vector<32x64xf32>, vector<16x64xf32> -> vector<16x64xf32>
    %253 = vector.extract_strided_slice %35 {offsets = [0, 32], sizes = [32, 64], strides = [1, 1]} : vector<32x96xf32> to vector<32x64xf32>
    %cst_153 = arith.constant dense<0.000000e+00> : vector<4x64xf32>
    %254 = tpu.matmul %61, %253, %cst_153 {dimension_numbers = #tpu.dot_dimension_numbers<[1], [0], [0], [1], [0, 0, 1, 1], [], []>} : vector<4x32xf32>, vector<32x64xf32>, vector<4x64xf32> -> vector<4x64xf32>
    %255 = vector.extract_strided_slice %250 {offsets = [0, 0], sizes = [8, 32], strides = [1, 1]} : vector<16x32xf32> to vector<8x32xf32>
    %cst_154 = arith.constant dense<0.000000e+00> : vector<32x32xf32>
    %256 = tpu.matmul %0, %255, %cst_154 {dimension_numbers = #tpu.dot_dimension_numbers<[1], [0], [0], [1], [0, 0, 1, 1], [], []>} : vector<32x8xf32>, vector<8x32xf32>, vector<32x32xf32> -> vector<32x32xf32>
    %257 = arith.mulf %256, %1 : vector<32x32xf32>
    %258 = vector.extract_strided_slice %252 {offsets = [0, 0], sizes = [8, 64], strides = [1, 1]} : vector<16x64xf32> to vector<8x64xf32>
    %259 = vector.extract_strided_slice %258 {offsets = [0, 0], sizes = [8, 32], strides = [1, 1]} : vector<8x64xf32> to vector<8x32xf32>
    %cst_155 = arith.constant dense<0.000000e+00> : vector<32x8xf32>
    %260 = tpu.matmul %257, %259, %cst_155 {dimension_numbers = #tpu.dot_dimension_numbers<[1], [1], [0], [0], [0, 0, 1, 0], [], []>} : vector<32x32xf32>, vector<8x32xf32>, vector<32x8xf32> -> vector<32x8xf32>
    %cst_156 = arith.constant 0.353553385 : f32
    %261 = vector.broadcast %cst_156 : f32 to vector<32x8xf32>
    %262 = arith.mulf %260, %261 : vector<32x8xf32>
    %cst_157 = arith.constant dense<0xFF800000> : vector<32xf32>
    %263 = vector.multi_reduction <maximumf>, %262, %cst_157 [1] : vector<32x8xf32> to vector<32xf32>
    %264 = vector.shape_cast %263 : vector<32xf32> to vector<32x1xf32>
    %265 = vector.broadcast %264 : vector<32x1xf32> to vector<32x8xf32>
    %266 = arith.subf %262, %265 : vector<32x8xf32>
    %267 = math.exp %266 : vector<32x8xf32>
    %cst_158 = arith.constant dense<0.000000e+00> : vector<32xf32>
    %268 = vector.multi_reduction <add>, %267, %cst_158 [1] : vector<32x8xf32> to vector<32xf32>
    %269 = vector.shape_cast %268 : vector<32xf32> to vector<32x1xf32>
    %270 = tpu.reciprocal %269 {approx = true} : vector<32x1xf32> -> vector<32x1xf32>
    %271 = vector.broadcast %270 : vector<32x1xf32> to vector<32x8xf32>
    %272 = arith.mulf %267, %271 : vector<32x8xf32>
    %273 = vector.extract_strided_slice %258 {offsets = [0, 32], sizes = [8, 32], strides = [1, 1]} : vector<8x64xf32> to vector<8x32xf32>
    %cst_159 = arith.constant dense<0.000000e+00> : vector<32x32xf32>
    %274 = tpu.matmul %272, %273, %cst_159 {dimension_numbers = #tpu.dot_dimension_numbers<[1], [0], [0], [1], [0, 0, 1, 1], [], []>} : vector<32x8xf32>, vector<8x32xf32>, vector<32x32xf32> -> vector<32x32xf32>
    %275 = vector.extract_strided_slice %254 {offsets = [0, 0], sizes = [2, 64], strides = [1, 1]} : vector<4x64xf32> to vector<2x64xf32>
    %276 = vector.extract_strided_slice %275 {offsets = [0, 0], sizes = [2, 32], strides = [1, 1]} : vector<2x64xf32> to vector<2x32xf32>
    %cst_160 = arith.constant dense<0.000000e+00> : vector<32x2xf32>
    %277 = tpu.matmul %257, %276, %cst_160 {dimension_numbers = #tpu.dot_dimension_numbers<[1], [1], [0], [0], [0, 0, 1, 0], [], []>} : vector<32x32xf32>, vector<2x32xf32>, vector<32x2xf32> -> vector<32x2xf32>
    %cst_161 = arith.constant 0.353553385 : f32
    %278 = vector.broadcast %cst_161 : f32 to vector<32x2xf32>
    %279 = arith.mulf %277, %278 : vector<32x2xf32>
    %cst_162 = arith.constant dense<0xFF800000> : vector<32xf32>
    %280 = vector.multi_reduction <maximumf>, %279, %cst_162 [1] : vector<32x2xf32> to vector<32xf32>
    %281 = vector.shape_cast %280 : vector<32xf32> to vector<32x1xf32>
    %282 = vector.broadcast %281 : vector<32x1xf32> to vector<32x2xf32>
    %283 = arith.subf %279, %282 : vector<32x2xf32>
    %284 = math.exp %283 : vector<32x2xf32>
    %cst_163 = arith.constant dense<0.000000e+00> : vector<32xf32>
    %285 = vector.multi_reduction <add>, %284, %cst_163 [1] : vector<32x2xf32> to vector<32xf32>
    %286 = vector.shape_cast %285 : vector<32xf32> to vector<32x1xf32>
    %287 = tpu.reciprocal %286 {approx = true} : vector<32x1xf32> -> vector<32x1xf32>
    %288 = vector.broadcast %287 : vector<32x1xf32> to vector<32x2xf32>
    %289 = arith.mulf %284, %288 : vector<32x2xf32>
    %290 = vector.extract_strided_slice %275 {offsets = [0, 32], sizes = [2, 32], strides = [1, 1]} : vector<2x64xf32> to vector<2x32xf32>
    %cst_164 = arith.constant dense<0.000000e+00> : vector<32x32xf32>
    %291 = tpu.matmul %289, %290, %cst_164 {dimension_numbers = #tpu.dot_dimension_numbers<[1], [0], [0], [1], [0, 0, 1, 1], [], []>} : vector<32x2xf32>, vector<2x32xf32>, vector<32x32xf32> -> vector<32x32xf32>
    %292 = arith.subf %274, %291 : vector<32x32xf32>
    %293 = arith.mulf %292, %1 : vector<32x32xf32>
    %294 = arith.mulf %293, %293 : vector<32x32xf32>
    %295 = arith.addf %28, %294 : vector<32x32xf32>
    %296 = vector.extract_strided_slice %250 {offsets = [8, 0], sizes = [8, 32], strides = [1, 1]} : vector<16x32xf32> to vector<8x32xf32>
    %cst_165 = arith.constant dense<0.000000e+00> : vector<32x32xf32>
    %297 = tpu.matmul %0, %296, %cst_165 {dimension_numbers = #tpu.dot_dimension_numbers<[1], [0], [0], [1], [0, 0, 1, 1], [], []>} : vector<32x8xf32>, vector<8x32xf32>, vector<32x32xf32> -> vector<32x32xf32>
    %298 = arith.mulf %297, %1 : vector<32x32xf32>
    %299 = vector.extract_strided_slice %252 {offsets = [8, 0], sizes = [8, 64], strides = [1, 1]} : vector<16x64xf32> to vector<8x64xf32>
    %300 = vector.extract_strided_slice %299 {offsets = [0, 0], sizes = [8, 32], strides = [1, 1]} : vector<8x64xf32> to vector<8x32xf32>
    %cst_166 = arith.constant dense<0.000000e+00> : vector<32x8xf32>
    %301 = tpu.matmul %298, %300, %cst_166 {dimension_numbers = #tpu.dot_dimension_numbers<[1], [1], [0], [0], [0, 0, 1, 0], [], []>} : vector<32x32xf32>, vector<8x32xf32>, vector<32x8xf32> -> vector<32x8xf32>
    %cst_167 = arith.constant 0.353553385 : f32
    %302 = vector.broadcast %cst_167 : f32 to vector<32x8xf32>
    %303 = arith.mulf %301, %302 : vector<32x8xf32>
    %cst_168 = arith.constant dense<0xFF800000> : vector<32xf32>
    %304 = vector.multi_reduction <maximumf>, %303, %cst_168 [1] : vector<32x8xf32> to vector<32xf32>
    %305 = vector.shape_cast %304 : vector<32xf32> to vector<32x1xf32>
    %306 = vector.broadcast %305 : vector<32x1xf32> to vector<32x8xf32>
    %307 = arith.subf %303, %306 : vector<32x8xf32>
    %308 = math.exp %307 : vector<32x8xf32>
    %cst_169 = arith.constant dense<0.000000e+00> : vector<32xf32>
    %309 = vector.multi_reduction <add>, %308, %cst_169 [1] : vector<32x8xf32> to vector<32xf32>
    %310 = vector.shape_cast %309 : vector<32xf32> to vector<32x1xf32>
    %311 = tpu.reciprocal %310 {approx = true} : vector<32x1xf32> -> vector<32x1xf32>
    %312 = vector.broadcast %311 : vector<32x1xf32> to vector<32x8xf32>
    %313 = arith.mulf %308, %312 : vector<32x8xf32>
    %314 = vector.extract_strided_slice %299 {offsets = [0, 32], sizes = [8, 32], strides = [1, 1]} : vector<8x64xf32> to vector<8x32xf32>
    %cst_170 = arith.constant dense<0.000000e+00> : vector<32x32xf32>
    %315 = tpu.matmul %313, %314, %cst_170 {dimension_numbers = #tpu.dot_dimension_numbers<[1], [0], [0], [1], [0, 0, 1, 1], [], []>} : vector<32x8xf32>, vector<8x32xf32>, vector<32x32xf32> -> vector<32x32xf32>
    %316 = vector.extract_strided_slice %254 {offsets = [2, 0], sizes = [2, 64], strides = [1, 1]} : vector<4x64xf32> to vector<2x64xf32>
    %317 = vector.extract_strided_slice %316 {offsets = [0, 0], sizes = [2, 32], strides = [1, 1]} : vector<2x64xf32> to vector<2x32xf32>
    %cst_171 = arith.constant dense<0.000000e+00> : vector<32x2xf32>
    %318 = tpu.matmul %298, %317, %cst_171 {dimension_numbers = #tpu.dot_dimension_numbers<[1], [1], [0], [0], [0, 0, 1, 0], [], []>} : vector<32x32xf32>, vector<2x32xf32>, vector<32x2xf32> -> vector<32x2xf32>
    %cst_172 = arith.constant 0.353553385 : f32
    %319 = vector.broadcast %cst_172 : f32 to vector<32x2xf32>
    %320 = arith.mulf %318, %319 : vector<32x2xf32>
    %cst_173 = arith.constant dense<0xFF800000> : vector<32xf32>
    %321 = vector.multi_reduction <maximumf>, %320, %cst_173 [1] : vector<32x2xf32> to vector<32xf32>
    %322 = vector.shape_cast %321 : vector<32xf32> to vector<32x1xf32>
    %323 = vector.broadcast %322 : vector<32x1xf32> to vector<32x2xf32>
    %324 = arith.subf %320, %323 : vector<32x2xf32>
    %325 = math.exp %324 : vector<32x2xf32>
    %cst_174 = arith.constant dense<0.000000e+00> : vector<32xf32>
    %326 = vector.multi_reduction <add>, %325, %cst_174 [1] : vector<32x2xf32> to vector<32xf32>
    %327 = vector.shape_cast %326 : vector<32xf32> to vector<32x1xf32>
    %328 = tpu.reciprocal %327 {approx = true} : vector<32x1xf32> -> vector<32x1xf32>
    %329 = vector.broadcast %328 : vector<32x1xf32> to vector<32x2xf32>
    %330 = arith.mulf %325, %329 : vector<32x2xf32>
    %331 = vector.extract_strided_slice %316 {offsets = [0, 32], sizes = [2, 32], strides = [1, 1]} : vector<2x64xf32> to vector<2x32xf32>
    %cst_175 = arith.constant dense<0.000000e+00> : vector<32x32xf32>
    %332 = tpu.matmul %330, %331, %cst_175 {dimension_numbers = #tpu.dot_dimension_numbers<[1], [0], [0], [1], [0, 0, 1, 1], [], []>} : vector<32x2xf32>, vector<2x32xf32>, vector<32x32xf32> -> vector<32x32xf32>
    %333 = arith.subf %315, %332 : vector<32x32xf32>
    %334 = arith.mulf %333, %1 : vector<32x32xf32>
    %335 = arith.mulf %334, %334 : vector<32x32xf32>
    %336 = arith.addf %295, %335 : vector<32x32xf32>
    %c0_176 = arith.constant 0 : index
    %c1_177 = arith.constant 1 : index
    %c0_178 = arith.constant 0 : index
    %c0_179 = arith.constant 0 : index
    %337 = vector.load %arg8[%c0_176, %c1_177, %c0_178, %c0_179] : memref<1x2x32x128xf32, #tpu.memory_space<vmem>>, vector<1x1x32x128xf32>
    %338 = vector.shape_cast %337 : vector<1x1x32x128xf32> to vector<32x128xf32>
    %339 = vector.extract_strided_slice %338 {offsets = [0, 0], sizes = [32, 96], strides = [1, 1]} : vector<32x128xf32> to vector<32x96xf32>
    %340 = vector.extract_strided_slice %338 {offsets = [0, 32], sizes = [32, 64], strides = [1, 1]} : vector<32x128xf32> to vector<32x64xf32>
    %341 = vector.extract_strided_slice %338 {offsets = [0, 96], sizes = [32, 32], strides = [1, 1]} : vector<32x128xf32> to vector<32x32xf32>
    %c0_180 = arith.constant 0 : index
    %c1_181 = arith.constant 1 : index
    %c0_182 = arith.constant 0 : index
    %c0_183 = arith.constant 0 : index
    %342 = vector.load %arg9[%c0_180, %c1_181, %c0_182, %c0_183] : memref<1x2x32x96xf32, #tpu.memory_space<vmem>>, vector<1x1x32x96xf32>
    %343 = vector.shape_cast %342 : vector<1x1x32x96xf32> to vector<32x96xf32>
    %c0_184 = arith.constant 0 : index
    %c1_185 = arith.constant 1 : index
    %c0_186 = arith.constant 0 : index
    %c0_187 = arith.constant 0 : index
    %344 = vector.load %arg7[%c0_184, %c1_185, %c0_186, %c0_187] : memref<1x2x6x32xf32, #tpu.memory_space<vmem>>, vector<1x1x1x32xf32>
    %345 = vector.shape_cast %344 : vector<1x1x1x32xf32> to vector<1x32xf32>
    %c0_188 = arith.constant 0 : index
    %c1_189 = arith.constant 1 : index
    %c1_190 = arith.constant 1 : index
    %c0_191 = arith.constant 0 : index
    %346 = vector.load %arg7[%c0_188, %c1_189, %c1_190, %c0_191] : memref<1x2x6x32xf32, #tpu.memory_space<vmem>>, vector<1x1x1x32xf32>
    %347 = vector.shape_cast %346 : vector<1x1x1x32xf32> to vector<1x32xf32>
    %c0_192 = arith.constant 0 : index
    %c1_193 = arith.constant 1 : index
    %c2_194 = arith.constant 2 : index
    %c0_195 = arith.constant 0 : index
    %348 = vector.load %arg7[%c0_192, %c1_193, %c2_194, %c0_195] : memref<1x2x6x32xf32, #tpu.memory_space<vmem>>, vector<1x1x1x32xf32>
    %349 = vector.shape_cast %348 : vector<1x1x1x32xf32> to vector<1x32xf32>
    %c0_196 = arith.constant 0 : index
    %c1_197 = arith.constant 1 : index
    %c3_198 = arith.constant 3 : index
    %c0_199 = arith.constant 0 : index
    %350 = vector.load %arg7[%c0_196, %c1_197, %c3_198, %c0_199] : memref<1x2x6x32xf32, #tpu.memory_space<vmem>>, vector<1x1x1x32xf32>
    %351 = vector.shape_cast %350 : vector<1x1x1x32xf32> to vector<1x32xf32>
    %c0_200 = arith.constant 0 : index
    %c1_201 = arith.constant 1 : index
    %c4_202 = arith.constant 4 : index
    %c0_203 = arith.constant 0 : index
    %352 = vector.load %arg7[%c0_200, %c1_201, %c4_202, %c0_203] : memref<1x2x6x32xf32, #tpu.memory_space<vmem>>, vector<1x1x1x32xf32>
    %353 = vector.shape_cast %352 : vector<1x1x1x32xf32> to vector<1x32xf32>
    %c0_204 = arith.constant 0 : index
    %c1_205 = arith.constant 1 : index
    %c5_206 = arith.constant 5 : index
    %c0_207 = arith.constant 0 : index
    %354 = vector.load %arg7[%c0_204, %c1_205, %c5_206, %c0_207] : memref<1x2x6x32xf32, #tpu.memory_space<vmem>>, vector<1x1x1x32xf32>
    %355 = vector.shape_cast %354 : vector<1x1x1x32xf32> to vector<1x32xf32>
    %c0_208 = arith.constant 0 : index
    %c1_209 = arith.constant 1 : index
    %c0_210 = arith.constant 0 : index
    %c0_211 = arith.constant 0 : index
    %356 = vector.load %arg10[%c0_208, %c1_209, %c0_210, %c0_211] : memref<1x2x32x64xf32, #tpu.memory_space<vmem>>, vector<1x1x32x64xf32>
    %357 = vector.shape_cast %356 : vector<1x1x32x64xf32> to vector<32x64xf32>
    %c0_212 = arith.constant 0 : index
    %c1_213 = arith.constant 1 : index
    %c0_214 = arith.constant 0 : index
    %c0_215 = arith.constant 0 : index
    %358 = vector.load %arg11[%c0_212, %c1_213, %c0_214, %c0_215] : memref<1x2x1x64xf32, #tpu.memory_space<vmem>>, vector<1x1x1x64xf32>
    %359 = vector.shape_cast %358 : vector<1x1x1x64xf32> to vector<1x64xf32>
    %c0_216 = arith.constant 0 : index
    %c1_217 = arith.constant 1 : index
    %c0_218 = arith.constant 0 : index
    %c0_219 = arith.constant 0 : index
    %360 = vector.load %arg12[%c0_216, %c1_217, %c0_218, %c0_219] : memref<1x2x64x32xf32, #tpu.memory_space<vmem>>, vector<1x1x64x32xf32>
    %361 = vector.shape_cast %360 : vector<1x1x64x32xf32> to vector<64x32xf32>
    %c0_220 = arith.constant 0 : index
    %c1_221 = arith.constant 1 : index
    %c0_222 = arith.constant 0 : index
    %c0_223 = arith.constant 0 : index
    %362 = vector.load %arg13[%c0_220, %c1_221, %c0_222, %c0_223] : memref<1x2x1x32xf32, #tpu.memory_space<vmem>>, vector<1x1x1x32xf32>
    %363 = vector.shape_cast %362 : vector<1x1x1x32xf32> to vector<1x32xf32>
    %c0_224 = arith.constant 0 : index
    %c1_225 = arith.constant 1 : index
    %c0_226 = arith.constant 0 : index
    %c0_227 = arith.constant 0 : index
    %364 = vector.load %arg4[%c0_224, %c1_225, %c0_226, %c0_227] : memref<1x2x16x32xf32, #tpu.memory_space<vmem>>, vector<1x1x16x32xf32>
    %365 = vector.shape_cast %364 : vector<1x1x16x32xf32> to vector<16x32xf32>
    %c0_228 = arith.constant 0 : index
    %c1_229 = arith.constant 1 : index
    %c0_230 = arith.constant 0 : index
    %c0_231 = arith.constant 0 : index
    %366 = vector.load %arg5[%c0_228, %c1_229, %c0_230, %c0_231] : memref<1x2x8x32xf32, #tpu.memory_space<vmem>>, vector<1x1x8x32xf32>
    %367 = vector.shape_cast %366 : vector<1x1x8x32xf32> to vector<8x32xf32>
    %c0_232 = arith.constant 0 : index
    %c1_233 = arith.constant 1 : index
    %c0_234 = arith.constant 0 : index
    %c0_235 = arith.constant 0 : index
    %368 = vector.load %arg6[%c0_232, %c1_233, %c0_234, %c0_235] : memref<1x2x4x32xf32, #tpu.memory_space<vmem>>, vector<1x1x4x32xf32>
    %369 = vector.shape_cast %368 : vector<1x1x4x32xf32> to vector<4x32xf32>
    %cst_236 = arith.constant dense<0.000000e+00> : vector<16xf32>
    %370 = vector.multi_reduction <add>, %248, %cst_236 [1] : vector<16x32xf32> to vector<16xf32>
    %371 = vector.shape_cast %370 : vector<16xf32> to vector<16x1xf32>
    %cst_237 = arith.constant 3.200000e+01 : f32
    %372 = vector.broadcast %cst_237 : f32 to vector<16x1xf32>
    %373 = arith.divf %371, %372 : vector<16x1xf32>
    %374 = vector.broadcast %373 : vector<16x1xf32> to vector<16x32xf32>
    %375 = arith.subf %248, %374 : vector<16x32xf32>
    %376 = arith.mulf %375, %375 : vector<16x32xf32>
    %cst_238 = arith.constant dense<0.000000e+00> : vector<16xf32>
    %377 = vector.multi_reduction <add>, %376, %cst_238 [1] : vector<16x32xf32> to vector<16xf32>
    %378 = vector.shape_cast %377 : vector<16xf32> to vector<16x1xf32>
    %cst_239 = arith.constant 3.200000e+01 : f32
    %379 = vector.broadcast %cst_239 : f32 to vector<16x1xf32>
    %380 = arith.divf %378, %379 : vector<16x1xf32>
    %cst_240 = arith.constant 9.99999974E-6 : f32
    %381 = vector.broadcast %cst_240 : f32 to vector<16x1xf32>
    %382 = arith.addf %380, %381 : vector<16x1xf32>
    %383 = math.rsqrt %382 : vector<16x1xf32>
    %384 = vector.broadcast %383 : vector<16x1xf32> to vector<16x32xf32>
    %385 = arith.mulf %375, %384 : vector<16x32xf32>
    %386 = vector.broadcast %345 : vector<1x32xf32> to vector<16x32xf32>
    %387 = arith.mulf %385, %386 : vector<16x32xf32>
    %388 = vector.broadcast %347 : vector<1x32xf32> to vector<16x32xf32>
    %389 = arith.addf %387, %388 : vector<16x32xf32>
    %c0_241 = arith.constant 0 : index
    %c1_242 = arith.constant 1 : index
    %c0_243 = arith.constant 0 : index
    %c0_244 = arith.constant 0 : index
    %390 = vector.load %arg18[%c0_241, %c1_242, %c0_243, %c0_244] : memref<1x2x16x32xf32, #tpu.memory_space<vmem>>, vector<1x1x16x32xf32>
    %391 = vector.shape_cast %390 : vector<1x1x16x32xf32> to vector<16x32xf32>
    %392 = vector.shape_cast %389 : vector<16x32xf32> to vector<1x1x16x32xf32>
    tpu.vector_store %arg18[%c0_241, %c1_242, %c0_243, %c0_244], %392 {strides = array<i32>} : memref<1x2x16x32xf32, #tpu.memory_space<vmem>>, vector<1x1x16x32xf32>,
    %cst_245 = arith.constant dense<0.000000e+00> : vector<16x96xf32>
    %393 = tpu.matmul %389, %339, %cst_245 {dimension_numbers = #tpu.dot_dimension_numbers<[1], [0], [0], [1], [0, 0, 1, 1], [], []>} : vector<16x32xf32>, vector<32x96xf32>, vector<16x96xf32> -> vector<16x96xf32>
    %cst_246 = arith.constant dense<0.000000e+00> : vector<16x64xf32>
    %394 = tpu.matmul %365, %340, %cst_246 {dimension_numbers = #tpu.dot_dimension_numbers<[1], [0], [0], [1], [0, 0, 1, 1], [], []>} : vector<16x32xf32>, vector<32x64xf32>, vector<16x64xf32> -> vector<16x64xf32>
    %cst_247 = arith.constant dense<0.000000e+00> : vector<8x64xf32>
    %395 = tpu.matmul %367, %340, %cst_247 {dimension_numbers = #tpu.dot_dimension_numbers<[1], [0], [0], [1], [0, 0, 1, 1], [], []>} : vector<8x32xf32>, vector<32x64xf32>, vector<8x64xf32> -> vector<8x64xf32>
    %396 = vector.extract_strided_slice %393 {offsets = [0, 0], sizes = [8, 32], strides = [1, 1]} : vector<16x96xf32> to vector<8x32xf32>
    %397 = vector.extract_strided_slice %395 {offsets = [0, 0], sizes = [4, 64], strides = [1, 1]} : vector<8x64xf32> to vector<4x64xf32>
    %c0_248 = arith.constant 0 : index
    %c0_249 = arith.constant 0 : index
    %398 = vector.load %arg21[%c0_248, %c0_249] : memref<20x64xf32, #tpu.memory_space<vmem>>, vector<4x64xf32>
    tpu.vector_store %arg21[%c0_248, %c0_249], %397 {strides = array<i32>} : memref<20x64xf32, #tpu.memory_space<vmem>>, vector<4x64xf32>,
    %399 = vector.extract_strided_slice %394 {offsets = [0, 0], sizes = [8, 64], strides = [1, 1]} : vector<16x64xf32> to vector<8x64xf32>
    %c4_250 = arith.constant 4 : index
    %c0_251 = arith.constant 0 : index
    %400 = vector.load %arg21[%c4_250, %c0_251] : memref<20x64xf32, #tpu.memory_space<vmem>>, vector<8x64xf32>
    tpu.vector_store %arg21[%c4_250, %c0_251], %399 {strides = array<i32>} : memref<20x64xf32, #tpu.memory_space<vmem>>, vector<8x64xf32>,
    %401 = vector.extract_strided_slice %393 {offsets = [0, 32], sizes = [8, 64], strides = [1, 1]} : vector<16x96xf32> to vector<8x64xf32>
    %c12_252 = arith.constant 12 : index
    %c0_253 = arith.constant 0 : index
    %402 = vector.load %arg21[%c12_252, %c0_253] : memref<20x64xf32, #tpu.memory_space<vmem>>, vector<8x64xf32>
    tpu.vector_store %arg21[%c12_252, %c0_253], %401 {strides = array<i32>} : memref<20x64xf32, #tpu.memory_space<vmem>>, vector<8x64xf32>,
    %c0_254 = arith.constant 0 : index
    %c0_255 = arith.constant 0 : index
    %403 = vector.load %arg21[%c0_254, %c0_255] : memref<20x64xf32, #tpu.memory_space<vmem>>, vector<20x64xf32>
    %cst_256 = arith.constant dense<0.000000e+00> : vector<32x32xf32>
    %404 = tpu.matmul %0, %396, %cst_256 {dimension_numbers = #tpu.dot_dimension_numbers<[1], [0], [0], [1], [0, 0, 1, 1], [], []>} : vector<32x8xf32>, vector<8x32xf32>, vector<32x32xf32> -> vector<32x32xf32>
    %405 = arith.mulf %404, %1 : vector<32x32xf32>
    %406 = vector.extract_strided_slice %403 {offsets = [0, 0], sizes = [20, 32], strides = [1, 1]} : vector<20x64xf32> to vector<20x32xf32>
    %cst_257 = arith.constant dense<0.000000e+00> : vector<32x20xf32>
    %407 = tpu.matmul %405, %406, %cst_257 {dimension_numbers = #tpu.dot_dimension_numbers<[1], [1], [0], [0], [0, 0, 1, 0], [], []>} : vector<32x32xf32>, vector<20x32xf32>, vector<32x20xf32> -> vector<32x20xf32>
    %cst_258 = arith.constant 0.353553385 : f32
    %408 = vector.broadcast %cst_258 : f32 to vector<32x20xf32>
    %409 = arith.mulf %407, %408 : vector<32x20xf32>
    %cst_259 = arith.constant dense<0.000000e+00> : vector<32x28xf32>
    %410 = tpu.matmul %405, %4, %cst_259 {dimension_numbers = #tpu.dot_dimension_numbers<[1], [0], [0], [1], [0, 0, 1, 1], [], []>} : vector<32x32xf32>, vector<32x28xf32>, vector<32x28xf32> -> vector<32x28xf32>
    %411 = vector.extract_strided_slice %410 {offsets = [0, 4], sizes = [32, 24], strides = [1, 1]} : vector<32x28xf32> to vector<32x24xf32>
    %412 = vector.extract_strided_slice %410 {offsets = [0, 0], sizes = [32, 24], strides = [1, 1]} : vector<32x28xf32> to vector<32x24xf32>
    %413 = vector.shape_cast %17 : vector<32x1xi1> to vector<32x1xi1>
    %414 = vector.broadcast %413 : vector<32x1xi1> to vector<32x24xi1>
    %415 = arith.select %414, %411, %412 : vector<32x24xi1>, vector<32x24xf32>
    %416 = vector.extract_strided_slice %415 {offsets = [0, 2], sizes = [32, 22], strides = [1, 1]} : vector<32x24xf32> to vector<32x22xf32>
    %417 = vector.extract_strided_slice %415 {offsets = [0, 0], sizes = [32, 22], strides = [1, 1]} : vector<32x24xf32> to vector<32x22xf32>
    %418 = vector.shape_cast %21 : vector<32x1xi1> to vector<32x1xi1>
    %419 = vector.broadcast %418 : vector<32x1xi1> to vector<32x22xi1>
    %420 = arith.select %419, %416, %417 : vector<32x22xi1>, vector<32x22xf32>
    %421 = vector.extract_strided_slice %420 {offsets = [0, 1], sizes = [32, 21], strides = [1, 1]} : vector<32x22xf32> to vector<32x21xf32>
    %422 = vector.extract_strided_slice %420 {offsets = [0, 0], sizes = [32, 21], strides = [1, 1]} : vector<32x22xf32> to vector<32x21xf32>
    %423 = vector.shape_cast %25 : vector<32x1xi1> to vector<32x1xi1>
    %424 = vector.broadcast %423 : vector<32x1xi1> to vector<32x21xi1>
    %425 = arith.select %424, %421, %422 : vector<32x21xi1>, vector<32x21xf32>
    %426 = vector.extract_strided_slice %425 {offsets = [0, 0], sizes = [32, 20], strides = [1, 1]} : vector<32x21xf32> to vector<32x20xf32>
    %427 = arith.addf %409, %426 : vector<32x20xf32>
    %428 = arith.addf %427, %6 : vector<32x20xf32>
    %cst_260 = arith.constant dense<0xFF800000> : vector<32xf32>
    %429 = vector.multi_reduction <maximumf>, %428, %cst_260 [1] : vector<32x20xf32> to vector<32xf32>
    %430 = vector.shape_cast %429 : vector<32xf32> to vector<32x1xf32>
    %431 = vector.broadcast %430 : vector<32x1xf32> to vector<32x20xf32>
    %432 = arith.subf %428, %431 : vector<32x20xf32>
    %433 = math.exp %432 : vector<32x20xf32>
    %cst_261 = arith.constant dense<0.000000e+00> : vector<32xf32>
    %434 = vector.multi_reduction <add>, %433, %cst_261 [1] : vector<32x20xf32> to vector<32xf32>
    %435 = vector.shape_cast %434 : vector<32xf32> to vector<32x1xf32>
    %436 = tpu.reciprocal %435 {approx = true} : vector<32x1xf32> -> vector<32x1xf32>
    %437 = vector.broadcast %436 : vector<32x1xf32> to vector<32x20xf32>
    %438 = arith.mulf %433, %437 : vector<32x20xf32>
    %c0_262 = arith.constant 0 : index
    %c1_263 = arith.constant 1 : index
    %c0_264 = arith.constant 0 : index
    %c0_265 = arith.constant 0 : index
    %c0_266 = arith.constant 0 : index
    %439 = vector.load %arg19[%c0_262, %c1_263, %c0_264, %c0_265, %c0_266] : memref<1x2x2x32x20xf32, #tpu.memory_space<vmem>>, vector<1x1x1x32x20xf32>
    %440 = vector.shape_cast %439 : vector<1x1x1x32x20xf32> to vector<32x20xf32>
    %441 = vector.shape_cast %438 : vector<32x20xf32> to vector<1x1x1x32x20xf32>
    tpu.vector_store %arg19[%c0_262, %c1_263, %c0_264, %c0_265, %c0_266], %441 {strides = array<i32>} : memref<1x2x2x32x20xf32, #tpu.memory_space<vmem>>, vector<1x1x1x32x20xf32>,
    %442 = vector.extract_strided_slice %403 {offsets = [0, 32], sizes = [20, 32], strides = [1, 1]} : vector<20x64xf32> to vector<20x32xf32>
    %cst_267 = arith.constant dense<0.000000e+00> : vector<32x32xf32>
    %443 = tpu.matmul %438, %442, %cst_267 {dimension_numbers = #tpu.dot_dimension_numbers<[1], [0], [0], [1], [0, 0, 1, 1], [], []>} : vector<32x20xf32>, vector<20x32xf32>, vector<32x32xf32> -> vector<32x32xf32>
    %444 = arith.mulf %443, %1 : vector<32x32xf32>
    %cst_268 = arith.constant dense<0.000000e+00> : vector<8x32xf32>
    %445 = tpu.matmul %2, %444, %cst_268 {dimension_numbers = #tpu.dot_dimension_numbers<[1], [0], [0], [1], [0, 0, 1, 1], [], []>} : vector<8x32xf32>, vector<32x32xf32>, vector<8x32xf32> -> vector<8x32xf32>
    %c0_269 = arith.constant 0 : index
    %c0_270 = arith.constant 0 : index
    %446 = vector.load %arg22[%c0_269, %c0_270] : memref<16x32xf32, #tpu.memory_space<vmem>>, vector<8x32xf32>
    tpu.vector_store %arg22[%c0_269, %c0_270], %445 {strides = array<i32>} : memref<16x32xf32, #tpu.memory_space<vmem>>, vector<8x32xf32>,
    %447 = vector.extract_strided_slice %393 {offsets = [8, 0], sizes = [8, 32], strides = [1, 1]} : vector<16x96xf32> to vector<8x32xf32>
    %448 = vector.extract_strided_slice %395 {offsets = [4, 0], sizes = [4, 64], strides = [1, 1]} : vector<8x64xf32> to vector<4x64xf32>
    %c0_271 = arith.constant 0 : index
    %c0_272 = arith.constant 0 : index
    %449 = vector.load %arg21[%c0_271, %c0_272] : memref<20x64xf32, #tpu.memory_space<vmem>>, vector<4x64xf32>
    tpu.vector_store %arg21[%c0_271, %c0_272], %448 {strides = array<i32>} : memref<20x64xf32, #tpu.memory_space<vmem>>, vector<4x64xf32>,
    %450 = vector.extract_strided_slice %394 {offsets = [8, 0], sizes = [8, 64], strides = [1, 1]} : vector<16x64xf32> to vector<8x64xf32>
    %c4_273 = arith.constant 4 : index
    %c0_274 = arith.constant 0 : index
    %451 = vector.load %arg21[%c4_273, %c0_274] : memref<20x64xf32, #tpu.memory_space<vmem>>, vector<8x64xf32>
    tpu.vector_store %arg21[%c4_273, %c0_274], %450 {strides = array<i32>} : memref<20x64xf32, #tpu.memory_space<vmem>>, vector<8x64xf32>,
    %452 = vector.extract_strided_slice %393 {offsets = [8, 32], sizes = [8, 64], strides = [1, 1]} : vector<16x96xf32> to vector<8x64xf32>
    %c12_275 = arith.constant 12 : index
    %c0_276 = arith.constant 0 : index
    %453 = vector.load %arg21[%c12_275, %c0_276] : memref<20x64xf32, #tpu.memory_space<vmem>>, vector<8x64xf32>
    tpu.vector_store %arg21[%c12_275, %c0_276], %452 {strides = array<i32>} : memref<20x64xf32, #tpu.memory_space<vmem>>, vector<8x64xf32>,
    %c0_277 = arith.constant 0 : index
    %c0_278 = arith.constant 0 : index
    %454 = vector.load %arg21[%c0_277, %c0_278] : memref<20x64xf32, #tpu.memory_space<vmem>>, vector<20x64xf32>
    %cst_279 = arith.constant dense<0.000000e+00> : vector<32x32xf32>
    %455 = tpu.matmul %0, %447, %cst_279 {dimension_numbers = #tpu.dot_dimension_numbers<[1], [0], [0], [1], [0, 0, 1, 1], [], []>} : vector<32x8xf32>, vector<8x32xf32>, vector<32x32xf32> -> vector<32x32xf32>
    %456 = arith.mulf %455, %1 : vector<32x32xf32>
    %457 = vector.extract_strided_slice %454 {offsets = [0, 0], sizes = [20, 32], strides = [1, 1]} : vector<20x64xf32> to vector<20x32xf32>
    %cst_280 = arith.constant dense<0.000000e+00> : vector<32x20xf32>
    %458 = tpu.matmul %456, %457, %cst_280 {dimension_numbers = #tpu.dot_dimension_numbers<[1], [1], [0], [0], [0, 0, 1, 0], [], []>} : vector<32x32xf32>, vector<20x32xf32>, vector<32x20xf32> -> vector<32x20xf32>
    %cst_281 = arith.constant 0.353553385 : f32
    %459 = vector.broadcast %cst_281 : f32 to vector<32x20xf32>
    %460 = arith.mulf %458, %459 : vector<32x20xf32>
    %cst_282 = arith.constant dense<0.000000e+00> : vector<32x28xf32>
    %461 = tpu.matmul %456, %4, %cst_282 {dimension_numbers = #tpu.dot_dimension_numbers<[1], [0], [0], [1], [0, 0, 1, 1], [], []>} : vector<32x32xf32>, vector<32x28xf32>, vector<32x28xf32> -> vector<32x28xf32>
    %462 = vector.extract_strided_slice %461 {offsets = [0, 4], sizes = [32, 24], strides = [1, 1]} : vector<32x28xf32> to vector<32x24xf32>
    %463 = vector.extract_strided_slice %461 {offsets = [0, 0], sizes = [32, 24], strides = [1, 1]} : vector<32x28xf32> to vector<32x24xf32>
    %464 = vector.shape_cast %17 : vector<32x1xi1> to vector<32x1xi1>
    %465 = vector.broadcast %464 : vector<32x1xi1> to vector<32x24xi1>
    %466 = arith.select %465, %462, %463 : vector<32x24xi1>, vector<32x24xf32>
    %467 = vector.extract_strided_slice %466 {offsets = [0, 2], sizes = [32, 22], strides = [1, 1]} : vector<32x24xf32> to vector<32x22xf32>
    %468 = vector.extract_strided_slice %466 {offsets = [0, 0], sizes = [32, 22], strides = [1, 1]} : vector<32x24xf32> to vector<32x22xf32>
    %469 = vector.shape_cast %21 : vector<32x1xi1> to vector<32x1xi1>
    %470 = vector.broadcast %469 : vector<32x1xi1> to vector<32x22xi1>
    %471 = arith.select %470, %467, %468 : vector<32x22xi1>, vector<32x22xf32>
    %472 = vector.extract_strided_slice %471 {offsets = [0, 1], sizes = [32, 21], strides = [1, 1]} : vector<32x22xf32> to vector<32x21xf32>
    %473 = vector.extract_strided_slice %471 {offsets = [0, 0], sizes = [32, 21], strides = [1, 1]} : vector<32x22xf32> to vector<32x21xf32>
    %474 = vector.shape_cast %25 : vector<32x1xi1> to vector<32x1xi1>
    %475 = vector.broadcast %474 : vector<32x1xi1> to vector<32x21xi1>
    %476 = arith.select %475, %472, %473 : vector<32x21xi1>, vector<32x21xf32>
    %477 = vector.extract_strided_slice %476 {offsets = [0, 0], sizes = [32, 20], strides = [1, 1]} : vector<32x21xf32> to vector<32x20xf32>
    %478 = arith.addf %460, %477 : vector<32x20xf32>
    %479 = arith.addf %478, %8 : vector<32x20xf32>
    %cst_283 = arith.constant dense<0xFF800000> : vector<32xf32>
    %480 = vector.multi_reduction <maximumf>, %479, %cst_283 [1] : vector<32x20xf32> to vector<32xf32>
    %481 = vector.shape_cast %480 : vector<32xf32> to vector<32x1xf32>
    %482 = vector.broadcast %481 : vector<32x1xf32> to vector<32x20xf32>
    %483 = arith.subf %479, %482 : vector<32x20xf32>
    %484 = math.exp %483 : vector<32x20xf32>
    %cst_284 = arith.constant dense<0.000000e+00> : vector<32xf32>
    %485 = vector.multi_reduction <add>, %484, %cst_284 [1] : vector<32x20xf32> to vector<32xf32>
    %486 = vector.shape_cast %485 : vector<32xf32> to vector<32x1xf32>
    %487 = tpu.reciprocal %486 {approx = true} : vector<32x1xf32> -> vector<32x1xf32>
    %488 = vector.broadcast %487 : vector<32x1xf32> to vector<32x20xf32>
    %489 = arith.mulf %484, %488 : vector<32x20xf32>
    %c0_285 = arith.constant 0 : index
    %c1_286 = arith.constant 1 : index
    %c1_287 = arith.constant 1 : index
    %c0_288 = arith.constant 0 : index
    %c0_289 = arith.constant 0 : index
    %490 = vector.load %arg19[%c0_285, %c1_286, %c1_287, %c0_288, %c0_289] : memref<1x2x2x32x20xf32, #tpu.memory_space<vmem>>, vector<1x1x1x32x20xf32>
    %491 = vector.shape_cast %490 : vector<1x1x1x32x20xf32> to vector<32x20xf32>
    %492 = vector.shape_cast %489 : vector<32x20xf32> to vector<1x1x1x32x20xf32>
    tpu.vector_store %arg19[%c0_285, %c1_286, %c1_287, %c0_288, %c0_289], %492 {strides = array<i32>} : memref<1x2x2x32x20xf32, #tpu.memory_space<vmem>>, vector<1x1x1x32x20xf32>,
    %493 = vector.extract_strided_slice %454 {offsets = [0, 32], sizes = [20, 32], strides = [1, 1]} : vector<20x64xf32> to vector<20x32xf32>
    %cst_290 = arith.constant dense<0.000000e+00> : vector<32x32xf32>
    %494 = tpu.matmul %489, %493, %cst_290 {dimension_numbers = #tpu.dot_dimension_numbers<[1], [0], [0], [1], [0, 0, 1, 1], [], []>} : vector<32x20xf32>, vector<20x32xf32>, vector<32x32xf32> -> vector<32x32xf32>
    %495 = arith.mulf %494, %1 : vector<32x32xf32>
    %cst_291 = arith.constant dense<0.000000e+00> : vector<8x32xf32>
    %496 = tpu.matmul %2, %495, %cst_291 {dimension_numbers = #tpu.dot_dimension_numbers<[1], [0], [0], [1], [0, 0, 1, 1], [], []>} : vector<8x32xf32>, vector<32x32xf32>, vector<8x32xf32> -> vector<8x32xf32>
    %c8_292 = arith.constant 8 : index
    %c0_293 = arith.constant 0 : index
    %497 = vector.load %arg22[%c8_292, %c0_293] : memref<16x32xf32, #tpu.memory_space<vmem>>, vector<8x32xf32>
    tpu.vector_store %arg22[%c8_292, %c0_293], %496 {strides = array<i32>} : memref<16x32xf32, #tpu.memory_space<vmem>>, vector<8x32xf32>,
    %c0_294 = arith.constant 0 : index
    %c0_295 = arith.constant 0 : index
    %498 = vector.load %arg22[%c0_294, %c0_295] : memref<16x32xf32, #tpu.memory_space<vmem>>, vector<16x32xf32>
    %cst_296 = arith.constant dense<0.000000e+00> : vector<16x32xf32>
    %499 = tpu.matmul %498, %341, %cst_296 {dimension_numbers = #tpu.dot_dimension_numbers<[1], [0], [0], [1], [0, 0, 1, 1], [], []>} : vector<16x32xf32>, vector<32x32xf32>, vector<16x32xf32> -> vector<16x32xf32>
    %500 = arith.addf %499, %389 : vector<16x32xf32>
    %cst_297 = arith.constant dense<0.000000e+00> : vector<16xf32>
    %501 = vector.multi_reduction <add>, %500, %cst_297 [1] : vector<16x32xf32> to vector<16xf32>
    %502 = vector.shape_cast %501 : vector<16xf32> to vector<16x1xf32>
    %cst_298 = arith.constant 3.200000e+01 : f32
    %503 = vector.broadcast %cst_298 : f32 to vector<16x1xf32>
    %504 = arith.divf %502, %503 : vector<16x1xf32>
    %505 = vector.broadcast %504 : vector<16x1xf32> to vector<16x32xf32>
    %506 = arith.subf %500, %505 : vector<16x32xf32>
    %507 = arith.mulf %506, %506 : vector<16x32xf32>
    %cst_299 = arith.constant dense<0.000000e+00> : vector<16xf32>
    %508 = vector.multi_reduction <add>, %507, %cst_299 [1] : vector<16x32xf32> to vector<16xf32>
    %509 = vector.shape_cast %508 : vector<16xf32> to vector<16x1xf32>
    %cst_300 = arith.constant 3.200000e+01 : f32
    %510 = vector.broadcast %cst_300 : f32 to vector<16x1xf32>
    %511 = arith.divf %509, %510 : vector<16x1xf32>
    %cst_301 = arith.constant 9.99999974E-6 : f32
    %512 = vector.broadcast %cst_301 : f32 to vector<16x1xf32>
    %513 = arith.addf %511, %512 : vector<16x1xf32>
    %514 = math.rsqrt %513 : vector<16x1xf32>
    %515 = vector.broadcast %514 : vector<16x1xf32> to vector<16x32xf32>
    %516 = arith.mulf %506, %515 : vector<16x32xf32>
    %517 = vector.broadcast %349 : vector<1x32xf32> to vector<16x32xf32>
    %518 = arith.mulf %516, %517 : vector<16x32xf32>
    %519 = vector.broadcast %351 : vector<1x32xf32> to vector<16x32xf32>
    %520 = arith.addf %518, %519 : vector<16x32xf32>
    %521 = arith.addf %520, %248 : vector<16x32xf32>
    %cst_302 = arith.constant dense<0.000000e+00> : vector<16xf32>
    %522 = vector.multi_reduction <add>, %521, %cst_302 [1] : vector<16x32xf32> to vector<16xf32>
    %523 = vector.shape_cast %522 : vector<16xf32> to vector<16x1xf32>
    %cst_303 = arith.constant 3.200000e+01 : f32
    %524 = vector.broadcast %cst_303 : f32 to vector<16x1xf32>
    %525 = arith.divf %523, %524 : vector<16x1xf32>
    %526 = vector.broadcast %525 : vector<16x1xf32> to vector<16x32xf32>
    %527 = arith.subf %521, %526 : vector<16x32xf32>
    %528 = arith.mulf %527, %527 : vector<16x32xf32>
    %cst_304 = arith.constant dense<0.000000e+00> : vector<16xf32>
    %529 = vector.multi_reduction <add>, %528, %cst_304 [1] : vector<16x32xf32> to vector<16xf32>
    %530 = vector.shape_cast %529 : vector<16xf32> to vector<16x1xf32>
    %cst_305 = arith.constant 3.200000e+01 : f32
    %531 = vector.broadcast %cst_305 : f32 to vector<16x1xf32>
    %532 = arith.divf %530, %531 : vector<16x1xf32>
    %cst_306 = arith.constant 9.99999974E-6 : f32
    %533 = vector.broadcast %cst_306 : f32 to vector<16x1xf32>
    %534 = arith.addf %532, %533 : vector<16x1xf32>
    %535 = math.rsqrt %534 : vector<16x1xf32>
    %536 = vector.broadcast %535 : vector<16x1xf32> to vector<16x32xf32>
    %537 = arith.mulf %527, %536 : vector<16x32xf32>
    %538 = vector.broadcast %353 : vector<1x32xf32> to vector<16x32xf32>
    %539 = arith.mulf %537, %538 : vector<16x32xf32>
    %540 = vector.broadcast %355 : vector<1x32xf32> to vector<16x32xf32>
    %541 = arith.addf %539, %540 : vector<16x32xf32>
    %cst_307 = arith.constant dense<0.000000e+00> : vector<16x64xf32>
    %542 = tpu.matmul %541, %357, %cst_307 {dimension_numbers = #tpu.dot_dimension_numbers<[1], [0], [0], [1], [0, 0, 1, 1], [], []>} : vector<16x32xf32>, vector<32x64xf32>, vector<16x64xf32> -> vector<16x64xf32>
    %543 = vector.broadcast %359 : vector<1x64xf32> to vector<16x64xf32>
    %544 = arith.addf %542, %543 : vector<16x64xf32>
    %cst_308 = arith.constant 5.000000e-01 : f32
    %545 = vector.broadcast %cst_308 : f32 to vector<16x64xf32>
    %546 = arith.mulf %545, %544 : vector<16x64xf32>
    %cst_309 = arith.constant 0.707106769 : f32
    %547 = vector.broadcast %cst_309 : f32 to vector<16x64xf32>
    %548 = arith.mulf %544, %547 : vector<16x64xf32>
    %549 = math.erf %548 : vector<16x64xf32>
    %cst_310 = arith.constant 1.000000e+00 : f32
    %550 = vector.broadcast %cst_310 : f32 to vector<16x64xf32>
    %551 = arith.addf %550, %549 : vector<16x64xf32>
    %552 = arith.mulf %546, %551 : vector<16x64xf32>
    %cst_311 = arith.constant dense<0.000000e+00> : vector<16x32xf32>
    %553 = tpu.matmul %552, %361, %cst_311 {dimension_numbers = #tpu.dot_dimension_numbers<[1], [0], [0], [1], [0, 0, 1, 1], [], []>} : vector<16x64xf32>, vector<64x32xf32>, vector<16x32xf32> -> vector<16x32xf32>
    %554 = vector.broadcast %363 : vector<1x32xf32> to vector<16x32xf32>
    %555 = arith.addf %553, %554 : vector<16x32xf32>
    %556 = arith.addf %555, %521 : vector<16x32xf32>
    %557 = vector.extract_strided_slice %343 {offsets = [0, 0], sizes = [32, 32], strides = [1, 1]} : vector<32x96xf32> to vector<32x32xf32>
    %cst_312 = arith.constant dense<0.000000e+00> : vector<16x32xf32>
    %558 = tpu.matmul %520, %557, %cst_312 {dimension_numbers = #tpu.dot_dimension_numbers<[1], [0], [0], [1], [0, 0, 1, 1], [], []>} : vector<16x32xf32>, vector<32x32xf32>, vector<16x32xf32> -> vector<16x32xf32>
    %559 = vector.extract_strided_slice %343 {offsets = [0, 32], sizes = [32, 64], strides = [1, 1]} : vector<32x96xf32> to vector<32x64xf32>
    %cst_313 = arith.constant dense<0.000000e+00> : vector<16x64xf32>
    %560 = tpu.matmul %365, %559, %cst_313 {dimension_numbers = #tpu.dot_dimension_numbers<[1], [0], [0], [1], [0, 0, 1, 1], [], []>} : vector<16x32xf32>, vector<32x64xf32>, vector<16x64xf32> -> vector<16x64xf32>
    %561 = vector.extract_strided_slice %343 {offsets = [0, 32], sizes = [32, 64], strides = [1, 1]} : vector<32x96xf32> to vector<32x64xf32>
    %cst_314 = arith.constant dense<0.000000e+00> : vector<4x64xf32>
    %562 = tpu.matmul %369, %561, %cst_314 {dimension_numbers = #tpu.dot_dimension_numbers<[1], [0], [0], [1], [0, 0, 1, 1], [], []>} : vector<4x32xf32>, vector<32x64xf32>, vector<4x64xf32> -> vector<4x64xf32>
    %563 = vector.extract_strided_slice %558 {offsets = [0, 0], sizes = [8, 32], strides = [1, 1]} : vector<16x32xf32> to vector<8x32xf32>
    %cst_315 = arith.constant dense<0.000000e+00> : vector<32x32xf32>
    %564 = tpu.matmul %0, %563, %cst_315 {dimension_numbers = #tpu.dot_dimension_numbers<[1], [0], [0], [1], [0, 0, 1, 1], [], []>} : vector<32x8xf32>, vector<8x32xf32>, vector<32x32xf32> -> vector<32x32xf32>
    %565 = arith.mulf %564, %1 : vector<32x32xf32>
    %566 = vector.extract_strided_slice %560 {offsets = [0, 0], sizes = [8, 64], strides = [1, 1]} : vector<16x64xf32> to vector<8x64xf32>
    %567 = vector.extract_strided_slice %566 {offsets = [0, 0], sizes = [8, 32], strides = [1, 1]} : vector<8x64xf32> to vector<8x32xf32>
    %cst_316 = arith.constant dense<0.000000e+00> : vector<32x8xf32>
    %568 = tpu.matmul %565, %567, %cst_316 {dimension_numbers = #tpu.dot_dimension_numbers<[1], [1], [0], [0], [0, 0, 1, 0], [], []>} : vector<32x32xf32>, vector<8x32xf32>, vector<32x8xf32> -> vector<32x8xf32>
    %cst_317 = arith.constant 0.353553385 : f32
    %569 = vector.broadcast %cst_317 : f32 to vector<32x8xf32>
    %570 = arith.mulf %568, %569 : vector<32x8xf32>
    %cst_318 = arith.constant dense<0xFF800000> : vector<32xf32>
    %571 = vector.multi_reduction <maximumf>, %570, %cst_318 [1] : vector<32x8xf32> to vector<32xf32>
    %572 = vector.shape_cast %571 : vector<32xf32> to vector<32x1xf32>
    %573 = vector.broadcast %572 : vector<32x1xf32> to vector<32x8xf32>
    %574 = arith.subf %570, %573 : vector<32x8xf32>
    %575 = math.exp %574 : vector<32x8xf32>
    %cst_319 = arith.constant dense<0.000000e+00> : vector<32xf32>
    %576 = vector.multi_reduction <add>, %575, %cst_319 [1] : vector<32x8xf32> to vector<32xf32>
    %577 = vector.shape_cast %576 : vector<32xf32> to vector<32x1xf32>
    %578 = tpu.reciprocal %577 {approx = true} : vector<32x1xf32> -> vector<32x1xf32>
    %579 = vector.broadcast %578 : vector<32x1xf32> to vector<32x8xf32>
    %580 = arith.mulf %575, %579 : vector<32x8xf32>
    %581 = vector.extract_strided_slice %566 {offsets = [0, 32], sizes = [8, 32], strides = [1, 1]} : vector<8x64xf32> to vector<8x32xf32>
    %cst_320 = arith.constant dense<0.000000e+00> : vector<32x32xf32>
    %582 = tpu.matmul %580, %581, %cst_320 {dimension_numbers = #tpu.dot_dimension_numbers<[1], [0], [0], [1], [0, 0, 1, 1], [], []>} : vector<32x8xf32>, vector<8x32xf32>, vector<32x32xf32> -> vector<32x32xf32>
    %583 = vector.extract_strided_slice %562 {offsets = [0, 0], sizes = [2, 64], strides = [1, 1]} : vector<4x64xf32> to vector<2x64xf32>
    %584 = vector.extract_strided_slice %583 {offsets = [0, 0], sizes = [2, 32], strides = [1, 1]} : vector<2x64xf32> to vector<2x32xf32>
    %cst_321 = arith.constant dense<0.000000e+00> : vector<32x2xf32>
    %585 = tpu.matmul %565, %584, %cst_321 {dimension_numbers = #tpu.dot_dimension_numbers<[1], [1], [0], [0], [0, 0, 1, 0], [], []>} : vector<32x32xf32>, vector<2x32xf32>, vector<32x2xf32> -> vector<32x2xf32>
    %cst_322 = arith.constant 0.353553385 : f32
    %586 = vector.broadcast %cst_322 : f32 to vector<32x2xf32>
    %587 = arith.mulf %585, %586 : vector<32x2xf32>
    %cst_323 = arith.constant dense<0xFF800000> : vector<32xf32>
    %588 = vector.multi_reduction <maximumf>, %587, %cst_323 [1] : vector<32x2xf32> to vector<32xf32>
    %589 = vector.shape_cast %588 : vector<32xf32> to vector<32x1xf32>
    %590 = vector.broadcast %589 : vector<32x1xf32> to vector<32x2xf32>
    %591 = arith.subf %587, %590 : vector<32x2xf32>
    %592 = math.exp %591 : vector<32x2xf32>
    %cst_324 = arith.constant dense<0.000000e+00> : vector<32xf32>
    %593 = vector.multi_reduction <add>, %592, %cst_324 [1] : vector<32x2xf32> to vector<32xf32>
    %594 = vector.shape_cast %593 : vector<32xf32> to vector<32x1xf32>
    %595 = tpu.reciprocal %594 {approx = true} : vector<32x1xf32> -> vector<32x1xf32>
    %596 = vector.broadcast %595 : vector<32x1xf32> to vector<32x2xf32>
    %597 = arith.mulf %592, %596 : vector<32x2xf32>
    %598 = vector.extract_strided_slice %583 {offsets = [0, 32], sizes = [2, 32], strides = [1, 1]} : vector<2x64xf32> to vector<2x32xf32>
    %cst_325 = arith.constant dense<0.000000e+00> : vector<32x32xf32>
    %599 = tpu.matmul %597, %598, %cst_325 {dimension_numbers = #tpu.dot_dimension_numbers<[1], [0], [0], [1], [0, 0, 1, 1], [], []>} : vector<32x2xf32>, vector<2x32xf32>, vector<32x32xf32> -> vector<32x32xf32>
    %600 = arith.subf %582, %599 : vector<32x32xf32>
    %601 = arith.mulf %600, %1 : vector<32x32xf32>
    %602 = arith.mulf %601, %601 : vector<32x32xf32>
    %603 = arith.addf %336, %602 : vector<32x32xf32>
    %604 = vector.extract_strided_slice %558 {offsets = [8, 0], sizes = [8, 32], strides = [1, 1]} : vector<16x32xf32> to vector<8x32xf32>
    %cst_326 = arith.constant dense<0.000000e+00> : vector<32x32xf32>
    %605 = tpu.matmul %0, %604, %cst_326 {dimension_numbers = #tpu.dot_dimension_numbers<[1], [0], [0], [1], [0, 0, 1, 1], [], []>} : vector<32x8xf32>, vector<8x32xf32>, vector<32x32xf32> -> vector<32x32xf32>
    %606 = arith.mulf %605, %1 : vector<32x32xf32>
    %607 = vector.extract_strided_slice %560 {offsets = [8, 0], sizes = [8, 64], strides = [1, 1]} : vector<16x64xf32> to vector<8x64xf32>
    %608 = vector.extract_strided_slice %607 {offsets = [0, 0], sizes = [8, 32], strides = [1, 1]} : vector<8x64xf32> to vector<8x32xf32>
    %cst_327 = arith.constant dense<0.000000e+00> : vector<32x8xf32>
    %609 = tpu.matmul %606, %608, %cst_327 {dimension_numbers = #tpu.dot_dimension_numbers<[1], [1], [0], [0], [0, 0, 1, 0], [], []>} : vector<32x32xf32>, vector<8x32xf32>, vector<32x8xf32> -> vector<32x8xf32>
    %cst_328 = arith.constant 0.353553385 : f32
    %610 = vector.broadcast %cst_328 : f32 to vector<32x8xf32>
    %611 = arith.mulf %609, %610 : vector<32x8xf32>
    %cst_329 = arith.constant dense<0xFF800000> : vector<32xf32>
    %612 = vector.multi_reduction <maximumf>, %611, %cst_329 [1] : vector<32x8xf32> to vector<32xf32>
    %613 = vector.shape_cast %612 : vector<32xf32> to vector<32x1xf32>
    %614 = vector.broadcast %613 : vector<32x1xf32> to vector<32x8xf32>
    %615 = arith.subf %611, %614 : vector<32x8xf32>
    %616 = math.exp %615 : vector<32x8xf32>
    %cst_330 = arith.constant dense<0.000000e+00> : vector<32xf32>
    %617 = vector.multi_reduction <add>, %616, %cst_330 [1] : vector<32x8xf32> to vector<32xf32>
    %618 = vector.shape_cast %617 : vector<32xf32> to vector<32x1xf32>
    %619 = tpu.reciprocal %618 {approx = true} : vector<32x1xf32> -> vector<32x1xf32>
    %620 = vector.broadcast %619 : vector<32x1xf32> to vector<32x8xf32>
    %621 = arith.mulf %616, %620 : vector<32x8xf32>
    %622 = vector.extract_strided_slice %607 {offsets = [0, 32], sizes = [8, 32], strides = [1, 1]} : vector<8x64xf32> to vector<8x32xf32>
    %cst_331 = arith.constant dense<0.000000e+00> : vector<32x32xf32>
    %623 = tpu.matmul %621, %622, %cst_331 {dimension_numbers = #tpu.dot_dimension_numbers<[1], [0], [0], [1], [0, 0, 1, 1], [], []>} : vector<32x8xf32>, vector<8x32xf32>, vector<32x32xf32> -> vector<32x32xf32>
    %624 = vector.extract_strided_slice %562 {offsets = [2, 0], sizes = [2, 64], strides = [1, 1]} : vector<4x64xf32> to vector<2x64xf32>
    %625 = vector.extract_strided_slice %624 {offsets = [0, 0], sizes = [2, 32], strides = [1, 1]} : vector<2x64xf32> to vector<2x32xf32>
    %cst_332 = arith.constant dense<0.000000e+00> : vector<32x2xf32>
    %626 = tpu.matmul %606, %625, %cst_332 {dimension_numbers = #tpu.dot_dimension_numbers<[1], [1], [0], [0], [0, 0, 1, 0], [], []>} : vector<32x32xf32>, vector<2x32xf32>, vector<32x2xf32> -> vector<32x2xf32>
    %cst_333 = arith.constant 0.353553385 : f32
    %627 = vector.broadcast %cst_333 : f32 to vector<32x2xf32>
    %628 = arith.mulf %626, %627 : vector<32x2xf32>
    %cst_334 = arith.constant dense<0xFF800000> : vector<32xf32>
    %629 = vector.multi_reduction <maximumf>, %628, %cst_334 [1] : vector<32x2xf32> to vector<32xf32>
    %630 = vector.shape_cast %629 : vector<32xf32> to vector<32x1xf32>
    %631 = vector.broadcast %630 : vector<32x1xf32> to vector<32x2xf32>
    %632 = arith.subf %628, %631 : vector<32x2xf32>
    %633 = math.exp %632 : vector<32x2xf32>
    %cst_335 = arith.constant dense<0.000000e+00> : vector<32xf32>
    %634 = vector.multi_reduction <add>, %633, %cst_335 [1] : vector<32x2xf32> to vector<32xf32>
    %635 = vector.shape_cast %634 : vector<32xf32> to vector<32x1xf32>
    %636 = tpu.reciprocal %635 {approx = true} : vector<32x1xf32> -> vector<32x1xf32>
    %637 = vector.broadcast %636 : vector<32x1xf32> to vector<32x2xf32>
    %638 = arith.mulf %633, %637 : vector<32x2xf32>
    %639 = vector.extract_strided_slice %624 {offsets = [0, 32], sizes = [2, 32], strides = [1, 1]} : vector<2x64xf32> to vector<2x32xf32>
    %cst_336 = arith.constant dense<0.000000e+00> : vector<32x32xf32>
    %640 = tpu.matmul %638, %639, %cst_336 {dimension_numbers = #tpu.dot_dimension_numbers<[1], [0], [0], [1], [0, 0, 1, 1], [], []>} : vector<32x2xf32>, vector<2x32xf32>, vector<32x32xf32> -> vector<32x32xf32>
    %641 = arith.subf %623, %640 : vector<32x32xf32>
    %642 = arith.mulf %641, %1 : vector<32x32xf32>
    %643 = arith.mulf %642, %642 : vector<32x32xf32>
    %644 = arith.addf %603, %643 : vector<32x32xf32>
    %c0_337 = arith.constant 0 : index
    %c0_338 = arith.constant 0 : index
    %c0_339 = arith.constant 0 : index
    %645 = vector.load %arg17[%c0_337, %c0_338, %c0_339] : memref<1x16x32xf32, #tpu.memory_space<vmem>>, vector<1x16x32xf32>
    %646 = vector.shape_cast %645 : vector<1x16x32xf32> to vector<16x32xf32>
    %647 = vector.shape_cast %556 : vector<16x32xf32> to vector<1x16x32xf32>
    tpu.vector_store %arg17[%c0_337, %c0_338, %c0_339], %647 {strides = array<i32>} : memref<1x16x32xf32, #tpu.memory_space<vmem>>, vector<1x16x32xf32>,
    %cst_340 = arith.constant dense<0.000000e+00> : vector<32xf32>
    %648 = vector.multi_reduction <add>, %644, %cst_340 [1] : vector<32x32xf32> to vector<32xf32>
    %649 = vector.shape_cast %648 : vector<32xf32> to vector<32x1xf32>
    %cst_341 = arith.constant dense<0.000000e+00> : vector<1xf32>
    %650 = vector.multi_reduction <add>, %649, %cst_341 [0] : vector<32x1xf32> to vector<1xf32>
    %651 = vector.shape_cast %650 : vector<1xf32> to vector<1x1xf32>
    %cst_342 = arith.constant 9.765625E-4 : f32
    %652 = vector.broadcast %cst_342 : f32 to vector<1x1xf32>
    %653 = arith.mulf %651, %652 : vector<1x1xf32>
    %c0_343 = arith.constant 0 : index
    %c0_344 = arith.constant 0 : index
    %c0_345 = arith.constant 0 : index
    %654 = vector.load %arg20[%c0_343, %c0_344, %c0_345] : memref<1x1x1xf32, #tpu.memory_space<vmem>>, vector<1x1x1xf32>
    %655 = vector.shape_cast %654 : vector<1x1x1xf32> to vector<1x1xf32>
    %656 = vector.shape_cast %653 : vector<1x1xf32> to vector<1x1x1xf32>
    tpu.vector_store %arg20[%c0_343, %c0_344, %c0_345], %656 {strides = array<i32>} : memref<1x1x1xf32, #tpu.memory_space<vmem>>, vector<1x1x1xf32>,
    return
  }
  func.func @transform_0(%arg0: i32) -> (i32, i32, i32) {
    %c0_i32 = arith.constant 0 : i32
    %c0_i32_0 = arith.constant 0 : i32
    %c0_i32_1 = arith.constant 0 : i32
    return %arg0, %c0_i32, %c0_i32_0 : i32, i32, i32
  }
  func.func @transform_1(%arg0: i32) -> (i32, i32, i32, i32) {
    %c0_i32 = arith.constant 0 : i32
    %c0_i32_0 = arith.constant 0 : i32
    %c0_i32_1 = arith.constant 0 : i32
    %c0_i32_2 = arith.constant 0 : i32
    return %arg0, %c0_i32, %c0_i32_0, %c0_i32_1 : i32, i32, i32, i32
  }
  func.func @transform_2(%arg0: i32) -> (i32, i32, i32) {
    %c0_i32 = arith.constant 0 : i32
    %c0_i32_0 = arith.constant 0 : i32
    %c0_i32_1 = arith.constant 0 : i32
    return %arg0, %c0_i32, %c0_i32_0 : i32, i32, i32
  }
  func.func @transform_3(%arg0: i32) -> (i32, i32, i32, i32) {
    %c0_i32 = arith.constant 0 : i32
    %c0_i32_0 = arith.constant 0 : i32
    %c0_i32_1 = arith.constant 0 : i32
    %c0_i32_2 = arith.constant 0 : i32
    return %arg0, %c0_i32, %c0_i32_0, %c0_i32_1 : i32, i32, i32, i32
  }
  func.func @transform_4(%arg0: i32) -> (i32, i32, i32, i32) {
    %c0_i32 = arith.constant 0 : i32
    %c0_i32_0 = arith.constant 0 : i32
    %c0_i32_1 = arith.constant 0 : i32
    %c0_i32_2 = arith.constant 0 : i32
    return %arg0, %c0_i32, %c0_i32_0, %c0_i32_1 : i32, i32, i32, i32
  }
  func.func @transform_5(%arg0: i32) -> (i32, i32, i32, i32) {
    %c0_i32 = arith.constant 0 : i32
    %c0_i32_0 = arith.constant 0 : i32
    %c0_i32_1 = arith.constant 0 : i32
    %c0_i32_2 = arith.constant 0 : i32
    return %arg0, %c0_i32, %c0_i32_0, %c0_i32_1 : i32, i32, i32, i32
  }
  func.func @transform_6(%arg0: i32) -> (i32, i32, i32, i32) {
    %c0_i32 = arith.constant 0 : i32
    %c0_i32_0 = arith.constant 0 : i32
    %c0_i32_1 = arith.constant 0 : i32
    %c0_i32_2 = arith.constant 0 : i32
    return %arg0, %c0_i32, %c0_i32_0, %c0_i32_1 : i32, i32, i32, i32
  }
  func.func @transform_7(%arg0: i32) -> (i32, i32, i32, i32) {
    %c0_i32 = arith.constant 0 : i32
    %c0_i32_0 = arith.constant 0 : i32
    %c0_i32_1 = arith.constant 0 : i32
    %c0_i32_2 = arith.constant 0 : i32
    return %arg0, %c0_i32, %c0_i32_0, %c0_i32_1 : i32, i32, i32, i32
  }
  func.func @transform_8(%arg0: i32) -> (i32, i32, i32, i32) {
    %c0_i32 = arith.constant 0 : i32
    %c0_i32_0 = arith.constant 0 : i32
    %c0_i32_1 = arith.constant 0 : i32
    %c0_i32_2 = arith.constant 0 : i32
    return %arg0, %c0_i32, %c0_i32_0, %c0_i32_1 : i32, i32, i32, i32
  }
  func.func @transform_9(%arg0: i32) -> (i32, i32, i32, i32) {
    %c0_i32 = arith.constant 0 : i32
    %c0_i32_0 = arith.constant 0 : i32
    %c0_i32_1 = arith.constant 0 : i32
    %c0_i32_2 = arith.constant 0 : i32
    return %arg0, %c0_i32, %c0_i32_0, %c0_i32_1 : i32, i32, i32, i32
  }
  func.func @transform_10(%arg0: i32) -> (i32, i32, i32, i32) {
    %c0_i32 = arith.constant 0 : i32
    %c0_i32_0 = arith.constant 0 : i32
    %c0_i32_1 = arith.constant 0 : i32
    %c0_i32_2 = arith.constant 0 : i32
    return %arg0, %c0_i32, %c0_i32_0, %c0_i32_1 : i32, i32, i32, i32
  }
  func.func @transform_11(%arg0: i32) -> (i32, i32, i32, i32) {
    %c0_i32 = arith.constant 0 : i32
    %c0_i32_0 = arith.constant 0 : i32
    %c0_i32_1 = arith.constant 0 : i32
    %c0_i32_2 = arith.constant 0 : i32
    return %arg0, %c0_i32, %c0_i32_0, %c0_i32_1 : i32, i32, i32, i32
  }
  func.func @transform_12(%arg0: i32) -> (i32, i32, i32, i32) {
    %c0_i32 = arith.constant 0 : i32
    %c0_i32_0 = arith.constant 0 : i32
    %c0_i32_1 = arith.constant 0 : i32
    %c0_i32_2 = arith.constant 0 : i32
    return %arg0, %c0_i32, %c0_i32_0, %c0_i32_1 : i32, i32, i32, i32
  }
  func.func @transform_13(%arg0: i32) -> (i32, i32) {
    %c0_i32 = arith.constant 0 : i32
    %c0_i32_0 = arith.constant 0 : i32
    %c0_i32_1 = arith.constant 0 : i32
    return %c0_i32, %c0_i32_0 : i32, i32
  }
  func.func @transform_14(%arg0: i32) -> (i32, i32) {
    %c0_i32 = arith.constant 0 : i32
    %c0_i32_0 = arith.constant 0 : i32
    %c0_i32_1 = arith.constant 0 : i32
    return %c0_i32, %c0_i32_0 : i32, i32
  }
  func.func @transform_15(%arg0: i32) -> (i32, i32) {
    %c0_i32 = arith.constant 0 : i32
    %c0_i32_0 = arith.constant 0 : i32
    %c0_i32_1 = arith.constant 0 : i32
    return %c0_i32, %c0_i32_0 : i32, i32
  }
  func.func @transform_16(%arg0: i32) -> (i32, i32, i32) {
    %c0_i32 = arith.constant 0 : i32
    %c0_i32_0 = arith.constant 0 : i32
    %c0_i32_1 = arith.constant 0 : i32
    return %arg0, %c0_i32, %c0_i32_0 : i32, i32, i32
  }
  func.func @transform_17(%arg0: i32) -> (i32, i32, i32, i32) {
    %c0_i32 = arith.constant 0 : i32
    %c0_i32_0 = arith.constant 0 : i32
    %c0_i32_1 = arith.constant 0 : i32
    %c0_i32_2 = arith.constant 0 : i32
    return %arg0, %c0_i32, %c0_i32_0, %c0_i32_1 : i32, i32, i32, i32
  }
  func.func @transform_18(%arg0: i32) -> (i32, i32, i32, i32, i32) {
    %c0_i32 = arith.constant 0 : i32
    %c0_i32_0 = arith.constant 0 : i32
    %c0_i32_1 = arith.constant 0 : i32
    %c0_i32_2 = arith.constant 0 : i32
    %c0_i32_3 = arith.constant 0 : i32
    return %arg0, %c0_i32, %c0_i32_0, %c0_i32_1, %c0_i32_2 : i32, i32, i32, i32, i32
  }
  func.func @transform_19(%arg0: i32) -> (i32, i32, i32) {
    %c0_i32 = arith.constant 0 : i32
    %c0_i32_0 = arith.constant 0 : i32
    %c0_i32_1 = arith.constant 0 : i32
    return %arg0, %c0_i32, %c0_i32_0 : i32, i32, i32
  }
}

</mosaic_0001>

<llo_original>
// kernel: compressive_encoder.1
$region0: #{compressive_encoder.1}
  #allocation0 [shape = 'u32[]', space=smem, size = 0x4, offset = 0x4, fixed_abs, tag = 'smem constant byte address 0x4 - core index']
  #allocation1 [shape = 'u32[144,128]{1,0:T(1,128)}', space=vmem, size = 0x12000, scoped, tag = 'internal scratch']
  #allocation2 [shape = 'f32[20,64]{1,0:T(8,128)}', space=vmem, size = 0x3000, scoped, tag = 'scratch operand']
  #allocation3 [shape = 'f32[16,32]{1,0:T(8,128)}', space=vmem, size = 0x2000, scoped, tag = 'scratch operand']
  %s0 = inlined_call_operand.vmem [shape: f32[4,16,32], index: 0, kind: input, shape index: {}]
  %s1 = inlined_call_operand.vmem [shape: f32[4,2,32,20], index: 1, kind: input, shape index: {}]
  %s2 = inlined_call_operand.vmem [shape: f32[4,32,28], index: 2, kind: input, shape index: {}]
  %s3 = inlined_call_operand.vmem [shape: f32[4,2,16,32], index: 3, kind: input, shape index: {}]
  %s4 = inlined_call_operand.vmem [shape: f32[4,2,8,32], index: 4, kind: input, shape index: {}]
  %s5 = inlined_call_operand.vmem [shape: f32[4,2,4,32], index: 5, kind: input, shape index: {}]
  %s6 = inlined_call_operand.vmem [shape: f32[4,2,6,32], index: 6, kind: input, shape index: {}]
  %s7 = inlined_call_operand.vmem [shape: f32[4,2,32,128], index: 7, kind: input, shape index: {}]
  %s8 = inlined_call_operand.vmem [shape: f32[4,2,32,96], index: 8, kind: input, shape index: {}]
  %s9 = inlined_call_operand.vmem [shape: f32[4,2,32,64], index: 9, kind: input, shape index: {}]
  %s10 = inlined_call_operand.vmem [shape: f32[4,2,1,64], index: 10, kind: input, shape index: {}]
  %s11 = inlined_call_operand.vmem [shape: f32[4,2,64,32], index: 11, kind: input, shape index: {}]
  %s12 = inlined_call_operand.vmem [shape: f32[4,2,1,32], index: 12, kind: input, shape index: {}]
  %s13 = inlined_call_operand.vmem [shape: f32[32,8], index: 13, kind: input, shape index: {}]
  %s14 = inlined_call_operand.vmem [shape: f32[32,32], index: 14, kind: input, shape index: {}]
  %s15 = inlined_call_operand.vmem [shape: f32[8,32], index: 15, kind: input, shape index: {}]
  %s16 = inlined_call_operand.vmem [shape: f32[4,16,32], index: 16, kind: output, shape index: {0}]
  %s17 = inlined_call_operand.hbm [shape: f32[4,2,16,32], index: 17, kind: output, shape index: {1}]
  %s18 = inlined_call_operand.hbm [shape: f32[4,2,2,32,20], index: 18, kind: output, shape index: {2}]
  %s19 = inlined_call_operand.vmem [shape: f32[4,1,1], index: 19, kind: output, shape index: {3}]
  %20 = xla_tuple %s16, %s17, %s18, %s19
  %s21 = sld [smem:[#allocation0]]
  $region121: #{compressive_encoder.1} parent=0
    _
  %s23 = ssub.s32 1, %s21
  %s24 = scalar_select 0, %s23, %s21
  $region1: #{compressive_encoder.1} parent=0
    #allocation4 [shape = 'u8[32768]{0}', space=vmem, size = 0x8000, scoped, tag = 'output window, operand 1']
    #allocation5 [shape = 's32[2]{0}', space=sflag, size = 0x8, scoped, tag = 'scoped memory for compressive_encoder.1']
    #allocation6 [shape = 'u8[131072]{0}', space=vmem, size = 0x20000, scoped, tag = 'output window, operand 2']
    #allocation7 [shape = 's32[2]{0}', space=sflag, size = 0x8, scoped, tag = 'scoped memory for compressive_encoder.1']
    %25 = vsyncpa [#allocation5], 0
    %s26 = scalar_lea.sflag [#allocation5], 1
    %27 = vsyncpa %s26, 0
    %28 = vsyncpa [#allocation7], 0
    %s29 = scalar_lea.sflag [#allocation7], 1
    %30 = vsyncpa %s29, 0
    loop: start=0, step=1, limit=6
    $region2: #{compressive_encoder.1} parent=1 // loop_pre_header
      _
    $region3: #{compressive_encoder.1} parent=1 // loop_header
      %s32 = sphi 0, %s36
      %p33 = scmp.ge.s32.totalorder %s32, 6
      %s42 = sphi 0, %s44
      %s45 = sphi 0, %s42
      %s46 = sphi 0, %s45
      %s62 = sphi 0, %s46
      %s68 = sphi 0, %s70
      %s71 = sphi 0, %s68
      %s72 = sphi 0, %s71
      %s88 = sphi 0, %s72
      %s94 = sphi 0, %s96
      %s97 = sphi 0, %s94
      %s98 = sphi 0, %s97
      %s114 = sphi 0, %s98
      %s120 = sphi 0, %s122
      %s123 = sphi 0, %s120
      %s124 = sphi 0, %s123
      %s140 = sphi 0, %s124
      %s146 = sphi 0, %s148
      %s149 = sphi 0, %s146
      %s150 = sphi 0, %s149
      %s166 = sphi 0, %s150
      %s172 = sphi 0, %s174
      %s175 = sphi 0, %s172
      %s176 = sphi 0, %s175
      %s192 = sphi 0, %s176
      %s198 = sphi 0, %s200
      %s201 = sphi 0, %s198
      %s202 = sphi 0, %s201
      %s218 = sphi 0, %s202
      %s224 = sphi 0, %s226
      %s227 = sphi 0, %s224
      %s228 = sphi 0, %s227
      %s244 = sphi 0, %s228
      %s250 = sphi 0, %s252
      %s253 = sphi 0, %s250
      %s254 = sphi 0, %s253
      %s270 = sphi 0, %s254
      %s276 = sphi 0, %s278
      %s279 = sphi 0, %s276
      %s280 = sphi 0, %s279
      %s296 = sphi 0, %s280
      %s302 = sphi 0, %s304
      %s305 = sphi 0, %s302
      %s306 = sphi 0, %s305
      %s322 = sphi 0, %s306
      %s328 = sphi 0, %s330
      %s331 = sphi 0, %s328
      %s332 = sphi 0, %s331
      %s348 = sphi 0, %s332
      %s354 = sphi 0, %s356
      %s357 = sphi 0, %s354
      %s358 = sphi 0, %s357
      %s374 = sphi 0, %s358
      %s378 = sphi 0, %s378
      %s380 = sphi 0, %s378
      %s381 = sphi 0, %s380
      %s395 = sphi 0, %s381
      %s399 = sphi 0, %s399
      %s401 = sphi 0, %s399
      %s402 = sphi 0, %s401
      %s416 = sphi 0, %s402
      %s420 = sphi 0, %s420
      %s422 = sphi 0, %s420
      %s423 = sphi 0, %s422
      %s437 = sphi 0, %s423
      %s443 = sphi 0, %s445
      %s446 = sphi 0, %s443
      %s447 = sphi 0, %s446
      %s463 = sphi 0, %s447
      %s469 = sphi 0, %s471
      %s472 = sphi 0, %s469
      %s473 = sphi 0, %s472
      %s489 = sphi 0, %s473
      %s495 = sphi 0, %s497
      %s498 = sphi 0, %s495
      %s499 = sphi 0, %s498
      %s515 = sphi 0, %s499
      %s521 = sphi 0, %s523
      %s524 = sphi 0, %s521
      %s525 = sphi 0, %s524
      %s541 = sphi 0, %s525
    $region4: #{compressive_encoder.1} parent=1 // loop_header_branch
      %35 = sbr.rel (%p33) target = $region8
    $region5: #{compressive_encoder.1} parent=1 // loop_body
      %s37 = ssub.s32 %s32, 1
      %s38 = ssub.s32 %s32, 2
      %s39 = sadd.s32 %s32, 1
      %s40 = ssub.s32 %s32, %s39
      %p41 = scmp.eq.s32.totalorder %s40, 0
      %s43 = sadd.s32 %s42, 1
      %s44 = scalar_select %p41, %s42, %s43
      %p47 = pneg %p41
      %p48 = scmp.eq.s32.totalorder %s32, 3
      %p49 = por %p47, %p48
      %p50 = scmp.ne.s32.totalorder %s42, %s45
      %p51 = scmp.eq.s32.totalorder %s32, 0
      %p52 = por %p50, %p51
      %p53 = scmp.ne.s32.totalorder %s42, %s45
      %p54 = scmp.eq.s32.totalorder %s37, 3
      %p55 = por %p53, %p54
      %p56 = scmp.ne.s32.totalorder %s45, %s46
      %p57 = scmp.eq.s32.totalorder %s37, 0
      %p58 = por %p56, %p57
      %p59 = scmp.ne.s32.totalorder %s45, %s46
      %p60 = scmp.eq.s32.totalorder %s38, 3
      %p61 = por %p59, %p60
      %p63 = scmp.ne.s32.totalorder %s46, %s62
      %p64 = scmp.eq.s32.totalorder %s38, 0
      %p65 = por %p63, %p64
      %s66 = ssub.s32 %s32, %s39
      %p67 = scmp.eq.s32.totalorder %s66, 0
      %s69 = sadd.s32 %s68, 1
      %s70 = scalar_select %p67, %s68, %s69
      %p73 = pneg %p67
      %p74 = scmp.eq.s32.totalorder %s32, 3
      %p75 = por %p73, %p74
      %p76 = scmp.ne.s32.totalorder %s68, %s71
      %p77 = scmp.eq.s32.totalorder %s32, 0
      %p78 = por %p76, %p77
      %p79 = scmp.ne.s32.totalorder %s68, %s71
      %p80 = scmp.eq.s32.totalorder %s37, 3
      %p81 = por %p79, %p80
      %p82 = scmp.ne.s32.totalorder %s71, %s72
      %p83 = scmp.eq.s32.totalorder %s37, 0
      %p84 = por %p82, %p83
      %p85 = scmp.ne.s32.totalorder %s71, %s72
      %p86 = scmp.eq.s32.totalorder %s38, 3
      %p87 = por %p85, %p86
      %p89 = scmp.ne.s32.totalorder %s72, %s88
      %p90 = scmp.eq.s32.totalorder %s38, 0
      %p91 = por %p89, %p90
      %s92 = ssub.s32 %s32, %s39
      %p93 = scmp.eq.s32.totalorder %s92, 0
      %s95 = sadd.s32 %s94, 1
      %s96 = scalar_select %p93, %s94, %s95
      %p99 = pneg %p93
      %p100 = scmp.eq.s32.totalorder %s32, 3
      %p101 = por %p99, %p100
      %p102 = scmp.ne.s32.totalorder %s94, %s97
      %p103 = scmp.eq.s32.totalorder %s32, 0
      %p104 = por %p102, %p103
      %p105 = scmp.ne.s32.totalorder %s94, %s97
      %p106 = scmp.eq.s32.totalorder %s37, 3
      %p107 = por %p105, %p106
      %p108 = scmp.ne.s32.totalorder %s97, %s98
      %p109 = scmp.eq.s32.totalorder %s37, 0
      %p110 = por %p108, %p109
      %p111 = scmp.ne.s32.totalorder %s97, %s98
      %p112 = scmp.eq.s32.totalorder %s38, 3
      %p113 = por %p111, %p112
      %p115 = scmp.ne.s32.totalorder %s98, %s114
      %p116 = scmp.eq.s32.totalorder %s38, 0
      %p117 = por %p115, %p116
      %s118 = ssub.s32 %s32, %s39
      %p119 = scmp.eq.s32.totalorder %s118, 0
      %s121 = sadd.s32 %s120, 1
      %s122 = scalar_select %p119, %s120, %s121
      %p125 = pneg %p119
      %p126 = scmp.eq.s32.totalorder %s32, 3
      %p127 = por %p125, %p126
      %p128 = scmp.ne.s32.totalorder %s120, %s123
      %p129 = scmp.eq.s32.totalorder %s32, 0
      %p130 = por %p128, %p129
      %p131 = scmp.ne.s32.totalorder %s120, %s123
      %p132 = scmp.eq.s32.totalorder %s37, 3
      %p133 = por %p131, %p132
      %p134 = scmp.ne.s32.totalorder %s123, %s124
      %p135 = scmp.eq.s32.totalorder %s37, 0
      %p136 = por %p134, %p135
      %p137 = scmp.ne.s32.totalorder %s123, %s124
      %p138 = scmp.eq.s32.totalorder %s38, 3
      %p139 = por %p137, %p138
      %p141 = scmp.ne.s32.totalorder %s124, %s140
      %p142 = scmp.eq.s32.totalorder %s38, 0
      %p143 = por %p141, %p142
      %s144 = ssub.s32 %s32, %s39
      %p145 = scmp.eq.s32.totalorder %s144, 0
      %s147 = sadd.s32 %s146, 1
      %s148 = scalar_select %p145, %s146, %s147
      %p151 = pneg %p145
      %p152 = scmp.eq.s32.totalorder %s32, 3
      %p153 = por %p151, %p152
      %p154 = scmp.ne.s32.totalorder %s146, %s149
      %p155 = scmp.eq.s32.totalorder %s32, 0
      %p156 = por %p154, %p155
      %p157 = scmp.ne.s32.totalorder %s146, %s149
      %p158 = scmp.eq.s32.totalorder %s37, 3
      %p159 = por %p157, %p158
      %p160 = scmp.ne.s32.totalorder %s149, %s150
      %p161 = scmp.eq.s32.totalorder %s37, 0
      %p162 = por %p160, %p161
      %p163 = scmp.ne.s32.totalorder %s149, %s150
      %p164 = scmp.eq.s32.totalorder %s38, 3
      %p165 = por %p163, %p164
      %p167 = scmp.ne.s32.totalorder %s150, %s166
      %p168 = scmp.eq.s32.totalorder %s38, 0
      %p169 = por %p167, %p168
      %s170 = ssub.s32 %s32, %s39
      %p171 = scmp.eq.s32.totalorder %s170, 0
      %s173 = sadd.s32 %s172, 1
      %s174 = scalar_select %p171, %s172, %s173
      %p177 = pneg %p171
      %p178 = scmp.eq.s32.totalorder %s32, 3
      %p179 = por %p177, %p178
      %p180 = scmp.ne.s32.totalorder %s172, %s175
      %p181 = scmp.eq.s32.totalorder %s32, 0
      %p182 = por %p180, %p181
      %p183 = scmp.ne.s32.totalorder %s172, %s175
      %p184 = scmp.eq.s32.totalorder %s37, 3
      %p185 = por %p183, %p184
      %p186 = scmp.ne.s32.totalorder %s175, %s176
      %p187 = scmp.eq.s32.totalorder %s37, 0
      %p188 = por %p186, %p187
      %p189 = scmp.ne.s32.totalorder %s175, %s176
      %p190 = scmp.eq.s32.totalorder %s38, 3
      %p191 = por %p189, %p190
      %p193 = scmp.ne.s32.totalorder %s176, %s192
      %p194 = scmp.eq.s32.totalorder %s38, 0
      %p195 = por %p193, %p194
      %s196 = ssub.s32 %s32, %s39
      %p197 = scmp.eq.s32.totalorder %s196, 0
      %s199 = sadd.s32 %s198, 1
      %s200 = scalar_select %p197, %s198, %s199
      %p203 = pneg %p197
      %p204 = scmp.eq.s32.totalorder %s32, 3
      %p205 = por %p203, %p204
      %p206 = scmp.ne.s32.totalorder %s198, %s201
      %p207 = scmp.eq.s32.totalorder %s32, 0
      %p208 = por %p206, %p207
      %p209 = scmp.ne.s32.totalorder %s198, %s201
      %p210 = scmp.eq.s32.totalorder %s37, 3
      %p211 = por %p209, %p210
      %p212 = scmp.ne.s32.totalorder %s201, %s202
      %p213 = scmp.eq.s32.totalorder %s37, 0
      %p214 = por %p212, %p213
      %p215 = scmp.ne.s32.totalorder %s201, %s202
      %p216 = scmp.eq.s32.totalorder %s38, 3
      %p217 = por %p215, %p216
      %p219 = scmp.ne.s32.totalorder %s202, %s218
      %p220 = scmp.eq.s32.totalorder %s38, 0
      %p221 = por %p219, %p220
      %s222 = ssub.s32 %s32, %s39
      %p223 = scmp.eq.s32.totalorder %s222, 0
      %s225 = sadd.s32 %s224, 1
      %s226 = scalar_select %p223, %s224, %s225
      %p229 = pneg %p223
      %p230 = scmp.eq.s32.totalorder %s32, 3
      %p231 = por %p229, %p230
      %p232 = scmp.ne.s32.totalorder %s224, %s227
      %p233 = scmp.eq.s32.totalorder %s32, 0
      %p234 = por %p232, %p233
      %p235 = scmp.ne.s32.totalorder %s224, %s227
      %p236 = scmp.eq.s32.totalorder %s37, 3
      %p237 = por %p235, %p236
      %p238 = scmp.ne.s32.totalorder %s227, %s228
      %p239 = scmp.eq.s32.totalorder %s37, 0
      %p240 = por %p238, %p239
      %p241 = scmp.ne.s32.totalorder %s227, %s228
      %p242 = scmp.eq.s32.totalorder %s38, 3
      %p243 = por %p241, %p242
      %p245 = scmp.ne.s32.totalorder %s228, %s244
      %p246 = scmp.eq.s32.totalorder %s38, 0
      %p247 = por %p245, %p246
      %s248 = ssub.s32 %s32, %s39
      %p249 = scmp.eq.s32.totalorder %s248, 0
      %s251 = sadd.s32 %s250, 1
      %s252 = scalar_select %p249, %s250, %s251
      %p255 = pneg %p249
      %p256 = scmp.eq.s32.totalorder %s32, 3
      %p257 = por %p255, %p256
      %p258 = scmp.ne.s32.totalorder %s250, %s253
      %p259 = scmp.eq.s32.totalorder %s32, 0
      %p260 = por %p258, %p259
      %p261 = scmp.ne.s32.totalorder %s250, %s253
      %p262 = scmp.eq.s32.totalorder %s37, 3
      %p263 = por %p261, %p262
      %p264 = scmp.ne.s32.totalorder %s253, %s254
      %p265 = scmp.eq.s32.totalorder %s37, 0
      %p266 = por %p264, %p265
      %p267 = scmp.ne.s32.totalorder %s253, %s254
      %p268 = scmp.eq.s32.totalorder %s38, 3
      %p269 = por %p267, %p268
      %p271 = scmp.ne.s32.totalorder %s254, %s270
      %p272 = scmp.eq.s32.totalorder %s38, 0
      %p273 = por %p271, %p272
      %s274 = ssub.s32 %s32, %s39
      %p275 = scmp.eq.s32.totalorder %s274, 0
      %s277 = sadd.s32 %s276, 1
      %s278 = scalar_select %p275, %s276, %s277
      %p281 = pneg %p275
      %p282 = scmp.eq.s32.totalorder %s32, 3
      %p283 = por %p281, %p282
      %p284 = scmp.ne.s32.totalorder %s276, %s279
      %p285 = scmp.eq.s32.totalorder %s32, 0
      %p286 = por %p284, %p285
      %p287 = scmp.ne.s32.totalorder %s276, %s279
      %p288 = scmp.eq.s32.totalorder %s37, 3
      %p289 = por %p287, %p288
      %p290 = scmp.ne.s32.totalorder %s279, %s280
      %p291 = scmp.eq.s32.totalorder %s37, 0
      %p292 = por %p290, %p291
      %p293 = scmp.ne.s32.totalorder %s279, %s280
      %p294 = scmp.eq.s32.totalorder %s38, 3
      %p295 = por %p293, %p294
      %p297 = scmp.ne.s32.totalorder %s280, %s296
      %p298 = scmp.eq.s32.totalorder %s38, 0
      %p299 = por %p297, %p298
      %s300 = ssub.s32 %s32, %s39
      %p301 = scmp.eq.s32.totalorder %s300, 0
      %s303 = sadd.s32 %s302, 1
      %s304 = scalar_select %p301, %s302, %s303
      %p307 = pneg %p301
      %p308 = scmp.eq.s32.totalorder %s32, 3
      %p309 = por %p307, %p308
      %p310 = scmp.ne.s32.totalorder %s302, %s305
      %p311 = scmp.eq.s32.totalorder %s32, 0
      %p312 = por %p310, %p311
      %p313 = scmp.ne.s32.totalorder %s302, %s305
      %p314 = scmp.eq.s32.totalorder %s37, 3
      %p315 = por %p313, %p314
      %p316 = scmp.ne.s32.totalorder %s305, %s306
      %p317 = scmp.eq.s32.totalorder %s37, 0
      %p318 = por %p316, %p317
      %p319 = scmp.ne.s32.totalorder %s305, %s306
      %p320 = scmp.eq.s32.totalorder %s38, 3
      %p321 = por %p319, %p320
      %p323 = scmp.ne.s32.totalorder %s306, %s322
      %p324 = scmp.eq.s32.totalorder %s38, 0
      %p325 = por %p323, %p324
      %s326 = ssub.s32 %s32, %s39
      %p327 = scmp.eq.s32.totalorder %s326, 0
      %s329 = sadd.s32 %s328, 1
      %s330 = scalar_select %p327, %s328, %s329
      %p333 = pneg %p327
      %p334 = scmp.eq.s32.totalorder %s32, 3
      %p335 = por %p333, %p334
      %p336 = scmp.ne.s32.totalorder %s328, %s331
      %p337 = scmp.eq.s32.totalorder %s32, 0
      %p338 = por %p336, %p337
      %p339 = scmp.ne.s32.totalorder %s328, %s331
      %p340 = scmp.eq.s32.totalorder %s37, 3
      %p341 = por %p339, %p340
      %p342 = scmp.ne.s32.totalorder %s331, %s332
      %p343 = scmp.eq.s32.totalorder %s37, 0
      %p344 = por %p342, %p343
      %p345 = scmp.ne.s32.totalorder %s331, %s332
      %p346 = scmp.eq.s32.totalorder %s38, 3
      %p347 = por %p345, %p346
      %p349 = scmp.ne.s32.totalorder %s332, %s348
      %p350 = scmp.eq.s32.totalorder %s38, 0
      %p351 = por %p349, %p350
      %s352 = ssub.s32 %s32, %s39
      %p353 = scmp.eq.s32.totalorder %s352, 0
      %s355 = sadd.s32 %s354, 1
      %s356 = scalar_select %p353, %s354, %s355
      %p359 = pneg %p353
      %p360 = scmp.eq.s32.totalorder %s32, 3
      %p361 = por %p359, %p360
      %p362 = scmp.ne.s32.totalorder %s354, %s357
      %p363 = scmp.eq.s32.totalorder %s32, 0
      %p364 = por %p362, %p363
      %p365 = scmp.ne.s32.totalorder %s354, %s357
      %p366 = scmp.eq.s32.totalorder %s37, 3
      %p367 = por %p365, %p366
      %p368 = scmp.ne.s32.totalorder %s357, %s358
      %p369 = scmp.eq.s32.totalorder %s37, 0
      %p370 = por %p368, %p369
      %p371 = scmp.ne.s32.totalorder %s357, %s358
      %p372 = scmp.eq.s32.totalorder %s38, 3
      %p373 = por %p371, %p372
      %p375 = scmp.ne.s32.totalorder %s358, %s374
      %p376 = scmp.eq.s32.totalorder %s38, 0
      %p377 = por %p375, %p376
      %s379 = sadd.s32 %s378, 1
      %p382 = scmp.eq.s32.totalorder %s32, 3
      %p383 = scmp.ne.s32.totalorder %s378, %s380
      %p384 = scmp.eq.s32.totalorder %s32, 0
      %p385 = por %p383, %p384
      %p386 = scmp.ne.s32.totalorder %s378, %s380
      %p387 = scmp.eq.s32.totalorder %s37, 3
      %p388 = por %p386, %p387
      %p389 = scmp.ne.s32.totalorder %s380, %s381
      %p390 = scmp.eq.s32.totalorder %s37, 0
      %p391 = por %p389, %p390
      %p392 = scmp.ne.s32.totalorder %s380, %s381
      %p393 = scmp.eq.s32.totalorder %s38, 3
      %p394 = por %p392, %p393
      %p396 = scmp.ne.s32.totalorder %s381, %s395
      %p397 = scmp.eq.s32.totalorder %s38, 0
      %p398 = por %p396, %p397
      %s400 = sadd.s32 %s399, 1
      %p403 = scmp.eq.s32.totalorder %s32, 3
      %p404 = scmp.ne.s32.totalorder %s399, %s401
      %p405 = scmp.eq.s32.totalorder %s32, 0
      %p406 = por %p404, %p405
      %p407 = scmp.ne.s32.totalorder %s399, %s401
      %p408 = scmp.eq.s32.totalorder %s37, 3
      %p409 = por %p407, %p408
      %p410 = scmp.ne.s32.totalorder %s401, %s402
      %p411 = scmp.eq.s32.totalorder %s37, 0
      %p412 = por %p410, %p411
      %p413 = scmp.ne.s32.totalorder %s401, %s402
      %p414 = scmp.eq.s32.totalorder %s38, 3
      %p415 = por %p413, %p414
      %p417 = scmp.ne.s32.totalorder %s402, %s416
      %p418 = scmp.eq.s32.totalorder %s38, 0
      %p419 = por %p417, %p418
      %s421 = sadd.s32 %s420, 1
      %p424 = scmp.eq.s32.totalorder %s32, 3
      %p425 = scmp.ne.s32.totalorder %s420, %s422
      %p426 = scmp.eq.s32.totalorder %s32, 0
      %p427 = por %p425, %p426
      %p428 = scmp.ne.s32.totalorder %s420, %s422
      %p429 = scmp.eq.s32.totalorder %s37, 3
      %p430 = por %p428, %p429
      %p431 = scmp.ne.s32.totalorder %s422, %s423
      %p432 = scmp.eq.s32.totalorder %s37, 0
      %p433 = por %p431, %p432
      %p434 = scmp.ne.s32.totalorder %s422, %s423
      %p435 = scmp.eq.s32.totalorder %s38, 3
      %p436 = por %p434, %p435
      %p438 = scmp.ne.s32.totalorder %s423, %s437
      %p439 = scmp.eq.s32.totalorder %s38, 0
      %p440 = por %p438, %p439
      %s441 = ssub.s32 %s32, %s39
      %p442 = scmp.eq.s32.totalorder %s441, 0
      %s444 = sadd.s32 %s443, 1
      %s445 = scalar_select %p442, %s443, %s444
      %p448 = pneg %p442
      %p449 = scmp.eq.s32.totalorder %s32, 3
      %p450 = por %p448, %p449
      %p451 = scmp.ne.s32.totalorder %s443, %s446
      %p452 = scmp.eq.s32.totalorder %s32, 0
      %p453 = por %p451, %p452
      %p454 = scmp.ne.s32.totalorder %s443, %s446
      %p455 = scmp.eq.s32.totalorder %s37, 3
      %p456 = por %p454, %p455
      %p457 = scmp.ne.s32.totalorder %s446, %s447
      %p458 = scmp.eq.s32.totalorder %s37, 0
      %p459 = por %p457, %p458
      %p460 = scmp.ne.s32.totalorder %s446, %s447
      %p461 = scmp.eq.s32.totalorder %s38, 3
      %p462 = por %p460, %p461
      %p464 = scmp.ne.s32.totalorder %s447, %s463
      %p465 = scmp.eq.s32.totalorder %s38, 0
      %p466 = por %p464, %p465
      %s467 = ssub.s32 %s32, %s39
      %p468 = scmp.eq.s32.totalorder %s467, 0
      %s470 = sadd.s32 %s469, 1
      %s471 = scalar_select %p468, %s469, %s470
      %p474 = pneg %p468
      %p475 = scmp.eq.s32.totalorder %s32, 3
      %p476 = por %p474, %p475
      %p477 = scmp.ne.s32.totalorder %s469, %s472
      %p478 = scmp.eq.s32.totalorder %s32, 0
      %p479 = por %p477, %p478
      %p480 = scmp.ne.s32.totalorder %s469, %s472
      %p481 = scmp.eq.s32.totalorder %s37, 3
      %p482 = por %p480, %p481
      %p483 = scmp.ne.s32.totalorder %s472, %s473
      %p484 = scmp.eq.s32.totalorder %s37, 0
      %p485 = por %p483, %p484
      %p486 = scmp.ne.s32.totalorder %s472, %s473
      %p487 = scmp.eq.s32.totalorder %s38, 3
      %p488 = por %p486, %p487
      %p490 = scmp.ne.s32.totalorder %s473, %s489
      %p491 = scmp.eq.s32.totalorder %s38, 0
      %p492 = por %p490, %p491
      %s493 = ssub.s32 %s32, %s39
      %p494 = scmp.eq.s32.totalorder %s493, 0
      %s496 = sadd.s32 %s495, 1
      %s497 = scalar_select %p494, %s495, %s496
      %p500 = pneg %p494
      %p501 = scmp.eq.s32.totalorder %s32, 3
      %p502 = por %p500, %p501
      %p503 = scmp.ne.s32.totalorder %s495, %s498
      %p504 = scmp.eq.s32.totalorder %s32, 0
      %p505 = por %p503, %p504
      %p506 = scmp.ne.s32.totalorder %s495, %s498
      %p507 = scmp.eq.s32.totalorder %s37, 3
      %p508 = por %p506, %p507
      %p509 = scmp.ne.s32.totalorder %s498, %s499
      %p510 = scmp.eq.s32.totalorder %s37, 0
      %p511 = por %p509, %p510
      %p512 = scmp.ne.s32.totalorder %s498, %s499
      %p513 = scmp.eq.s32.totalorder %s38, 3
      %p514 = por %p512, %p513
      %p516 = scmp.ne.s32.totalorder %s499, %s515
      %p517 = scmp.eq.s32.totalorder %s38, 0
      %p518 = por %p516, %p517
      %s519 = ssub.s32 %s32, %s39
      %p520 = scmp.eq.s32.totalorder %s519, 0
      %s522 = sadd.s32 %s521, 1
      %s523 = scalar_select %p520, %s521, %s522
      %p526 = pneg %p520
      %p527 = scmp.eq.s32.totalorder %s32, 3
      %p528 = por %p526, %p527
      %p529 = scmp.ne.s32.totalorder %s521, %s524
      %p530 = scmp.eq.s32.totalorder %s32, 0
      %p531 = por %p529, %p530
      %p532 = scmp.ne.s32.totalorder %s521, %s524
      %p533 = scmp.eq.s32.totalorder %s37, 3
      %p534 = por %p532, %p533
      %p535 = scmp.ne.s32.totalorder %s524, %s525
      %p536 = scmp.eq.s32.totalorder %s37, 0
      %p537 = por %p535, %p536
      %p538 = scmp.ne.s32.totalorder %s524, %s525
      %p539 = scmp.eq.s32.totalorder %s38, 3
      %p540 = por %p538, %p539
      %p542 = scmp.ne.s32.totalorder %s525, %s541
      %p543 = scmp.eq.s32.totalorder %s38, 0
      %p544 = por %p542, %p543
      %p545 = scmp.le.s32.totalorder 1, %s32
      %p546 = scmp.lt.s32.totalorder %s32, 5
      %p547 = pnand %p545, %p546
      %p548 = pneg %p547
      // Predicated region
      $region9: #{compressive_encoder.1} parent=5 // pred_check
        _
      $region10: #{compressive_encoder.1} parent=5 // pred_check_branch
        %550 = sbr.rel (%p547) target = $region12
      $region11: #{compressive_encoder.1} parent=5 // pred_region
        %s551 = ssub.s32 %s32, 1
        // Predicated region
        $region13: #{compressive_encoder.1} parent=11 // pred_check
          %p552 = pneg %p391
        $region14: #{compressive_encoder.1} parent=11 // pred_check_branch
          %554 = sbr.rel (%p552) target = $region16
        $region15: #{compressive_encoder.1} parent=11 // pred_region
          _
        $region16: #{compressive_encoder.1} parent=11 // pred_fallthru
          _
        // Predicated region
        $region17: #{compressive_encoder.1} parent=11 // pred_check
          %p555 = pneg %p412
        $region18: #{compressive_encoder.1} parent=11 // pred_check_branch
          %557 = sbr.rel (%p555) target = $region20
        $region19: #{compressive_encoder.1} parent=11 // pred_region
          _
        $region20: #{compressive_encoder.1} parent=11 // pred_fallthru
          _
        // Predicated region
        $region21: #{compressive_encoder.1} parent=11 // pred_check
          %p558 = pneg %p433
        $region22: #{compressive_encoder.1} parent=11 // pred_check_branch
          %560 = sbr.rel (%p558) target = $region24
        $region23: #{compressive_encoder.1} parent=11 // pred_region
          _
        $region24: #{compressive_encoder.1} parent=11 // pred_fallthru
          _
      $region12: #{compressive_encoder.1} parent=5 // pred_fallthru
        _
      %p561 = scmp.lt.s32.totalorder %s32, 4
      // Predicated region
      $region25: #{compressive_encoder.1} parent=5 // pred_check
        %p562 = pneg %p561
      $region26: #{compressive_encoder.1} parent=5 // pred_check_branch
        %564 = sbr.rel (%p562) target = $region28
      $region27: #{compressive_encoder.1} parent=5 // pred_region
        // Predicated region
        $region29: #{compressive_encoder.1} parent=27 // pred_check
          %p565 = pneg %p52
        $region30: #{compressive_encoder.1} parent=27 // pred_check_branch
          %567 = sbr.rel (%p565) target = $region32
        $region31: #{compressive_encoder.1} parent=27 // pred_region
          %p568 = scmp.lt.s32.totalorder %s32, 3
          %s569 = scalar_select %p568, %s32, 3
          %s570 = smul.addr %s569, 2
          %s571 = smul.addr %s570, 8
          %s572 = scalar_lea.vmem %s0, %s571
        $region32: #{compressive_encoder.1} parent=27 // pred_fallthru
          _
        // Predicated region
        $region33: #{compressive_encoder.1} parent=27 // pred_check
          %p573 = pneg %p78
        $region34: #{compressive_encoder.1} parent=27 // pred_check_branch
          %575 = sbr.rel (%p573) target = $region36
        $region35: #{compressive_encoder.1} parent=27 // pred_region
          %p576 = scmp.lt.s32.totalorder %s32, 3
          %s577 = scalar_select %p576, %s32, 3
          %s578 = smul.addr %s577, 8
          %s579 = smul.addr %s578, 8
          %s580 = scalar_lea.vmem %s1, %s579
        $region36: #{compressive_encoder.1} parent=27 // pred_fallthru
          _
        // Predicated region
        $region37: #{compressive_encoder.1} parent=27 // pred_check
          %p581 = pneg %p104
        $region38: #{compressive_encoder.1} parent=27 // pred_check_branch
          %583 = sbr.rel (%p581) target = $region40
        $region39: #{compressive_encoder.1} parent=27 // pred_region
          %p584 = scmp.lt.s32.totalorder %s32, 3
          %s585 = scalar_select %p584, %s32, 3
          %s586 = smul.addr %s585, 4
          %s587 = smul.addr %s586, 8
          %s588 = scalar_lea.vmem %s2, %s587
        $region40: #{compressive_encoder.1} parent=27 // pred_fallthru
          _
        // Predicated region
        $region41: #{compressive_encoder.1} parent=27 // pred_check
          %p589 = pneg %p130
        $region42: #{compressive_encoder.1} parent=27 // pred_check_branch
          %591 = sbr.rel (%p589) target = $region44
        $region43: #{compressive_encoder.1} parent=27 // pred_region
          %p592 = scmp.lt.s32.totalorder %s32, 3
          %s593 = scalar_select %p592, %s32, 3
          %s594 = smul.addr %s593, 4
          %s595 = smul.addr %s594, 8
          %s596 = scalar_lea.vmem %s3, %s595
        $region44: #{compressive_encoder.1} parent=27 // pred_fallthru
          _
        // Predicated region
        $region45: #{compressive_encoder.1} parent=27 // pred_check
          %p597 = pneg %p156
        $region46: #{compressive_encoder.1} parent=27 // pred_check_branch
          %599 = sbr.rel (%p597) target = $region48
        $region47: #{compressive_encoder.1} parent=27 // pred_region
          %p600 = scmp.lt.s32.totalorder %s32, 3
          %s601 = scalar_select %p600, %s32, 3
          %s602 = smul.addr %s601, 2
          %s603 = smul.addr %s602, 8
          %s604 = scalar_lea.vmem %s4, %s603
        $region48: #{compressive_encoder.1} parent=27 // pred_fallthru
          _
        // Predicated region
        $region49: #{compressive_encoder.1} parent=27 // pred_check
          %p605 = pneg %p182
        $region50: #{compressive_encoder.1} parent=27 // pred_check_branch
          %607 = sbr.rel (%p605) target = $region52
        $region51: #{compressive_encoder.1} parent=27 // pred_region
          %p608 = scmp.lt.s32.totalorder %s32, 3
          %s609 = scalar_select %p608, %s32, 3
          %s610 = smul.addr %s609, 2
          %s611 = smul.addr %s610, 4
          %s612 = scalar_lea.vmem %s5, %s611
        $region52: #{compressive_encoder.1} parent=27 // pred_fallthru
          _
        // Predicated region
        $region53: #{compressive_encoder.1} parent=27 // pred_check
          %p613 = pneg %p208
        $region54: #{compressive_encoder.1} parent=27 // pred_check_branch
          %615 = sbr.rel (%p613) target = $region56
        $region55: #{compressive_encoder.1} parent=27 // pred_region
          %p616 = scmp.lt.s32.totalorder %s32, 3
          %s617 = scalar_select %p616, %s32, 3
          %s618 = smul.addr %s617, 2
          %s619 = smul.addr %s618, 8
          %s620 = scalar_lea.vmem %s6, %s619
        $region56: #{compressive_encoder.1} parent=27 // pred_fallthru
          _
        // Predicated region
        $region57: #{compressive_encoder.1} parent=27 // pred_check
          %p621 = pneg %p234
        $region58: #{compressive_encoder.1} parent=27 // pred_check_branch
          %623 = sbr.rel (%p621) target = $region60
        $region59: #{compressive_encoder.1} parent=27 // pred_region
          %p624 = scmp.lt.s32.totalorder %s32, 3
          %s625 = scalar_select %p624, %s32, 3
          %s626 = smul.addr %s625, 8
          %s627 = smul.addr %s626, 8
          %s628 = scalar_lea.vmem %s7, %s627
        $region60: #{compressive_encoder.1} parent=27 // pred_fallthru
          _
        // Predicated region
        $region61: #{compressive_encoder.1} parent=27 // pred_check
          %p629 = pneg %p260
        $region62: #{compressive_encoder.1} parent=27 // pred_check_branch
          %631 = sbr.rel (%p629) target = $region64
        $region63: #{compressive_encoder.1} parent=27 // pred_region
          %p632 = scmp.lt.s32.totalorder %s32, 3
          %s633 = scalar_select %p632, %s32, 3
          %s634 = smul.addr %s633, 8
          %s635 = smul.addr %s634, 8
          %s636 = scalar_lea.vmem %s8, %s635
        $region64: #{compressive_encoder.1} parent=27 // pred_fallthru
          _
        // Predicated region
        $region65: #{compressive_encoder.1} parent=27 // pred_check
          %p637 = pneg %p286
        $region66: #{compressive_encoder.1} parent=27 // pred_check_branch
          %639 = sbr.rel (%p637) target = $region68
        $region67: #{compressive_encoder.1} parent=27 // pred_region
          %p640 = scmp.lt.s32.totalorder %s32, 3
          %s641 = scalar_select %p640, %s32, 3
          %s642 = smul.addr %s641, 8
          %s643 = smul.addr %s642, 8
          %s644 = scalar_lea.vmem %s9, %s643
        $region68: #{compressive_encoder.1} parent=27 // pred_fallthru
          _
        // Predicated region
        $region69: #{compressive_encoder.1} parent=27 // pred_check
          %p645 = pneg %p312
        $region70: #{compressive_encoder.1} parent=27 // pred_check_branch
          %647 = sbr.rel (%p645) target = $region72
        $region71: #{compressive_encoder.1} parent=27 // pred_region
          %p648 = scmp.lt.s32.totalorder %s32, 3
          %s649 = scalar_select %p648, %s32, 3
          %s650 = smul.addr %s649, 2
          %s651 = scalar_lea.vmem %s10, %s650
        $region72: #{compressive_encoder.1} parent=27 // pred_fallthru
          _
        // Predicated region
        $region73: #{compressive_encoder.1} parent=27 // pred_check
          %p652 = pneg %p338
        $region74: #{compressive_encoder.1} parent=27 // pred_check_branch
          %654 = sbr.rel (%p652) target = $region76
        $region75: #{compressive_encoder.1} parent=27 // pred_region
          %p655 = scmp.lt.s32.totalorder %s32, 3
          %s656 = scalar_select %p655, %s32, 3
          %s657 = smul.addr %s656, 16
          %s658 = smul.addr %s657, 8
          %s659 = scalar_lea.vmem %s11, %s658
        $region76: #{compressive_encoder.1} parent=27 // pred_fallthru
          _
        // Predicated region
        $region77: #{compressive_encoder.1} parent=27 // pred_check
          %p660 = pneg %p364
        $region78: #{compressive_encoder.1} parent=27 // pred_check_branch
          %662 = sbr.rel (%p660) target = $region80
        $region79: #{compressive_encoder.1} parent=27 // pred_region
          %p663 = scmp.lt.s32.totalorder %s32, 3
          %s664 = scalar_select %p663, %s32, 3
          %s665 = smul.addr %s664, 2
          %s666 = scalar_lea.vmem %s12, %s665
        $region80: #{compressive_encoder.1} parent=27 // pred_fallthru
          _
      $region28: #{compressive_encoder.1} parent=5 // pred_fallthru
        _
      %p667 = scmp.le.s32.totalorder 1, %s32
      %p668 = scmp.lt.s32.totalorder %s32, 5
      %p669 = pnand %p667, %p668
      %p670 = pneg %p669
      // Predicated region
      $region81: #{compressive_encoder.1} parent=5 // pred_check
        _
      $region82: #{compressive_encoder.1} parent=5 // pred_check_branch
        %672 = sbr.rel (%p669) target = $region84
      $region83: #{compressive_encoder.1} parent=5 // pred_region
        %s673 = ssub.s32 %s32, 1
        %p674 = scmp.lt.s32.totalorder %s37, 3
        %s675 = scalar_select %p674, %s37, 3
        %s676 = smul.addr %s675, 2
        %s677 = smul.addr %s676, 8
        %s678 = scalar_lea.vmem %s0, %s677
        %p679 = pneg %p58
        %p680 = pneg %p55
        %p681 = scmp.lt.s32.totalorder %s37, 3
        %s682 = scalar_select %p681, %s37, 3
        %s683 = smul.addr %s682, 8
        %s684 = smul.addr %s683, 8
        %s685 = scalar_lea.vmem %s1, %s684
        %p686 = pneg %p84
        %p687 = pneg %p81
        %p688 = scmp.lt.s32.totalorder %s37, 3
        %s689 = scalar_select %p688, %s37, 3
        %s690 = smul.addr %s689, 4
        %s691 = smul.addr %s690, 8
        %s692 = scalar_lea.vmem %s2, %s691
        %p693 = pneg %p110
        %p694 = pneg %p107
        %p695 = scmp.lt.s32.totalorder %s37, 3
        %s696 = scalar_select %p695, %s37, 3
        %s697 = smul.addr %s696, 4
        %s698 = smul.addr %s697, 8
        %s699 = scalar_lea.vmem %s3, %s698
        %p700 = pneg %p136
        %p701 = pneg %p133
        %p702 = scmp.lt.s32.totalorder %s37, 3
        %s703 = scalar_select %p702, %s37, 3
        %s704 = smul.addr %s703, 2
        %s705 = smul.addr %s704, 8
        %s706 = scalar_lea.vmem %s4, %s705
        %p707 = pneg %p162
        %p708 = pneg %p159
        %p709 = scmp.lt.s32.totalorder %s37, 3
        %s710 = scalar_select %p709, %s37, 3
        %s711 = smul.addr %s710, 2
        %s712 = smul.addr %s711, 4
        %s713 = scalar_lea.vmem %s5, %s712
        %p714 = pneg %p188
        %p715 = pneg %p185
        %p716 = scmp.lt.s32.totalorder %s37, 3
        %s717 = scalar_select %p716, %s37, 3
        %s718 = smul.addr %s717, 2
        %s719 = smul.addr %s718, 8
        %s720 = scalar_lea.vmem %s6, %s719
        %p721 = pneg %p214
        %p722 = pneg %p211
        %p723 = scmp.lt.s32.totalorder %s37, 3
        %s724 = scalar_select %p723, %s37, 3
        %s725 = smul.addr %s724, 8
        %s726 = smul.addr %s725, 8
        %s727 = scalar_lea.vmem %s7, %s726
        %p728 = pneg %p240
        %p729 = pneg %p237
        %p730 = scmp.lt.s32.totalorder %s37, 3
        %s731 = scalar_select %p730, %s37, 3
        %s732 = smul.addr %s731, 8
        %s733 = smul.addr %s732, 8
        %s734 = scalar_lea.vmem %s8, %s733
        %p735 = pneg %p266
        %p736 = pneg %p263
        %p737 = scmp.lt.s32.totalorder %s37, 3
        %s738 = scalar_select %p737, %s37, 3
        %s739 = smul.addr %s738, 8
        %s740 = smul.addr %s739, 8
        %s741 = scalar_lea.vmem %s9, %s740
        %p742 = pneg %p292
        %p743 = pneg %p289
        %p744 = scmp.lt.s32.totalorder %s37, 3
        %s745 = scalar_select %p744, %s37, 3
        %s746 = smul.addr %s745, 2
        %s747 = scalar_lea.vmem %s10, %s746
        %p748 = pneg %p318
        %p749 = pneg %p315
        %p750 = scmp.lt.s32.totalorder %s37, 3
        %s751 = scalar_select %p750, %s37, 3
        %s752 = smul.addr %s751, 16
        %s753 = smul.addr %s752, 8
        %s754 = scalar_lea.vmem %s11, %s753
        %p755 = pneg %p344
        %p756 = pneg %p341
        %p757 = scmp.lt.s32.totalorder %s37, 3
        %s758 = scalar_select %p757, %s37, 3
        %s759 = smul.addr %s758, 2
        %s760 = scalar_lea.vmem %s12, %s759
        %p761 = pneg %p370
        %p762 = pneg %p367
        %p763 = pneg %p391
        %p764 = pneg %p388
        %p765 = pneg %p412
        %p766 = pneg %p409
        %p767 = pneg %p433
        %p768 = pneg %p430
        %p769 = pneg %p459
        %p770 = pneg %p456
        %p771 = scmp.lt.s32.totalorder %s37, 3
        %s772 = scalar_select %p771, %s37, 3
        %s773 = smul.addr %s772, 2
        %s774 = smul.addr %s773, 8
        %s775 = scalar_lea.vmem %s16, %s774
        %p776 = pneg %p485
        %p777 = pneg %p482
        %s778 = sand.u32 %s472, 1
        %s779 = scalar_lea.sflag [#allocation5], %s778
        %s780 = sand.u32 %s472, 1
        %s781 = smul.addr %s780, 32
        %s782 = scalar_lea.vmem [#allocation4], %s781
        %p783 = pneg %p511
        %p784 = pneg %p508
        %s785 = sand.u32 %s498, 1
        %s786 = scalar_lea.sflag [#allocation7], %s785
        %s787 = sand.u32 %s498, 1
        %s788 = smul.addr %s787, 128
        %s789 = scalar_lea.vmem [#allocation6], %s788
        %p790 = pneg %p537
        %p791 = pneg %p534
        %p792 = scmp.lt.s32.totalorder %s37, 3
        %s793 = scalar_select %p792, %s37, 3
        %s794 = scalar_lea.vmem %s19, %s793
        %p795 = scmp.lt.s32.totalorder %s37, 3
        %s796 = scalar_select %p795, %s37, 3
        %s797 = smul.addr %s796, 2
        %s798 = smul.addr %s797, 8
        %s799 = scalar_lea.vmem %s0, %s798
        %p800 = scmp.lt.s32.totalorder %s37, 3
        %s801 = scalar_select %p800, %s37, 3
        %s802 = smul.addr %s801, 8
        %s803 = smul.addr %s802, 8
        %s804 = scalar_lea.vmem %s1, %s803
        %p805 = scmp.lt.s32.totalorder %s37, 3
        %s806 = scalar_select %p805, %s37, 3
        %s807 = smul.addr %s806, 4
        %s808 = smul.addr %s807, 8
        %s809 = scalar_lea.vmem %s2, %s808
        %p810 = scmp.lt.s32.totalorder %s37, 3
        %s811 = scalar_select %p810, %s37, 3
        %s812 = smul.addr %s811, 4
        %s813 = smul.addr %s812, 8
        %s814 = scalar_lea.vmem %s3, %s813
        %p815 = scmp.lt.s32.totalorder %s37, 3
        %s816 = scalar_select %p815, %s37, 3
        %s817 = smul.addr %s816, 2
        %s818 = smul.addr %s817, 8
        %s819 = scalar_lea.vmem %s4, %s818
        %p820 = scmp.lt.s32.totalorder %s37, 3
        %s821 = scalar_select %p820, %s37, 3
        %s822 = smul.addr %s821, 2
        %s823 = smul.addr %s822, 4
        %s824 = scalar_lea.vmem %s5, %s823
        %p825 = scmp.lt.s32.totalorder %s37, 3
        %s826 = scalar_select %p825, %s37, 3
        %s827 = smul.addr %s826, 2
        %s828 = smul.addr %s827, 8
        %s829 = scalar_lea.vmem %s6, %s828
        %p830 = scmp.lt.s32.totalorder %s37, 3
        %s831 = scalar_select %p830, %s37, 3
        %s832 = smul.addr %s831, 8
        %s833 = smul.addr %s832, 8
        %s834 = scalar_lea.vmem %s7, %s833
        %p835 = scmp.lt.s32.totalorder %s37, 3
        %s836 = scalar_select %p835, %s37, 3
        %s837 = smul.addr %s836, 8
        %s838 = smul.addr %s837, 8
        %s839 = scalar_lea.vmem %s8, %s838
        %p840 = scmp.lt.s32.totalorder %s37, 3
        %s841 = scalar_select %p840, %s37, 3
        %s842 = smul.addr %s841, 8
        %s843 = smul.addr %s842, 8
        %s844 = scalar_lea.vmem %s9, %s843
        %p845 = scmp.lt.s32.totalorder %s37, 3
        %s846 = scalar_select %p845, %s37, 3
        %s847 = smul.addr %s846, 2
        %s848 = scalar_lea.vmem %s10, %s847
        %p849 = scmp.lt.s32.totalorder %s37, 3
        %s850 = scalar_select %p849, %s37, 3
        %s851 = smul.addr %s850, 16
        %s852 = smul.addr %s851, 8
        %s853 = scalar_lea.vmem %s11, %s852
        %p854 = scmp.lt.s32.totalorder %s37, 3
        %s855 = scalar_select %p854, %s37, 3
        %s856 = smul.addr %s855, 2
        %s857 = scalar_lea.vmem %s12, %s856
        %p858 = scmp.lt.s32.totalorder %s37, 3
        %s859 = scalar_select %p858, %s37, 3
        %s860 = smul.addr %s859, 2
        %s861 = smul.addr %s860, 8
        %s862 = scalar_lea.vmem %s16, %s861
        %p863 = scmp.lt.s32.totalorder %s37, 3
        %s864 = scalar_select %p863, %s37, 3
        %s865 = scalar_lea.vmem %s19, %s864
        %v866 = vld [vmem:[%s13] sm:$0xff]
        %v867 = vld [vmem:[%s13 + $0x8] sm:$0xff]
        %v868 = vld [vmem:[%s13 + $0x10] sm:$0xff]
        %v869 = vld [vmem:[%s13 + $0x18] sm:$0xff]
        %v870 = vld [vmem:[%s14] sm:$0xff]
        %v871 = vld [vmem:[%s14 + $0x8] sm:$0xff]
        %v872 = vld [vmem:[%s14 + $0x10] sm:$0xff]
        %v873 = vld [vmem:[%s14 + $0x18] sm:$0xff]
        %v874 = vld [vmem:[%s15] sm:$0xff]
        %v875 = vld [vmem:[%s809] sm:$0xff]
        %v876 = vld [vmem:[%s809 + $0x8] sm:$0xff]
        %v877 = vld [vmem:[%s809 + $0x10] sm:$0xff]
        %v878 = vld [vmem:[%s809 + $0x18] sm:$0xff]
        %v879 = vld [vmem:[%s804] sm:$0xff]
        %v880 = vld [vmem:[%s804 + $0x8] sm:$0xff]
        %v881 = vld [vmem:[%s804 + $0x10] sm:$0xff]
        %v882 = vld [vmem:[%s804 + $0x18] sm:$0xff]
        %s883 = scalar_lea.vmem %s804, 32
        %v884 = vld [vmem:[%s883] sm:$0xff]
        %v885 = vld [vmem:[%s883 + $0x8] sm:$0xff]
        %v886 = vld [vmem:[%s883 + $0x10] sm:$0xff]
        %v887 = vld [vmem:[%s883 + $0x18] sm:$0xff]
        %v888 = vlaneseq
        %v889 = vshrl.u32 %v888, 7
        %v890 = vadd.s32 %v889, 8
        %v891 = vadd.s32 %v889, 16
        %v892 = vadd.s32 %v889, 24
        %v893 = vand.u32 %v889, 7
        %v894 = vand.u32 %v890, 7
        %v895 = vand.u32 %v891, 7
        %v896 = vand.u32 %v892, 7
        %v897 = vsub.s32 7, %v893
        %v898 = vsub.s32 7, %v894
        %v899 = vsub.s32 7, %v895
        %v900 = vsub.s32 7, %v896
        %v901 = vand.u32 %v897, 4
        %v902 = vand.u32 %v898, 4
        %v903 = vand.u32 %v899, 4
        %v904 = vand.u32 %v900, 4
        %vm905 = vcmp.gt.s32.totalorder %v901, 0
        %vm906 = vcmp.gt.s32.totalorder %v902, 0
        %vm907 = vcmp.gt.s32.totalorder %v903, 0
        %vm908 = vcmp.gt.s32.totalorder %v904, 0
        %v909 = vand.u32 %v897, 2
        %v910 = vand.u32 %v898, 2
        %v911 = vand.u32 %v899, 2
        %v912 = vand.u32 %v900, 2
        %vm913 = vcmp.gt.s32.totalorder %v909, 0
        %vm914 = vcmp.gt.s32.totalorder %v910, 0
        %vm915 = vcmp.gt.s32.totalorder %v911, 0
        %vm916 = vcmp.gt.s32.totalorder %v912, 0
        %v917 = vand.u32 %v897, 1
        %v918 = vand.u32 %v898, 1
        %v919 = vand.u32 %v899, 1
        %v920 = vand.u32 %v900, 1
        %vm921 = vcmp.gt.s32.totalorder %v917, 0
        %vm922 = vcmp.gt.s32.totalorder %v918, 0
        %vm923 = vcmp.gt.s32.totalorder %v919, 0
        %vm924 = vcmp.gt.s32.totalorder %v920, 0
        %v925 = vld [vmem:[%s799] sm:$0xff]
        %v926 = vld [vmem:[%s799 + $0x8] sm:$0xff]
        %v927 = vld [vmem:[%s834] sm:$0xff]
        %v928 = vld [vmem:[%s834 + $0x8] sm:$0xff]
        %v929 = vld [vmem:[%s834 + $0x10] sm:$0xff]
        %v930 = vld [vmem:[%s834 + $0x18] sm:$0xff]
        %v931 = vld [vmem:[%s839] sm:$0xff]
        %v932 = vld [vmem:[%s839 + $0x8] sm:$0xff]
        %v933 = vld [vmem:[%s839 + $0x10] sm:$0xff]
        %v934 = vld [vmem:[%s839 + $0x18] sm:$0xff]
        %v935 = vld [vmem:[%s829] sm:$0x1]
        %v936 = vld [vmem:[%s829 + $0x1] sm:$0x1]
        %v937 = vld [vmem:[%s829 + $0x2] sm:$0x1]
        %v938 = vld [vmem:[%s829 + $0x3] sm:$0x1]
        %v939 = vld [vmem:[%s829 + $0x4] sm:$0x1]
        %v940 = vld [vmem:[%s829 + $0x5] sm:$0x1]
        %v941 = vld [vmem:[%s844] sm:$0xff]
        %v942 = vld [vmem:[%s844 + $0x8] sm:$0xff]
        %v943 = vld [vmem:[%s844 + $0x10] sm:$0xff]
        %v944 = vld [vmem:[%s844 + $0x18] sm:$0xff]
        %v945 = vld [vmem:[%s848] sm:$0x1]
        %v946 = vld [vmem:[%s853] sm:$0xff]
        %v947 = vld [vmem:[%s853 + $0x8] sm:$0xff]
        %v948 = vld [vmem:[%s853 + $0x10] sm:$0xff]
        %v949 = vld [vmem:[%s853 + $0x18] sm:$0xff]
        %v950 = vld [vmem:[%s853 + $0x20] sm:$0xff]
        %v951 = vld [vmem:[%s853 + $0x28] sm:$0xff]
        %v952 = vld [vmem:[%s853 + $0x30] sm:$0xff]
        %v953 = vld [vmem:[%s853 + $0x38] sm:$0xff]
        %v954 = vld [vmem:[%s857] sm:$0x1]
        %v955 = vld [vmem:[%s814] sm:$0xff]
        %v956 = vld [vmem:[%s814 + $0x8] sm:$0xff]
        %v957 = vld [vmem:[%s819] sm:$0xff]
        %v958 = vld [vmem:[%s824] sm:$0xf]
        %vm959 = vcmask 261120
        %v960 = vsel %vm959, %v925, 0.0
        %961 = vadd.xlane.f32.xlu0 %v960
        %v962 = vpop.xlane.xlu0 %961
        %v963 = vsel %vm959, %v926, 0.0
        %964 = vadd.xlane.f32.xlu0 %v963
        %v965 = vpop.xlane.xlu0 %964
        %v966 = vrcp.pop 32.0
        %v967 = vmul.f32 %v962, %v966
        %v968 = vmul.f32 %v965, %v966
        %v969 = vsub.f32 %v925, %v967
        %v970 = vsub.f32 %v926, %v968
        %v971 = vmul.f32 %v969, %v969
        %v972 = vmul.f32 %v970, %v970
        %v973 = vsel %vm959, %v971, 0.0
        %974 = vadd.xlane.f32.xlu0 %v973
        %v975 = vpop.xlane.xlu0 %974
        %v976 = vsel %vm959, %v972, 0.0
        %977 = vadd.xlane.f32.xlu0 %v976
        %v978 = vpop.xlane.xlu0 %977
        %v979 = vmul.f32 %v975, %v966
        %v980 = vmul.f32 %v978, %v966
        %v981 = vadd.f32 %v979, 1e-05
        %v982 = vadd.f32 %v980, 1e-05
        %v983 = vrsqrt.pop %v981
        %v984 = vrsqrt.pop %v982
        %v985 = vmul.f32 %v969, %v983
        %v986 = vmul.f32 %v970, %v984
        %v987 = vlaneseq
        %v988 = vshrl.u32 %v987, 7
        %v989 = vsub.s32 0, %v988
        %v990 = vrot.slane %v935, %v989
        %v991 = vmul.f32 %v985, %v990
        %v992 = vmul.f32 %v986, %v990
        %v993 = vlaneseq
        %v994 = vshrl.u32 %v993, 7
        %v995 = vsub.s32 0, %v994
        %v996 = vrot.slane %v936, %v995
        %v997 = vadd.f32 %v991, %v996
        %v998 = vadd.f32 %v992, %v996
        %999 = vst.msk [vmem:[%s782] sm:$0xff] %vm959, %v997
        %1000 = vst.msk [vmem:[%s782 + $0x8] sm:$0xff] %vm959, %v998
        %v1002 = vsel %vm959, %v997, 0
        %v1005 = vsel %vm959, %v998, 0
        %1007 = vmatprep.subr.mxu0 0.0
        %1008 = vmatpush1.msra.mxu0 %v927
        %1009 = vmatprep.subr.mxu0 0.0
        %1010 = vmatpush1.msra.mxu0 %v928
        %1011 = vmatprep.subr.mxu0 0.0
        %1012 = vmatpush1.msra.mxu0 %v929
        %1013 = vmatprep.subr.mxu0 0.0
        %1014 = vmatpush1.msra.mxu0 %v930
        %1015 = vmatprep.subr.mxu0 0.0
        %1016 = vmatpush1.msra.mxu0 0.0
        %1017 = vmatprep.subr.mxu0 0.0
        %1018 = vmatpush1.msra.mxu0 0.0
        %1019 = vmatprep.subr.mxu0 0.0
        %1020 = vmatpush1.msra.mxu0 0.0
        %1021 = vmatprep.subr.mxu0 0.0
        %1022 = vmatpush1.msra.mxu0 0.0
        %1023 = vmatprep.subr.mxu0 0.0
        %1024 = vmatpush1.msra.mxu0 0.0
        %1025 = vmatprep.subr.mxu0 0.0
        %1026 = vmatpush1.msra.mxu0 0.0
        %1027 = vmatprep.subr.mxu0 0.0
        %1028 = vmatpush1.msra.mxu0 0.0
        %1029 = vmatprep.subr.mxu0 0.0
        %1030 = vmatpush1.msra.mxu0 0.0
        %1031 = vmatprep.subr.mxu0 0.0
        %1032 = vmatpush1.msra.mxu0 0.0
        %1033 = vmatprep.subr.mxu0 0.0
        %1034 = vmatpush1.msra.mxu0 0.0
        %1035 = vmatprep.subr.mxu0 0.0
        %1036 = vmatpush1.msra.mxu0 0.0
        %1037 = vmatprep.subr.mxu0 0.0
        %1038 = vmatpush1.msra.mxu0 0.0
        %1039 = vmatprep.subr.mxu0 0.0
        %1040 = vmatpush1.msra.mxu0 0.0
        %1041 = vmatprep.subr.mxu0 0.0
        %1042 = vmatpush1.msra.mxu0 0.0
        %1043 = vmatprep.subr.mxu0 0.0
        %1044 = vmatpush1.msra.mxu0 0.0
        %1045 = vmatprep.subr.mxu0 0.0
        %1046 = vmatpush1.msra.mxu0 0.0
        %1047 = vmatprep.subr.mxu0 0.0
        %1048 = vmatpush1.msra.mxu0 0.0
        %1049 = vmatprep.subr.mxu0 0.0
        %1050 = vmatpush1.msra.mxu0 0.0
        %1051 = vmatprep.subr.mxu0 0.0
        %1052 = vmatpush1.msra.mxu0 0.0
        %1053 = vmatprep.subr.mxu0 0.0
        %1054 = vmatpush1.msra.mxu0 0.0
        %1055 = vmatprep.subr.mxu0 0.0
        %1056 = vmatpush1.msra.mxu0 0.0
        %1057 = vmatprep.subr.mxu0 0.0
        %1058 = vmatpush1.msra.mxu0 0.0
        %1059 = vmatprep.subr.mxu0 0.0
        %1060 = vmatpush1.msra.mxu0 0.0
        %1061 = vmatprep.subr.mxu0 0.0
        %1062 = vmatpush1.msra.mxu0 0.0
        %1063 = vmatprep.subr.mxu0 0.0
        %1064 = vmatpush1.msra.mxu0 0.0
        %1065 = vmatprep.subr.mxu0 0.0
        %1066 = vmatpush1.msra.mxu0 0.0
        %1067 = vmatprep.subr.mxu0 0.0
        %1068 = vmatpush1.msra.mxu0 0.0
        %1069 = vmatprep.subr.mxu0 0.0
        %1070 = vmatpush1.msra.mxu0 0.0
        %1071 = vmatprep.mubr.f32.mxu0 0.0
        %1072 = vmatmul.mubr.f32.gmra.mrb[0].mxu0 %v1002
        %v1073 = vpop.f32.mrb[0].mxu0
        %v1074 = vadd.f32 0.0, %v1073
        %v1075 = vpop.f32.mrb[0].mxu0
        %1076 = vmatprep.mubr.f32.mxu0 0.0
        %1077 = vmatmul.mubr.f32.gmra.mrb[0].mxu0 %v1005
        %v1078 = vpop.f32.mrb[0].mxu0
        %v1079 = vadd.f32 0.0, %v1078
        %v1080 = vpop.f32.mrb[0].mxu0
        %1081 = vdwg.mxu0
        %1086 = vrot.lane.b32.xlu0 %v927, 96
        %v1087 = vpop.permute.xlu0 %1086
        %1088 = vrot.lane.b32.xlu0 %v928, 96
        %v1089 = vpop.permute.xlu0 %1088
        %1090 = vrot.lane.b32.xlu0 %v929, 96
        %v1091 = vpop.permute.xlu0 %1090
        %1092 = vrot.lane.b32.xlu0 %v930, 96
        %v1093 = vpop.permute.xlu0 %1092
        %v1099 = vsel %vm959, %v955, 0
        %v1102 = vsel %vm959, %v956, 0
        %1104 = vmatprep.subr.mxu0 0.0
        %1105 = vmatpush1.msra.mxu0 %v1087
        %1106 = vmatprep.subr.mxu0 0.0
        %1107 = vmatpush1.msra.mxu0 %v1089
        %1108 = vmatprep.subr.mxu0 0.0
        %1109 = vmatpush1.msra.mxu0 %v1091
        %1110 = vmatprep.subr.mxu0 0.0
        %1111 = vmatpush1.msra.mxu0 %v1093
        %1112 = vmatprep.subr.mxu0 0.0
        %1113 = vmatpush1.msra.mxu0 0.0
        %1114 = vmatprep.subr.mxu0 0.0
        %1115 = vmatpush1.msra.mxu0 0.0
        %1116 = vmatprep.subr.mxu0 0.0
        %1117 = vmatpush1.msra.mxu0 0.0
        %1118 = vmatprep.subr.mxu0 0.0
        %1119 = vmatpush1.msra.mxu0 0.0
        %1120 = vmatprep.subr.mxu0 0.0
        %1121 = vmatpush1.msra.mxu0 0.0
        %1122 = vmatprep.subr.mxu0 0.0
        %1123 = vmatpush1.msra.mxu0 0.0
        %1124 = vmatprep.subr.mxu0 0.0
        %1125 = vmatpush1.msra.mxu0 0.0
        %1126 = vmatprep.subr.mxu0 0.0
        %1127 = vmatpush1.msra.mxu0 0.0
        %1128 = vmatprep.subr.mxu0 0.0
        %1129 = vmatpush1.msra.mxu0 0.0
        %1130 = vmatprep.subr.mxu0 0.0
        %1131 = vmatpush1.msra.mxu0 0.0
        %1132 = vmatprep.subr.mxu0 0.0
        %1133 = vmatpush1.msra.mxu0 0.0
        %1134 = vmatprep.subr.mxu0 0.0
        %1135 = vmatpush1.msra.mxu0 0.0
        %1136 = vmatprep.subr.mxu0 0.0
        %1137 = vmatpush1.msra.mxu0 0.0
        %1138 = vmatprep.subr.mxu0 0.0
        %1139 = vmatpush1.msra.mxu0 0.0
        %1140 = vmatprep.subr.mxu0 0.0
        %1141 = vmatpush1.msra.mxu0 0.0
        %1142 = vmatprep.subr.mxu0 0.0
        %1143 = vmatpush1.msra.mxu0 0.0
        %1144 = vmatprep.subr.mxu0 0.0
        %1145 = vmatpush1.msra.mxu0 0.0
        %1146 = vmatprep.subr.mxu0 0.0
        %1147 = vmatpush1.msra.mxu0 0.0
        %1148 = vmatprep.subr.mxu0 0.0
        %1149 = vmatpush1.msra.mxu0 0.0
        %1150 = vmatprep.subr.mxu0 0.0
        %1151 = vmatpush1.msra.mxu0 0.0
        %1152 = vmatprep.subr.mxu0 0.0
        %1153 = vmatpush1.msra.mxu0 0.0
        %1154 = vmatprep.subr.mxu0 0.0
        %1155 = vmatpush1.msra.mxu0 0.0
        %1156 = vmatprep.subr.mxu0 0.0
        %1157 = vmatpush1.msra.mxu0 0.0
        %1158 = vmatprep.subr.mxu0 0.0
        %1159 = vmatpush1.msra.mxu0 0.0
        %1160 = vmatprep.subr.mxu0 0.0
        %1161 = vmatpush1.msra.mxu0 0.0
        %1162 = vmatprep.subr.mxu0 0.0
        %1163 = vmatpush1.msra.mxu0 0.0
        %1164 = vmatprep.subr.mxu0 0.0
        %1165 = vmatpush1.msra.mxu0 0.0
        %1166 = vmatprep.subr.mxu0 0.0
        %1167 = vmatpush1.msra.mxu0 0.0
        %1168 = vmatprep.mubr.f32.mxu0 0.0
        %1169 = vmatmul.mubr.f32.gmra.mrb[0].mxu0 %v1099
        %v1170 = vpop.f32.mrb[0].mxu0
        %v1171 = vadd.f32 0.0, %v1170
        %v1172 = vpop.f32.mrb[0].mxu0
        %1173 = vmatprep.mubr.f32.mxu0 0.0
        %1174 = vmatmul.mubr.f32.gmra.mrb[0].mxu0 %v1102
        %v1175 = vpop.f32.mrb[0].mxu0
        %v1176 = vadd.f32 0.0, %v1175
        %v1177 = vpop.f32.mrb[0].mxu0
        %1178 = vdwg.mxu0
        %v1180 = vsel %vm959, %v957, 0
        %1182 = vmatprep.subr.mxu0 0.0
        %1183 = vmatpush1.msra.mxu0 %v1087
        %1184 = vmatprep.subr.mxu0 0.0
        %1185 = vmatpush1.msra.mxu0 %v1089
        %1186 = vmatprep.subr.mxu0 0.0
        %1187 = vmatpush1.msra.mxu0 %v1091
        %1188 = vmatprep.subr.mxu0 0.0
        %1189 = vmatpush1.msra.mxu0 %v1093
        %1190 = vmatprep.subr.mxu0 0.0
        %1191 = vmatpush1.msra.mxu0 0.0
        %1192 = vmatprep.subr.mxu0 0.0
        %1193 = vmatpush1.msra.mxu0 0.0
        %1194 = vmatprep.subr.mxu0 0.0
        %1195 = vmatpush1.msra.mxu0 0.0
        %1196 = vmatprep.subr.mxu0 0.0
        %1197 = vmatpush1.msra.mxu0 0.0
        %1198 = vmatprep.subr.mxu0 0.0
        %1199 = vmatpush1.msra.mxu0 0.0
        %1200 = vmatprep.subr.mxu0 0.0
        %1201 = vmatpush1.msra.mxu0 0.0
        %1202 = vmatprep.subr.mxu0 0.0
        %1203 = vmatpush1.msra.mxu0 0.0
        %1204 = vmatprep.subr.mxu0 0.0
        %1205 = vmatpush1.msra.mxu0 0.0
        %1206 = vmatprep.subr.mxu0 0.0
        %1207 = vmatpush1.msra.mxu0 0.0
        %1208 = vmatprep.subr.mxu0 0.0
        %1209 = vmatpush1.msra.mxu0 0.0
        %1210 = vmatprep.subr.mxu0 0.0
        %1211 = vmatpush1.msra.mxu0 0.0
        %1212 = vmatprep.subr.mxu0 0.0
        %1213 = vmatpush1.msra.mxu0 0.0
        %1214 = vmatprep.subr.mxu0 0.0
        %1215 = vmatpush1.msra.mxu0 0.0
        %1216 = vmatprep.subr.mxu0 0.0
        %1217 = vmatpush1.msra.mxu0 0.0
        %1218 = vmatprep.subr.mxu0 0.0
        %1219 = vmatpush1.msra.mxu0 0.0
        %1220 = vmatprep.subr.mxu0 0.0
        %1221 = vmatpush1.msra.mxu0 0.0
        %1222 = vmatprep.subr.mxu0 0.0
        %1223 = vmatpush1.msra.mxu0 0.0
        %1224 = vmatprep.subr.mxu0 0.0
        %1225 = vmatpush1.msra.mxu0 0.0
        %1226 = vmatprep.subr.mxu0 0.0
        %1227 = vmatpush1.msra.mxu0 0.0
        %1228 = vmatprep.subr.mxu0 0.0
        %1229 = vmatpush1.msra.mxu0 0.0
        %1230 = vmatprep.subr.mxu0 0.0
        %1231 = vmatpush1.msra.mxu0 0.0
        %1232 = vmatprep.subr.mxu0 0.0
        %1233 = vmatpush1.msra.mxu0 0.0
        %1234 = vmatprep.subr.mxu0 0.0
        %1235 = vmatpush1.msra.mxu0 0.0
        %1236 = vmatprep.subr.mxu0 0.0
        %1237 = vmatpush1.msra.mxu0 0.0
        %1238 = vmatprep.subr.mxu0 0.0
        %1239 = vmatpush1.msra.mxu0 0.0
        %1240 = vmatprep.subr.mxu0 0.0
        %1241 = vmatpush1.msra.mxu0 0.0
        %1242 = vmatprep.subr.mxu0 0.0
        %1243 = vmatpush1.msra.mxu0 0.0
        %1244 = vmatprep.subr.mxu0 0.0
        %1245 = vmatpush1.msra.mxu0 0.0
        %1246 = vmatprep.mubr.f32.mxu0 0.0
        %1247 = vmatmul.mubr.f32.gmra.mrb[0].mxu0 %v1180
        %v1248 = vpop.f32.mrb[0].mxu0
        %v1249 = vadd.f32 0.0, %v1248
        %v1250 = vpop.f32.mrb[0].mxu0
        %1251 = vdwg.mxu0
        %vm1252 = vcmask 519168
        %1253 = vst.msk [vmem:[#allocation2] sm:$0xf] %vm1252, %v1249
        %vm1254 = vcmask 523264
        %1255 = vst.msk [vmem:[#allocation2 + $0x4] sm:$0xff] %vm1254, %v1171
        %1257 = vrot.lane.b32.xlu0 %v1074, 96
        %v1258 = vpop.permute.xlu0 %1257
        %1260 = vst.msk [vmem:[#allocation2 + $0xc] sm:$0xff] %vm1254, %v1258
        %v1261 = vld [vmem:[#allocation2] sm:$0xff]
        %v1262 = vld [vmem:[#allocation2 + $0x8] sm:$0xff]
        %v1263 = vld [vmem:[#allocation2 + $0x10] sm:$0xf]
        %vm1264 = vcmask 64512
        %v1266 = vsel %vm1264, %v866, 0
        %v1269 = vsel %vm1264, %v867, 0
        %v1272 = vsel %vm1264, %v868, 0
        %v1275 = vsel %vm1264, %v869, 0
        %1277 = vmatprep.subr.mxu0 0.0
        %1278 = vmatpush1.msra.mxu0 %v1074
        %1279 = vmatprep.subr.mxu0 0.0
        %1280 = vmatpush1.msra.mxu0 0.0
        %1281 = vmatprep.subr.mxu0 0.0
        %1282 = vmatpush1.msra.mxu0 0.0
        %1283 = vmatprep.subr.mxu0 0.0
        %1284 = vmatpush1.msra.mxu0 0.0
        %1285 = vmatprep.subr.mxu0 0.0
        %1286 = vmatpush1.msra.mxu0 0.0
        %1287 = vmatprep.subr.mxu0 0.0
        %1288 = vmatpush1.msra.mxu0 0.0
        %1289 = vmatprep.subr.mxu0 0.0
        %1290 = vmatpush1.msra.mxu0 0.0
        %1291 = vmatprep.subr.mxu0 0.0
        %1292 = vmatpush1.msra.mxu0 0.0
        %1293 = vmatprep.subr.mxu0 0.0
        %1294 = vmatpush1.msra.mxu0 0.0
        %1295 = vmatprep.subr.mxu0 0.0
        %1296 = vmatpush1.msra.mxu0 0.0
        %1297 = vmatprep.subr.mxu0 0.0
        %1298 = vmatpush1.msra.mxu0 0.0
        %1299 = vmatprep.subr.mxu0 0.0
        %1300 = vmatpush1.msra.mxu0 0.0
        %1301 = vmatprep.subr.mxu0 0.0
        %1302 = vmatpush1.msra.mxu0 0.0
        %1303 = vmatprep.subr.mxu0 0.0
        %1304 = vmatpush1.msra.mxu0 0.0
        %1305 = vmatprep.subr.mxu0 0.0
        %1306 = vmatpush1.msra.mxu0 0.0
        %1307 = vmatprep.subr.mxu0 0.0
        %1308 = vmatpush1.msra.mxu0 0.0
        %1309 = vmatprep.subr.mxu0 0.0
        %1310 = vmatpush1.msra.mxu0 0.0
        %1311 = vmatprep.subr.mxu0 0.0
        %1312 = vmatpush1.msra.mxu0 0.0
        %1313 = vmatprep.subr.mxu0 0.0
        %1314 = vmatpush1.msra.mxu0 0.0
        %1315 = vmatprep.subr.mxu0 0.0
        %1316 = vmatpush1.msra.mxu0 0.0
        %1317 = vmatprep.subr.mxu0 0.0
        %1318 = vmatpush1.msra.mxu0 0.0
        %1319 = vmatprep.subr.mxu0 0.0
        %1320 = vmatpush1.msra.mxu0 0.0
        %1321 = vmatprep.subr.mxu0 0.0
        %1322 = vmatpush1.msra.mxu0 0.0
        %1323 = vmatprep.subr.mxu0 0.0
        %1324 = vmatpush1.msra.mxu0 0.0
        %1325 = vmatprep.subr.mxu0 0.0
        %1326 = vmatpush1.msra.mxu0 0.0
        %1327 = vmatprep.subr.mxu0 0.0
        %1328 = vmatpush1.msra.mxu0 0.0
        %1329 = vmatprep.subr.mxu0 0.0
        %1330 = vmatpush1.msra.mxu0 0.0
        %1331 = vmatprep.subr.mxu0 0.0
        %1332 = vmatpush1.msra.mxu0 0.0
        %1333 = vmatprep.subr.mxu0 0.0
        %1334 = vmatpush1.msra.mxu0 0.0
        %1335 = vmatprep.subr.mxu0 0.0
        %1336 = vmatpush1.msra.mxu0 0.0
        %1337 = vmatprep.subr.mxu0 0.0
        %1338 = vmatpush1.msra.mxu0 0.0
        %1339 = vmatprep.subr.mxu0 0.0
        %1340 = vmatpush1.msra.mxu0 0.0
        %1341 = vmatprep.mubr.f32.mxu0 0.0
        %1342 = vmatmul.mubr.f32.gmra.mrb[0].mxu0 %v1266
        %v1343 = vpop.f32.mrb[0].mxu0
        %v1344 = vadd.f32 0.0, %v1343
        %v1345 = vpop.f32.mrb[0].mxu0
        %1346 = vmatprep.mubr.f32.mxu0 0.0
        %1347 = vmatmul.mubr.f32.gmra.mrb[0].mxu0 %v1269
        %v1348 = vpop.f32.mrb[0].mxu0
        %v1349 = vadd.f32 0.0, %v1348
        %v1350 = vpop.f32.mrb[0].mxu0
        %1351 = vmatprep.mubr.f32.mxu0 0.0
        %1352 = vmatmul.mubr.f32.gmra.mrb[0].mxu0 %v1272
        %v1353 = vpop.f32.mrb[0].mxu0
        %v1354 = vadd.f32 0.0, %v1353
        %v1355 = vpop.f32.mrb[0].mxu0
        %1356 = vmatprep.mubr.f32.mxu0 0.0
        %1357 = vmatmul.mubr.f32.gmra.mrb[0].mxu0 %v1275
        %v1358 = vpop.f32.mrb[0].mxu0
        %v1359 = vadd.f32 0.0, %v1358
        %v1360 = vpop.f32.mrb[0].mxu0
        %1361 = vdwg.mxu0
        %v1362 = vmul.f32 %v1344, %v870
        %v1363 = vmul.f32 %v1349, %v871
        %v1364 = vmul.f32 %v1354, %v872
        %v1365 = vmul.f32 %v1359, %v873
        %v1367 = vsel %vm959, %v1362, 0
        %v1370 = vsel %vm959, %v1363, 0
        %v1373 = vsel %vm959, %v1364, 0
        %v1376 = vsel %vm959, %v1365, 0
        %v1379 = vsel %vm959, %v1261, 0
        %v1382 = vsel %vm959, %v1262, 0
        %v1385 = vsel %vm959, %v1263, 0
        %1387 = vmatprep.subr.mxu0 0.0
        %1388 = vmatpush1.xpose.msra.mxu0 %v1379
        %1389 = vmatprep.subr.mxu0 0.0
        %1390 = vmatpush1.xpose.msra.mxu0 %v1382
        %1391 = vmatprep.subr.mxu0 0.0
        %1392 = vmatpush1.xpose.msra.mxu0 %v1385
        %1393 = vmatprep.subr.mxu0 0.0
        %1394 = vmatpush1.xpose.msra.mxu0 0.0
        %1395 = vmatprep.subr.mxu0 0.0
        %1396 = vmatpush1.xpose.msra.mxu0 0.0
        %1397 = vmatprep.subr.mxu0 0.0
        %1398 = vmatpush1.xpose.msra.mxu0 0.0
        %1399 = vmatprep.subr.mxu0 0.0
        %1400 = vmatpush1.xpose.msra.mxu0 0.0
        %1401 = vmatprep.subr.mxu0 0.0
        %1402 = vmatpush1.xpose.msra.mxu0 0.0
        %1403 = vmatprep.subr.mxu0 0.0
        %1404 = vmatpush1.xpose.msra.mxu0 0.0
        %1405 = vmatprep.subr.mxu0 0.0
        %1406 = vmatpush1.xpose.msra.mxu0 0.0
        %1407 = vmatprep.subr.mxu0 0.0
        %1408 = vmatpush1.xpose.msra.mxu0 0.0
        %1409 = vmatprep.subr.mxu0 0.0
        %1410 = vmatpush1.xpose.msra.mxu0 0.0
        %1411 = vmatprep.subr.mxu0 0.0
        %1412 = vmatpush1.xpose.msra.mxu0 0.0
        %1413 = vmatprep.subr.mxu0 0.0
        %1414 = vmatpush1.xpose.msra.mxu0 0.0
        %1415 = vmatprep.subr.mxu0 0.0
        %1416 = vmatpush1.xpose.msra.mxu0 0.0
        %1417 = vmatprep.subr.mxu0 0.0
        %1418 = vmatpush1.xpose.msra.mxu0 0.0
        %1419 = vmatprep.subr.mxu0 0.0
        %1420 = vmatpush1.xpose.msra.mxu0 0.0
        %1421 = vmatprep.subr.mxu0 0.0
        %1422 = vmatpush1.xpose.msra.mxu0 0.0
        %1423 = vmatprep.subr.mxu0 0.0
        %1424 = vmatpush1.xpose.msra.mxu0 0.0
        %1425 = vmatprep.subr.mxu0 0.0
        %1426 = vmatpush1.xpose.msra.mxu0 0.0
        %1427 = vmatprep.subr.mxu0 0.0
        %1428 = vmatpush1.xpose.msra.mxu0 0.0
        %1429 = vmatprep.subr.mxu0 0.0
        %1430 = vmatpush1.xpose.msra.mxu0 0.0
        %1431 = vmatprep.subr.mxu0 0.0
        %1432 = vmatpush1.xpose.msra.mxu0 0.0
        %1433 = vmatprep.subr.mxu0 0.0
        %1434 = vmatpush1.xpose.msra.mxu0 0.0
        %1435 = vmatprep.subr.mxu0 0.0
        %1436 = vmatpush1.xpose.msra.mxu0 0.0
        %1437 = vmatprep.subr.mxu0 0.0
        %1438 = vmatpush1.xpose.msra.mxu0 0.0
        %1439 = vmatprep.subr.mxu0 0.0
        %1440 = vmatpush1.xpose.msra.mxu0 0.0
        %1441 = vmatprep.subr.mxu0 0.0
        %1442 = vmatpush1.xpose.msra.mxu0 0.0
        %1443 = vmatprep.subr.mxu0 0.0
        %1444 = vmatpush1.xpose.msra.mxu0 0.0
        %1445 = vmatprep.subr.mxu0 0.0
        %1446 = vmatpush1.xpose.msra.mxu0 0.0
        %1447 = vmatprep.subr.mxu0 0.0
        %1448 = vmatpush1.xpose.msra.mxu0 0.0
        %1449 = vmatprep.subr.mxu0 0.0
        %1450 = vmatpush1.xpose.msra.mxu0 0.0
        %1451 = vmatprep.mubr.f32.mxu0 0.0
        %1452 = vmatmul.mubr.f32.gmra.mrb[0].mxu0 %v1367
        %v1453 = vpop.f32.mrb[0].mxu0
        %v1454 = vadd.f32 0.0, %v1453
        %v1455 = vpop.f32.mrb[0].mxu0
        %1456 = vmatprep.mubr.f32.mxu0 0.0
        %1457 = vmatmul.mubr.f32.gmra.mrb[0].mxu0 %v1370
        %v1458 = vpop.f32.mrb[0].mxu0
        %v1459 = vadd.f32 0.0, %v1458
        %v1460 = vpop.f32.mrb[0].mxu0
        %1461 = vmatprep.mubr.f32.mxu0 0.0
        %1462 = vmatmul.mubr.f32.gmra.mrb[0].mxu0 %v1373
        %v1463 = vpop.f32.mrb[0].mxu0
        %v1464 = vadd.f32 0.0, %v1463
        %v1465 = vpop.f32.mrb[0].mxu0
        %1466 = vmatprep.mubr.f32.mxu0 0.0
        %1467 = vmatmul.mubr.f32.gmra.mrb[0].mxu0 %v1376
        %v1468 = vpop.f32.mrb[0].mxu0
        %v1469 = vadd.f32 0.0, %v1468
        %v1470 = vpop.f32.mrb[0].mxu0
        %1471 = vdwg.mxu0
        %v1472 = vmul.f32 %v1454, 0.35355338
        %v1473 = vmul.f32 %v1459, 0.35355338
        %v1474 = vmul.f32 %v1464, 0.35355338
        %v1475 = vmul.f32 %v1469, 0.35355338
        %1476 = vmatprep.subr.mxu0 0.0
        %1477 = vmatpush1.msra.mxu0 %v875
        %1478 = vmatprep.subr.mxu0 0.0
        %1479 = vmatpush1.msra.mxu0 %v876
        %1480 = vmatprep.subr.mxu0 0.0
        %1481 = vmatpush1.msra.mxu0 %v877
        %1482 = vmatprep.subr.mxu0 0.0
        %1483 = vmatpush1.msra.mxu0 %v878
        %1484 = vmatprep.subr.mxu0 0.0
        %1485 = vmatpush1.msra.mxu0 0.0
        %1486 = vmatprep.subr.mxu0 0.0
        %1487 = vmatpush1.msra.mxu0 0.0
        %1488 = vmatprep.subr.mxu0 0.0
        %1489 = vmatpush1.msra.mxu0 0.0
        %1490 = vmatprep.subr.mxu0 0.0
        %1491 = vmatpush1.msra.mxu0 0.0
        %1492 = vmatprep.subr.mxu0 0.0
        %1493 = vmatpush1.msra.mxu0 0.0
        %1494 = vmatprep.subr.mxu0 0.0
        %1495 = vmatpush1.msra.mxu0 0.0
        %1496 = vmatprep.subr.mxu0 0.0
        %1497 = vmatpush1.msra.mxu0 0.0
        %1498 = vmatprep.subr.mxu0 0.0
        %1499 = vmatpush1.msra.mxu0 0.0
        %1500 = vmatprep.subr.mxu0 0.0
        %1501 = vmatpush1.msra.mxu0 0.0
        %1502 = vmatprep.subr.mxu0 0.0
        %1503 = vmatpush1.msra.mxu0 0.0
        %1504 = vmatprep.subr.mxu0 0.0
        %1505 = vmatpush1.msra.mxu0 0.0
        %1506 = vmatprep.subr.mxu0 0.0
        %1507 = vmatpush1.msra.mxu0 0.0
        %1508 = vmatprep.subr.mxu0 0.0
        %1509 = vmatpush1.msra.mxu0 0.0
        %1510 = vmatprep.subr.mxu0 0.0
        %1511 = vmatpush1.msra.mxu0 0.0
        %1512 = vmatprep.subr.mxu0 0.0
        %1513 = vmatpush1.msra.mxu0 0.0
        %1514 = vmatprep.subr.mxu0 0.0
        %1515 = vmatpush1.msra.mxu0 0.0
        %1516 = vmatprep.subr.mxu0 0.0
        %1517 = vmatpush1.msra.mxu0 0.0
        %1518 = vmatprep.subr.mxu0 0.0
        %1519 = vmatpush1.msra.mxu0 0.0
        %1520 = vmatprep.subr.mxu0 0.0
        %1521 = vmatpush1.msra.mxu0 0.0
        %1522 = vmatprep.subr.mxu0 0.0
        %1523 = vmatpush1.msra.mxu0 0.0
        %1524 = vmatprep.subr.mxu0 0.0
        %1525 = vmatpush1.msra.mxu0 0.0
        %1526 = vmatprep.subr.mxu0 0.0
        %1527 = vmatpush1.msra.mxu0 0.0
        %1528 = vmatprep.subr.mxu0 0.0
        %1529 = vmatpush1.msra.mxu0 0.0
        %1530 = vmatprep.subr.mxu0 0.0
        %1531 = vmatpush1.msra.mxu0 0.0
        %1532 = vmatprep.subr.mxu0 0.0
        %1533 = vmatpush1.msra.mxu0 0.0
        %1534 = vmatprep.subr.mxu0 0.0
        %1535 = vmatpush1.msra.mxu0 0.0
        %1536 = vmatprep.subr.mxu0 0.0
        %1537 = vmatpush1.msra.mxu0 0.0
        %1538 = vmatprep.subr.mxu0 0.0
        %1539 = vmatpush1.msra.mxu0 0.0
        %1540 = vmatprep.mubr.f32.mxu0 0.0
        %1541 = vmatmul.mubr.f32.gmra.mrb[0].mxu0 %v1367
        %v1542 = vpop.f32.mrb[0].mxu0
        %v1543 = vadd.f32 0.0, %v1542
        %v1544 = vpop.f32.mrb[0].mxu0
        %1545 = vmatprep.mubr.f32.mxu0 0.0
        %1546 = vmatmul.mubr.f32.gmra.mrb[0].mxu0 %v1370
        %v1547 = vpop.f32.mrb[0].mxu0
        %v1548 = vadd.f32 0.0, %v1547
        %v1549 = vpop.f32.mrb[0].mxu0
        %1550 = vmatprep.mubr.f32.mxu0 0.0
        %1551 = vmatmul.mubr.f32.gmra.mrb[0].mxu0 %v1373
        %v1552 = vpop.f32.mrb[0].mxu0
        %v1553 = vadd.f32 0.0, %v1552
        %v1554 = vpop.f32.mrb[0].mxu0
        %1555 = vmatprep.mubr.f32.mxu0 0.0
        %1556 = vmatmul.mubr.f32.gmra.mrb[0].mxu0 %v1376
        %v1557 = vpop.f32.mrb[0].mxu0
        %v1558 = vadd.f32 0.0, %v1557
        %v1559 = vpop.f32.mrb[0].mxu0
        %1560 = vdwg.mxu0
        %v1561 = vsel %vm905, 1, 0
        %v1562 = vsel %vm906, 1, 0
        %v1563 = vsel %vm907, 1, 0
        %v1564 = vsel %vm908, 1, 0
        %vm1565 = vcmp.eq.s32.totalorder %v1561, 1
        %vm1566 = vcmp.eq.s32.totalorder %v1562, 1
        %vm1567 = vcmp.eq.s32.totalorder %v1563, 1
        %vm1568 = vcmp.eq.s32.totalorder %v1564, 1
        %1573 = vrot.lane.b32.xlu0 %v1543, 4
        %v1574 = vpop.permute.xlu0 %1573
        %1575 = vrot.lane.b32.xlu0 %v1548, 4
        %v1576 = vpop.permute.xlu0 %1575
        %1577 = vrot.lane.b32.xlu0 %v1553, 4
        %v1578 = vpop.permute.xlu0 %1577
        %1579 = vrot.lane.b32.xlu0 %v1558, 4
        %v1580 = vpop.permute.xlu0 %1579
        %v1585 = vsel %vm1565, %v1543, %v1574
        %v1586 = vsel %vm1566, %v1548, %v1576
        %v1587 = vsel %vm1567, %v1553, %v1578
        %v1588 = vsel %vm1568, %v1558, %v1580
        %v1589 = vsel %vm913, 1, 0
        %v1590 = vsel %vm914, 1, 0
        %v1591 = vsel %vm915, 1, 0
        %v1592 = vsel %vm916, 1, 0
        %vm1593 = vcmp.eq.s32.totalorder %v1589, 1
        %vm1594 = vcmp.eq.s32.totalorder %v1590, 1
        %vm1595 = vcmp.eq.s32.totalorder %v1591, 1
        %vm1596 = vcmp.eq.s32.totalorder %v1592, 1
        %1601 = vrot.lane.b32.xlu0 %v1585, 2
        %v1602 = vpop.permute.xlu0 %1601
        %1603 = vrot.lane.b32.xlu0 %v1586, 2
        %v1604 = vpop.permute.xlu0 %1603
        %1605 = vrot.lane.b32.xlu0 %v1587, 2
        %v1606 = vpop.permute.xlu0 %1605
        %1607 = vrot.lane.b32.xlu0 %v1588, 2
        %v1608 = vpop.permute.xlu0 %1607
        %v1613 = vsel %vm1593, %v1585, %v1602
        %v1614 = vsel %vm1594, %v1586, %v1604
        %v1615 = vsel %vm1595, %v1587, %v1606
        %v1616 = vsel %vm1596, %v1588, %v1608
        %v1617 = vsel %vm921, 1, 0
        %v1618 = vsel %vm922, 1, 0
        %v1619 = vsel %vm923, 1, 0
        %v1620 = vsel %vm924, 1, 0
        %vm1621 = vcmp.eq.s32.totalorder %v1617, 1
        %vm1622 = vcmp.eq.s32.totalorder %v1618, 1
        %vm1623 = vcmp.eq.s32.totalorder %v1619, 1
        %vm1624 = vcmp.eq.s32.totalorder %v1620, 1
        %1629 = vrot.lane.b32.xlu0 %v1613, 1
        %v1630 = vpop.permute.xlu0 %1629
        %1631 = vrot.lane.b32.xlu0 %v1614, 1
        %v1632 = vpop.permute.xlu0 %1631
        %1633 = vrot.lane.b32.xlu0 %v1615, 1
        %v1634 = vpop.permute.xlu0 %1633
        %1635 = vrot.lane.b32.xlu0 %v1616, 1
        %v1636 = vpop.permute.xlu0 %1635
        %v1641 = vsel %vm1621, %v1613, %v1630
        %v1642 = vsel %vm1622, %v1614, %v1632
        %v1643 = vsel %vm1623, %v1615, %v1634
        %v1644 = vsel %vm1624, %v1616, %v1636
        %1649 = vrot.lane.b32.xlu0 %v1641, 121
        %v1650 = vpop.permute.xlu0 %1649
        %1651 = vrot.lane.b32.xlu0 %v1642, 121
        %v1652 = vpop.permute.xlu0 %1651
        %1653 = vrot.lane.b32.xlu0 %v1643, 121
        %v1654 = vpop.permute.xlu0 %1653
        %1655 = vrot.lane.b32.xlu0 %v1644, 121
        %v1656 = vpop.permute.xlu0 %1655
        %v1661 = vadd.f32 %v1472, %v1650
        %v1662 = vadd.f32 %v1473, %v1652
        %v1663 = vadd.f32 %v1474, %v1654
        %v1664 = vadd.f32 %v1475, %v1656
        %v1665 = vadd.f32 %v1661, %v879
        %v1666 = vadd.f32 %v1662, %v880
        %v1667 = vadd.f32 %v1663, %v881
        %v1668 = vadd.f32 %v1664, %v882
        %vm1669 = vcmask 162816
        %v1670 = vsel %vm1669, %v1665, -inf
        %1671 = vmax.xlane.f32.xlu0 %v1670
        %v1672 = vpop.xlane.xlu0 %1671
        %v1673 = vsel %vm1669, %v1666, -inf
        %1674 = vmax.xlane.f32.xlu0 %v1673
        %v1675 = vpop.xlane.xlu0 %1674
        %v1676 = vsel %vm1669, %v1667, -inf
        %1677 = vmax.xlane.f32.xlu0 %v1676
        %v1678 = vpop.xlane.xlu0 %1677
        %v1679 = vsel %vm1669, %v1668, -inf
        %1680 = vmax.xlane.f32.xlu0 %v1679
        %v1681 = vpop.xlane.xlu0 %1680
        %v1682 = vsub.f32 %v1665, %v1672
        %v1683 = vsub.f32 %v1666, %v1675
        %v1684 = vsub.f32 %v1667, %v1678
        %v1685 = vsub.f32 %v1668, %v1681
        %v1686 = vmul.f32 %v1682, 1.442695
        %v1687 = vpow.pop %v1686
        %v1688 = vmul.f32 %v1683, 1.442695
        %v1689 = vpow.pop %v1688
        %v1690 = vmul.f32 %v1684, 1.442695
        %v1691 = vpow.pop %v1690
        %v1692 = vmul.f32 %v1685, 1.442695
        %v1693 = vpow.pop %v1692
        %v1694 = vsel %vm1669, %v1687, 0.0
        %1695 = vadd.xlane.f32.xlu0 %v1694
        %v1696 = vpop.xlane.xlu0 %1695
        %v1697 = vsel %vm1669, %v1689, 0.0
        %1698 = vadd.xlane.f32.xlu0 %v1697
        %v1699 = vpop.xlane.xlu0 %1698
        %v1700 = vsel %vm1669, %v1691, 0.0
        %1701 = vadd.xlane.f32.xlu0 %v1700
        %v1702 = vpop.xlane.xlu0 %1701
        %v1703 = vsel %vm1669, %v1693, 0.0
        %1704 = vadd.xlane.f32.xlu0 %v1703
        %v1705 = vpop.xlane.xlu0 %1704
        %v1706 = vrcp.pop %v1696
        %v1707 = vrcp.pop %v1699
        %v1708 = vrcp.pop %v1702
        %v1709 = vrcp.pop %v1705
        %v1710 = vmul.f32 %v1687, %v1706
        %v1711 = vmul.f32 %v1689, %v1707
        %v1712 = vmul.f32 %v1691, %v1708
        %v1713 = vmul.f32 %v1693, %v1709
        %1714 = vst.msk [vmem:[%s789] sm:$0xff] %vm1669, %v1710
        %1715 = vst.msk [vmem:[%s789 + $0x8] sm:$0xff] %vm1669, %v1711
        %1716 = vst.msk [vmem:[%s789 + $0x10] sm:$0xff] %vm1669, %v1712
        %1717 = vst.msk [vmem:[%s789 + $0x18] sm:$0xff] %vm1669, %v1713
        %1718 = vrot.lane.b32.xlu0 %v1261, 96
        %v1719 = vpop.permute.xlu0 %1718
        %1720 = vrot.lane.b32.xlu0 %v1262, 96
        %v1721 = vpop.permute.xlu0 %1720
        %1722 = vrot.lane.b32.xlu0 %v1263, 96
        %v1723 = vpop.permute.xlu0 %1722
        %v1727 = vsel %vm1669, %v1710, 0
        %v1730 = vsel %vm1669, %v1711, 0
        %v1733 = vsel %vm1669, %v1712, 0
        %v1736 = vsel %vm1669, %v1713, 0
        %vm1738 = vcmask 1043456
        %v1739 = vsel %vm1738, %v1723, 0
        %1741 = vmatprep.subr.mxu0 0.0
        %1742 = vmatpush1.msra.mxu0 %v1719
        %1743 = vmatprep.subr.mxu0 0.0
        %1744 = vmatpush1.msra.mxu0 %v1721
        %1745 = vmatprep.subr.mxu0 0.0
        %1746 = vmatpush1.msra.mxu0 %v1739
        %1747 = vmatprep.subr.mxu0 0.0
        %1748 = vmatpush1.msra.mxu0 0.0
        %1749 = vmatprep.subr.mxu0 0.0
        %1750 = vmatpush1.msra.mxu0 0.0
        %1751 = vmatprep.subr.mxu0 0.0
        %1752 = vmatpush1.msra.mxu0 0.0
        %1753 = vmatprep.subr.mxu0 0.0
        %1754 = vmatpush1.msra.mxu0 0.0
        %1755 = vmatprep.subr.mxu0 0.0
        %1756 = vmatpush1.msra.mxu0 0.0
        %1757 = vmatprep.subr.mxu0 0.0
        %1758 = vmatpush1.msra.mxu0 0.0
        %1759 = vmatprep.subr.mxu0 0.0
        %1760 = vmatpush1.msra.mxu0 0.0
        %1761 = vmatprep.subr.mxu0 0.0
        %1762 = vmatpush1.msra.mxu0 0.0
        %1763 = vmatprep.subr.mxu0 0.0
        %1764 = vmatpush1.msra.mxu0 0.0
        %1765 = vmatprep.subr.mxu0 0.0
        %1766 = vmatpush1.msra.mxu0 0.0
        %1767 = vmatprep.subr.mxu0 0.0
        %1768 = vmatpush1.msra.mxu0 0.0
        %1769 = vmatprep.subr.mxu0 0.0
        %1770 = vmatpush1.msra.mxu0 0.0
        %1771 = vmatprep.subr.mxu0 0.0
        %1772 = vmatpush1.msra.mxu0 0.0
        %1773 = vmatprep.subr.mxu0 0.0
        %1774 = vmatpush1.msra.mxu0 0.0
        %1775 = vmatprep.subr.mxu0 0.0
        %1776 = vmatpush1.msra.mxu0 0.0
        %1777 = vmatprep.subr.mxu0 0.0
        %1778 = vmatpush1.msra.mxu0 0.0
        %1779 = vmatprep.subr.mxu0 0.0
        %1780 = vmatpush1.msra.mxu0 0.0
        %1781 = vmatprep.subr.mxu0 0.0
        %1782 = vmatpush1.msra.mxu0 0.0
        %1783 = vmatprep.subr.mxu0 0.0
        %1784 = vmatpush1.msra.mxu0 0.0
        %1785 = vmatprep.subr.mxu0 0.0
        %1786 = vmatpush1.msra.mxu0 0.0
        %1787 = vmatprep.subr.mxu0 0.0
        %1788 = vmatpush1.msra.mxu0 0.0
        %1789 = vmatprep.subr.mxu0 0.0
        %1790 = vmatpush1.msra.mxu0 0.0
        %1791 = vmatprep.subr.mxu0 0.0
        %1792 = vmatpush1.msra.mxu0 0.0
        %1793 = vmatprep.subr.mxu0 0.0
        %1794 = vmatpush1.msra.mxu0 0.0
        %1795 = vmatprep.subr.mxu0 0.0
        %1796 = vmatpush1.msra.mxu0 0.0
        %1797 = vmatprep.subr.mxu0 0.0
        %1798 = vmatpush1.msra.mxu0 0.0
        %1799 = vmatprep.subr.mxu0 0.0
        %1800 = vmatpush1.msra.mxu0 0.0
        %1801 = vmatprep.subr.mxu0 0.0
        %1802 = vmatpush1.msra.mxu0 0.0
        %1803 = vmatprep.subr.mxu0 0.0
        %1804 = vmatpush1.msra.mxu0 0.0
        %1805 = vmatprep.mubr.f32.mxu0 0.0
        %1806 = vmatmul.mubr.f32.gmra.mrb[0].mxu0 %v1727
        %v1807 = vpop.f32.mrb[0].mxu0
        %v1808 = vadd.f32 0.0, %v1807
        %v1809 = vpop.f32.mrb[0].mxu0
        %1810 = vmatprep.mubr.f32.mxu0 0.0
        %1811 = vmatmul.mubr.f32.gmra.mrb[0].mxu0 %v1730
        %v1812 = vpop.f32.mrb[0].mxu0
        %v1813 = vadd.f32 0.0, %v1812
        %v1814 = vpop.f32.mrb[0].mxu0
        %1815 = vmatprep.mubr.f32.mxu0 0.0
        %1816 = vmatmul.mubr.f32.gmra.mrb[0].mxu0 %v1733
        %v1817 = vpop.f32.mrb[0].mxu0
        %v1818 = vadd.f32 0.0, %v1817
        %v1819 = vpop.f32.mrb[0].mxu0
        %1820 = vmatprep.mubr.f32.mxu0 0.0
        %1821 = vmatmul.mubr.f32.gmra.mrb[0].mxu0 %v1736
        %v1822 = vpop.f32.mrb[0].mxu0
        %v1823 = vadd.f32 0.0, %v1822
        %v1824 = vpop.f32.mrb[0].mxu0
        %1825 = vdwg.mxu0
        %v1826 = vmul.f32 %v1808, %v870
        %v1827 = vmul.f32 %v1813, %v871
        %v1828 = vmul.f32 %v1818, %v872
        %v1829 = vmul.f32 %v1823, %v873
        %v1831 = vsel %vm959, %v874, 0
        %1833 = vmatprep.subr.mxu0 0.0
        %1834 = vmatpush1.msra.mxu0 %v1826
        %1835 = vmatprep.subr.mxu0 0.0
        %1836 = vmatpush1.msra.mxu0 %v1827
        %1837 = vmatprep.subr.mxu0 0.0
        %1838 = vmatpush1.msra.mxu0 %v1828
        %1839 = vmatprep.subr.mxu0 0.0
        %1840 = vmatpush1.msra.mxu0 %v1829
        %1841 = vmatprep.subr.mxu0 0.0
        %1842 = vmatpush1.msra.mxu0 0.0
        %1843 = vmatprep.subr.mxu0 0.0
        %1844 = vmatpush1.msra.mxu0 0.0
        %1845 = vmatprep.subr.mxu0 0.0
        %1846 = vmatpush1.msra.mxu0 0.0
        %1847 = vmatprep.subr.mxu0 0.0
        %1848 = vmatpush1.msra.mxu0 0.0
        %1849 = vmatprep.subr.mxu0 0.0
        %1850 = vmatpush1.msra.mxu0 0.0
        %1851 = vmatprep.subr.mxu0 0.0
        %1852 = vmatpush1.msra.mxu0 0.0
        %1853 = vmatprep.subr.mxu0 0.0
        %1854 = vmatpush1.msra.mxu0 0.0
        %1855 = vmatprep.subr.mxu0 0.0
        %1856 = vmatpush1.msra.mxu0 0.0
        %1857 = vmatprep.subr.mxu0 0.0
        %1858 = vmatpush1.msra.mxu0 0.0
        %1859 = vmatprep.subr.mxu0 0.0
        %1860 = vmatpush1.msra.mxu0 0.0
        %1861 = vmatprep.subr.mxu0 0.0
        %1862 = vmatpush1.msra.mxu0 0.0
        %1863 = vmatprep.subr.mxu0 0.0
        %1864 = vmatpush1.msra.mxu0 0.0
        %1865 = vmatprep.subr.mxu0 0.0
        %1866 = vmatpush1.msra.mxu0 0.0
        %1867 = vmatprep.subr.mxu0 0.0
        %1868 = vmatpush1.msra.mxu0 0.0
        %1869 = vmatprep.subr.mxu0 0.0
        %1870 = vmatpush1.msra.mxu0 0.0
        %1871 = vmatprep.subr.mxu0 0.0
        %1872 = vmatpush1.msra.mxu0 0.0
        %1873 = vmatprep.subr.mxu0 0.0
        %1874 = vmatpush1.msra.mxu0 0.0
        %1875 = vmatprep.subr.mxu0 0.0
        %1876 = vmatpush1.msra.mxu0 0.0
        %1877 = vmatprep.subr.mxu0 0.0
        %1878 = vmatpush1.msra.mxu0 0.0
        %1879 = vmatprep.subr.mxu0 0.0
        %1880 = vmatpush1.msra.mxu0 0.0
        %1881 = vmatprep.subr.mxu0 0.0
        %1882 = vmatpush1.msra.mxu0 0.0
        %1883 = vmatprep.subr.mxu0 0.0
        %1884 = vmatpush1.msra.mxu0 0.0
        %1885 = vmatprep.subr.mxu0 0.0
        %1886 = vmatpush1.msra.mxu0 0.0
        %1887 = vmatprep.subr.mxu0 0.0
        %1888 = vmatpush1.msra.mxu0 0.0
        %1889 = vmatprep.subr.mxu0 0.0
        %1890 = vmatpush1.msra.mxu0 0.0
        %1891 = vmatprep.subr.mxu0 0.0
        %1892 = vmatpush1.msra.mxu0 0.0
        %1893 = vmatprep.subr.mxu0 0.0
        %1894 = vmatpush1.msra.mxu0 0.0
        %1895 = vmatprep.subr.mxu0 0.0
        %1896 = vmatpush1.msra.mxu0 0.0
        %1897 = vmatprep.mubr.f32.mxu0 0.0
        %1898 = vmatmul.mubr.f32.gmra.mrb[0].mxu0 %v1831
        %v1899 = vpop.f32.mrb[0].mxu0
        %v1900 = vadd.f32 0.0, %v1899
        %v1901 = vpop.f32.mrb[0].mxu0
        %1902 = vdwg.mxu0
        %1903 = vst.msk [vmem:[#allocation3] sm:$0xff] %vm959, %v1900
        %vm1904 = vcmask 523268
        %1905 = vst.msk [vmem:[#allocation2 - $0x4] sm:$0xf0] %vm1904, %v1249
        %1906 = vst.msk [vmem:[#allocation2 + $0x4] sm:$0xff] %vm1254, %v1176
        %1908 = vrot.lane.b32.xlu0 %v1079, 96
        %v1909 = vpop.permute.xlu0 %1908
        %1911 = vst.msk [vmem:[#allocation2 + $0xc] sm:$0xff] %vm1254, %v1909
        %v1912 = vld [vmem:[#allocation2] sm:$0xff]
        %v1913 = vld [vmem:[#allocation2 + $0x8] sm:$0xff]
        %v1914 = vld [vmem:[#allocation2 + $0x10] sm:$0xf]
        %1915 = vmatprep.subr.mxu0 0.0
        %1916 = vmatpush1.msra.mxu0 %v1079
        %1917 = vmatprep.subr.mxu0 0.0
        %1918 = vmatpush1.msra.mxu0 0.0
        %1919 = vmatprep.subr.mxu0 0.0
        %1920 = vmatpush1.msra.mxu0 0.0
        %1921 = vmatprep.subr.mxu0 0.0
        %1922 = vmatpush1.msra.mxu0 0.0
        %1923 = vmatprep.subr.mxu0 0.0
        %1924 = vmatpush1.msra.mxu0 0.0
        %1925 = vmatprep.subr.mxu0 0.0
        %1926 = vmatpush1.msra.mxu0 0.0
        %1927 = vmatprep.subr.mxu0 0.0
        %1928 = vmatpush1.msra.mxu0 0.0
        %1929 = vmatprep.subr.mxu0 0.0
        %1930 = vmatpush1.msra.mxu0 0.0
        %1931 = vmatprep.subr.mxu0 0.0
        %1932 = vmatpush1.msra.mxu0 0.0
        %1933 = vmatprep.subr.mxu0 0.0
        %1934 = vmatpush1.msra.mxu0 0.0
        %1935 = vmatprep.subr.mxu0 0.0
        %1936 = vmatpush1.msra.mxu0 0.0
        %1937 = vmatprep.subr.mxu0 0.0
        %1938 = vmatpush1.msra.mxu0 0.0
        %1939 = vmatprep.subr.mxu0 0.0
        %1940 = vmatpush1.msra.mxu0 0.0
        %1941 = vmatprep.subr.mxu0 0.0
        %1942 = vmatpush1.msra.mxu0 0.0
        %1943 = vmatprep.subr.mxu0 0.0
        %1944 = vmatpush1.msra.mxu0 0.0
        %1945 = vmatprep.subr.mxu0 0.0
        %1946 = vmatpush1.msra.mxu0 0.0
        %1947 = vmatprep.subr.mxu0 0.0
        %1948 = vmatpush1.msra.mxu0 0.0
        %1949 = vmatprep.subr.mxu0 0.0
        %1950 = vmatpush1.msra.mxu0 0.0
        %1951 = vmatprep.subr.mxu0 0.0
        %1952 = vmatpush1.msra.mxu0 0.0
        %1953 = vmatprep.subr.mxu0 0.0
        %1954 = vmatpush1.msra.mxu0 0.0
        %1955 = vmatprep.subr.mxu0 0.0
        %1956 = vmatpush1.msra.mxu0 0.0
        %1957 = vmatprep.subr.mxu0 0.0
        %1958 = vmatpush1.msra.mxu0 0.0
        %1959 = vmatprep.subr.mxu0 0.0
        %1960 = vmatpush1.msra.mxu0 0.0
        %1961 = vmatprep.subr.mxu0 0.0
        %1962 = vmatpush1.msra.mxu0 0.0
        %1963 = vmatprep.subr.mxu0 0.0
        %1964 = vmatpush1.msra.mxu0 0.0
        %1965 = vmatprep.subr.mxu0 0.0
        %1966 = vmatpush1.msra.mxu0 0.0
        %1967 = vmatprep.subr.mxu0 0.0
        %1968 = vmatpush1.msra.mxu0 0.0
        %1969 = vmatprep.subr.mxu0 0.0
        %1970 = vmatpush1.msra.mxu0 0.0
        %1971 = vmatprep.subr.mxu0 0.0
        %1972 = vmatpush1.msra.mxu0 0.0
        %1973 = vmatprep.subr.mxu0 0.0
        %1974 = vmatpush1.msra.mxu0 0.0
        %1975 = vmatprep.subr.mxu0 0.0
        %1976 = vmatpush1.msra.mxu0 0.0
        %1977 = vmatprep.subr.mxu0 0.0
        %1978 = vmatpush1.msra.mxu0 0.0
        %1979 = vmatprep.mubr.f32.mxu0 0.0
        %1980 = vmatmul.mubr.f32.gmra.mrb[0].mxu0 %v1266
        %v1981 = vpop.f32.mrb[0].mxu0
        %v1982 = vadd.f32 0.0, %v1981
        %v1983 = vpop.f32.mrb[0].mxu0
        %1984 = vmatprep.mubr.f32.mxu0 0.0
        %1985 = vmatmul.mubr.f32.gmra.mrb[0].mxu0 %v1269
        %v1986 = vpop.f32.mrb[0].mxu0
        %v1987 = vadd.f32 0.0, %v1986
        %v1988 = vpop.f32.mrb[0].mxu0
        %1989 = vmatprep.mubr.f32.mxu0 0.0
        %1990 = vmatmul.mubr.f32.gmra.mrb[0].mxu0 %v1272
        %v1991 = vpop.f32.mrb[0].mxu0
        %v1992 = vadd.f32 0.0, %v1991
        %v1993 = vpop.f32.mrb[0].mxu0
        %1994 = vmatprep.mubr.f32.mxu0 0.0
        %1995 = vmatmul.mubr.f32.gmra.mrb[0].mxu0 %v1275
        %v1996 = vpop.f32.mrb[0].mxu0
        %v1997 = vadd.f32 0.0, %v1996
        %v1998 = vpop.f32.mrb[0].mxu0
        %1999 = vdwg.mxu0
        %v2000 = vmul.f32 %v1982, %v870
        %v2001 = vmul.f32 %v1987, %v871
        %v2002 = vmul.f32 %v1992, %v872
        %v2003 = vmul.f32 %v1997, %v873
        %v2005 = vsel %vm959, %v2000, 0
        %v2008 = vsel %vm959, %v2001, 0
        %v2011 = vsel %vm959, %v2002, 0
        %v2014 = vsel %vm959, %v2003, 0
        %v2017 = vsel %vm959, %v1912, 0
        %v2020 = vsel %vm959, %v1913, 0
        %v2023 = vsel %vm959, %v1914, 0
        %2025 = vmatprep.subr.mxu0 0.0
        %2026 = vmatpush1.xpose.msra.mxu0 %v2017
        %2027 = vmatprep.subr.mxu0 0.0
        %2028 = vmatpush1.xpose.msra.mxu0 %v2020
        %2029 = vmatprep.subr.mxu0 0.0
        %2030 = vmatpush1.xpose.msra.mxu0 %v2023
        %2031 = vmatprep.subr.mxu0 0.0
        %2032 = vmatpush1.xpose.msra.mxu0 0.0
        %2033 = vmatprep.subr.mxu0 0.0
        %2034 = vmatpush1.xpose.msra.mxu0 0.0
        %2035 = vmatprep.subr.mxu0 0.0
        %2036 = vmatpush1.xpose.msra.mxu0 0.0
        %2037 = vmatprep.subr.mxu0 0.0
        %2038 = vmatpush1.xpose.msra.mxu0 0.0
        %2039 = vmatprep.subr.mxu0 0.0
        %2040 = vmatpush1.xpose.msra.mxu0 0.0
        %2041 = vmatprep.subr.mxu0 0.0
        %2042 = vmatpush1.xpose.msra.mxu0 0.0
        %2043 = vmatprep.subr.mxu0 0.0
        %2044 = vmatpush1.xpose.msra.mxu0 0.0
        %2045 = vmatprep.subr.mxu0 0.0
        %2046 = vmatpush1.xpose.msra.mxu0 0.0
        %2047 = vmatprep.subr.mxu0 0.0
        %2048 = vmatpush1.xpose.msra.mxu0 0.0
        %2049 = vmatprep.subr.mxu0 0.0
        %2050 = vmatpush1.xpose.msra.mxu0 0.0
        %2051 = vmatprep.subr.mxu0 0.0
        %2052 = vmatpush1.xpose.msra.mxu0 0.0
        %2053 = vmatprep.subr.mxu0 0.0
        %2054 = vmatpush1.xpose.msra.mxu0 0.0
        %2055 = vmatprep.subr.mxu0 0.0
        %2056 = vmatpush1.xpose.msra.mxu0 0.0
        %2057 = vmatprep.subr.mxu0 0.0
        %2058 = vmatpush1.xpose.msra.mxu0 0.0
        %2059 = vmatprep.subr.mxu0 0.0
        %2060 = vmatpush1.xpose.msra.mxu0 0.0
        %2061 = vmatprep.subr.mxu0 0.0
        %2062 = vmatpush1.xpose.msra.mxu0 0.0
        %2063 = vmatprep.subr.mxu0 0.0
        %2064 = vmatpush1.xpose.msra.mxu0 0.0
        %2065 = vmatprep.subr.mxu0 0.0
        %2066 = vmatpush1.xpose.msra.mxu0 0.0
        %2067 = vmatprep.subr.mxu0 0.0
        %2068 = vmatpush1.xpose.msra.mxu0 0.0
        %2069 = vmatprep.subr.mxu0 0.0
        %2070 = vmatpush1.xpose.msra.mxu0 0.0
        %2071 = vmatprep.subr.mxu0 0.0
        %2072 = vmatpush1.xpose.msra.mxu0 0.0
        %2073 = vmatprep.subr.mxu0 0.0
        %2074 = vmatpush1.xpose.msra.mxu0 0.0
        %2075 = vmatprep.subr.mxu0 0.0
        %2076 = vmatpush1.xpose.msra.mxu0 0.0
        %2077 = vmatprep.subr.mxu0 0.0
        %2078 = vmatpush1.xpose.msra.mxu0 0.0
        %2079 = vmatprep.subr.mxu0 0.0
        %2080 = vmatpush1.xpose.msra.mxu0 0.0
        %2081 = vmatprep.subr.mxu0 0.0
        %2082 = vmatpush1.xpose.msra.mxu0 0.0
        %2083 = vmatprep.subr.mxu0 0.0
        %2084 = vmatpush1.xpose.msra.mxu0 0.0
        %2085 = vmatprep.subr.mxu0 0.0
        %2086 = vmatpush1.xpose.msra.mxu0 0.0
        %2087 = vmatprep.subr.mxu0 0.0
        %2088 = vmatpush1.xpose.msra.mxu0 0.0
        %2089 = vmatprep.mubr.f32.mxu0 0.0
        %2090 = vmatmul.mubr.f32.gmra.mrb[0].mxu0 %v2005
        %v2091 = vpop.f32.mrb[0].mxu0
        %v2092 = vadd.f32 0.0, %v2091
        %v2093 = vpop.f32.mrb[0].mxu0
        %2094 = vmatprep.mubr.f32.mxu0 0.0
        %2095 = vmatmul.mubr.f32.gmra.mrb[0].mxu0 %v2008
        %v2096 = vpop.f32.mrb[0].mxu0
        %v2097 = vadd.f32 0.0, %v2096
        %v2098 = vpop.f32.mrb[0].mxu0
        %2099 = vmatprep.mubr.f32.mxu0 0.0
        %2100 = vmatmul.mubr.f32.gmra.mrb[0].mxu0 %v2011
        %v2101 = vpop.f32.mrb[0].mxu0
        %v2102 = vadd.f32 0.0, %v2101
        %v2103 = vpop.f32.mrb[0].mxu0
        %2104 = vmatprep.mubr.f32.mxu0 0.0
        %2105 = vmatmul.mubr.f32.gmra.mrb[0].mxu0 %v2014
        %v2106 = vpop.f32.mrb[0].mxu0
        %v2107 = vadd.f32 0.0, %v2106
        %v2108 = vpop.f32.mrb[0].mxu0
        %2109 = vdwg.mxu0
        %v2110 = vmul.f32 %v2092, 0.35355338
        %v2111 = vmul.f32 %v2097, 0.35355338
        %v2112 = vmul.f32 %v2102, 0.35355338
        %v2113 = vmul.f32 %v2107, 0.35355338
        %2114 = vmatprep.subr.mxu0 0.0
        %2115 = vmatpush1.msra.mxu0 %v875
        %2116 = vmatprep.subr.mxu0 0.0
        %2117 = vmatpush1.msra.mxu0 %v876
        %2118 = vmatprep.subr.mxu0 0.0
        %2119 = vmatpush1.msra.mxu0 %v877
        %2120 = vmatprep.subr.mxu0 0.0
        %2121 = vmatpush1.msra.mxu0 %v878
        %2122 = vmatprep.subr.mxu0 0.0
        %2123 = vmatpush1.msra.mxu0 0.0
        %2124 = vmatprep.subr.mxu0 0.0
        %2125 = vmatpush1.msra.mxu0 0.0
        %2126 = vmatprep.subr.mxu0 0.0
        %2127 = vmatpush1.msra.mxu0 0.0
        %2128 = vmatprep.subr.mxu0 0.0
        %2129 = vmatpush1.msra.mxu0 0.0
        %2130 = vmatprep.subr.mxu0 0.0
        %2131 = vmatpush1.msra.mxu0 0.0
        %2132 = vmatprep.subr.mxu0 0.0
        %2133 = vmatpush1.msra.mxu0 0.0
        %2134 = vmatprep.subr.mxu0 0.0
        %2135 = vmatpush1.msra.mxu0 0.0
        %2136 = vmatprep.subr.mxu0 0.0
        %2137 = vmatpush1.msra.mxu0 0.0
        %2138 = vmatprep.subr.mxu0 0.0
        %2139 = vmatpush1.msra.mxu0 0.0
        %2140 = vmatprep.subr.mxu0 0.0
        %2141 = vmatpush1.msra.mxu0 0.0
        %2142 = vmatprep.subr.mxu0 0.0
        %2143 = vmatpush1.msra.mxu0 0.0
        %2144 = vmatprep.subr.mxu0 0.0
        %2145 = vmatpush1.msra.mxu0 0.0
        %2146 = vmatprep.subr.mxu0 0.0
        %2147 = vmatpush1.msra.mxu0 0.0
        %2148 = vmatprep.subr.mxu0 0.0
        %2149 = vmatpush1.msra.mxu0 0.0
        %2150 = vmatprep.subr.mxu0 0.0
        %2151 = vmatpush1.msra.mxu0 0.0
        %2152 = vmatprep.subr.mxu0 0.0
        %2153 = vmatpush1.msra.mxu0 0.0
        %2154 = vmatprep.subr.mxu0 0.0
        %2155 = vmatpush1.msra.mxu0 0.0
        %2156 = vmatprep.subr.mxu0 0.0
        %2157 = vmatpush1.msra.mxu0 0.0
        %2158 = vmatprep.subr.mxu0 0.0
        %2159 = vmatpush1.msra.mxu0 0.0
        %2160 = vmatprep.subr.mxu0 0.0
        %2161 = vmatpush1.msra.mxu0 0.0
        %2162 = vmatprep.subr.mxu0 0.0
        %2163 = vmatpush1.msra.mxu0 0.0
        %2164 = vmatprep.subr.mxu0 0.0
        %2165 = vmatpush1.msra.mxu0 0.0
        %2166 = vmatprep.subr.mxu0 0.0
        %2167 = vmatpush1.msra.mxu0 0.0
        %2168 = vmatprep.subr.mxu0 0.0
        %2169 = vmatpush1.msra.mxu0 0.0
        %2170 = vmatprep.subr.mxu0 0.0
        %2171 = vmatpush1.msra.mxu0 0.0
        %2172 = vmatprep.subr.mxu0 0.0
        %2173 = vmatpush1.msra.mxu0 0.0
        %2174 = vmatprep.subr.mxu0 0.0
        %2175 = vmatpush1.msra.mxu0 0.0
        %2176 = vmatprep.subr.mxu0 0.0
        %2177 = vmatpush1.msra.mxu0 0.0
        %2178 = vmatprep.mubr.f32.mxu0 0.0
        %2179 = vmatmul.mubr.f32.gmra.mrb[0].mxu0 %v2005
        %v2180 = vpop.f32.mrb[0].mxu0
        %v2181 = vadd.f32 0.0, %v2180
        %v2182 = vpop.f32.mrb[0].mxu0
        %2183 = vmatprep.mubr.f32.mxu0 0.0
        %2184 = vmatmul.mubr.f32.gmra.mrb[0].mxu0 %v2008
        %v2185 = vpop.f32.mrb[0].mxu0
        %v2186 = vadd.f32 0.0, %v2185
        %v2187 = vpop.f32.mrb[0].mxu0
        %2188 = vmatprep.mubr.f32.mxu0 0.0
        %2189 = vmatmul.mubr.f32.gmra.mrb[0].mxu0 %v2011
        %v2190 = vpop.f32.mrb[0].mxu0
        %v2191 = vadd.f32 0.0, %v2190
        %v2192 = vpop.f32.mrb[0].mxu0
        %2193 = vmatprep.mubr.f32.mxu0 0.0
        %2194 = vmatmul.mubr.f32.gmra.mrb[0].mxu0 %v2014
        %v2195 = vpop.f32.mrb[0].mxu0
        %v2196 = vadd.f32 0.0, %v2195
        %v2197 = vpop.f32.mrb[0].mxu0
        %2198 = vdwg.mxu0
        %2203 = vrot.lane.b32.xlu0 %v2181, 4
        %v2204 = vpop.permute.xlu0 %2203
        %2205 = vrot.lane.b32.xlu0 %v2186, 4
        %v2206 = vpop.permute.xlu0 %2205
        %2207 = vrot.lane.b32.xlu0 %v2191, 4
        %v2208 = vpop.permute.xlu0 %2207
        %2209 = vrot.lane.b32.xlu0 %v2196, 4
        %v2210 = vpop.permute.xlu0 %2209
        %v2215 = vsel %vm1565, %v2181, %v2204
        %v2216 = vsel %vm1566, %v2186, %v2206
        %v2217 = vsel %vm1567, %v2191, %v2208
        %v2218 = vsel %vm1568, %v2196, %v2210
        %2223 = vrot.lane.b32.xlu0 %v2215, 2
        %v2224 = vpop.permute.xlu0 %2223
        %2225 = vrot.lane.b32.xlu0 %v2216, 2
        %v2226 = vpop.permute.xlu0 %2225
        %2227 = vrot.lane.b32.xlu0 %v2217, 2
        %v2228 = vpop.permute.xlu0 %2227
        %2229 = vrot.lane.b32.xlu0 %v2218, 2
        %v2230 = vpop.permute.xlu0 %2229
        %v2235 = vsel %vm1593, %v2215, %v2224
        %v2236 = vsel %vm1594, %v2216, %v2226
        %v2237 = vsel %vm1595, %v2217, %v2228
        %v2238 = vsel %vm1596, %v2218, %v2230
        %2243 = vrot.lane.b32.xlu0 %v2235, 1
        %v2244 = vpop.permute.xlu0 %2243
        %2245 = vrot.lane.b32.xlu0 %v2236, 1
        %v2246 = vpop.permute.xlu0 %2245
        %2247 = vrot.lane.b32.xlu0 %v2237, 1
        %v2248 = vpop.permute.xlu0 %2247
        %2249 = vrot.lane.b32.xlu0 %v2238, 1
        %v2250 = vpop.permute.xlu0 %2249
        %v2255 = vsel %vm1621, %v2235, %v2244
        %v2256 = vsel %vm1622, %v2236, %v2246
        %v2257 = vsel %vm1623, %v2237, %v2248
        %v2258 = vsel %vm1624, %v2238, %v2250
        %2263 = vrot.lane.b32.xlu0 %v2255, 121
        %v2264 = vpop.permute.xlu0 %2263
        %2265 = vrot.lane.b32.xlu0 %v2256, 121
        %v2266 = vpop.permute.xlu0 %2265
        %2267 = vrot.lane.b32.xlu0 %v2257, 121
        %v2268 = vpop.permute.xlu0 %2267
        %2269 = vrot.lane.b32.xlu0 %v2258, 121
        %v2270 = vpop.permute.xlu0 %2269
        %v2275 = vadd.f32 %v2110, %v2264
        %v2276 = vadd.f32 %v2111, %v2266
        %v2277 = vadd.f32 %v2112, %v2268
        %v2278 = vadd.f32 %v2113, %v2270
        %v2279 = vadd.f32 %v2275, %v884
        %v2280 = vadd.f32 %v2276, %v885
        %v2281 = vadd.f32 %v2277, %v886
        %v2282 = vadd.f32 %v2278, %v887
        %v2283 = vsel %vm1669, %v2279, -inf
        %2284 = vmax.xlane.f32.xlu0 %v2283
        %v2285 = vpop.xlane.xlu0 %2284
        %v2286 = vsel %vm1669, %v2280, -inf
        %2287 = vmax.xlane.f32.xlu0 %v2286
        %v2288 = vpop.xlane.xlu0 %2287
        %v2289 = vsel %vm1669, %v2281, -inf
        %2290 = vmax.xlane.f32.xlu0 %v2289
        %v2291 = vpop.xlane.xlu0 %2290
        %v2292 = vsel %vm1669, %v2282, -inf
        %2293 = vmax.xlane.f32.xlu0 %v2292
        %v2294 = vpop.xlane.xlu0 %2293
        %v2295 = vsub.f32 %v2279, %v2285
        %v2296 = vsub.f32 %v2280, %v2288
        %v2297 = vsub.f32 %v2281, %v2291
        %v2298 = vsub.f32 %v2282, %v2294
        %v2299 = vmul.f32 %v2295, 1.442695
        %v2300 = vpow.pop %v2299
        %v2301 = vmul.f32 %v2296, 1.442695
        %v2302 = vpow.pop %v2301
        %v2303 = vmul.f32 %v2297, 1.442695
        %v2304 = vpow.pop %v2303
        %v2305 = vmul.f32 %v2298, 1.442695
        %v2306 = vpow.pop %v2305
        %v2307 = vsel %vm1669, %v2300, 0.0
        %2308 = vadd.xlane.f32.xlu0 %v2307
        %v2309 = vpop.xlane.xlu0 %2308
        %v2310 = vsel %vm1669, %v2302, 0.0
        %2311 = vadd.xlane.f32.xlu0 %v2310
        %v2312 = vpop.xlane.xlu0 %2311
        %v2313 = vsel %vm1669, %v2304, 0.0
        %2314 = vadd.xlane.f32.xlu0 %v2313
        %v2315 = vpop.xlane.xlu0 %2314
        %v2316 = vsel %vm1669, %v2306, 0.0
        %2317 = vadd.xlane.f32.xlu0 %v2316
        %v2318 = vpop.xlane.xlu0 %2317
        %v2319 = vrcp.pop %v2309
        %v2320 = vrcp.pop %v2312
        %v2321 = vrcp.pop %v2315
        %v2322 = vrcp.pop %v2318
        %v2323 = vmul.f32 %v2300, %v2319
        %v2324 = vmul.f32 %v2302, %v2320
        %v2325 = vmul.f32 %v2304, %v2321
        %v2326 = vmul.f32 %v2306, %v2322
        %s2327 = scalar_lea.vmem %s789, 32 [#allocation6]
        %2328 = vst.msk [vmem:[%s2327] sm:$0xff] %vm1669, %v2323
        %2329 = vst.msk [vmem:[%s2327 + $0x8] sm:$0xff] %vm1669, %v2324
        %2330 = vst.msk [vmem:[%s2327 + $0x10] sm:$0xff] %vm1669, %v2325
        %2331 = vst.msk [vmem:[%s2327 + $0x18] sm:$0xff] %vm1669, %v2326
        %2332 = vrot.lane.b32.xlu0 %v1912, 96
        %v2333 = vpop.permute.xlu0 %2332
        %2334 = vrot.lane.b32.xlu0 %v1913, 96
        %v2335 = vpop.permute.xlu0 %2334
        %2336 = vrot.lane.b32.xlu0 %v1914, 96
        %v2337 = vpop.permute.xlu0 %2336
        %v2341 = vsel %vm1669, %v2323, 0
        %v2344 = vsel %vm1669, %v2324, 0
        %v2347 = vsel %vm1669, %v2325, 0
        %v2350 = vsel %vm1669, %v2326, 0
        %v2352 = vsel %vm1738, %v2337, 0
        %2354 = vmatprep.subr.mxu0 0.0
        %2355 = vmatpush1.msra.mxu0 %v2333
        %2356 = vmatprep.subr.mxu0 0.0
        %2357 = vmatpush1.msra.mxu0 %v2335
        %2358 = vmatprep.subr.mxu0 0.0
        %2359 = vmatpush1.msra.mxu0 %v2352
        %2360 = vmatprep.subr.mxu0 0.0
        %2361 = vmatpush1.msra.mxu0 0.0
        %2362 = vmatprep.subr.mxu0 0.0
        %2363 = vmatpush1.msra.mxu0 0.0
        %2364 = vmatprep.subr.mxu0 0.0
        %2365 = vmatpush1.msra.mxu0 0.0
        %2366 = vmatprep.subr.mxu0 0.0
        %2367 = vmatpush1.msra.mxu0 0.0
        %2368 = vmatprep.subr.mxu0 0.0
        %2369 = vmatpush1.msra.mxu0 0.0
        %2370 = vmatprep.subr.mxu0 0.0
        %2371 = vmatpush1.msra.mxu0 0.0
        %2372 = vmatprep.subr.mxu0 0.0
        %2373 = vmatpush1.msra.mxu0 0.0
        %2374 = vmatprep.subr.mxu0 0.0
        %2375 = vmatpush1.msra.mxu0 0.0
        %2376 = vmatprep.subr.mxu0 0.0
        %2377 = vmatpush1.msra.mxu0 0.0
        %2378 = vmatprep.subr.mxu0 0.0
        %2379 = vmatpush1.msra.mxu0 0.0
        %2380 = vmatprep.subr.mxu0 0.0
        %2381 = vmatpush1.msra.mxu0 0.0
        %2382 = vmatprep.subr.mxu0 0.0
        %2383 = vmatpush1.msra.mxu0 0.0
        %2384 = vmatprep.subr.mxu0 0.0
        %2385 = vmatpush1.msra.mxu0 0.0
        %2386 = vmatprep.subr.mxu0 0.0
        %2387 = vmatpush1.msra.mxu0 0.0
        %2388 = vmatprep.subr.mxu0 0.0
        %2389 = vmatpush1.msra.mxu0 0.0
        %2390 = vmatprep.subr.mxu0 0.0
        %2391 = vmatpush1.msra.mxu0 0.0
        %2392 = vmatprep.subr.mxu0 0.0
        %2393 = vmatpush1.msra.mxu0 0.0
        %2394 = vmatprep.subr.mxu0 0.0
        %2395 = vmatpush1.msra.mxu0 0.0
        %2396 = vmatprep.subr.mxu0 0.0
        %2397 = vmatpush1.msra.mxu0 0.0
        %2398 = vmatprep.subr.mxu0 0.0
        %2399 = vmatpush1.msra.mxu0 0.0
        %2400 = vmatprep.subr.mxu0 0.0
        %2401 = vmatpush1.msra.mxu0 0.0
        %2402 = vmatprep.subr.mxu0 0.0
        %2403 = vmatpush1.msra.mxu0 0.0
        %2404 = vmatprep.subr.mxu0 0.0
        %2405 = vmatpush1.msra.mxu0 0.0
        %2406 = vmatprep.subr.mxu0 0.0
        %2407 = vmatpush1.msra.mxu0 0.0
        %2408 = vmatprep.subr.mxu0 0.0
        %2409 = vmatpush1.msra.mxu0 0.0
        %2410 = vmatprep.subr.mxu0 0.0
        %2411 = vmatpush1.msra.mxu0 0.0
        %2412 = vmatprep.subr.mxu0 0.0
        %2413 = vmatpush1.msra.mxu0 0.0
        %2414 = vmatprep.subr.mxu0 0.0
        %2415 = vmatpush1.msra.mxu0 0.0
        %2416 = vmatprep.subr.mxu0 0.0
        %2417 = vmatpush1.msra.mxu0 0.0
        %2418 = vmatprep.mubr.f32.mxu0 0.0
        %2419 = vmatmul.mubr.f32.gmra.mrb[0].mxu0 %v2341
        %v2420 = vpop.f32.mrb[0].mxu0
        %v2421 = vadd.f32 0.0, %v2420
        %v2422 = vpop.f32.mrb[0].mxu0
        %2423 = vmatprep.mubr.f32.mxu0 0.0
        %2424 = vmatmul.mubr.f32.gmra.mrb[0].mxu0 %v2344
        %v2425 = vpop.f32.mrb[0].mxu0
        %v2426 = vadd.f32 0.0, %v2425
        %v2427 = vpop.f32.mrb[0].mxu0
        %2428 = vmatprep.mubr.f32.mxu0 0.0
        %2429 = vmatmul.mubr.f32.gmra.mrb[0].mxu0 %v2347
        %v2430 = vpop.f32.mrb[0].mxu0
        %v2431 = vadd.f32 0.0, %v2430
        %v2432 = vpop.f32.mrb[0].mxu0
        %2433 = vmatprep.mubr.f32.mxu0 0.0
        %2434 = vmatmul.mubr.f32.gmra.mrb[0].mxu0 %v2350
        %v2435 = vpop.f32.mrb[0].mxu0
        %v2436 = vadd.f32 0.0, %v2435
        %v2437 = vpop.f32.mrb[0].mxu0
        %2438 = vdwg.mxu0
        %v2439 = vmul.f32 %v2421, %v870
        %v2440 = vmul.f32 %v2426, %v871
        %v2441 = vmul.f32 %v2431, %v872
        %v2442 = vmul.f32 %v2436, %v873
        %2443 = vmatprep.subr.mxu0 0.0
        %2444 = vmatpush1.msra.mxu0 %v2439
        %2445 = vmatprep.subr.mxu0 0.0
        %2446 = vmatpush1.msra.mxu0 %v2440
        %2447 = vmatprep.subr.mxu0 0.0
        %2448 = vmatpush1.msra.mxu0 %v2441
        %2449 = vmatprep.subr.mxu0 0.0
        %2450 = vmatpush1.msra.mxu0 %v2442
        %2451 = vmatprep.subr.mxu0 0.0
        %2452 = vmatpush1.msra.mxu0 0.0
        %2453 = vmatprep.subr.mxu0 0.0
        %2454 = vmatpush1.msra.mxu0 0.0
        %2455 = vmatprep.subr.mxu0 0.0
        %2456 = vmatpush1.msra.mxu0 0.0
        %2457 = vmatprep.subr.mxu0 0.0
        %2458 = vmatpush1.msra.mxu0 0.0
        %2459 = vmatprep.subr.mxu0 0.0
        %2460 = vmatpush1.msra.mxu0 0.0
        %2461 = vmatprep.subr.mxu0 0.0
        %2462 = vmatpush1.msra.mxu0 0.0
        %2463 = vmatprep.subr.mxu0 0.0
        %2464 = vmatpush1.msra.mxu0 0.0
        %2465 = vmatprep.subr.mxu0 0.0
        %2466 = vmatpush1.msra.mxu0 0.0
        %2467 = vmatprep.subr.mxu0 0.0
        %2468 = vmatpush1.msra.mxu0 0.0
        %2469 = vmatprep.subr.mxu0 0.0
        %2470 = vmatpush1.msra.mxu0 0.0
        %2471 = vmatprep.subr.mxu0 0.0
        %2472 = vmatpush1.msra.mxu0 0.0
        %2473 = vmatprep.subr.mxu0 0.0
        %2474 = vmatpush1.msra.mxu0 0.0
        %2475 = vmatprep.subr.mxu0 0.0
        %2476 = vmatpush1.msra.mxu0 0.0
        %2477 = vmatprep.subr.mxu0 0.0
        %2478 = vmatpush1.msra.mxu0 0.0
        %2479 = vmatprep.subr.mxu0 0.0
        %2480 = vmatpush1.msra.mxu0 0.0
        %2481 = vmatprep.subr.mxu0 0.0
        %2482 = vmatpush1.msra.mxu0 0.0
        %2483 = vmatprep.subr.mxu0 0.0
        %2484 = vmatpush1.msra.mxu0 0.0
        %2485 = vmatprep.subr.mxu0 0.0
        %2486 = vmatpush1.msra.mxu0 0.0
        %2487 = vmatprep.subr.mxu0 0.0
        %2488 = vmatpush1.msra.mxu0 0.0
        %2489 = vmatprep.subr.mxu0 0.0
        %2490 = vmatpush1.msra.mxu0 0.0
        %2491 = vmatprep.subr.mxu0 0.0
        %2492 = vmatpush1.msra.mxu0 0.0
        %2493 = vmatprep.subr.mxu0 0.0
        %2494 = vmatpush1.msra.mxu0 0.0
        %2495 = vmatprep.subr.mxu0 0.0
        %2496 = vmatpush1.msra.mxu0 0.0
        %2497 = vmatprep.subr.mxu0 0.0
        %2498 = vmatpush1.msra.mxu0 0.0
        %2499 = vmatprep.subr.mxu0 0.0
        %2500 = vmatpush1.msra.mxu0 0.0
        %2501 = vmatprep.subr.mxu0 0.0
        %2502 = vmatpush1.msra.mxu0 0.0
        %2503 = vmatprep.subr.mxu0 0.0
        %2504 = vmatpush1.msra.mxu0 0.0
        %2505 = vmatprep.subr.mxu0 0.0
        %2506 = vmatpush1.msra.mxu0 0.0
        %2507 = vmatprep.mubr.f32.mxu0 0.0
        %2508 = vmatmul.mubr.f32.gmra.mrb[0].mxu0 %v1831
        %v2509 = vpop.f32.mrb[0].mxu0
        %v2510 = vadd.f32 0.0, %v2509
        %v2511 = vpop.f32.mrb[0].mxu0
        %2512 = vdwg.mxu0
        %2513 = vst.msk [vmem:[#allocation3 + $0x8] sm:$0xff] %vm959, %v2510
        %v2514 = vld [vmem:[#allocation3] sm:$0xff]
        %v2515 = vld [vmem:[#allocation3 + $0x8] sm:$0xff]
        %2516 = vrot.lane.b32.xlu0 %v927, 32
        %v2517 = vpop.permute.xlu0 %2516
        %2518 = vrot.lane.b32.xlu0 %v928, 32
        %v2519 = vpop.permute.xlu0 %2518
        %2520 = vrot.lane.b32.xlu0 %v929, 32
        %v2521 = vpop.permute.xlu0 %2520
        %2522 = vrot.lane.b32.xlu0 %v930, 32
        %v2523 = vpop.permute.xlu0 %2522
        %v2529 = vsel %vm959, %v2514, 0
        %v2532 = vsel %vm959, %v2515, 0
        %2534 = vmatprep.subr.mxu0 0.0
        %2535 = vmatpush1.msra.mxu0 %v2517
        %2536 = vmatprep.subr.mxu0 0.0
        %2537 = vmatpush1.msra.mxu0 %v2519
        %2538 = vmatprep.subr.mxu0 0.0
        %2539 = vmatpush1.msra.mxu0 %v2521
        %2540 = vmatprep.subr.mxu0 0.0
        %2541 = vmatpush1.msra.mxu0 %v2523
        %2542 = vmatprep.subr.mxu0 0.0
        %2543 = vmatpush1.msra.mxu0 0.0
        %2544 = vmatprep.subr.mxu0 0.0
        %2545 = vmatpush1.msra.mxu0 0.0
        %2546 = vmatprep.subr.mxu0 0.0
        %2547 = vmatpush1.msra.mxu0 0.0
        %2548 = vmatprep.subr.mxu0 0.0
        %2549 = vmatpush1.msra.mxu0 0.0
        %2550 = vmatprep.subr.mxu0 0.0
        %2551 = vmatpush1.msra.mxu0 0.0
        %2552 = vmatprep.subr.mxu0 0.0
        %2553 = vmatpush1.msra.mxu0 0.0
        %2554 = vmatprep.subr.mxu0 0.0
        %2555 = vmatpush1.msra.mxu0 0.0
        %2556 = vmatprep.subr.mxu0 0.0
        %2557 = vmatpush1.msra.mxu0 0.0
        %2558 = vmatprep.subr.mxu0 0.0
        %2559 = vmatpush1.msra.mxu0 0.0
        %2560 = vmatprep.subr.mxu0 0.0
        %2561 = vmatpush1.msra.mxu0 0.0
        %2562 = vmatprep.subr.mxu0 0.0
        %2563 = vmatpush1.msra.mxu0 0.0
        %2564 = vmatprep.subr.mxu0 0.0
        %2565 = vmatpush1.msra.mxu0 0.0
        %2566 = vmatprep.subr.mxu0 0.0
        %2567 = vmatpush1.msra.mxu0 0.0
        %2568 = vmatprep.subr.mxu0 0.0
        %2569 = vmatpush1.msra.mxu0 0.0
        %2570 = vmatprep.subr.mxu0 0.0
        %2571 = vmatpush1.msra.mxu0 0.0
        %2572 = vmatprep.subr.mxu0 0.0
        %2573 = vmatpush1.msra.mxu0 0.0
        %2574 = vmatprep.subr.mxu0 0.0
        %2575 = vmatpush1.msra.mxu0 0.0
        %2576 = vmatprep.subr.mxu0 0.0
        %2577 = vmatpush1.msra.mxu0 0.0
        %2578 = vmatprep.subr.mxu0 0.0
        %2579 = vmatpush1.msra.mxu0 0.0
        %2580 = vmatprep.subr.mxu0 0.0
        %2581 = vmatpush1.msra.mxu0 0.0
        %2582 = vmatprep.subr.mxu0 0.0
        %2583 = vmatpush1.msra.mxu0 0.0
        %2584 = vmatprep.subr.mxu0 0.0
        %2585 = vmatpush1.msra.mxu0 0.0
        %2586 = vmatprep.subr.mxu0 0.0
        %2587 = vmatpush1.msra.mxu0 0.0
        %2588 = vmatprep.subr.mxu0 0.0
        %2589 = vmatpush1.msra.mxu0 0.0
        %2590 = vmatprep.subr.mxu0 0.0
        %2591 = vmatpush1.msra.mxu0 0.0
        %2592 = vmatprep.subr.mxu0 0.0
        %2593 = vmatpush1.msra.mxu0 0.0
        %2594 = vmatprep.subr.mxu0 0.0
        %2595 = vmatpush1.msra.mxu0 0.0
        %2596 = vmatprep.subr.mxu0 0.0
        %2597 = vmatpush1.msra.mxu0 0.0
        %2598 = vmatprep.mubr.f32.mxu0 0.0
        %2599 = vmatmul.mubr.f32.gmra.mrb[0].mxu0 %v2529
        %v2600 = vpop.f32.mrb[0].mxu0
        %v2601 = vadd.f32 %v997, %v2600
        %v2602 = vpop.f32.mrb[0].mxu0
        %2603 = vmatprep.mubr.f32.mxu0 0.0
        %2604 = vmatmul.mubr.f32.gmra.mrb[0].mxu0 %v2532
        %v2605 = vpop.f32.mrb[0].mxu0
        %v2606 = vadd.f32 %v998, %v2605
        %v2607 = vpop.f32.mrb[0].mxu0
        %2608 = vdwg.mxu0
        %v2609 = vsel %vm959, %v2601, 0.0
        %2610 = vadd.xlane.f32.xlu0 %v2609
        %v2611 = vpop.xlane.xlu0 %2610
        %v2612 = vsel %vm959, %v2606, 0.0
        %2613 = vadd.xlane.f32.xlu0 %v2612
        %v2614 = vpop.xlane.xlu0 %2613
        %v2615 = vmul.f32 %v2611, %v966
        %v2616 = vmul.f32 %v2614, %v966
        %v2617 = vsub.f32 %v2601, %v2615
        %v2618 = vsub.f32 %v2606, %v2616
        %v2619 = vmul.f32 %v2617, %v2617
        %v2620 = vmul.f32 %v2618, %v2618
        %v2621 = vsel %vm959, %v2619, 0.0
        %2622 = vadd.xlane.f32.xlu0 %v2621
        %v2623 = vpop.xlane.xlu0 %2622
        %v2624 = vsel %vm959, %v2620, 0.0
        %2625 = vadd.xlane.f32.xlu0 %v2624
        %v2626 = vpop.xlane.xlu0 %2625
        %v2627 = vmul.f32 %v2623, %v966
        %v2628 = vmul.f32 %v2626, %v966
        %v2629 = vadd.f32 %v2627, 1e-05
        %v2630 = vadd.f32 %v2628, 1e-05
        %v2631 = vrsqrt.pop %v2629
        %v2632 = vrsqrt.pop %v2630
        %v2633 = vmul.f32 %v2617, %v2631
        %v2634 = vmul.f32 %v2618, %v2632
        %v2635 = vlaneseq
        %v2636 = vshrl.u32 %v2635, 7
        %v2637 = vsub.s32 0, %v2636
        %v2638 = vrot.slane %v937, %v2637
        %v2639 = vmul.f32 %v2633, %v2638
        %v2640 = vmul.f32 %v2634, %v2638
        %v2641 = vlaneseq
        %v2642 = vshrl.u32 %v2641, 7
        %v2643 = vsub.s32 0, %v2642
        %v2644 = vrot.slane %v938, %v2643
        %v2645 = vadd.f32 %v2639, %v2644
        %v2646 = vadd.f32 %v2640, %v2644
        %v2647 = vadd.f32 %v2645, %v925
        %v2648 = vadd.f32 %v2646, %v926
        %v2649 = vsel %vm959, %v2647, 0.0
        %2650 = vadd.xlane.f32.xlu0 %v2649
        %v2651 = vpop.xlane.xlu0 %2650
        %v2652 = vsel %vm959, %v2648, 0.0
        %2653 = vadd.xlane.f32.xlu0 %v2652
        %v2654 = vpop.xlane.xlu0 %2653
        %v2655 = vmul.f32 %v2651, %v966
        %v2656 = vmul.f32 %v2654, %v966
        %v2657 = vsub.f32 %v2647, %v2655
        %v2658 = vsub.f32 %v2648, %v2656
        %v2659 = vmul.f32 %v2657, %v2657
        %v2660 = vmul.f32 %v2658, %v2658
        %v2661 = vsel %vm959, %v2659, 0.0
        %2662 = vadd.xlane.f32.xlu0 %v2661
        %v2663 = vpop.xlane.xlu0 %2662
        %v2664 = vsel %vm959, %v2660, 0.0
        %2665 = vadd.xlane.f32.xlu0 %v2664
        %v2666 = vpop.xlane.xlu0 %2665
        %v2667 = vmul.f32 %v2663, %v966
        %v2668 = vmul.f32 %v2666, %v966
        %v2669 = vadd.f32 %v2667, 1e-05
        %v2670 = vadd.f32 %v2668, 1e-05
        %v2671 = vrsqrt.pop %v2669
        %v2672 = vrsqrt.pop %v2670
        %v2673 = vmul.f32 %v2657, %v2671
        %v2674 = vmul.f32 %v2658, %v2672
        %v2675 = vlaneseq
        %v2676 = vshrl.u32 %v2675, 7
        %v2677 = vsub.s32 0, %v2676
        %v2678 = vrot.slane %v939, %v2677
        %v2679 = vmul.f32 %v2673, %v2678
        %v2680 = vmul.f32 %v2674, %v2678
        %v2681 = vlaneseq
        %v2682 = vshrl.u32 %v2681, 7
        %v2683 = vsub.s32 0, %v2682
        %v2684 = vrot.slane %v940, %v2683
        %v2685 = vadd.f32 %v2679, %v2684
        %v2686 = vadd.f32 %v2680, %v2684
        %v2688 = vlaneseq
        %v2689 = vshrl.u32 %v2688, 7
        %v2690 = vsub.s32 0, %v2689
        %v2691 = vrot.slane %v945, %v2690
        %v2694 = vsel %vm959, %v2685, 0
        %v2697 = vsel %vm959, %v2686, 0
        %2699 = vmatprep.subr.mxu0 0.0
        %2700 = vmatpush1.msra.mxu0 %v941
        %2701 = vmatprep.subr.mxu0 0.0
        %2702 = vmatpush1.msra.mxu0 %v942
        %2703 = vmatprep.subr.mxu0 0.0
        %2704 = vmatpush1.msra.mxu0 %v943
        %2705 = vmatprep.subr.mxu0 0.0
        %2706 = vmatpush1.msra.mxu0 %v944
        %2707 = vmatprep.subr.mxu0 0.0
        %2708 = vmatpush1.msra.mxu0 0.0
        %2709 = vmatprep.subr.mxu0 0.0
        %2710 = vmatpush1.msra.mxu0 0.0
        %2711 = vmatprep.subr.mxu0 0.0
        %2712 = vmatpush1.msra.mxu0 0.0
        %2713 = vmatprep.subr.mxu0 0.0
        %2714 = vmatpush1.msra.mxu0 0.0
        %2715 = vmatprep.subr.mxu0 0.0
        %2716 = vmatpush1.msra.mxu0 0.0
        %2717 = vmatprep.subr.mxu0 0.0
        %2718 = vmatpush1.msra.mxu0 0.0
        %2719 = vmatprep.subr.mxu0 0.0
        %2720 = vmatpush1.msra.mxu0 0.0
        %2721 = vmatprep.subr.mxu0 0.0
        %2722 = vmatpush1.msra.mxu0 0.0
        %2723 = vmatprep.subr.mxu0 0.0
        %2724 = vmatpush1.msra.mxu0 0.0
        %2725 = vmatprep.subr.mxu0 0.0
        %2726 = vmatpush1.msra.mxu0 0.0
        %2727 = vmatprep.subr.mxu0 0.0
        %2728 = vmatpush1.msra.mxu0 0.0
        %2729 = vmatprep.subr.mxu0 0.0
        %2730 = vmatpush1.msra.mxu0 0.0
        %2731 = vmatprep.subr.mxu0 0.0
        %2732 = vmatpush1.msra.mxu0 0.0
        %2733 = vmatprep.subr.mxu0 0.0
        %2734 = vmatpush1.msra.mxu0 0.0
        %2735 = vmatprep.subr.mxu0 0.0
        %2736 = vmatpush1.msra.mxu0 0.0
        %2737 = vmatprep.subr.mxu0 0.0
        %2738 = vmatpush1.msra.mxu0 0.0
        %2739 = vmatprep.subr.mxu0 0.0
        %2740 = vmatpush1.msra.mxu0 0.0
        %2741 = vmatprep.subr.mxu0 0.0
        %2742 = vmatpush1.msra.mxu0 0.0
        %2743 = vmatprep.subr.mxu0 0.0
        %2744 = vmatpush1.msra.mxu0 0.0
        %2745 = vmatprep.subr.mxu0 0.0
        %2746 = vmatpush1.msra.mxu0 0.0
        %2747 = vmatprep.subr.mxu0 0.0
        %2748 = vmatpush1.msra.mxu0 0.0
        %2749 = vmatprep.subr.mxu0 0.0
        %2750 = vmatpush1.msra.mxu0 0.0
        %2751 = vmatprep.subr.mxu0 0.0
        %2752 = vmatpush1.msra.mxu0 0.0
        %2753 = vmatprep.subr.mxu0 0.0
        %2754 = vmatpush1.msra.mxu0 0.0
        %2755 = vmatprep.subr.mxu0 0.0
        %2756 = vmatpush1.msra.mxu0 0.0
        %2757 = vmatprep.subr.mxu0 0.0
        %2758 = vmatpush1.msra.mxu0 0.0
        %2759 = vmatprep.subr.mxu0 0.0
        %2760 = vmatpush1.msra.mxu0 0.0
        %2761 = vmatprep.subr.mxu0 0.0
        %2762 = vmatpush1.msra.mxu0 0.0
        %2763 = vmatprep.mubr.f32.mxu0 0.0
        %2764 = vmatmul.mubr.f32.gmra.mrb[0].mxu0 %v2694
        %v2765 = vpop.f32.mrb[0].mxu0
        %v2766 = vadd.f32 %v2691, %v2765
        %v2767 = vpop.f32.mrb[0].mxu0
        %2768 = vmatprep.mubr.f32.mxu0 0.0
        %2769 = vmatmul.mubr.f32.gmra.mrb[0].mxu0 %v2697
        %v2770 = vpop.f32.mrb[0].mxu0
        %v2771 = vadd.f32 %v2691, %v2770
        %v2772 = vpop.f32.mrb[0].mxu0
        %2773 = vdwg.mxu0
        %v2774 = vmul.f32 %v2766, 0.5
        %v2775 = vmul.f32 %v2771, 0.5
        %v2776 = vmul.f32 %v2766, 0.70710677
        %v2777 = vmul.f32 %v2771, 0.70710677
        %v2778 = verf.f32.pop %v2776
        %v2779 = verf.f32.pop %v2777
        %v2780 = vadd.f32 %v2778, 1.0
        %v2781 = vadd.f32 %v2779, 1.0
        %v2782 = vmul.f32 %v2774, %v2780
        %v2783 = vmul.f32 %v2775, %v2781
        %v2785 = vlaneseq
        %v2786 = vshrl.u32 %v2785, 7
        %v2787 = vsub.s32 0, %v2786
        %v2788 = vrot.slane %v954, %v2787
        %v2791 = vsel %vm1254, %v2782, 0
        %v2794 = vsel %vm1254, %v2783, 0
        %2796 = vmatprep.subr.mxu0 0.0
        %2797 = vmatpush1.msra.mxu0 %v946
        %2798 = vmatprep.subr.mxu0 0.0
        %2799 = vmatpush1.msra.mxu0 %v947
        %2800 = vmatprep.subr.mxu0 0.0
        %2801 = vmatpush1.msra.mxu0 %v948
        %2802 = vmatprep.subr.mxu0 0.0
        %2803 = vmatpush1.msra.mxu0 %v949
        %2804 = vmatprep.subr.mxu0 0.0
        %2805 = vmatpush1.msra.mxu0 %v950
        %2806 = vmatprep.subr.mxu0 0.0
        %2807 = vmatpush1.msra.mxu0 %v951
        %2808 = vmatprep.subr.mxu0 0.0
        %2809 = vmatpush1.msra.mxu0 %v952
        %2810 = vmatprep.subr.mxu0 0.0
        %2811 = vmatpush1.msra.mxu0 %v953
        %2812 = vmatprep.subr.mxu0 0.0
        %2813 = vmatpush1.msra.mxu0 0.0
        %2814 = vmatprep.subr.mxu0 0.0
        %2815 = vmatpush1.msra.mxu0 0.0
        %2816 = vmatprep.subr.mxu0 0.0
        %2817 = vmatpush1.msra.mxu0 0.0
        %2818 = vmatprep.subr.mxu0 0.0
        %2819 = vmatpush1.msra.mxu0 0.0
        %2820 = vmatprep.subr.mxu0 0.0
        %2821 = vmatpush1.msra.mxu0 0.0
        %2822 = vmatprep.subr.mxu0 0.0
        %2823 = vmatpush1.msra.mxu0 0.0
        %2824 = vmatprep.subr.mxu0 0.0
        %2825 = vmatpush1.msra.mxu0 0.0
        %2826 = vmatprep.subr.mxu0 0.0
        %2827 = vmatpush1.msra.mxu0 0.0
        %2828 = vmatprep.subr.mxu0 0.0
        %2829 = vmatpush1.msra.mxu0 0.0
        %2830 = vmatprep.subr.mxu0 0.0
        %2831 = vmatpush1.msra.mxu0 0.0
        %2832 = vmatprep.subr.mxu0 0.0
        %2833 = vmatpush1.msra.mxu0 0.0
        %2834 = vmatprep.subr.mxu0 0.0
        %2835 = vmatpush1.msra.mxu0 0.0
        %2836 = vmatprep.subr.mxu0 0.0
        %2837 = vmatpush1.msra.mxu0 0.0
        %2838 = vmatprep.subr.mxu0 0.0
        %2839 = vmatpush1.msra.mxu0 0.0
        %2840 = vmatprep.subr.mxu0 0.0
        %2841 = vmatpush1.msra.mxu0 0.0
        %2842 = vmatprep.subr.mxu0 0.0
        %2843 = vmatpush1.msra.mxu0 0.0
        %2844 = vmatprep.subr.mxu0 0.0
        %2845 = vmatpush1.msra.mxu0 0.0
        %2846 = vmatprep.subr.mxu0 0.0
        %2847 = vmatpush1.msra.mxu0 0.0
        %2848 = vmatprep.subr.mxu0 0.0
        %2849 = vmatpush1.msra.mxu0 0.0
        %2850 = vmatprep.subr.mxu0 0.0
        %2851 = vmatpush1.msra.mxu0 0.0
        %2852 = vmatprep.subr.mxu0 0.0
        %2853 = vmatpush1.msra.mxu0 0.0
        %2854 = vmatprep.subr.mxu0 0.0
        %2855 = vmatpush1.msra.mxu0 0.0
        %2856 = vmatprep.subr.mxu0 0.0
        %2857 = vmatpush1.msra.mxu0 0.0
        %2858 = vmatprep.subr.mxu0 0.0
        %2859 = vmatpush1.msra.mxu0 0.0
        %2860 = vmatprep.mubr.f32.mxu0 0.0
        %2861 = vmatmul.mubr.f32.gmra.mrb[0].mxu0 %v2791
        %v2862 = vpop.f32.mrb[0].mxu0
        %v2863 = vadd.f32 %v2788, %v2862
        %v2864 = vpop.f32.mrb[0].mxu0
        %2865 = vmatprep.mubr.f32.mxu0 0.0
        %2866 = vmatmul.mubr.f32.gmra.mrb[0].mxu0 %v2794
        %v2867 = vpop.f32.mrb[0].mxu0
        %v2868 = vadd.f32 %v2788, %v2867
        %v2869 = vpop.f32.mrb[0].mxu0
        %2870 = vdwg.mxu0
        %v2871 = vadd.f32 %v2863, %v2647
        %v2872 = vadd.f32 %v2868, %v2648
        %v2874 = vsel %vm959, %v2645, 0
        %v2877 = vsel %vm959, %v2646, 0
        %2879 = vmatprep.subr.mxu0 0.0
        %2880 = vmatpush1.msra.mxu0 %v931
        %2881 = vmatprep.subr.mxu0 0.0
        %2882 = vmatpush1.msra.mxu0 %v932
        %2883 = vmatprep.subr.mxu0 0.0
        %2884 = vmatpush1.msra.mxu0 %v933
        %2885 = vmatprep.subr.mxu0 0.0
        %2886 = vmatpush1.msra.mxu0 %v934
        %2887 = vmatprep.subr.mxu0 0.0
        %2888 = vmatpush1.msra.mxu0 0.0
        %2889 = vmatprep.subr.mxu0 0.0
        %2890 = vmatpush1.msra.mxu0 0.0
        %2891 = vmatprep.subr.mxu0 0.0
        %2892 = vmatpush1.msra.mxu0 0.0
        %2893 = vmatprep.subr.mxu0 0.0
        %2894 = vmatpush1.msra.mxu0 0.0
        %2895 = vmatprep.subr.mxu0 0.0
        %2896 = vmatpush1.msra.mxu0 0.0
        %2897 = vmatprep.subr.mxu0 0.0
        %2898 = vmatpush1.msra.mxu0 0.0
        %2899 = vmatprep.subr.mxu0 0.0
        %2900 = vmatpush1.msra.mxu0 0.0
        %2901 = vmatprep.subr.mxu0 0.0
        %2902 = vmatpush1.msra.mxu0 0.0
        %2903 = vmatprep.subr.mxu0 0.0
        %2904 = vmatpush1.msra.mxu0 0.0
        %2905 = vmatprep.subr.mxu0 0.0
        %2906 = vmatpush1.msra.mxu0 0.0
        %2907 = vmatprep.subr.mxu0 0.0
        %2908 = vmatpush1.msra.mxu0 0.0
        %2909 = vmatprep.subr.mxu0 0.0
        %2910 = vmatpush1.msra.mxu0 0.0
        %2911 = vmatprep.subr.mxu0 0.0
        %2912 = vmatpush1.msra.mxu0 0.0
        %2913 = vmatprep.subr.mxu0 0.0
        %2914 = vmatpush1.msra.mxu0 0.0
        %2915 = vmatprep.subr.mxu0 0.0
        %2916 = vmatpush1.msra.mxu0 0.0
        %2917 = vmatprep.subr.mxu0 0.0
        %2918 = vmatpush1.msra.mxu0 0.0
        %2919 = vmatprep.subr.mxu0 0.0
        %2920 = vmatpush1.msra.mxu0 0.0
        %2921 = vmatprep.subr.mxu0 0.0
        %2922 = vmatpush1.msra.mxu0 0.0
        %2923 = vmatprep.subr.mxu0 0.0
        %2924 = vmatpush1.msra.mxu0 0.0
        %2925 = vmatprep.subr.mxu0 0.0
        %2926 = vmatpush1.msra.mxu0 0.0
        %2927 = vmatprep.subr.mxu0 0.0
        %2928 = vmatpush1.msra.mxu0 0.0
        %2929 = vmatprep.subr.mxu0 0.0
        %2930 = vmatpush1.msra.mxu0 0.0
        %2931 = vmatprep.subr.mxu0 0.0
        %2932 = vmatpush1.msra.mxu0 0.0
        %2933 = vmatprep.subr.mxu0 0.0
        %2934 = vmatpush1.msra.mxu0 0.0
        %2935 = vmatprep.subr.mxu0 0.0
        %2936 = vmatpush1.msra.mxu0 0.0
        %2937 = vmatprep.subr.mxu0 0.0
        %2938 = vmatpush1.msra.mxu0 0.0
        %2939 = vmatprep.subr.mxu0 0.0
        %2940 = vmatpush1.msra.mxu0 0.0
        %2941 = vmatprep.subr.mxu0 0.0
        %2942 = vmatpush1.msra.mxu0 0.0
        %2943 = vmatprep.mubr.f32.mxu0 0.0
        %2944 = vmatmul.mubr.f32.gmra.mrb[0].mxu0 %v2874
        %v2945 = vpop.f32.mrb[0].mxu0
        %v2946 = vadd.f32 0.0, %v2945
        %v2947 = vpop.f32.mrb[0].mxu0
        %2948 = vmatprep.mubr.f32.mxu0 0.0
        %2949 = vmatmul.mubr.f32.gmra.mrb[0].mxu0 %v2877
        %v2950 = vpop.f32.mrb[0].mxu0
        %v2951 = vadd.f32 0.0, %v2950
        %v2952 = vpop.f32.mrb[0].mxu0
        %2953 = vdwg.mxu0
        %2958 = vrot.lane.b32.xlu0 %v931, 96
        %v2959 = vpop.permute.xlu0 %2958
        %2960 = vrot.lane.b32.xlu0 %v932, 96
        %v2961 = vpop.permute.xlu0 %2960
        %2962 = vrot.lane.b32.xlu0 %v933, 96
        %v2963 = vpop.permute.xlu0 %2962
        %2964 = vrot.lane.b32.xlu0 %v934, 96
        %v2965 = vpop.permute.xlu0 %2964
        %2970 = vmatprep.subr.mxu0 0.0
        %2971 = vmatpush1.msra.mxu0 %v2959
        %2972 = vmatprep.subr.mxu0 0.0
        %2973 = vmatpush1.msra.mxu0 %v2961
        %2974 = vmatprep.subr.mxu0 0.0
        %2975 = vmatpush1.msra.mxu0 %v2963
        %2976 = vmatprep.subr.mxu0 0.0
        %2977 = vmatpush1.msra.mxu0 %v2965
        %2978 = vmatprep.subr.mxu0 0.0
        %2979 = vmatpush1.msra.mxu0 0.0
        %2980 = vmatprep.subr.mxu0 0.0
        %2981 = vmatpush1.msra.mxu0 0.0
        %2982 = vmatprep.subr.mxu0 0.0
        %2983 = vmatpush1.msra.mxu0 0.0
        %2984 = vmatprep.subr.mxu0 0.0
        %2985 = vmatpush1.msra.mxu0 0.0
        %2986 = vmatprep.subr.mxu0 0.0
        %2987 = vmatpush1.msra.mxu0 0.0
        %2988 = vmatprep.subr.mxu0 0.0
        %2989 = vmatpush1.msra.mxu0 0.0
        %2990 = vmatprep.subr.mxu0 0.0
        %2991 = vmatpush1.msra.mxu0 0.0
        %2992 = vmatprep.subr.mxu0 0.0
        %2993 = vmatpush1.msra.mxu0 0.0
        %2994 = vmatprep.subr.mxu0 0.0
        %2995 = vmatpush1.msra.mxu0 0.0
        %2996 = vmatprep.subr.mxu0 0.0
        %2997 = vmatpush1.msra.mxu0 0.0
        %2998 = vmatprep.subr.mxu0 0.0
        %2999 = vmatpush1.msra.mxu0 0.0
        %3000 = vmatprep.subr.mxu0 0.0
        %3001 = vmatpush1.msra.mxu0 0.0
        %3002 = vmatprep.subr.mxu0 0.0
        %3003 = vmatpush1.msra.mxu0 0.0
        %3004 = vmatprep.subr.mxu0 0.0
        %3005 = vmatpush1.msra.mxu0 0.0
        %3006 = vmatprep.subr.mxu0 0.0
        %3007 = vmatpush1.msra.mxu0 0.0
        %3008 = vmatprep.subr.mxu0 0.0
        %3009 = vmatpush1.msra.mxu0 0.0
        %3010 = vmatprep.subr.mxu0 0.0
        %3011 = vmatpush1.msra.mxu0 0.0
        %3012 = vmatprep.subr.mxu0 0.0
        %3013 = vmatpush1.msra.mxu0 0.0
        %3014 = vmatprep.subr.mxu0 0.0
        %3015 = vmatpush1.msra.mxu0 0.0
        %3016 = vmatprep.subr.mxu0 0.0
        %3017 = vmatpush1.msra.mxu0 0.0
        %3018 = vmatprep.subr.mxu0 0.0
        %3019 = vmatpush1.msra.mxu0 0.0
        %3020 = vmatprep.subr.mxu0 0.0
        %3021 = vmatpush1.msra.mxu0 0.0
        %3022 = vmatprep.subr.mxu0 0.0
        %3023 = vmatpush1.msra.mxu0 0.0
        %3024 = vmatprep.subr.mxu0 0.0
        %3025 = vmatpush1.msra.mxu0 0.0
        %3026 = vmatprep.subr.mxu0 0.0
        %3027 = vmatpush1.msra.mxu0 0.0
        %3028 = vmatprep.subr.mxu0 0.0
        %3029 = vmatpush1.msra.mxu0 0.0
        %3030 = vmatprep.subr.mxu0 0.0
        %3031 = vmatpush1.msra.mxu0 0.0
        %3032 = vmatprep.subr.mxu0 0.0
        %3033 = vmatpush1.msra.mxu0 0.0
        %3034 = vmatprep.mubr.f32.mxu0 0.0
        %3035 = vmatmul.mubr.f32.gmra.mrb[0].mxu0 %v1099
        %v3036 = vpop.f32.mrb[0].mxu0
        %v3037 = vadd.f32 0.0, %v3036
        %v3038 = vpop.f32.mrb[0].mxu0
        %3039 = vmatprep.mubr.f32.mxu0 0.0
        %3040 = vmatmul.mubr.f32.gmra.mrb[0].mxu0 %v1102
        %v3041 = vpop.f32.mrb[0].mxu0
        %v3042 = vadd.f32 0.0, %v3041
        %v3043 = vpop.f32.mrb[0].mxu0
        %3044 = vdwg.mxu0
        %v3046 = vsel %vm959, %v958, 0
        %3048 = vmatprep.subr.mxu0 0.0
        %3049 = vmatpush1.msra.mxu0 %v2959
        %3050 = vmatprep.subr.mxu0 0.0
        %3051 = vmatpush1.msra.mxu0 %v2961
        %3052 = vmatprep.subr.mxu0 0.0
        %3053 = vmatpush1.msra.mxu0 %v2963
        %3054 = vmatprep.subr.mxu0 0.0
        %3055 = vmatpush1.msra.mxu0 %v2965
        %3056 = vmatprep.subr.mxu0 0.0
        %3057 = vmatpush1.msra.mxu0 0.0
        %3058 = vmatprep.subr.mxu0 0.0
        %3059 = vmatpush1.msra.mxu0 0.0
        %3060 = vmatprep.subr.mxu0 0.0
        %3061 = vmatpush1.msra.mxu0 0.0
        %3062 = vmatprep.subr.mxu0 0.0
        %3063 = vmatpush1.msra.mxu0 0.0
        %3064 = vmatprep.subr.mxu0 0.0
        %3065 = vmatpush1.msra.mxu0 0.0
        %3066 = vmatprep.subr.mxu0 0.0
        %3067 = vmatpush1.msra.mxu0 0.0
        %3068 = vmatprep.subr.mxu0 0.0
        %3069 = vmatpush1.msra.mxu0 0.0
        %3070 = vmatprep.subr.mxu0 0.0
        %3071 = vmatpush1.msra.mxu0 0.0
        %3072 = vmatprep.subr.mxu0 0.0
        %3073 = vmatpush1.msra.mxu0 0.0
        %3074 = vmatprep.subr.mxu0 0.0
        %3075 = vmatpush1.msra.mxu0 0.0
        %3076 = vmatprep.subr.mxu0 0.0
        %3077 = vmatpush1.msra.mxu0 0.0
        %3078 = vmatprep.subr.mxu0 0.0
        %3079 = vmatpush1.msra.mxu0 0.0
        %3080 = vmatprep.subr.mxu0 0.0
        %3081 = vmatpush1.msra.mxu0 0.0
        %3082 = vmatprep.subr.mxu0 0.0
        %3083 = vmatpush1.msra.mxu0 0.0
        %3084 = vmatprep.subr.mxu0 0.0
        %3085 = vmatpush1.msra.mxu0 0.0
        %3086 = vmatprep.subr.mxu0 0.0
        %3087 = vmatpush1.msra.mxu0 0.0
        %3088 = vmatprep.subr.mxu0 0.0
        %3089 = vmatpush1.msra.mxu0 0.0
        %3090 = vmatprep.subr.mxu0 0.0
        %3091 = vmatpush1.msra.mxu0 0.0
        %3092 = vmatprep.subr.mxu0 0.0
        %3093 = vmatpush1.msra.mxu0 0.0
        %3094 = vmatprep.subr.mxu0 0.0
        %3095 = vmatpush1.msra.mxu0 0.0
        %3096 = vmatprep.subr.mxu0 0.0
        %3097 = vmatpush1.msra.mxu0 0.0
        %3098 = vmatprep.subr.mxu0 0.0
        %3099 = vmatpush1.msra.mxu0 0.0
        %3100 = vmatprep.subr.mxu0 0.0
        %3101 = vmatpush1.msra.mxu0 0.0
        %3102 = vmatprep.subr.mxu0 0.0
        %3103 = vmatpush1.msra.mxu0 0.0
        %3104 = vmatprep.subr.mxu0 0.0
        %3105 = vmatpush1.msra.mxu0 0.0
        %3106 = vmatprep.subr.mxu0 0.0
        %3107 = vmatpush1.msra.mxu0 0.0
        %3108 = vmatprep.subr.mxu0 0.0
        %3109 = vmatpush1.msra.mxu0 0.0
        %3110 = vmatprep.subr.mxu0 0.0
        %3111 = vmatpush1.msra.mxu0 0.0
        %3112 = vmatprep.mubr.f32.mxu0 0.0
        %3113 = vmatmul.mubr.f32.gmra.mrb[0].mxu0 %v3046
        %v3114 = vpop.f32.mrb[0].mxu0
        %v3115 = vadd.f32 0.0, %v3114
        %v3116 = vpop.f32.mrb[0].mxu0
        %3117 = vdwg.mxu0
        %3118 = vmatprep.subr.mxu0 0.0
        %3119 = vmatpush1.msra.mxu0 %v2946
        %3120 = vmatprep.subr.mxu0 0.0
        %3121 = vmatpush1.msra.mxu0 0.0
        %3122 = vmatprep.subr.mxu0 0.0
        %3123 = vmatpush1.msra.mxu0 0.0
        %3124 = vmatprep.subr.mxu0 0.0
        %3125 = vmatpush1.msra.mxu0 0.0
        %3126 = vmatprep.subr.mxu0 0.0
        %3127 = vmatpush1.msra.mxu0 0.0
        %3128 = vmatprep.subr.mxu0 0.0
        %3129 = vmatpush1.msra.mxu0 0.0
        %3130 = vmatprep.subr.mxu0 0.0
        %3131 = vmatpush1.msra.mxu0 0.0
        %3132 = vmatprep.subr.mxu0 0.0
        %3133 = vmatpush1.msra.mxu0 0.0
        %3134 = vmatprep.subr.mxu0 0.0
        %3135 = vmatpush1.msra.mxu0 0.0
        %3136 = vmatprep.subr.mxu0 0.0
        %3137 = vmatpush1.msra.mxu0 0.0
        %3138 = vmatprep.subr.mxu0 0.0
        %3139 = vmatpush1.msra.mxu0 0.0
        %3140 = vmatprep.subr.mxu0 0.0
        %3141 = vmatpush1.msra.mxu0 0.0
        %3142 = vmatprep.subr.mxu0 0.0
        %3143 = vmatpush1.msra.mxu0 0.0
        %3144 = vmatprep.subr.mxu0 0.0
        %3145 = vmatpush1.msra.mxu0 0.0
        %3146 = vmatprep.subr.mxu0 0.0
        %3147 = vmatpush1.msra.mxu0 0.0
        %3148 = vmatprep.subr.mxu0 0.0
        %3149 = vmatpush1.msra.mxu0 0.0
        %3150 = vmatprep.subr.mxu0 0.0
        %3151 = vmatpush1.msra.mxu0 0.0
        %3152 = vmatprep.subr.mxu0 0.0
        %3153 = vmatpush1.msra.mxu0 0.0
        %3154 = vmatprep.subr.mxu0 0.0
        %3155 = vmatpush1.msra.mxu0 0.0
        %3156 = vmatprep.subr.mxu0 0.0
        %3157 = vmatpush1.msra.mxu0 0.0
        %3158 = vmatprep.subr.mxu0 0.0
        %3159 = vmatpush1.msra.mxu0 0.0
        %3160 = vmatprep.subr.mxu0 0.0
        %3161 = vmatpush1.msra.mxu0 0.0
        %3162 = vmatprep.subr.mxu0 0.0
        %3163 = vmatpush1.msra.mxu0 0.0
        %3164 = vmatprep.subr.mxu0 0.0
        %3165 = vmatpush1.msra.mxu0 0.0
        %3166 = vmatprep.subr.mxu0 0.0
        %3167 = vmatpush1.msra.mxu0 0.0
        %3168 = vmatprep.subr.mxu0 0.0
        %3169 = vmatpush1.msra.mxu0 0.0
        %3170 = vmatprep.subr.mxu0 0.0
        %3171 = vmatpush1.msra.mxu0 0.0
        %3172 = vmatprep.subr.mxu0 0.0
        %3173 = vmatpush1.msra.mxu0 0.0
        %3174 = vmatprep.subr.mxu0 0.0
        %3175 = vmatpush1.msra.mxu0 0.0
        %3176 = vmatprep.subr.mxu0 0.0
        %3177 = vmatpush1.msra.mxu0 0.0
        %3178 = vmatprep.subr.mxu0 0.0
        %3179 = vmatpush1.msra.mxu0 0.0
        %3180 = vmatprep.subr.mxu0 0.0
        %3181 = vmatpush1.msra.mxu0 0.0
        %3182 = vmatprep.mubr.f32.mxu0 0.0
        %3183 = vmatmul.mubr.f32.gmra.mrb[0].mxu0 %v1266
        %v3184 = vpop.f32.mrb[0].mxu0
        %v3185 = vadd.f32 0.0, %v3184
        %v3186 = vpop.f32.mrb[0].mxu0
        %3187 = vmatprep.mubr.f32.mxu0 0.0
        %3188 = vmatmul.mubr.f32.gmra.mrb[0].mxu0 %v1269
        %v3189 = vpop.f32.mrb[0].mxu0
        %v3190 = vadd.f32 0.0, %v3189
        %v3191 = vpop.f32.mrb[0].mxu0
        %3192 = vmatprep.mubr.f32.mxu0 0.0
        %3193 = vmatmul.mubr.f32.gmra.mrb[0].mxu0 %v1272
        %v3194 = vpop.f32.mrb[0].mxu0
        %v3195 = vadd.f32 0.0, %v3194
        %v3196 = vpop.f32.mrb[0].mxu0
        %3197 = vmatprep.mubr.f32.mxu0 0.0
        %3198 = vmatmul.mubr.f32.gmra.mrb[0].mxu0 %v1275
        %v3199 = vpop.f32.mrb[0].mxu0
        %v3200 = vadd.f32 0.0, %v3199
        %v3201 = vpop.f32.mrb[0].mxu0
        %3202 = vdwg.mxu0
        %v3203 = vmul.f32 %v3185, %v870
        %v3204 = vmul.f32 %v3190, %v871
        %v3205 = vmul.f32 %v3195, %v872
        %v3206 = vmul.f32 %v3200, %v873
        %v3208 = vsel %vm959, %v3203, 0
        %v3211 = vsel %vm959, %v3204, 0
        %v3214 = vsel %vm959, %v3205, 0
        %v3217 = vsel %vm959, %v3206, 0
        %v3220 = vsel %vm959, %v3037, 0
        %3222 = vmatprep.subr.mxu0 0.0
        %3223 = vmatpush1.xpose.msra.mxu0 %v3220
        %3224 = vmatprep.subr.mxu0 0.0
        %3225 = vmatpush1.xpose.msra.mxu0 0.0
        %3226 = vmatprep.subr.mxu0 0.0
        %3227 = vmatpush1.xpose.msra.mxu0 0.0
        %3228 = vmatprep.subr.mxu0 0.0
        %3229 = vmatpush1.xpose.msra.mxu0 0.0
        %3230 = vmatprep.subr.mxu0 0.0
        %3231 = vmatpush1.xpose.msra.mxu0 0.0
        %3232 = vmatprep.subr.mxu0 0.0
        %3233 = vmatpush1.xpose.msra.mxu0 0.0
        %3234 = vmatprep.subr.mxu0 0.0
        %3235 = vmatpush1.xpose.msra.mxu0 0.0
        %3236 = vmatprep.subr.mxu0 0.0
        %3237 = vmatpush1.xpose.msra.mxu0 0.0
        %3238 = vmatprep.subr.mxu0 0.0
        %3239 = vmatpush1.xpose.msra.mxu0 0.0
        %3240 = vmatprep.subr.mxu0 0.0
        %3241 = vmatpush1.xpose.msra.mxu0 0.0
        %3242 = vmatprep.subr.mxu0 0.0
        %3243 = vmatpush1.xpose.msra.mxu0 0.0
        %3244 = vmatprep.subr.mxu0 0.0
        %3245 = vmatpush1.xpose.msra.mxu0 0.0
        %3246 = vmatprep.subr.mxu0 0.0
        %3247 = vmatpush1.xpose.msra.mxu0 0.0
        %3248 = vmatprep.subr.mxu0 0.0
        %3249 = vmatpush1.xpose.msra.mxu0 0.0
        %3250 = vmatprep.subr.mxu0 0.0
        %3251 = vmatpush1.xpose.msra.mxu0 0.0
        %3252 = vmatprep.subr.mxu0 0.0
        %3253 = vmatpush1.xpose.msra.mxu0 0.0
        %3254 = vmatprep.subr.mxu0 0.0
        %3255 = vmatpush1.xpose.msra.mxu0 0.0
        %3256 = vmatprep.subr.mxu0 0.0
        %3257 = vmatpush1.xpose.msra.mxu0 0.0
        %3258 = vmatprep.subr.mxu0 0.0
        %3259 = vmatpush1.xpose.msra.mxu0 0.0
        %3260 = vmatprep.subr.mxu0 0.0
        %3261 = vmatpush1.xpose.msra.mxu0 0.0
        %3262 = vmatprep.subr.mxu0 0.0
        %3263 = vmatpush1.xpose.msra.mxu0 0.0
        %3264 = vmatprep.subr.mxu0 0.0
        %3265 = vmatpush1.xpose.msra.mxu0 0.0
        %3266 = vmatprep.subr.mxu0 0.0
        %3267 = vmatpush1.xpose.msra.mxu0 0.0
        %3268 = vmatprep.subr.mxu0 0.0
        %3269 = vmatpush1.xpose.msra.mxu0 0.0
        %3270 = vmatprep.subr.mxu0 0.0
        %3271 = vmatpush1.xpose.msra.mxu0 0.0
        %3272 = vmatprep.subr.mxu0 0.0
        %3273 = vmatpush1.xpose.msra.mxu0 0.0
        %3274 = vmatprep.subr.mxu0 0.0
        %3275 = vmatpush1.xpose.msra.mxu0 0.0
        %3276 = vmatprep.subr.mxu0 0.0
        %3277 = vmatpush1.xpose.msra.mxu0 0.0
        %3278 = vmatprep.subr.mxu0 0.0
        %3279 = vmatpush1.xpose.msra.mxu0 0.0
        %3280 = vmatprep.subr.mxu0 0.0
        %3281 = vmatpush1.xpose.msra.mxu0 0.0
        %3282 = vmatprep.subr.mxu0 0.0
        %3283 = vmatpush1.xpose.msra.mxu0 0.0
        %3284 = vmatprep.subr.mxu0 0.0
        %3285 = vmatpush1.xpose.msra.mxu0 0.0
        %3286 = vmatprep.mubr.f32.mxu0 0.0
        %3287 = vmatmul.mubr.f32.gmra.mrb[0].mxu0 %v3208
        %v3288 = vpop.f32.mrb[0].mxu0
        %v3289 = vadd.f32 0.0, %v3288
        %v3290 = vpop.f32.mrb[0].mxu0
        %3291 = vmatprep.mubr.f32.mxu0 0.0
        %3292 = vmatmul.mubr.f32.gmra.mrb[0].mxu0 %v3211
        %v3293 = vpop.f32.mrb[0].mxu0
        %v3294 = vadd.f32 0.0, %v3293
        %v3295 = vpop.f32.mrb[0].mxu0
        %3296 = vmatprep.mubr.f32.mxu0 0.0
        %3297 = vmatmul.mubr.f32.gmra.mrb[0].mxu0 %v3214
        %v3298 = vpop.f32.mrb[0].mxu0
        %v3299 = vadd.f32 0.0, %v3298
        %v3300 = vpop.f32.mrb[0].mxu0
        %3301 = vmatprep.mubr.f32.mxu0 0.0
        %3302 = vmatmul.mubr.f32.gmra.mrb[0].mxu0 %v3217
        %v3303 = vpop.f32.mrb[0].mxu0
        %v3304 = vadd.f32 0.0, %v3303
        %v3305 = vpop.f32.mrb[0].mxu0
        %3306 = vdwg.mxu0
        %v3307 = vmul.f32 %v3289, 0.35355338
        %v3308 = vmul.f32 %v3294, 0.35355338
        %v3309 = vmul.f32 %v3299, 0.35355338
        %v3310 = vmul.f32 %v3304, 0.35355338
        %v3311 = vsel %vm1264, %v3307, -inf
        %3312 = vmax.xlane.f32.xlu0 %v3311
        %v3313 = vpop.xlane.xlu0 %3312
        %v3314 = vsel %vm1264, %v3308, -inf
        %3315 = vmax.xlane.f32.xlu0 %v3314
        %v3316 = vpop.xlane.xlu0 %3315
        %v3317 = vsel %vm1264, %v3309, -inf
        %3318 = vmax.xlane.f32.xlu0 %v3317
        %v3319 = vpop.xlane.xlu0 %3318
        %v3320 = vsel %vm1264, %v3310, -inf
        %3321 = vmax.xlane.f32.xlu0 %v3320
        %v3322 = vpop.xlane.xlu0 %3321
        %v3323 = vsub.f32 %v3307, %v3313
        %v3324 = vsub.f32 %v3308, %v3316
        %v3325 = vsub.f32 %v3309, %v3319
        %v3326 = vsub.f32 %v3310, %v3322
        %v3327 = vmul.f32 %v3323, 1.442695
        %v3328 = vpow.pop %v3327
        %v3329 = vmul.f32 %v3324, 1.442695
        %v3330 = vpow.pop %v3329
        %v3331 = vmul.f32 %v3325, 1.442695
        %v3332 = vpow.pop %v3331
        %v3333 = vmul.f32 %v3326, 1.442695
        %v3334 = vpow.pop %v3333
        %v3335 = vsel %vm1264, %v3328, 0.0
        %3336 = vadd.xlane.f32.xlu0 %v3335
        %v3337 = vpop.xlane.xlu0 %3336
        %v3338 = vsel %vm1264, %v3330, 0.0
        %3339 = vadd.xlane.f32.xlu0 %v3338
        %v3340 = vpop.xlane.xlu0 %3339
        %v3341 = vsel %vm1264, %v3332, 0.0
        %3342 = vadd.xlane.f32.xlu0 %v3341
        %v3343 = vpop.xlane.xlu0 %3342
        %v3344 = vsel %vm1264, %v3334, 0.0
        %3345 = vadd.xlane.f32.xlu0 %v3344
        %v3346 = vpop.xlane.xlu0 %3345
        %v3347 = vrcp.pop %v3337
        %v3348 = vrcp.pop %v3340
        %v3349 = vrcp.pop %v3343
        %v3350 = vrcp.pop %v3346
        %v3351 = vmul.f32 %v3328, %v3347
        %v3352 = vmul.f32 %v3330, %v3348
        %v3353 = vmul.f32 %v3332, %v3349
        %v3354 = vmul.f32 %v3334, %v3350
        %3355 = vrot.lane.b32.xlu0 %v3037, 96
        %v3356 = vpop.permute.xlu0 %3355
        %v3359 = vsel %vm1264, %v3351, 0
        %v3362 = vsel %vm1264, %v3352, 0
        %v3365 = vsel %vm1264, %v3353, 0
        %v3368 = vsel %vm1264, %v3354, 0
        %3370 = vmatprep.subr.mxu0 0.0
        %3371 = vmatpush1.msra.mxu0 %v3356
        %3372 = vmatprep.subr.mxu0 0.0
        %3373 = vmatpush1.msra.mxu0 0.0
        %3374 = vmatprep.subr.mxu0 0.0
        %3375 = vmatpush1.msra.mxu0 0.0
        %3376 = vmatprep.subr.mxu0 0.0
        %3377 = vmatpush1.msra.mxu0 0.0
        %3378 = vmatprep.subr.mxu0 0.0
        %3379 = vmatpush1.msra.mxu0 0.0
        %3380 = vmatprep.subr.mxu0 0.0
        %3381 = vmatpush1.msra.mxu0 0.0
        %3382 = vmatprep.subr.mxu0 0.0
        %3383 = vmatpush1.msra.mxu0 0.0
        %3384 = vmatprep.subr.mxu0 0.0
        %3385 = vmatpush1.msra.mxu0 0.0
        %3386 = vmatprep.subr.mxu0 0.0
        %3387 = vmatpush1.msra.mxu0 0.0
        %3388 = vmatprep.subr.mxu0 0.0
        %3389 = vmatpush1.msra.mxu0 0.0
        %3390 = vmatprep.subr.mxu0 0.0
        %3391 = vmatpush1.msra.mxu0 0.0
        %3392 = vmatprep.subr.mxu0 0.0
        %3393 = vmatpush1.msra.mxu0 0.0
        %3394 = vmatprep.subr.mxu0 0.0
        %3395 = vmatpush1.msra.mxu0 0.0
        %3396 = vmatprep.subr.mxu0 0.0
        %3397 = vmatpush1.msra.mxu0 0.0
        %3398 = vmatprep.subr.mxu0 0.0
        %3399 = vmatpush1.msra.mxu0 0.0
        %3400 = vmatprep.subr.mxu0 0.0
        %3401 = vmatpush1.msra.mxu0 0.0
        %3402 = vmatprep.subr.mxu0 0.0
        %3403 = vmatpush1.msra.mxu0 0.0
        %3404 = vmatprep.subr.mxu0 0.0
        %3405 = vmatpush1.msra.mxu0 0.0
        %3406 = vmatprep.subr.mxu0 0.0
        %3407 = vmatpush1.msra.mxu0 0.0
        %3408 = vmatprep.subr.mxu0 0.0
        %3409 = vmatpush1.msra.mxu0 0.0
        %3410 = vmatprep.subr.mxu0 0.0
        %3411 = vmatpush1.msra.mxu0 0.0
        %3412 = vmatprep.subr.mxu0 0.0
        %3413 = vmatpush1.msra.mxu0 0.0
        %3414 = vmatprep.subr.mxu0 0.0
        %3415 = vmatpush1.msra.mxu0 0.0
        %3416 = vmatprep.subr.mxu0 0.0
        %3417 = vmatpush1.msra.mxu0 0.0
        %3418 = vmatprep.subr.mxu0 0.0
        %3419 = vmatpush1.msra.mxu0 0.0
        %3420 = vmatprep.subr.mxu0 0.0
        %3421 = vmatpush1.msra.mxu0 0.0
        %3422 = vmatprep.subr.mxu0 0.0
        %3423 = vmatpush1.msra.mxu0 0.0
        %3424 = vmatprep.subr.mxu0 0.0
        %3425 = vmatpush1.msra.mxu0 0.0
        %3426 = vmatprep.subr.mxu0 0.0
        %3427 = vmatpush1.msra.mxu0 0.0
        %3428 = vmatprep.subr.mxu0 0.0
        %3429 = vmatpush1.msra.mxu0 0.0
        %3430 = vmatprep.subr.mxu0 0.0
        %3431 = vmatpush1.msra.mxu0 0.0
        %3432 = vmatprep.subr.mxu0 0.0
        %3433 = vmatpush1.msra.mxu0 0.0
        %3434 = vmatprep.mubr.f32.mxu0 0.0
        %3435 = vmatmul.mubr.f32.gmra.mrb[0].mxu0 %v3359
        %v3436 = vpop.f32.mrb[0].mxu0
        %v3437 = vadd.f32 0.0, %v3436
        %v3438 = vpop.f32.mrb[0].mxu0
        %3439 = vmatprep.mubr.f32.mxu0 0.0
        %3440 = vmatmul.mubr.f32.gmra.mrb[0].mxu0 %v3362
        %v3441 = vpop.f32.mrb[0].mxu0
        %v3442 = vadd.f32 0.0, %v3441
        %v3443 = vpop.f32.mrb[0].mxu0
        %3444 = vmatprep.mubr.f32.mxu0 0.0
        %3445 = vmatmul.mubr.f32.gmra.mrb[0].mxu0 %v3365
        %v3446 = vpop.f32.mrb[0].mxu0
        %v3447 = vadd.f32 0.0, %v3446
        %v3448 = vpop.f32.mrb[0].mxu0
        %3449 = vmatprep.mubr.f32.mxu0 0.0
        %3450 = vmatmul.mubr.f32.gmra.mrb[0].mxu0 %v3368
        %v3451 = vpop.f32.mrb[0].mxu0
        %v3452 = vadd.f32 0.0, %v3451
        %v3453 = vpop.f32.mrb[0].mxu0
        %3454 = vdwg.mxu0
        %v3456 = vsel %vm959, %v3115, 0
        %3458 = vmatprep.subr.mxu0 0.0
        %3459 = vmatpush1.xpose.msra.mxu0 %v3456
        %3460 = vmatprep.subr.mxu0 0.0
        %3461 = vmatpush1.xpose.msra.mxu0 0.0
        %3462 = vmatprep.subr.mxu0 0.0
        %3463 = vmatpush1.xpose.msra.mxu0 0.0
        %3464 = vmatprep.subr.mxu0 0.0
        %3465 = vmatpush1.xpose.msra.mxu0 0.0
        %3466 = vmatprep.subr.mxu0 0.0
        %3467 = vmatpush1.xpose.msra.mxu0 0.0
        %3468 = vmatprep.subr.mxu0 0.0
        %3469 = vmatpush1.xpose.msra.mxu0 0.0
        %3470 = vmatprep.subr.mxu0 0.0
        %3471 = vmatpush1.xpose.msra.mxu0 0.0
        %3472 = vmatprep.subr.mxu0 0.0
        %3473 = vmatpush1.xpose.msra.mxu0 0.0
        %3474 = vmatprep.subr.mxu0 0.0
        %3475 = vmatpush1.xpose.msra.mxu0 0.0
        %3476 = vmatprep.subr.mxu0 0.0
        %3477 = vmatpush1.xpose.msra.mxu0 0.0
        %3478 = vmatprep.subr.mxu0 0.0
        %3479 = vmatpush1.xpose.msra.mxu0 0.0
        %3480 = vmatprep.subr.mxu0 0.0
        %3481 = vmatpush1.xpose.msra.mxu0 0.0
        %3482 = vmatprep.subr.mxu0 0.0
        %3483 = vmatpush1.xpose.msra.mxu0 0.0
        %3484 = vmatprep.subr.mxu0 0.0
        %3485 = vmatpush1.xpose.msra.mxu0 0.0
        %3486 = vmatprep.subr.mxu0 0.0
        %3487 = vmatpush1.xpose.msra.mxu0 0.0
        %3488 = vmatprep.subr.mxu0 0.0
        %3489 = vmatpush1.xpose.msra.mxu0 0.0
        %3490 = vmatprep.subr.mxu0 0.0
        %3491 = vmatpush1.xpose.msra.mxu0 0.0
        %3492 = vmatprep.subr.mxu0 0.0
        %3493 = vmatpush1.xpose.msra.mxu0 0.0
        %3494 = vmatprep.subr.mxu0 0.0
        %3495 = vmatpush1.xpose.msra.mxu0 0.0
        %3496 = vmatprep.subr.mxu0 0.0
        %3497 = vmatpush1.xpose.msra.mxu0 0.0
        %3498 = vmatprep.subr.mxu0 0.0
        %3499 = vmatpush1.xpose.msra.mxu0 0.0
        %3500 = vmatprep.subr.mxu0 0.0
        %3501 = vmatpush1.xpose.msra.mxu0 0.0
        %3502 = vmatprep.subr.mxu0 0.0
        %3503 = vmatpush1.xpose.msra.mxu0 0.0
        %3504 = vmatprep.subr.mxu0 0.0
        %3505 = vmatpush1.xpose.msra.mxu0 0.0
        %3506 = vmatprep.subr.mxu0 0.0
        %3507 = vmatpush1.xpose.msra.mxu0 0.0
        %3508 = vmatprep.subr.mxu0 0.0
        %3509 = vmatpush1.xpose.msra.mxu0 0.0
        %3510 = vmatprep.subr.mxu0 0.0
        %3511 = vmatpush1.xpose.msra.mxu0 0.0
        %3512 = vmatprep.subr.mxu0 0.0
        %3513 = vmatpush1.xpose.msra.mxu0 0.0
        %3514 = vmatprep.subr.mxu0 0.0
        %3515 = vmatpush1.xpose.msra.mxu0 0.0
        %3516 = vmatprep.subr.mxu0 0.0
        %3517 = vmatpush1.xpose.msra.mxu0 0.0
        %3518 = vmatprep.subr.mxu0 0.0
        %3519 = vmatpush1.xpose.msra.mxu0 0.0
        %3520 = vmatprep.subr.mxu0 0.0
        %3521 = vmatpush1.xpose.msra.mxu0 0.0
        %3522 = vmatprep.mubr.f32.mxu0 0.0
        %3523 = vmatmul.mubr.f32.gmra.mrb[0].mxu0 %v3208
        %v3524 = vpop.f32.mrb[0].mxu0
        %v3525 = vadd.f32 0.0, %v3524
        %v3526 = vpop.f32.mrb[0].mxu0
        %3527 = vmatprep.mubr.f32.mxu0 0.0
        %3528 = vmatmul.mubr.f32.gmra.mrb[0].mxu0 %v3211
        %v3529 = vpop.f32.mrb[0].mxu0
        %v3530 = vadd.f32 0.0, %v3529
        %v3531 = vpop.f32.mrb[0].mxu0
        %3532 = vmatprep.mubr.f32.mxu0 0.0
        %3533 = vmatmul.mubr.f32.gmra.mrb[0].mxu0 %v3214
        %v3534 = vpop.f32.mrb[0].mxu0
        %v3535 = vadd.f32 0.0, %v3534
        %v3536 = vpop.f32.mrb[0].mxu0
        %3537 = vmatprep.mubr.f32.mxu0 0.0
        %3538 = vmatmul.mubr.f32.gmra.mrb[0].mxu0 %v3217
        %v3539 = vpop.f32.mrb[0].mxu0
        %v3540 = vadd.f32 0.0, %v3539
        %v3541 = vpop.f32.mrb[0].mxu0
        %3542 = vdwg.mxu0
        %v3543 = vmul.f32 %v3525, 0.35355338
        %v3544 = vmul.f32 %v3530, 0.35355338
        %v3545 = vmul.f32 %v3535, 0.35355338
        %v3546 = vmul.f32 %v3540, 0.35355338
        %vm3547 = vcmask 15360
        %v3548 = vsel %vm3547, %v3543, -inf
        %3549 = vmax.xlane.f32.xlu0 %v3548
        %v3550 = vpop.xlane.xlu0 %3549
        %v3551 = vsel %vm3547, %v3544, -inf
        %3552 = vmax.xlane.f32.xlu0 %v3551
        %v3553 = vpop.xlane.xlu0 %3552
        %v3554 = vsel %vm3547, %v3545, -inf
        %3555 = vmax.xlane.f32.xlu0 %v3554
        %v3556 = vpop.xlane.xlu0 %3555
        %v3557 = vsel %vm3547, %v3546, -inf
        %3558 = vmax.xlane.f32.xlu0 %v3557
        %v3559 = vpop.xlane.xlu0 %3558
        %v3560 = vsub.f32 %v3543, %v3550
        %v3561 = vsub.f32 %v3544, %v3553
        %v3562 = vsub.f32 %v3545, %v3556
        %v3563 = vsub.f32 %v3546, %v3559
        %v3564 = vmul.f32 %v3560, 1.442695
        %v3565 = vpow.pop %v3564
        %v3566 = vmul.f32 %v3561, 1.442695
        %v3567 = vpow.pop %v3566
        %v3568 = vmul.f32 %v3562, 1.442695
        %v3569 = vpow.pop %v3568
        %v3570 = vmul.f32 %v3563, 1.442695
        %v3571 = vpow.pop %v3570
        %v3572 = vsel %vm3547, %v3565, 0.0
        %3573 = vadd.xlane.f32.xlu0 %v3572
        %v3574 = vpop.xlane.xlu0 %3573
        %v3575 = vsel %vm3547, %v3567, 0.0
        %3576 = vadd.xlane.f32.xlu0 %v3575
        %v3577 = vpop.xlane.xlu0 %3576
        %v3578 = vsel %vm3547, %v3569, 0.0
        %3579 = vadd.xlane.f32.xlu0 %v3578
        %v3580 = vpop.xlane.xlu0 %3579
        %v3581 = vsel %vm3547, %v3571, 0.0
        %3582 = vadd.xlane.f32.xlu0 %v3581
        %v3583 = vpop.xlane.xlu0 %3582
        %v3584 = vrcp.pop %v3574
        %v3585 = vrcp.pop %v3577
        %v3586 = vrcp.pop %v3580
        %v3587 = vrcp.pop %v3583
        %v3588 = vmul.f32 %v3565, %v3584
        %v3589 = vmul.f32 %v3567, %v3585
        %v3590 = vmul.f32 %v3569, %v3586
        %v3591 = vmul.f32 %v3571, %v3587
        %3592 = vrot.lane.b32.xlu0 %v3115, 96
        %v3593 = vpop.permute.xlu0 %3592
        %v3595 = vsel %vm3547, %v3588, 0
        %v3598 = vsel %vm3547, %v3589, 0
        %v3601 = vsel %vm3547, %v3590, 0
        %v3604 = vsel %vm3547, %v3591, 0
        %vm3606 = vcmask 1041408
        %v3607 = vsel %vm3606, %v3593, 0
        %3609 = vmatprep.subr.mxu0 0.0
        %3610 = vmatpush1.msra.mxu0 %v3607
        %3611 = vmatprep.subr.mxu0 0.0
        %3612 = vmatpush1.msra.mxu0 0.0
        %3613 = vmatprep.subr.mxu0 0.0
        %3614 = vmatpush1.msra.mxu0 0.0
        %3615 = vmatprep.subr.mxu0 0.0
        %3616 = vmatpush1.msra.mxu0 0.0
        %3617 = vmatprep.subr.mxu0 0.0
        %3618 = vmatpush1.msra.mxu0 0.0
        %3619 = vmatprep.subr.mxu0 0.0
        %3620 = vmatpush1.msra.mxu0 0.0
        %3621 = vmatprep.subr.mxu0 0.0
        %3622 = vmatpush1.msra.mxu0 0.0
        %3623 = vmatprep.subr.mxu0 0.0
        %3624 = vmatpush1.msra.mxu0 0.0
        %3625 = vmatprep.subr.mxu0 0.0
        %3626 = vmatpush1.msra.mxu0 0.0
        %3627 = vmatprep.subr.mxu0 0.0
        %3628 = vmatpush1.msra.mxu0 0.0
        %3629 = vmatprep.subr.mxu0 0.0
        %3630 = vmatpush1.msra.mxu0 0.0
        %3631 = vmatprep.subr.mxu0 0.0
        %3632 = vmatpush1.msra.mxu0 0.0
        %3633 = vmatprep.subr.mxu0 0.0
        %3634 = vmatpush1.msra.mxu0 0.0
        %3635 = vmatprep.subr.mxu0 0.0
        %3636 = vmatpush1.msra.mxu0 0.0
        %3637 = vmatprep.subr.mxu0 0.0
        %3638 = vmatpush1.msra.mxu0 0.0
        %3639 = vmatprep.subr.mxu0 0.0
        %3640 = vmatpush1.msra.mxu0 0.0
        %3641 = vmatprep.subr.mxu0 0.0
        %3642 = vmatpush1.msra.mxu0 0.0
        %3643 = vmatprep.subr.mxu0 0.0
        %3644 = vmatpush1.msra.mxu0 0.0
        %3645 = vmatprep.subr.mxu0 0.0
        %3646 = vmatpush1.msra.mxu0 0.0
        %3647 = vmatprep.subr.mxu0 0.0
        %3648 = vmatpush1.msra.mxu0 0.0
        %3649 = vmatprep.subr.mxu0 0.0
        %3650 = vmatpush1.msra.mxu0 0.0
        %3651 = vmatprep.subr.mxu0 0.0
        %3652 = vmatpush1.msra.mxu0 0.0
        %3653 = vmatprep.subr.mxu0 0.0
        %3654 = vmatpush1.msra.mxu0 0.0
        %3655 = vmatprep.subr.mxu0 0.0
        %3656 = vmatpush1.msra.mxu0 0.0
        %3657 = vmatprep.subr.mxu0 0.0
        %3658 = vmatpush1.msra.mxu0 0.0
        %3659 = vmatprep.subr.mxu0 0.0
        %3660 = vmatpush1.msra.mxu0 0.0
        %3661 = vmatprep.subr.mxu0 0.0
        %3662 = vmatpush1.msra.mxu0 0.0
        %3663 = vmatprep.subr.mxu0 0.0
        %3664 = vmatpush1.msra.mxu0 0.0
        %3665 = vmatprep.subr.mxu0 0.0
        %3666 = vmatpush1.msra.mxu0 0.0
        %3667 = vmatprep.subr.mxu0 0.0
        %3668 = vmatpush1.msra.mxu0 0.0
        %3669 = vmatprep.subr.mxu0 0.0
        %3670 = vmatpush1.msra.mxu0 0.0
        %3671 = vmatprep.subr.mxu0 0.0
        %3672 = vmatpush1.msra.mxu0 0.0
        %3673 = vmatprep.mubr.f32.mxu0 0.0
        %3674 = vmatmul.mubr.f32.gmra.mrb[0].mxu0 %v3595
        %v3675 = vpop.f32.mrb[0].mxu0
        %v3676 = vadd.f32 0.0, %v3675
        %v3677 = vpop.f32.mrb[0].mxu0
        %3678 = vmatprep.mubr.f32.mxu0 0.0
        %3679 = vmatmul.mubr.f32.gmra.mrb[0].mxu0 %v3598
        %v3680 = vpop.f32.mrb[0].mxu0
        %v3681 = vadd.f32 0.0, %v3680
        %v3682 = vpop.f32.mrb[0].mxu0
        %3683 = vmatprep.mubr.f32.mxu0 0.0
        %3684 = vmatmul.mubr.f32.gmra.mrb[0].mxu0 %v3601
        %v3685 = vpop.f32.mrb[0].mxu0
        %v3686 = vadd.f32 0.0, %v3685
        %v3687 = vpop.f32.mrb[0].mxu0
        %3688 = vmatprep.mubr.f32.mxu0 0.0
        %3689 = vmatmul.mubr.f32.gmra.mrb[0].mxu0 %v3604
        %v3690 = vpop.f32.mrb[0].mxu0
        %v3691 = vadd.f32 0.0, %v3690
        %v3692 = vpop.f32.mrb[0].mxu0
        %3693 = vdwg.mxu0
        %v3694 = vsub.f32 %v3437, %v3676
        %v3695 = vsub.f32 %v3442, %v3681
        %v3696 = vsub.f32 %v3447, %v3686
        %v3697 = vsub.f32 %v3452, %v3691
        %v3698 = vmul.f32 %v3694, %v870
        %v3699 = vmul.f32 %v3695, %v871
        %v3700 = vmul.f32 %v3696, %v872
        %v3701 = vmul.f32 %v3697, %v873
        %v3702 = vmul.f32 %v3698, %v3698
        %v3703 = vmul.f32 %v3699, %v3699
        %v3704 = vmul.f32 %v3700, %v3700
        %v3705 = vmul.f32 %v3701, %v3701
        %v3706 = vadd.f32 %v3702, 0.0
        %v3707 = vadd.f32 %v3703, 0.0
        %v3708 = vadd.f32 %v3704, 0.0
        %v3709 = vadd.f32 %v3705, 0.0
        %3710 = vmatprep.subr.mxu0 0.0
        %3711 = vmatpush1.msra.mxu0 %v2951
        %3712 = vmatprep.subr.mxu0 0.0
        %3713 = vmatpush1.msra.mxu0 0.0
        %3714 = vmatprep.subr.mxu0 0.0
        %3715 = vmatpush1.msra.mxu0 0.0
        %3716 = vmatprep.subr.mxu0 0.0
        %3717 = vmatpush1.msra.mxu0 0.0
        %3718 = vmatprep.subr.mxu0 0.0
        %3719 = vmatpush1.msra.mxu0 0.0
        %3720 = vmatprep.subr.mxu0 0.0
        %3721 = vmatpush1.msra.mxu0 0.0
        %3722 = vmatprep.subr.mxu0 0.0
        %3723 = vmatpush1.msra.mxu0 0.0
        %3724 = vmatprep.subr.mxu0 0.0
        %3725 = vmatpush1.msra.mxu0 0.0
        %3726 = vmatprep.subr.mxu0 0.0
        %3727 = vmatpush1.msra.mxu0 0.0
        %3728 = vmatprep.subr.mxu0 0.0
        %3729 = vmatpush1.msra.mxu0 0.0
        %3730 = vmatprep.subr.mxu0 0.0
        %3731 = vmatpush1.msra.mxu0 0.0
        %3732 = vmatprep.subr.mxu0 0.0
        %3733 = vmatpush1.msra.mxu0 0.0
        %3734 = vmatprep.subr.mxu0 0.0
        %3735 = vmatpush1.msra.mxu0 0.0
        %3736 = vmatprep.subr.mxu0 0.0
        %3737 = vmatpush1.msra.mxu0 0.0
        %3738 = vmatprep.subr.mxu0 0.0
        %3739 = vmatpush1.msra.mxu0 0.0
        %3740 = vmatprep.subr.mxu0 0.0
        %3741 = vmatpush1.msra.mxu0 0.0
        %3742 = vmatprep.subr.mxu0 0.0
        %3743 = vmatpush1.msra.mxu0 0.0
        %3744 = vmatprep.subr.mxu0 0.0
        %3745 = vmatpush1.msra.mxu0 0.0
        %3746 = vmatprep.subr.mxu0 0.0
        %3747 = vmatpush1.msra.mxu0 0.0
        %3748 = vmatprep.subr.mxu0 0.0
        %3749 = vmatpush1.msra.mxu0 0.0
        %3750 = vmatprep.subr.mxu0 0.0
        %3751 = vmatpush1.msra.mxu0 0.0
        %3752 = vmatprep.subr.mxu0 0.0
        %3753 = vmatpush1.msra.mxu0 0.0
        %3754 = vmatprep.subr.mxu0 0.0
        %3755 = vmatpush1.msra.mxu0 0.0
        %3756 = vmatprep.subr.mxu0 0.0
        %3757 = vmatpush1.msra.mxu0 0.0
        %3758 = vmatprep.subr.mxu0 0.0
        %3759 = vmatpush1.msra.mxu0 0.0
        %3760 = vmatprep.subr.mxu0 0.0
        %3761 = vmatpush1.msra.mxu0 0.0
        %3762 = vmatprep.subr.mxu0 0.0
        %3763 = vmatpush1.msra.mxu0 0.0
        %3764 = vmatprep.subr.mxu0 0.0
        %3765 = vmatpush1.msra.mxu0 0.0
        %3766 = vmatprep.subr.mxu0 0.0
        %3767 = vmatpush1.msra.mxu0 0.0
        %3768 = vmatprep.subr.mxu0 0.0
        %3769 = vmatpush1.msra.mxu0 0.0
        %3770 = vmatprep.subr.mxu0 0.0
        %3771 = vmatpush1.msra.mxu0 0.0
        %3772 = vmatprep.subr.mxu0 0.0
        %3773 = vmatpush1.msra.mxu0 0.0
        %3774 = vmatprep.mubr.f32.mxu0 0.0
        %3775 = vmatmul.mubr.f32.gmra.mrb[0].mxu0 %v1266
        %v3776 = vpop.f32.mrb[0].mxu0
        %v3777 = vadd.f32 0.0, %v3776
        %v3778 = vpop.f32.mrb[0].mxu0
        %3779 = vmatprep.mubr.f32.mxu0 0.0
        %3780 = vmatmul.mubr.f32.gmra.mrb[0].mxu0 %v1269
        %v3781 = vpop.f32.mrb[0].mxu0
        %v3782 = vadd.f32 0.0, %v3781
        %v3783 = vpop.f32.mrb[0].mxu0
        %3784 = vmatprep.mubr.f32.mxu0 0.0
        %3785 = vmatmul.mubr.f32.gmra.mrb[0].mxu0 %v1272
        %v3786 = vpop.f32.mrb[0].mxu0
        %v3787 = vadd.f32 0.0, %v3786
        %v3788 = vpop.f32.mrb[0].mxu0
        %3789 = vmatprep.mubr.f32.mxu0 0.0
        %3790 = vmatmul.mubr.f32.gmra.mrb[0].mxu0 %v1275
        %v3791 = vpop.f32.mrb[0].mxu0
        %v3792 = vadd.f32 0.0, %v3791
        %v3793 = vpop.f32.mrb[0].mxu0
        %3794 = vdwg.mxu0
        %v3795 = vmul.f32 %v3777, %v870
        %v3796 = vmul.f32 %v3782, %v871
        %v3797 = vmul.f32 %v3787, %v872
        %v3798 = vmul.f32 %v3792, %v873
        %v3800 = vsel %vm959, %v3795, 0
        %v3803 = vsel %vm959, %v3796, 0
        %v3806 = vsel %vm959, %v3797, 0
        %v3809 = vsel %vm959, %v3798, 0
        %v3812 = vsel %vm959, %v3042, 0
        %3814 = vmatprep.subr.mxu0 0.0
        %3815 = vmatpush1.xpose.msra.mxu0 %v3812
        %3816 = vmatprep.subr.mxu0 0.0
        %3817 = vmatpush1.xpose.msra.mxu0 0.0
        %3818 = vmatprep.subr.mxu0 0.0
        %3819 = vmatpush1.xpose.msra.mxu0 0.0
        %3820 = vmatprep.subr.mxu0 0.0
        %3821 = vmatpush1.xpose.msra.mxu0 0.0
        %3822 = vmatprep.subr.mxu0 0.0
        %3823 = vmatpush1.xpose.msra.mxu0 0.0
        %3824 = vmatprep.subr.mxu0 0.0
        %3825 = vmatpush1.xpose.msra.mxu0 0.0
        %3826 = vmatprep.subr.mxu0 0.0
        %3827 = vmatpush1.xpose.msra.mxu0 0.0
        %3828 = vmatprep.subr.mxu0 0.0
        %3829 = vmatpush1.xpose.msra.mxu0 0.0
        %3830 = vmatprep.subr.mxu0 0.0
        %3831 = vmatpush1.xpose.msra.mxu0 0.0
        %3832 = vmatprep.subr.mxu0 0.0
        %3833 = vmatpush1.xpose.msra.mxu0 0.0
        %3834 = vmatprep.subr.mxu0 0.0
        %3835 = vmatpush1.xpose.msra.mxu0 0.0
        %3836 = vmatprep.subr.mxu0 0.0
        %3837 = vmatpush1.xpose.msra.mxu0 0.0
        %3838 = vmatprep.subr.mxu0 0.0
        %3839 = vmatpush1.xpose.msra.mxu0 0.0
        %3840 = vmatprep.subr.mxu0 0.0
        %3841 = vmatpush1.xpose.msra.mxu0 0.0
        %3842 = vmatprep.subr.mxu0 0.0
        %3843 = vmatpush1.xpose.msra.mxu0 0.0
        %3844 = vmatprep.subr.mxu0 0.0
        %3845 = vmatpush1.xpose.msra.mxu0 0.0
        %3846 = vmatprep.subr.mxu0 0.0
        %3847 = vmatpush1.xpose.msra.mxu0 0.0
        %3848 = vmatprep.subr.mxu0 0.0
        %3849 = vmatpush1.xpose.msra.mxu0 0.0
        %3850 = vmatprep.subr.mxu0 0.0
        %3851 = vmatpush1.xpose.msra.mxu0 0.0
        %3852 = vmatprep.subr.mxu0 0.0
        %3853 = vmatpush1.xpose.msra.mxu0 0.0
        %3854 = vmatprep.subr.mxu0 0.0
        %3855 = vmatpush1.xpose.msra.mxu0 0.0
        %3856 = vmatprep.subr.mxu0 0.0
        %3857 = vmatpush1.xpose.msra.mxu0 0.0
        %3858 = vmatprep.subr.mxu0 0.0
        %3859 = vmatpush1.xpose.msra.mxu0 0.0
        %3860 = vmatprep.subr.mxu0 0.0
        %3861 = vmatpush1.xpose.msra.mxu0 0.0
        %3862 = vmatprep.subr.mxu0 0.0
        %3863 = vmatpush1.xpose.msra.mxu0 0.0
        %3864 = vmatprep.subr.mxu0 0.0
        %3865 = vmatpush1.xpose.msra.mxu0 0.0
        %3866 = vmatprep.subr.mxu0 0.0
        %3867 = vmatpush1.xpose.msra.mxu0 0.0
        %3868 = vmatprep.subr.mxu0 0.0
        %3869 = vmatpush1.xpose.msra.mxu0 0.0
        %3870 = vmatprep.subr.mxu0 0.0
        %3871 = vmatpush1.xpose.msra.mxu0 0.0
        %3872 = vmatprep.subr.mxu0 0.0
        %3873 = vmatpush1.xpose.msra.mxu0 0.0
        %3874 = vmatprep.subr.mxu0 0.0
        %3875 = vmatpush1.xpose.msra.mxu0 0.0
        %3876 = vmatprep.subr.mxu0 0.0
        %3877 = vmatpush1.xpose.msra.mxu0 0.0
        %3878 = vmatprep.mubr.f32.mxu0 0.0
        %3879 = vmatmul.mubr.f32.gmra.mrb[0].mxu0 %v3800
        %v3880 = vpop.f32.mrb[0].mxu0
        %v3881 = vadd.f32 0.0, %v3880
        %v3882 = vpop.f32.mrb[0].mxu0
        %3883 = vmatprep.mubr.f32.mxu0 0.0
        %3884 = vmatmul.mubr.f32.gmra.mrb[0].mxu0 %v3803
        %v3885 = vpop.f32.mrb[0].mxu0
        %v3886 = vadd.f32 0.0, %v3885
        %v3887 = vpop.f32.mrb[0].mxu0
        %3888 = vmatprep.mubr.f32.mxu0 0.0
        %3889 = vmatmul.mubr.f32.gmra.mrb[0].mxu0 %v3806
        %v3890 = vpop.f32.mrb[0].mxu0
        %v3891 = vadd.f32 0.0, %v3890
        %v3892 = vpop.f32.mrb[0].mxu0
        %3893 = vmatprep.mubr.f32.mxu0 0.0
        %3894 = vmatmul.mubr.f32.gmra.mrb[0].mxu0 %v3809
        %v3895 = vpop.f32.mrb[0].mxu0
        %v3896 = vadd.f32 0.0, %v3895
        %v3897 = vpop.f32.mrb[0].mxu0
        %3898 = vdwg.mxu0
        %v3899 = vmul.f32 %v3881, 0.35355338
        %v3900 = vmul.f32 %v3886, 0.35355338
        %v3901 = vmul.f32 %v3891, 0.35355338
        %v3902 = vmul.f32 %v3896, 0.35355338
        %v3903 = vsel %vm1264, %v3899, -inf
        %3904 = vmax.xlane.f32.xlu0 %v3903
        %v3905 = vpop.xlane.xlu0 %3904
        %v3906 = vsel %vm1264, %v3900, -inf
        %3907 = vmax.xlane.f32.xlu0 %v3906
        %v3908 = vpop.xlane.xlu0 %3907
        %v3909 = vsel %vm1264, %v3901, -inf
        %3910 = vmax.xlane.f32.xlu0 %v3909
        %v3911 = vpop.xlane.xlu0 %3910
        %v3912 = vsel %vm1264, %v3902, -inf
        %3913 = vmax.xlane.f32.xlu0 %v3912
        %v3914 = vpop.xlane.xlu0 %3913
        %v3915 = vsub.f32 %v3899, %v3905
        %v3916 = vsub.f32 %v3900, %v3908
        %v3917 = vsub.f32 %v3901, %v3911
        %v3918 = vsub.f32 %v3902, %v3914
        %v3919 = vmul.f32 %v3915, 1.442695
        %v3920 = vpow.pop %v3919
        %v3921 = vmul.f32 %v3916, 1.442695
        %v3922 = vpow.pop %v3921
        %v3923 = vmul.f32 %v3917, 1.442695
        %v3924 = vpow.pop %v3923
        %v3925 = vmul.f32 %v3918, 1.442695
        %v3926 = vpow.pop %v3925
        %v3927 = vsel %vm1264, %v3920, 0.0
        %3928 = vadd.xlane.f32.xlu0 %v3927
        %v3929 = vpop.xlane.xlu0 %3928
        %v3930 = vsel %vm1264, %v3922, 0.0
        %3931 = vadd.xlane.f32.xlu0 %v3930
        %v3932 = vpop.xlane.xlu0 %3931
        %v3933 = vsel %vm1264, %v3924, 0.0
        %3934 = vadd.xlane.f32.xlu0 %v3933
        %v3935 = vpop.xlane.xlu0 %3934
        %v3936 = vsel %vm1264, %v3926, 0.0
        %3937 = vadd.xlane.f32.xlu0 %v3936
        %v3938 = vpop.xlane.xlu0 %3937
        %v3939 = vrcp.pop %v3929
        %v3940 = vrcp.pop %v3932
        %v3941 = vrcp.pop %v3935
        %v3942 = vrcp.pop %v3938
        %v3943 = vmul.f32 %v3920, %v3939
        %v3944 = vmul.f32 %v3922, %v3940
        %v3945 = vmul.f32 %v3924, %v3941
        %v3946 = vmul.f32 %v3926, %v3942
        %3947 = vrot.lane.b32.xlu0 %v3042, 96
        %v3948 = vpop.permute.xlu0 %3947
        %v3951 = vsel %vm1264, %v3943, 0
        %v3954 = vsel %vm1264, %v3944, 0
        %v3957 = vsel %vm1264, %v3945, 0
        %v3960 = vsel %vm1264, %v3946, 0
        %3962 = vmatprep.subr.mxu0 0.0
        %3963 = vmatpush1.msra.mxu0 %v3948
        %3964 = vmatprep.subr.mxu0 0.0
        %3965 = vmatpush1.msra.mxu0 0.0
        %3966 = vmatprep.subr.mxu0 0.0
        %3967 = vmatpush1.msra.mxu0 0.0
        %3968 = vmatprep.subr.mxu0 0.0
        %3969 = vmatpush1.msra.mxu0 0.0
        %3970 = vmatprep.subr.mxu0 0.0
        %3971 = vmatpush1.msra.mxu0 0.0
        %3972 = vmatprep.subr.mxu0 0.0
        %3973 = vmatpush1.msra.mxu0 0.0
        %3974 = vmatprep.subr.mxu0 0.0
        %3975 = vmatpush1.msra.mxu0 0.0
        %3976 = vmatprep.subr.mxu0 0.0
        %3977 = vmatpush1.msra.mxu0 0.0
        %3978 = vmatprep.subr.mxu0 0.0
        %3979 = vmatpush1.msra.mxu0 0.0
        %3980 = vmatprep.subr.mxu0 0.0
        %3981 = vmatpush1.msra.mxu0 0.0
        %3982 = vmatprep.subr.mxu0 0.0
        %3983 = vmatpush1.msra.mxu0 0.0
        %3984 = vmatprep.subr.mxu0 0.0
        %3985 = vmatpush1.msra.mxu0 0.0
        %3986 = vmatprep.subr.mxu0 0.0
        %3987 = vmatpush1.msra.mxu0 0.0
        %3988 = vmatprep.subr.mxu0 0.0
        %3989 = vmatpush1.msra.mxu0 0.0
        %3990 = vmatprep.subr.mxu0 0.0
        %3991 = vmatpush1.msra.mxu0 0.0
        %3992 = vmatprep.subr.mxu0 0.0
        %3993 = vmatpush1.msra.mxu0 0.0
        %3994 = vmatprep.subr.mxu0 0.0
        %3995 = vmatpush1.msra.mxu0 0.0
        %3996 = vmatprep.subr.mxu0 0.0
        %3997 = vmatpush1.msra.mxu0 0.0
        %3998 = vmatprep.subr.mxu0 0.0
        %3999 = vmatpush1.msra.mxu0 0.0
        %4000 = vmatprep.subr.mxu0 0.0
        %4001 = vmatpush1.msra.mxu0 0.0
        %4002 = vmatprep.subr.mxu0 0.0
        %4003 = vmatpush1.msra.mxu0 0.0
        %4004 = vmatprep.subr.mxu0 0.0
        %4005 = vmatpush1.msra.mxu0 0.0
        %4006 = vmatprep.subr.mxu0 0.0
        %4007 = vmatpush1.msra.mxu0 0.0
        %4008 = vmatprep.subr.mxu0 0.0
        %4009 = vmatpush1.msra.mxu0 0.0
        %4010 = vmatprep.subr.mxu0 0.0
        %4011 = vmatpush1.msra.mxu0 0.0
        %4012 = vmatprep.subr.mxu0 0.0
        %4013 = vmatpush1.msra.mxu0 0.0
        %4014 = vmatprep.subr.mxu0 0.0
        %4015 = vmatpush1.msra.mxu0 0.0
        %4016 = vmatprep.subr.mxu0 0.0
        %4017 = vmatpush1.msra.mxu0 0.0
        %4018 = vmatprep.subr.mxu0 0.0
        %4019 = vmatpush1.msra.mxu0 0.0
        %4020 = vmatprep.subr.mxu0 0.0
        %4021 = vmatpush1.msra.mxu0 0.0
        %4022 = vmatprep.subr.mxu0 0.0
        %4023 = vmatpush1.msra.mxu0 0.0
        %4024 = vmatprep.subr.mxu0 0.0
        %4025 = vmatpush1.msra.mxu0 0.0
        %4026 = vmatprep.mubr.f32.mxu0 0.0
        %4027 = vmatmul.mubr.f32.gmra.mrb[0].mxu0 %v3951
        %v4028 = vpop.f32.mrb[0].mxu0
        %v4029 = vadd.f32 0.0, %v4028
        %v4030 = vpop.f32.mrb[0].mxu0
        %4031 = vmatprep.mubr.f32.mxu0 0.0
        %4032 = vmatmul.mubr.f32.gmra.mrb[0].mxu0 %v3954
        %v4033 = vpop.f32.mrb[0].mxu0
        %v4034 = vadd.f32 0.0, %v4033
        %v4035 = vpop.f32.mrb[0].mxu0
        %4036 = vmatprep.mubr.f32.mxu0 0.0
        %4037 = vmatmul.mubr.f32.gmra.mrb[0].mxu0 %v3957
        %v4038 = vpop.f32.mrb[0].mxu0
        %v4039 = vadd.f32 0.0, %v4038
        %v4040 = vpop.f32.mrb[0].mxu0
        %4041 = vmatprep.mubr.f32.mxu0 0.0
        %4042 = vmatmul.mubr.f32.gmra.mrb[0].mxu0 %v3960
        %v4043 = vpop.f32.mrb[0].mxu0
        %v4044 = vadd.f32 0.0, %v4043
        %v4045 = vpop.f32.mrb[0].mxu0
        %4046 = vdwg.mxu0
        %v4047 = vrot.slane %v3115, 2
        %v4048 = vsel %vm959, %v4047, 0
        %4050 = vmatprep.subr.mxu0 0.0
        %4051 = vmatpush1.xpose.msra.mxu0 %v4048
        %4052 = vmatprep.subr.mxu0 0.0
        %4053 = vmatpush1.xpose.msra.mxu0 0.0
        %4054 = vmatprep.subr.mxu0 0.0
        %4055 = vmatpush1.xpose.msra.mxu0 0.0
        %4056 = vmatprep.subr.mxu0 0.0
        %4057 = vmatpush1.xpose.msra.mxu0 0.0
        %4058 = vmatprep.subr.mxu0 0.0
        %4059 = vmatpush1.xpose.msra.mxu0 0.0
        %4060 = vmatprep.subr.mxu0 0.0
        %4061 = vmatpush1.xpose.msra.mxu0 0.0
        %4062 = vmatprep.subr.mxu0 0.0
        %4063 = vmatpush1.xpose.msra.mxu0 0.0
        %4064 = vmatprep.subr.mxu0 0.0
        %4065 = vmatpush1.xpose.msra.mxu0 0.0
        %4066 = vmatprep.subr.mxu0 0.0
        %4067 = vmatpush1.xpose.msra.mxu0 0.0
        %4068 = vmatprep.subr.mxu0 0.0
        %4069 = vmatpush1.xpose.msra.mxu0 0.0
        %4070 = vmatprep.subr.mxu0 0.0
        %4071 = vmatpush1.xpose.msra.mxu0 0.0
        %4072 = vmatprep.subr.mxu0 0.0
        %4073 = vmatpush1.xpose.msra.mxu0 0.0
        %4074 = vmatprep.subr.mxu0 0.0
        %4075 = vmatpush1.xpose.msra.mxu0 0.0
        %4076 = vmatprep.subr.mxu0 0.0
        %4077 = vmatpush1.xpose.msra.mxu0 0.0
        %4078 = vmatprep.subr.mxu0 0.0
        %4079 = vmatpush1.xpose.msra.mxu0 0.0
        %4080 = vmatprep.subr.mxu0 0.0
        %4081 = vmatpush1.xpose.msra.mxu0 0.0
        %4082 = vmatprep.subr.mxu0 0.0
        %4083 = vmatpush1.xpose.msra.mxu0 0.0
        %4084 = vmatprep.subr.mxu0 0.0
        %4085 = vmatpush1.xpose.msra.mxu0 0.0
        %4086 = vmatprep.subr.mxu0 0.0
        %4087 = vmatpush1.xpose.msra.mxu0 0.0
        %4088 = vmatprep.subr.mxu0 0.0
        %4089 = vmatpush1.xpose.msra.mxu0 0.0
        %4090 = vmatprep.subr.mxu0 0.0
        %4091 = vmatpush1.xpose.msra.mxu0 0.0
        %4092 = vmatprep.subr.mxu0 0.0
        %4093 = vmatpush1.xpose.msra.mxu0 0.0
        %4094 = vmatprep.subr.mxu0 0.0
        %4095 = vmatpush1.xpose.msra.mxu0 0.0
        %4096 = vmatprep.subr.mxu0 0.0
        %4097 = vmatpush1.xpose.msra.mxu0 0.0
        %4098 = vmatprep.subr.mxu0 0.0
        %4099 = vmatpush1.xpose.msra.mxu0 0.0
        %4100 = vmatprep.subr.mxu0 0.0
        %4101 = vmatpush1.xpose.msra.mxu0 0.0
        %4102 = vmatprep.subr.mxu0 0.0
        %4103 = vmatpush1.xpose.msra.mxu0 0.0
        %4104 = vmatprep.subr.mxu0 0.0
        %4105 = vmatpush1.xpose.msra.mxu0 0.0
        %4106 = vmatprep.subr.mxu0 0.0
        %4107 = vmatpush1.xpose.msra.mxu0 0.0
        %4108 = vmatprep.subr.mxu0 0.0
        %4109 = vmatpush1.xpose.msra.mxu0 0.0
        %4110 = vmatprep.subr.mxu0 0.0
        %4111 = vmatpush1.xpose.msra.mxu0 0.0
        %4112 = vmatprep.subr.mxu0 0.0
        %4113 = vmatpush1.xpose.msra.mxu0 0.0
        %4114 = vmatprep.mubr.f32.mxu0 0.0
        %4115 = vmatmul.mubr.f32.gmra.mrb[0].mxu0 %v3800
        %v4116 = vpop.f32.mrb[0].mxu0
        %v4117 = vadd.f32 0.0, %v4116
        %v4118 = vpop.f32.mrb[0].mxu0
        %4119 = vmatprep.mubr.f32.mxu0 0.0
        %4120 = vmatmul.mubr.f32.gmra.mrb[0].mxu0 %v3803
        %v4121 = vpop.f32.mrb[0].mxu0
        %v4122 = vadd.f32 0.0, %v4121
        %v4123 = vpop.f32.mrb[0].mxu0
        %4124 = vmatprep.mubr.f32.mxu0 0.0
        %4125 = vmatmul.mubr.f32.gmra.mrb[0].mxu0 %v3806
        %v4126 = vpop.f32.mrb[0].mxu0
        %v4127 = vadd.f32 0.0, %v4126
        %v4128 = vpop.f32.mrb[0].mxu0
        %4129 = vmatprep.mubr.f32.mxu0 0.0
        %4130 = vmatmul.mubr.f32.gmra.mrb[0].mxu0 %v3809
        %v4131 = vpop.f32.mrb[0].mxu0
        %v4132 = vadd.f32 0.0, %v4131
        %v4133 = vpop.f32.mrb[0].mxu0
        %4134 = vdwg.mxu0
        %v4135 = vmul.f32 %v4117, 0.35355338
        %v4136 = vmul.f32 %v4122, 0.35355338
        %v4137 = vmul.f32 %v4127, 0.35355338
        %v4138 = vmul.f32 %v4132, 0.35355338
        %v4139 = vsel %vm3547, %v4135, -inf
        %4140 = vmax.xlane.f32.xlu0 %v4139
        %v4141 = vpop.xlane.xlu0 %4140
        %v4142 = vsel %vm3547, %v4136, -inf
        %4143 = vmax.xlane.f32.xlu0 %v4142
        %v4144 = vpop.xlane.xlu0 %4143
        %v4145 = vsel %vm3547, %v4137, -inf
        %4146 = vmax.xlane.f32.xlu0 %v4145
        %v4147 = vpop.xlane.xlu0 %4146
        %v4148 = vsel %vm3547, %v4138, -inf
        %4149 = vmax.xlane.f32.xlu0 %v4148
        %v4150 = vpop.xlane.xlu0 %4149
        %v4151 = vsub.f32 %v4135, %v4141
        %v4152 = vsub.f32 %v4136, %v4144
        %v4153 = vsub.f32 %v4137, %v4147
        %v4154 = vsub.f32 %v4138, %v4150
        %v4155 = vmul.f32 %v4151, 1.442695
        %v4156 = vpow.pop %v4155
        %v4157 = vmul.f32 %v4152, 1.442695
        %v4158 = vpow.pop %v4157
        %v4159 = vmul.f32 %v4153, 1.442695
        %v4160 = vpow.pop %v4159
        %v4161 = vmul.f32 %v4154, 1.442695
        %v4162 = vpow.pop %v4161
        %v4163 = vsel %vm3547, %v4156, 0.0
        %4164 = vadd.xlane.f32.xlu0 %v4163
        %v4165 = vpop.xlane.xlu0 %4164
        %v4166 = vsel %vm3547, %v4158, 0.0
        %4167 = vadd.xlane.f32.xlu0 %v4166
        %v4168 = vpop.xlane.xlu0 %4167
        %v4169 = vsel %vm3547, %v4160, 0.0
        %4170 = vadd.xlane.f32.xlu0 %v4169
        %v4171 = vpop.xlane.xlu0 %4170
        %v4172 = vsel %vm3547, %v4162, 0.0
        %4173 = vadd.xlane.f32.xlu0 %v4172
        %v4174 = vpop.xlane.xlu0 %4173
        %v4175 = vrcp.pop %v4165
        %v4176 = vrcp.pop %v4168
        %v4177 = vrcp.pop %v4171
        %v4178 = vrcp.pop %v4174
        %v4179 = vmul.f32 %v4156, %v4175
        %v4180 = vmul.f32 %v4158, %v4176
        %v4181 = vmul.f32 %v4160, %v4177
        %v4182 = vmul.f32 %v4162, %v4178
        %4183 = vrot.lane.b32.xlu0 %v4047, 96
        %v4184 = vpop.permute.xlu0 %4183
        %v4186 = vsel %vm3547, %v4179, 0
        %v4189 = vsel %vm3547, %v4180, 0
        %v4192 = vsel %vm3547, %v4181, 0
        %v4195 = vsel %vm3547, %v4182, 0
        %v4197 = vsel %vm3606, %v4184, 0
        %4199 = vmatprep.subr.mxu0 0.0
        %4200 = vmatpush1.msra.mxu0 %v4197
        %4201 = vmatprep.subr.mxu0 0.0
        %4202 = vmatpush1.msra.mxu0 0.0
        %4203 = vmatprep.subr.mxu0 0.0
        %4204 = vmatpush1.msra.mxu0 0.0
        %4205 = vmatprep.subr.mxu0 0.0
        %4206 = vmatpush1.msra.mxu0 0.0
        %4207 = vmatprep.subr.mxu0 0.0
        %4208 = vmatpush1.msra.mxu0 0.0
        %4209 = vmatprep.subr.mxu0 0.0
        %4210 = vmatpush1.msra.mxu0 0.0
        %4211 = vmatprep.subr.mxu0 0.0
        %4212 = vmatpush1.msra.mxu0 0.0
        %4213 = vmatprep.subr.mxu0 0.0
        %4214 = vmatpush1.msra.mxu0 0.0
        %4215 = vmatprep.subr.mxu0 0.0
        %4216 = vmatpush1.msra.mxu0 0.0
        %4217 = vmatprep.subr.mxu0 0.0
        %4218 = vmatpush1.msra.mxu0 0.0
        %4219 = vmatprep.subr.mxu0 0.0
        %4220 = vmatpush1.msra.mxu0 0.0
        %4221 = vmatprep.subr.mxu0 0.0
        %4222 = vmatpush1.msra.mxu0 0.0
        %4223 = vmatprep.subr.mxu0 0.0
        %4224 = vmatpush1.msra.mxu0 0.0
        %4225 = vmatprep.subr.mxu0 0.0
        %4226 = vmatpush1.msra.mxu0 0.0
        %4227 = vmatprep.subr.mxu0 0.0
        %4228 = vmatpush1.msra.mxu0 0.0
        %4229 = vmatprep.subr.mxu0 0.0
        %4230 = vmatpush1.msra.mxu0 0.0
        %4231 = vmatprep.subr.mxu0 0.0
        %4232 = vmatpush1.msra.mxu0 0.0
        %4233 = vmatprep.subr.mxu0 0.0
        %4234 = vmatpush1.msra.mxu0 0.0
        %4235 = vmatprep.subr.mxu0 0.0
        %4236 = vmatpush1.msra.mxu0 0.0
        %4237 = vmatprep.subr.mxu0 0.0
        %4238 = vmatpush1.msra.mxu0 0.0
        %4239 = vmatprep.subr.mxu0 0.0
        %4240 = vmatpush1.msra.mxu0 0.0
        %4241 = vmatprep.subr.mxu0 0.0
        %4242 = vmatpush1.msra.mxu0 0.0
        %4243 = vmatprep.subr.mxu0 0.0
        %4244 = vmatpush1.msra.mxu0 0.0
        %4245 = vmatprep.subr.mxu0 0.0
        %4246 = vmatpush1.msra.mxu0 0.0
        %4247 = vmatprep.subr.mxu0 0.0
        %4248 = vmatpush1.msra.mxu0 0.0
        %4249 = vmatprep.subr.mxu0 0.0
        %4250 = vmatpush1.msra.mxu0 0.0
        %4251 = vmatprep.subr.mxu0 0.0
        %4252 = vmatpush1.msra.mxu0 0.0
        %4253 = vmatprep.subr.mxu0 0.0
        %4254 = vmatpush1.msra.mxu0 0.0
        %4255 = vmatprep.subr.mxu0 0.0
        %4256 = vmatpush1.msra.mxu0 0.0
        %4257 = vmatprep.subr.mxu0 0.0
        %4258 = vmatpush1.msra.mxu0 0.0
        %4259 = vmatprep.subr.mxu0 0.0
        %4260 = vmatpush1.msra.mxu0 0.0
        %4261 = vmatprep.subr.mxu0 0.0
        %4262 = vmatpush1.msra.mxu0 0.0
        %4263 = vmatprep.mubr.f32.mxu0 0.0
        %4264 = vmatmul.mubr.f32.gmra.mrb[0].mxu0 %v4186
        %v4265 = vpop.f32.mrb[0].mxu0
        %v4266 = vadd.f32 0.0, %v4265
        %v4267 = vpop.f32.mrb[0].mxu0
        %4268 = vmatprep.mubr.f32.mxu0 0.0
        %4269 = vmatmul.mubr.f32.gmra.mrb[0].mxu0 %v4189
        %v4270 = vpop.f32.mrb[0].mxu0
        %v4271 = vadd.f32 0.0, %v4270
        %v4272 = vpop.f32.mrb[0].mxu0
        %4273 = vmatprep.mubr.f32.mxu0 0.0
        %4274 = vmatmul.mubr.f32.gmra.mrb[0].mxu0 %v4192
        %v4275 = vpop.f32.mrb[0].mxu0
        %v4276 = vadd.f32 0.0, %v4275
        %v4277 = vpop.f32.mrb[0].mxu0
        %4278 = vmatprep.mubr.f32.mxu0 0.0
        %4279 = vmatmul.mubr.f32.gmra.mrb[0].mxu0 %v4195
        %v4280 = vpop.f32.mrb[0].mxu0
        %v4281 = vadd.f32 0.0, %v4280
        %v4282 = vpop.f32.mrb[0].mxu0
        %4283 = vdwg.mxu0
        %v4284 = vsub.f32 %v4029, %v4266
        %v4285 = vsub.f32 %v4034, %v4271
        %v4286 = vsub.f32 %v4039, %v4276
        %v4287 = vsub.f32 %v4044, %v4281
        %v4288 = vmul.f32 %v4284, %v870
        %v4289 = vmul.f32 %v4285, %v871
        %v4290 = vmul.f32 %v4286, %v872
        %v4291 = vmul.f32 %v4287, %v873
        %v4292 = vmul.f32 %v4288, %v4288
        %v4293 = vmul.f32 %v4289, %v4289
        %v4294 = vmul.f32 %v4290, %v4290
        %v4295 = vmul.f32 %v4291, %v4291
        %v4296 = vadd.f32 %v3706, %v4292
        %v4297 = vadd.f32 %v3707, %v4293
        %v4298 = vadd.f32 %v3708, %v4294
        %v4299 = vadd.f32 %v3709, %v4295
        %s4300 = scalar_lea.vmem %s834, 32
        %v4301 = vld [vmem:[%s4300] sm:$0xff]
        %v4302 = vld [vmem:[%s4300 + $0x8] sm:$0xff]
        %v4303 = vld [vmem:[%s4300 + $0x10] sm:$0xff]
        %v4304 = vld [vmem:[%s4300 + $0x18] sm:$0xff]
        %s4305 = scalar_lea.vmem %s839, 32
        %v4306 = vld [vmem:[%s4305] sm:$0xff]
        %v4307 = vld [vmem:[%s4305 + $0x8] sm:$0xff]
        %v4308 = vld [vmem:[%s4305 + $0x10] sm:$0xff]
        %v4309 = vld [vmem:[%s4305 + $0x18] sm:$0xff]
        %s4310 = scalar_lea.vmem %s829, 8
        %v4311 = vld [vmem:[%s4310] sm:$0x1]
        %v4312 = vld [vmem:[%s4310 + $0x1] sm:$0x1]
        %v4313 = vld [vmem:[%s4310 + $0x2] sm:$0x1]
        %v4314 = vld [vmem:[%s4310 + $0x3] sm:$0x1]
        %v4315 = vld [vmem:[%s4310 + $0x4] sm:$0x1]
        %v4316 = vld [vmem:[%s4310 + $0x5] sm:$0x1]
        %s4317 = scalar_lea.vmem %s844, 32
        %v4318 = vld [vmem:[%s4317] sm:$0xff]
        %v4319 = vld [vmem:[%s4317 + $0x8] sm:$0xff]
        %v4320 = vld [vmem:[%s4317 + $0x10] sm:$0xff]
        %v4321 = vld [vmem:[%s4317 + $0x18] sm:$0xff]
        %s4322 = scalar_lea.vmem %s848, 1
        %v4323 = vld [vmem:[%s4322] sm:$0x1]
        %s4324 = scalar_lea.vmem %s853, 64
        %v4325 = vld [vmem:[%s4324] sm:$0xff]
        %v4326 = vld [vmem:[%s4324 + $0x8] sm:$0xff]
        %v4327 = vld [vmem:[%s4324 + $0x10] sm:$0xff]
        %v4328 = vld [vmem:[%s4324 + $0x18] sm:$0xff]
        %v4329 = vld [vmem:[%s4324 + $0x20] sm:$0xff]
        %v4330 = vld [vmem:[%s4324 + $0x28] sm:$0xff]
        %v4331 = vld [vmem:[%s4324 + $0x30] sm:$0xff]
        %v4332 = vld [vmem:[%s4324 + $0x38] sm:$0xff]
        %s4333 = scalar_lea.vmem %s857, 1
        %v4334 = vld [vmem:[%s4333] sm:$0x1]
        %s4335 = scalar_lea.vmem %s814, 16
        %v4336 = vld [vmem:[%s4335] sm:$0xff]
        %v4337 = vld [vmem:[%s4335 + $0x8] sm:$0xff]
        %s4338 = scalar_lea.vmem %s819, 8
        %v4339 = vld [vmem:[%s4338] sm:$0xff]
        %s4340 = scalar_lea.vmem %s824, 4
        %v4341 = vld [vmem:[%s4340] sm:$0xf]
        %v4342 = vsel %vm959, %v2871, 0.0
        %4343 = vadd.xlane.f32.xlu0 %v4342
        %v4344 = vpop.xlane.xlu0 %4343
        %v4345 = vsel %vm959, %v2872, 0.0
        %4346 = vadd.xlane.f32.xlu0 %v4345
        %v4347 = vpop.xlane.xlu0 %4346
        %v4348 = vmul.f32 %v4344, %v966
        %v4349 = vmul.f32 %v4347, %v966
        %v4350 = vsub.f32 %v2871, %v4348
        %v4351 = vsub.f32 %v2872, %v4349
        %v4352 = vmul.f32 %v4350, %v4350
        %v4353 = vmul.f32 %v4351, %v4351
        %v4354 = vsel %vm959, %v4352, 0.0
        %4355 = vadd.xlane.f32.xlu0 %v4354
        %v4356 = vpop.xlane.xlu0 %4355
        %v4357 = vsel %vm959, %v4353, 0.0
        %4358 = vadd.xlane.f32.xlu0 %v4357
        %v4359 = vpop.xlane.xlu0 %4358
        %v4360 = vmul.f32 %v4356, %v966
        %v4361 = vmul.f32 %v4359, %v966
        %v4362 = vadd.f32 %v4360, 1e-05
        %v4363 = vadd.f32 %v4361, 1e-05
        %v4364 = vrsqrt.pop %v4362
        %v4365 = vrsqrt.pop %v4363
        %v4366 = vmul.f32 %v4350, %v4364
        %v4367 = vmul.f32 %v4351, %v4365
        %v4368 = vlaneseq
        %v4369 = vshrl.u32 %v4368, 7
        %v4370 = vsub.s32 0, %v4369
        %v4371 = vrot.slane %v4311, %v4370
        %v4372 = vmul.f32 %v4366, %v4371
        %v4373 = vmul.f32 %v4367, %v4371
        %v4374 = vlaneseq
        %v4375 = vshrl.u32 %v4374, 7
        %v4376 = vsub.s32 0, %v4375
        %v4377 = vrot.slane %v4312, %v4376
        %v4378 = vadd.f32 %v4372, %v4377
        %v4379 = vadd.f32 %v4373, %v4377
        %s4380 = scalar_lea.vmem %s782, 16 [#allocation4]
        %4381 = vst.msk [vmem:[%s4380] sm:$0xff] %vm959, %v4378
        %4382 = vst.msk [vmem:[%s4380 + $0x8] sm:$0xff] %vm959, %v4379
        %v4384 = vsel %vm959, %v4378, 0
        %v4387 = vsel %vm959, %v4379, 0
        %4389 = vmatprep.subr.mxu0 0.0
        %4390 = vmatpush1.msra.mxu0 %v4301
        %4391 = vmatprep.subr.mxu0 0.0
        %4392 = vmatpush1.msra.mxu0 %v4302
        %4393 = vmatprep.subr.mxu0 0.0
        %4394 = vmatpush1.msra.mxu0 %v4303
        %4395 = vmatprep.subr.mxu0 0.0
        %4396 = vmatpush1.msra.mxu0 %v4304
        %4397 = vmatprep.subr.mxu0 0.0
        %4398 = vmatpush1.msra.mxu0 0.0
        %4399 = vmatprep.subr.mxu0 0.0
        %4400 = vmatpush1.msra.mxu0 0.0
        %4401 = vmatprep.subr.mxu0 0.0
        %4402 = vmatpush1.msra.mxu0 0.0
        %4403 = vmatprep.subr.mxu0 0.0
        %4404 = vmatpush1.msra.mxu0 0.0
        %4405 = vmatprep.subr.mxu0 0.0
        %4406 = vmatpush1.msra.mxu0 0.0
        %4407 = vmatprep.subr.mxu0 0.0
        %4408 = vmatpush1.msra.mxu0 0.0
        %4409 = vmatprep.subr.mxu0 0.0
        %4410 = vmatpush1.msra.mxu0 0.0
        %4411 = vmatprep.subr.mxu0 0.0
        %4412 = vmatpush1.msra.mxu0 0.0
        %4413 = vmatprep.subr.mxu0 0.0
        %4414 = vmatpush1.msra.mxu0 0.0
        %4415 = vmatprep.subr.mxu0 0.0
        %4416 = vmatpush1.msra.mxu0 0.0
        %4417 = vmatprep.subr.mxu0 0.0
        %4418 = vmatpush1.msra.mxu0 0.0
        %4419 = vmatprep.subr.mxu0 0.0
        %4420 = vmatpush1.msra.mxu0 0.0
        %4421 = vmatprep.subr.mxu0 0.0
        %4422 = vmatpush1.msra.mxu0 0.0
        %4423 = vmatprep.subr.mxu0 0.0
        %4424 = vmatpush1.msra.mxu0 0.0
        %4425 = vmatprep.subr.mxu0 0.0
        %4426 = vmatpush1.msra.mxu0 0.0
        %4427 = vmatprep.subr.mxu0 0.0
        %4428 = vmatpush1.msra.mxu0 0.0
        %4429 = vmatprep.subr.mxu0 0.0
        %4430 = vmatpush1.msra.mxu0 0.0
        %4431 = vmatprep.subr.mxu0 0.0
        %4432 = vmatpush1.msra.mxu0 0.0
        %4433 = vmatprep.subr.mxu0 0.0
        %4434 = vmatpush1.msra.mxu0 0.0
        %4435 = vmatprep.subr.mxu0 0.0
        %4436 = vmatpush1.msra.mxu0 0.0
        %4437 = vmatprep.subr.mxu0 0.0
        %4438 = vmatpush1.msra.mxu0 0.0
        %4439 = vmatprep.subr.mxu0 0.0
        %4440 = vmatpush1.msra.mxu0 0.0
        %4441 = vmatprep.subr.mxu0 0.0
        %4442 = vmatpush1.msra.mxu0 0.0
        %4443 = vmatprep.subr.mxu0 0.0
        %4444 = vmatpush1.msra.mxu0 0.0
        %4445 = vmatprep.subr.mxu0 0.0
        %4446 = vmatpush1.msra.mxu0 0.0
        %4447 = vmatprep.subr.mxu0 0.0
        %4448 = vmatpush1.msra.mxu0 0.0
        %4449 = vmatprep.subr.mxu0 0.0
        %4450 = vmatpush1.msra.mxu0 0.0
        %4451 = vmatprep.subr.mxu0 0.0
        %4452 = vmatpush1.msra.mxu0 0.0
        %4453 = vmatprep.mubr.f32.mxu0 0.0
        %4454 = vmatmul.mubr.f32.gmra.mrb[0].mxu0 %v4384
        %v4455 = vpop.f32.mrb[0].mxu0
        %v4456 = vadd.f32 0.0, %v4455
        %v4457 = vpop.f32.mrb[0].mxu0
        %4458 = vmatprep.mubr.f32.mxu0 0.0
        %4459 = vmatmul.mubr.f32.gmra.mrb[0].mxu0 %v4387
        %v4460 = vpop.f32.mrb[0].mxu0
        %v4461 = vadd.f32 0.0, %v4460
        %v4462 = vpop.f32.mrb[0].mxu0
        %4463 = vdwg.mxu0
        %4468 = vrot.lane.b32.xlu0 %v4301, 96
        %v4469 = vpop.permute.xlu0 %4468
        %4470 = vrot.lane.b32.xlu0 %v4302, 96
        %v4471 = vpop.permute.xlu0 %4470
        %4472 = vrot.lane.b32.xlu0 %v4303, 96
        %v4473 = vpop.permute.xlu0 %4472
        %4474 = vrot.lane.b32.xlu0 %v4304, 96
        %v4475 = vpop.permute.xlu0 %4474
        %v4481 = vsel %vm959, %v4336, 0
        %v4484 = vsel %vm959, %v4337, 0
        %4486 = vmatprep.subr.mxu0 0.0
        %4487 = vmatpush1.msra.mxu0 %v4469
        %4488 = vmatprep.subr.mxu0 0.0
        %4489 = vmatpush1.msra.mxu0 %v4471
        %4490 = vmatprep.subr.mxu0 0.0
        %4491 = vmatpush1.msra.mxu0 %v4473
        %4492 = vmatprep.subr.mxu0 0.0
        %4493 = vmatpush1.msra.mxu0 %v4475
        %4494 = vmatprep.subr.mxu0 0.0
        %4495 = vmatpush1.msra.mxu0 0.0
        %4496 = vmatprep.subr.mxu0 0.0
        %4497 = vmatpush1.msra.mxu0 0.0
        %4498 = vmatprep.subr.mxu0 0.0
        %4499 = vmatpush1.msra.mxu0 0.0
        %4500 = vmatprep.subr.mxu0 0.0
        %4501 = vmatpush1.msra.mxu0 0.0
        %4502 = vmatprep.subr.mxu0 0.0
        %4503 = vmatpush1.msra.mxu0 0.0
        %4504 = vmatprep.subr.mxu0 0.0
        %4505 = vmatpush1.msra.mxu0 0.0
        %4506 = vmatprep.subr.mxu0 0.0
        %4507 = vmatpush1.msra.mxu0 0.0
        %4508 = vmatprep.subr.mxu0 0.0
        %4509 = vmatpush1.msra.mxu0 0.0
        %4510 = vmatprep.subr.mxu0 0.0
        %4511 = vmatpush1.msra.mxu0 0.0
        %4512 = vmatprep.subr.mxu0 0.0
        %4513 = vmatpush1.msra.mxu0 0.0
        %4514 = vmatprep.subr.mxu0 0.0
        %4515 = vmatpush1.msra.mxu0 0.0
        %4516 = vmatprep.subr.mxu0 0.0
        %4517 = vmatpush1.msra.mxu0 0.0
        %4518 = vmatprep.subr.mxu0 0.0
        %4519 = vmatpush1.msra.mxu0 0.0
        %4520 = vmatprep.subr.mxu0 0.0
        %4521 = vmatpush1.msra.mxu0 0.0
        %4522 = vmatprep.subr.mxu0 0.0
        %4523 = vmatpush1.msra.mxu0 0.0
        %4524 = vmatprep.subr.mxu0 0.0
        %4525 = vmatpush1.msra.mxu0 0.0
        %4526 = vmatprep.subr.mxu0 0.0
        %4527 = vmatpush1.msra.mxu0 0.0
        %4528 = vmatprep.subr.mxu0 0.0
        %4529 = vmatpush1.msra.mxu0 0.0
        %4530 = vmatprep.subr.mxu0 0.0
        %4531 = vmatpush1.msra.mxu0 0.0
        %4532 = vmatprep.subr.mxu0 0.0
        %4533 = vmatpush1.msra.mxu0 0.0
        %4534 = vmatprep.subr.mxu0 0.0
        %4535 = vmatpush1.msra.mxu0 0.0
        %4536 = vmatprep.subr.mxu0 0.0
        %4537 = vmatpush1.msra.mxu0 0.0
        %4538 = vmatprep.subr.mxu0 0.0
        %4539 = vmatpush1.msra.mxu0 0.0
        %4540 = vmatprep.subr.mxu0 0.0
        %4541 = vmatpush1.msra.mxu0 0.0
        %4542 = vmatprep.subr.mxu0 0.0
        %4543 = vmatpush1.msra.mxu0 0.0
        %4544 = vmatprep.subr.mxu0 0.0
        %4545 = vmatpush1.msra.mxu0 0.0
        %4546 = vmatprep.subr.mxu0 0.0
        %4547 = vmatpush1.msra.mxu0 0.0
        %4548 = vmatprep.subr.mxu0 0.0
        %4549 = vmatpush1.msra.mxu0 0.0
        %4550 = vmatprep.mubr.f32.mxu0 0.0
        %4551 = vmatmul.mubr.f32.gmra.mrb[0].mxu0 %v4481
        %v4552 = vpop.f32.mrb[0].mxu0
        %v4553 = vadd.f32 0.0, %v4552
        %v4554 = vpop.f32.mrb[0].mxu0
        %4555 = vmatprep.mubr.f32.mxu0 0.0
        %4556 = vmatmul.mubr.f32.gmra.mrb[0].mxu0 %v4484
        %v4557 = vpop.f32.mrb[0].mxu0
        %v4558 = vadd.f32 0.0, %v4557
        %v4559 = vpop.f32.mrb[0].mxu0
        %4560 = vdwg.mxu0
        %v4562 = vsel %vm959, %v4339, 0
        %4564 = vmatprep.subr.mxu0 0.0
        %4565 = vmatpush1.msra.mxu0 %v4469
        %4566 = vmatprep.subr.mxu0 0.0
        %4567 = vmatpush1.msra.mxu0 %v4471
        %4568 = vmatprep.subr.mxu0 0.0
        %4569 = vmatpush1.msra.mxu0 %v4473
        %4570 = vmatprep.subr.mxu0 0.0
        %4571 = vmatpush1.msra.mxu0 %v4475
        %4572 = vmatprep.subr.mxu0 0.0
        %4573 = vmatpush1.msra.mxu0 0.0
        %4574 = vmatprep.subr.mxu0 0.0
        %4575 = vmatpush1.msra.mxu0 0.0
        %4576 = vmatprep.subr.mxu0 0.0
        %4577 = vmatpush1.msra.mxu0 0.0
        %4578 = vmatprep.subr.mxu0 0.0
        %4579 = vmatpush1.msra.mxu0 0.0
        %4580 = vmatprep.subr.mxu0 0.0
        %4581 = vmatpush1.msra.mxu0 0.0
        %4582 = vmatprep.subr.mxu0 0.0
        %4583 = vmatpush1.msra.mxu0 0.0
        %4584 = vmatprep.subr.mxu0 0.0
        %4585 = vmatpush1.msra.mxu0 0.0
        %4586 = vmatprep.subr.mxu0 0.0
        %4587 = vmatpush1.msra.mxu0 0.0
        %4588 = vmatprep.subr.mxu0 0.0
        %4589 = vmatpush1.msra.mxu0 0.0
        %4590 = vmatprep.subr.mxu0 0.0
        %4591 = vmatpush1.msra.mxu0 0.0
        %4592 = vmatprep.subr.mxu0 0.0
        %4593 = vmatpush1.msra.mxu0 0.0
        %4594 = vmatprep.subr.mxu0 0.0
        %4595 = vmatpush1.msra.mxu0 0.0
        %4596 = vmatprep.subr.mxu0 0.0
        %4597 = vmatpush1.msra.mxu0 0.0
        %4598 = vmatprep.subr.mxu0 0.0
        %4599 = vmatpush1.msra.mxu0 0.0
        %4600 = vmatprep.subr.mxu0 0.0
        %4601 = vmatpush1.msra.mxu0 0.0
        %4602 = vmatprep.subr.mxu0 0.0
        %4603 = vmatpush1.msra.mxu0 0.0
        %4604 = vmatprep.subr.mxu0 0.0
        %4605 = vmatpush1.msra.mxu0 0.0
        %4606 = vmatprep.subr.mxu0 0.0
        %4607 = vmatpush1.msra.mxu0 0.0
        %4608 = vmatprep.subr.mxu0 0.0
        %4609 = vmatpush1.msra.mxu0 0.0
        %4610 = vmatprep.subr.mxu0 0.0
        %4611 = vmatpush1.msra.mxu0 0.0
        %4612 = vmatprep.subr.mxu0 0.0
        %4613 = vmatpush1.msra.mxu0 0.0
        %4614 = vmatprep.subr.mxu0 0.0
        %4615 = vmatpush1.msra.mxu0 0.0
        %4616 = vmatprep.subr.mxu0 0.0
        %4617 = vmatpush1.msra.mxu0 0.0
        %4618 = vmatprep.subr.mxu0 0.0
        %4619 = vmatpush1.msra.mxu0 0.0
        %4620 = vmatprep.subr.mxu0 0.0
        %4621 = vmatpush1.msra.mxu0 0.0
        %4622 = vmatprep.subr.mxu0 0.0
        %4623 = vmatpush1.msra.mxu0 0.0
        %4624 = vmatprep.subr.mxu0 0.0
        %4625 = vmatpush1.msra.mxu0 0.0
        %4626 = vmatprep.subr.mxu0 0.0
        %4627 = vmatpush1.msra.mxu0 0.0
        %4628 = vmatprep.mubr.f32.mxu0 0.0
        %4629 = vmatmul.mubr.f32.gmra.mrb[0].mxu0 %v4562
        %v4630 = vpop.f32.mrb[0].mxu0
        %v4631 = vadd.f32 0.0, %v4630
        %v4632 = vpop.f32.mrb[0].mxu0
        %4633 = vdwg.mxu0
        %4634 = vst.msk [vmem:[#allocation2] sm:$0xf] %vm1252, %v4631
        %4635 = vst.msk [vmem:[#allocation2 + $0x4] sm:$0xff] %vm1254, %v4553
        %4637 = vrot.lane.b32.xlu0 %v4456, 96
        %v4638 = vpop.permute.xlu0 %4637
        %4640 = vst.msk [vmem:[#allocation2 + $0xc] sm:$0xff] %vm1254, %v4638
        %v4641 = vld [vmem:[#allocation2] sm:$0xff]
        %v4642 = vld [vmem:[#allocation2 + $0x8] sm:$0xff]
        %v4643 = vld [vmem:[#allocation2 + $0x10] sm:$0xf]
        %4644 = vmatprep.subr.mxu0 0.0
        %4645 = vmatpush1.msra.mxu0 %v4456
        %4646 = vmatprep.subr.mxu0 0.0
        %4647 = vmatpush1.msra.mxu0 0.0
        %4648 = vmatprep.subr.mxu0 0.0
        %4649 = vmatpush1.msra.mxu0 0.0
        %4650 = vmatprep.subr.mxu0 0.0
        %4651 = vmatpush1.msra.mxu0 0.0
        %4652 = vmatprep.subr.mxu0 0.0
        %4653 = vmatpush1.msra.mxu0 0.0
        %4654 = vmatprep.subr.mxu0 0.0
        %4655 = vmatpush1.msra.mxu0 0.0
        %4656 = vmatprep.subr.mxu0 0.0
        %4657 = vmatpush1.msra.mxu0 0.0
        %4658 = vmatprep.subr.mxu0 0.0
        %4659 = vmatpush1.msra.mxu0 0.0
        %4660 = vmatprep.subr.mxu0 0.0
        %4661 = vmatpush1.msra.mxu0 0.0
        %4662 = vmatprep.subr.mxu0 0.0
        %4663 = vmatpush1.msra.mxu0 0.0
        %4664 = vmatprep.subr.mxu0 0.0
        %4665 = vmatpush1.msra.mxu0 0.0
        %4666 = vmatprep.subr.mxu0 0.0
        %4667 = vmatpush1.msra.mxu0 0.0
        %4668 = vmatprep.subr.mxu0 0.0
        %4669 = vmatpush1.msra.mxu0 0.0
        %4670 = vmatprep.subr.mxu0 0.0
        %4671 = vmatpush1.msra.mxu0 0.0
        %4672 = vmatprep.subr.mxu0 0.0
        %4673 = vmatpush1.msra.mxu0 0.0
        %4674 = vmatprep.subr.mxu0 0.0
        %4675 = vmatpush1.msra.mxu0 0.0
        %4676 = vmatprep.subr.mxu0 0.0
        %4677 = vmatpush1.msra.mxu0 0.0
        %4678 = vmatprep.subr.mxu0 0.0
        %4679 = vmatpush1.msra.mxu0 0.0
        %4680 = vmatprep.subr.mxu0 0.0
        %4681 = vmatpush1.msra.mxu0 0.0
        %4682 = vmatprep.subr.mxu0 0.0
        %4683 = vmatpush1.msra.mxu0 0.0
        %4684 = vmatprep.subr.mxu0 0.0
        %4685 = vmatpush1.msra.mxu0 0.0
        %4686 = vmatprep.subr.mxu0 0.0
        %4687 = vmatpush1.msra.mxu0 0.0
        %4688 = vmatprep.subr.mxu0 0.0
        %4689 = vmatpush1.msra.mxu0 0.0
        %4690 = vmatprep.subr.mxu0 0.0
        %4691 = vmatpush1.msra.mxu0 0.0
        %4692 = vmatprep.subr.mxu0 0.0
        %4693 = vmatpush1.msra.mxu0 0.0
        %4694 = vmatprep.subr.mxu0 0.0
        %4695 = vmatpush1.msra.mxu0 0.0
        %4696 = vmatprep.subr.mxu0 0.0
        %4697 = vmatpush1.msra.mxu0 0.0
        %4698 = vmatprep.subr.mxu0 0.0
        %4699 = vmatpush1.msra.mxu0 0.0
        %4700 = vmatprep.subr.mxu0 0.0
        %4701 = vmatpush1.msra.mxu0 0.0
        %4702 = vmatprep.subr.mxu0 0.0
        %4703 = vmatpush1.msra.mxu0 0.0
        %4704 = vmatprep.subr.mxu0 0.0
        %4705 = vmatpush1.msra.mxu0 0.0
        %4706 = vmatprep.subr.mxu0 0.0
        %4707 = vmatpush1.msra.mxu0 0.0
        %4708 = vmatprep.mubr.f32.mxu0 0.0
        %4709 = vmatmul.mubr.f32.gmra.mrb[0].mxu0 %v1266
        %v4710 = vpop.f32.mrb[0].mxu0
        %v4711 = vadd.f32 0.0, %v4710
        %v4712 = vpop.f32.mrb[0].mxu0
        %4713 = vmatprep.mubr.f32.mxu0 0.0
        %4714 = vmatmul.mubr.f32.gmra.mrb[0].mxu0 %v1269
        %v4715 = vpop.f32.mrb[0].mxu0
        %v4716 = vadd.f32 0.0, %v4715
        %v4717 = vpop.f32.mrb[0].mxu0
        %4718 = vmatprep.mubr.f32.mxu0 0.0
        %4719 = vmatmul.mubr.f32.gmra.mrb[0].mxu0 %v1272
        %v4720 = vpop.f32.mrb[0].mxu0
        %v4721 = vadd.f32 0.0, %v4720
        %v4722 = vpop.f32.mrb[0].mxu0
        %4723 = vmatprep.mubr.f32.mxu0 0.0
        %4724 = vmatmul.mubr.f32.gmra.mrb[0].mxu0 %v1275
        %v4725 = vpop.f32.mrb[0].mxu0
        %v4726 = vadd.f32 0.0, %v4725
        %v4727 = vpop.f32.mrb[0].mxu0
        %4728 = vdwg.mxu0
        %v4729 = vmul.f32 %v4711, %v870
        %v4730 = vmul.f32 %v4716, %v871
        %v4731 = vmul.f32 %v4721, %v872
        %v4732 = vmul.f32 %v4726, %v873
        %v4734 = vsel %vm959, %v4729, 0
        %v4737 = vsel %vm959, %v4730, 0
        %v4740 = vsel %vm959, %v4731, 0
        %v4743 = vsel %vm959, %v4732, 0
        %v4746 = vsel %vm959, %v4641, 0
        %v4749 = vsel %vm959, %v4642, 0
        %v4752 = vsel %vm959, %v4643, 0
        %4754 = vmatprep.subr.mxu0 0.0
        %4755 = vmatpush1.xpose.msra.mxu0 %v4746
        %4756 = vmatprep.subr.mxu0 0.0
        %4757 = vmatpush1.xpose.msra.mxu0 %v4749
        %4758 = vmatprep.subr.mxu0 0.0
        %4759 = vmatpush1.xpose.msra.mxu0 %v4752
        %4760 = vmatprep.subr.mxu0 0.0
        %4761 = vmatpush1.xpose.msra.mxu0 0.0
        %4762 = vmatprep.subr.mxu0 0.0
        %4763 = vmatpush1.xpose.msra.mxu0 0.0
        %4764 = vmatprep.subr.mxu0 0.0
        %4765 = vmatpush1.xpose.msra.mxu0 0.0
        %4766 = vmatprep.subr.mxu0 0.0
        %4767 = vmatpush1.xpose.msra.mxu0 0.0
        %4768 = vmatprep.subr.mxu0 0.0
        %4769 = vmatpush1.xpose.msra.mxu0 0.0
        %4770 = vmatprep.subr.mxu0 0.0
        %4771 = vmatpush1.xpose.msra.mxu0 0.0
        %4772 = vmatprep.subr.mxu0 0.0
        %4773 = vmatpush1.xpose.msra.mxu0 0.0
        %4774 = vmatprep.subr.mxu0 0.0
        %4775 = vmatpush1.xpose.msra.mxu0 0.0
        %4776 = vmatprep.subr.mxu0 0.0
        %4777 = vmatpush1.xpose.msra.mxu0 0.0
        %4778 = vmatprep.subr.mxu0 0.0
        %4779 = vmatpush1.xpose.msra.mxu0 0.0
        %4780 = vmatprep.subr.mxu0 0.0
        %4781 = vmatpush1.xpose.msra.mxu0 0.0
        %4782 = vmatprep.subr.mxu0 0.0
        %4783 = vmatpush1.xpose.msra.mxu0 0.0
        %4784 = vmatprep.subr.mxu0 0.0
        %4785 = vmatpush1.xpose.msra.mxu0 0.0
        %4786 = vmatprep.subr.mxu0 0.0
        %4787 = vmatpush1.xpose.msra.mxu0 0.0
        %4788 = vmatprep.subr.mxu0 0.0
        %4789 = vmatpush1.xpose.msra.mxu0 0.0
        %4790 = vmatprep.subr.mxu0 0.0
        %4791 = vmatpush1.xpose.msra.mxu0 0.0
        %4792 = vmatprep.subr.mxu0 0.0
        %4793 = vmatpush1.xpose.msra.mxu0 0.0
        %4794 = vmatprep.subr.mxu0 0.0
        %4795 = vmatpush1.xpose.msra.mxu0 0.0
        %4796 = vmatprep.subr.mxu0 0.0
        %4797 = vmatpush1.xpose.msra.mxu0 0.0
        %4798 = vmatprep.subr.mxu0 0.0
        %4799 = vmatpush1.xpose.msra.mxu0 0.0
        %4800 = vmatprep.subr.mxu0 0.0
        %4801 = vmatpush1.xpose.msra.mxu0 0.0
        %4802 = vmatprep.subr.mxu0 0.0
        %4803 = vmatpush1.xpose.msra.mxu0 0.0
        %4804 = vmatprep.subr.mxu0 0.0
        %4805 = vmatpush1.xpose.msra.mxu0 0.0
        %4806 = vmatprep.subr.mxu0 0.0
        %4807 = vmatpush1.xpose.msra.mxu0 0.0
        %4808 = vmatprep.subr.mxu0 0.0
        %4809 = vmatpush1.xpose.msra.mxu0 0.0
        %4810 = vmatprep.subr.mxu0 0.0
        %4811 = vmatpush1.xpose.msra.mxu0 0.0
        %4812 = vmatprep.subr.mxu0 0.0
        %4813 = vmatpush1.xpose.msra.mxu0 0.0
        %4814 = vmatprep.subr.mxu0 0.0
        %4815 = vmatpush1.xpose.msra.mxu0 0.0
        %4816 = vmatprep.subr.mxu0 0.0
        %4817 = vmatpush1.xpose.msra.mxu0 0.0
        %4818 = vmatprep.mubr.f32.mxu0 0.0
        %4819 = vmatmul.mubr.f32.gmra.mrb[0].mxu0 %v4734
        %v4820 = vpop.f32.mrb[0].mxu0
        %v4821 = vadd.f32 0.0, %v4820
        %v4822 = vpop.f32.mrb[0].mxu0
        %4823 = vmatprep.mubr.f32.mxu0 0.0
        %4824 = vmatmul.mubr.f32.gmra.mrb[0].mxu0 %v4737
        %v4825 = vpop.f32.mrb[0].mxu0
        %v4826 = vadd.f32 0.0, %v4825
        %v4827 = vpop.f32.mrb[0].mxu0
        %4828 = vmatprep.mubr.f32.mxu0 0.0
        %4829 = vmatmul.mubr.f32.gmra.mrb[0].mxu0 %v4740
        %v4830 = vpop.f32.mrb[0].mxu0
        %v4831 = vadd.f32 0.0, %v4830
        %v4832 = vpop.f32.mrb[0].mxu0
        %4833 = vmatprep.mubr.f32.mxu0 0.0
        %4834 = vmatmul.mubr.f32.gmra.mrb[0].mxu0 %v4743
        %v4835 = vpop.f32.mrb[0].mxu0
        %v4836 = vadd.f32 0.0, %v4835
        %v4837 = vpop.f32.mrb[0].mxu0
        %4838 = vdwg.mxu0
        %v4839 = vmul.f32 %v4821, 0.35355338
        %v4840 = vmul.f32 %v4826, 0.35355338
        %v4841 = vmul.f32 %v4831, 0.35355338
        %v4842 = vmul.f32 %v4836, 0.35355338
        %4843 = vmatprep.subr.mxu0 0.0
        %4844 = vmatpush1.msra.mxu0 %v875
        %4845 = vmatprep.subr.mxu0 0.0
        %4846 = vmatpush1.msra.mxu0 %v876
        %4847 = vmatprep.subr.mxu0 0.0
        %4848 = vmatpush1.msra.mxu0 %v877
        %4849 = vmatprep.subr.mxu0 0.0
        %4850 = vmatpush1.msra.mxu0 %v878
        %4851 = vmatprep.subr.mxu0 0.0
        %4852 = vmatpush1.msra.mxu0 0.0
        %4853 = vmatprep.subr.mxu0 0.0
        %4854 = vmatpush1.msra.mxu0 0.0
        %4855 = vmatprep.subr.mxu0 0.0
        %4856 = vmatpush1.msra.mxu0 0.0
        %4857 = vmatprep.subr.mxu0 0.0
        %4858 = vmatpush1.msra.mxu0 0.0
        %4859 = vmatprep.subr.mxu0 0.0
        %4860 = vmatpush1.msra.mxu0 0.0
        %4861 = vmatprep.subr.mxu0 0.0
        %4862 = vmatpush1.msra.mxu0 0.0
        %4863 = vmatprep.subr.mxu0 0.0
        %4864 = vmatpush1.msra.mxu0 0.0
        %4865 = vmatprep.subr.mxu0 0.0
        %4866 = vmatpush1.msra.mxu0 0.0
        %4867 = vmatprep.subr.mxu0 0.0
        %4868 = vmatpush1.msra.mxu0 0.0
        %4869 = vmatprep.subr.mxu0 0.0
        %4870 = vmatpush1.msra.mxu0 0.0
        %4871 = vmatprep.subr.mxu0 0.0
        %4872 = vmatpush1.msra.mxu0 0.0
        %4873 = vmatprep.subr.mxu0 0.0
        %4874 = vmatpush1.msra.mxu0 0.0
        %4875 = vmatprep.subr.mxu0 0.0
        %4876 = vmatpush1.msra.mxu0 0.0
        %4877 = vmatprep.subr.mxu0 0.0
        %4878 = vmatpush1.msra.mxu0 0.0
        %4879 = vmatprep.subr.mxu0 0.0
        %4880 = vmatpush1.msra.mxu0 0.0
        %4881 = vmatprep.subr.mxu0 0.0
        %4882 = vmatpush1.msra.mxu0 0.0
        %4883 = vmatprep.subr.mxu0 0.0
        %4884 = vmatpush1.msra.mxu0 0.0
        %4885 = vmatprep.subr.mxu0 0.0
        %4886 = vmatpush1.msra.mxu0 0.0
        %4887 = vmatprep.subr.mxu0 0.0
        %4888 = vmatpush1.msra.mxu0 0.0
        %4889 = vmatprep.subr.mxu0 0.0
        %4890 = vmatpush1.msra.mxu0 0.0
        %4891 = vmatprep.subr.mxu0 0.0
        %4892 = vmatpush1.msra.mxu0 0.0
        %4893 = vmatprep.subr.mxu0 0.0
        %4894 = vmatpush1.msra.mxu0 0.0
        %4895 = vmatprep.subr.mxu0 0.0
        %4896 = vmatpush1.msra.mxu0 0.0
        %4897 = vmatprep.subr.mxu0 0.0
        %4898 = vmatpush1.msra.mxu0 0.0
        %4899 = vmatprep.subr.mxu0 0.0
        %4900 = vmatpush1.msra.mxu0 0.0
        %4901 = vmatprep.subr.mxu0 0.0
        %4902 = vmatpush1.msra.mxu0 0.0
        %4903 = vmatprep.subr.mxu0 0.0
        %4904 = vmatpush1.msra.mxu0 0.0
        %4905 = vmatprep.subr.mxu0 0.0
        %4906 = vmatpush1.msra.mxu0 0.0
        %4907 = vmatprep.mubr.f32.mxu0 0.0
        %4908 = vmatmul.mubr.f32.gmra.mrb[0].mxu0 %v4734
        %v4909 = vpop.f32.mrb[0].mxu0
        %v4910 = vadd.f32 0.0, %v4909
        %v4911 = vpop.f32.mrb[0].mxu0
        %4912 = vmatprep.mubr.f32.mxu0 0.0
        %4913 = vmatmul.mubr.f32.gmra.mrb[0].mxu0 %v4737
        %v4914 = vpop.f32.mrb[0].mxu0
        %v4915 = vadd.f32 0.0, %v4914
        %v4916 = vpop.f32.mrb[0].mxu0
        %4917 = vmatprep.mubr.f32.mxu0 0.0
        %4918 = vmatmul.mubr.f32.gmra.mrb[0].mxu0 %v4740
        %v4919 = vpop.f32.mrb[0].mxu0
        %v4920 = vadd.f32 0.0, %v4919
        %v4921 = vpop.f32.mrb[0].mxu0
        %4922 = vmatprep.mubr.f32.mxu0 0.0
        %4923 = vmatmul.mubr.f32.gmra.mrb[0].mxu0 %v4743
        %v4924 = vpop.f32.mrb[0].mxu0
        %v4925 = vadd.f32 0.0, %v4924
        %v4926 = vpop.f32.mrb[0].mxu0
        %4927 = vdwg.mxu0
        %4932 = vrot.lane.b32.xlu0 %v4910, 4
        %v4933 = vpop.permute.xlu0 %4932
        %4934 = vrot.lane.b32.xlu0 %v4915, 4
        %v4935 = vpop.permute.xlu0 %4934
        %4936 = vrot.lane.b32.xlu0 %v4920, 4
        %v4937 = vpop.permute.xlu0 %4936
        %4938 = vrot.lane.b32.xlu0 %v4925, 4
        %v4939 = vpop.permute.xlu0 %4938
        %v4944 = vsel %vm1565, %v4910, %v4933
        %v4945 = vsel %vm1566, %v4915, %v4935
        %v4946 = vsel %vm1567, %v4920, %v4937
        %v4947 = vsel %vm1568, %v4925, %v4939
        %4952 = vrot.lane.b32.xlu0 %v4944, 2
        %v4953 = vpop.permute.xlu0 %4952
        %4954 = vrot.lane.b32.xlu0 %v4945, 2
        %v4955 = vpop.permute.xlu0 %4954
        %4956 = vrot.lane.b32.xlu0 %v4946, 2
        %v4957 = vpop.permute.xlu0 %4956
        %4958 = vrot.lane.b32.xlu0 %v4947, 2
        %v4959 = vpop.permute.xlu0 %4958
        %v4964 = vsel %vm1593, %v4944, %v4953
        %v4965 = vsel %vm1594, %v4945, %v4955
        %v4966 = vsel %vm1595, %v4946, %v4957
        %v4967 = vsel %vm1596, %v4947, %v4959
        %4972 = vrot.lane.b32.xlu0 %v4964, 1
        %v4973 = vpop.permute.xlu0 %4972
        %4974 = vrot.lane.b32.xlu0 %v4965, 1
        %v4975 = vpop.permute.xlu0 %4974
        %4976 = vrot.lane.b32.xlu0 %v4966, 1
        %v4977 = vpop.permute.xlu0 %4976
        %4978 = vrot.lane.b32.xlu0 %v4967, 1
        %v4979 = vpop.permute.xlu0 %4978
        %v4984 = vsel %vm1621, %v4964, %v4973
        %v4985 = vsel %vm1622, %v4965, %v4975
        %v4986 = vsel %vm1623, %v4966, %v4977
        %v4987 = vsel %vm1624, %v4967, %v4979
        %4992 = vrot.lane.b32.xlu0 %v4984, 121
        %v4993 = vpop.permute.xlu0 %4992
        %4994 = vrot.lane.b32.xlu0 %v4985, 121
        %v4995 = vpop.permute.xlu0 %4994
        %4996 = vrot.lane.b32.xlu0 %v4986, 121
        %v4997 = vpop.permute.xlu0 %4996
        %4998 = vrot.lane.b32.xlu0 %v4987, 121
        %v4999 = vpop.permute.xlu0 %4998
        %v5004 = vadd.f32 %v4839, %v4993
        %v5005 = vadd.f32 %v4840, %v4995
        %v5006 = vadd.f32 %v4841, %v4997
        %v5007 = vadd.f32 %v4842, %v4999
        %v5008 = vadd.f32 %v5004, %v879
        %v5009 = vadd.f32 %v5005, %v880
        %v5010 = vadd.f32 %v5006, %v881
        %v5011 = vadd.f32 %v5007, %v882
        %v5012 = vsel %vm1669, %v5008, -inf
        %5013 = vmax.xlane.f32.xlu0 %v5012
        %v5014 = vpop.xlane.xlu0 %5013
        %v5015 = vsel %vm1669, %v5009, -inf
        %5016 = vmax.xlane.f32.xlu0 %v5015
        %v5017 = vpop.xlane.xlu0 %5016
        %v5018 = vsel %vm1669, %v5010, -inf
        %5019 = vmax.xlane.f32.xlu0 %v5018
        %v5020 = vpop.xlane.xlu0 %5019
        %v5021 = vsel %vm1669, %v5011, -inf
        %5022 = vmax.xlane.f32.xlu0 %v5021
        %v5023 = vpop.xlane.xlu0 %5022
        %v5024 = vsub.f32 %v5008, %v5014
        %v5025 = vsub.f32 %v5009, %v5017
        %v5026 = vsub.f32 %v5010, %v5020
        %v5027 = vsub.f32 %v5011, %v5023
        %v5028 = vmul.f32 %v5024, 1.442695
        %v5029 = vpow.pop %v5028
        %v5030 = vmul.f32 %v5025, 1.442695
        %v5031 = vpow.pop %v5030
        %v5032 = vmul.f32 %v5026, 1.442695
        %v5033 = vpow.pop %v5032
        %v5034 = vmul.f32 %v5027, 1.442695
        %v5035 = vpow.pop %v5034
        %v5036 = vsel %vm1669, %v5029, 0.0
        %5037 = vadd.xlane.f32.xlu0 %v5036
        %v5038 = vpop.xlane.xlu0 %5037
        %v5039 = vsel %vm1669, %v5031, 0.0
        %5040 = vadd.xlane.f32.xlu0 %v5039
        %v5041 = vpop.xlane.xlu0 %5040
        %v5042 = vsel %vm1669, %v5033, 0.0
        %5043 = vadd.xlane.f32.xlu0 %v5042
        %v5044 = vpop.xlane.xlu0 %5043
        %v5045 = vsel %vm1669, %v5035, 0.0
        %5046 = vadd.xlane.f32.xlu0 %v5045
        %v5047 = vpop.xlane.xlu0 %5046
        %v5048 = vrcp.pop %v5038
        %v5049 = vrcp.pop %v5041
        %v5050 = vrcp.pop %v5044
        %v5051 = vrcp.pop %v5047
        %v5052 = vmul.f32 %v5029, %v5048
        %v5053 = vmul.f32 %v5031, %v5049
        %v5054 = vmul.f32 %v5033, %v5050
        %v5055 = vmul.f32 %v5035, %v5051
        %s5056 = scalar_lea.vmem %s789, 64 [#allocation6]
        %5057 = vst.msk [vmem:[%s5056] sm:$0xff] %vm1669, %v5052
        %5058 = vst.msk [vmem:[%s5056 + $0x8] sm:$0xff] %vm1669, %v5053
        %5059 = vst.msk [vmem:[%s5056 + $0x10] sm:$0xff] %vm1669, %v5054
        %5060 = vst.msk [vmem:[%s5056 + $0x18] sm:$0xff] %vm1669, %v5055
        %5061 = vrot.lane.b32.xlu0 %v4641, 96
        %v5062 = vpop.permute.xlu0 %5061
        %5063 = vrot.lane.b32.xlu0 %v4642, 96
        %v5064 = vpop.permute.xlu0 %5063
        %5065 = vrot.lane.b32.xlu0 %v4643, 96
        %v5066 = vpop.permute.xlu0 %5065
        %v5070 = vsel %vm1669, %v5052, 0
        %v5073 = vsel %vm1669, %v5053, 0
        %v5076 = vsel %vm1669, %v5054, 0
        %v5079 = vsel %vm1669, %v5055, 0
        %v5081 = vsel %vm1738, %v5066, 0
        %5083 = vmatprep.subr.mxu0 0.0
        %5084 = vmatpush1.msra.mxu0 %v5062
        %5085 = vmatprep.subr.mxu0 0.0
        %5086 = vmatpush1.msra.mxu0 %v5064
        %5087 = vmatprep.subr.mxu0 0.0
        %5088 = vmatpush1.msra.mxu0 %v5081
        %5089 = vmatprep.subr.mxu0 0.0
        %5090 = vmatpush1.msra.mxu0 0.0
        %5091 = vmatprep.subr.mxu0 0.0
        %5092 = vmatpush1.msra.mxu0 0.0
        %5093 = vmatprep.subr.mxu0 0.0
        %5094 = vmatpush1.msra.mxu0 0.0
        %5095 = vmatprep.subr.mxu0 0.0
        %5096 = vmatpush1.msra.mxu0 0.0
        %5097 = vmatprep.subr.mxu0 0.0
        %5098 = vmatpush1.msra.mxu0 0.0
        %5099 = vmatprep.subr.mxu0 0.0
        %5100 = vmatpush1.msra.mxu0 0.0
        %5101 = vmatprep.subr.mxu0 0.0
        %5102 = vmatpush1.msra.mxu0 0.0
        %5103 = vmatprep.subr.mxu0 0.0
        %5104 = vmatpush1.msra.mxu0 0.0
        %5105 = vmatprep.subr.mxu0 0.0
        %5106 = vmatpush1.msra.mxu0 0.0
        %5107 = vmatprep.subr.mxu0 0.0
        %5108 = vmatpush1.msra.mxu0 0.0
        %5109 = vmatprep.subr.mxu0 0.0
        %5110 = vmatpush1.msra.mxu0 0.0
        %5111 = vmatprep.subr.mxu0 0.0
        %5112 = vmatpush1.msra.mxu0 0.0
        %5113 = vmatprep.subr.mxu0 0.0
        %5114 = vmatpush1.msra.mxu0 0.0
        %5115 = vmatprep.subr.mxu0 0.0
        %5116 = vmatpush1.msra.mxu0 0.0
        %5117 = vmatprep.subr.mxu0 0.0
        %5118 = vmatpush1.msra.mxu0 0.0
        %5119 = vmatprep.subr.mxu0 0.0
        %5120 = vmatpush1.msra.mxu0 0.0
        %5121 = vmatprep.subr.mxu0 0.0
        %5122 = vmatpush1.msra.mxu0 0.0
        %5123 = vmatprep.subr.mxu0 0.0
        %5124 = vmatpush1.msra.mxu0 0.0
        %5125 = vmatprep.subr.mxu0 0.0
        %5126 = vmatpush1.msra.mxu0 0.0
        %5127 = vmatprep.subr.mxu0 0.0
        %5128 = vmatpush1.msra.mxu0 0.0
        %5129 = vmatprep.subr.mxu0 0.0
        %5130 = vmatpush1.msra.mxu0 0.0
        %5131 = vmatprep.subr.mxu0 0.0
        %5132 = vmatpush1.msra.mxu0 0.0
        %5133 = vmatprep.subr.mxu0 0.0
        %5134 = vmatpush1.msra.mxu0 0.0
        %5135 = vmatprep.subr.mxu0 0.0
        %5136 = vmatpush1.msra.mxu0 0.0
        %5137 = vmatprep.subr.mxu0 0.0
        %5138 = vmatpush1.msra.mxu0 0.0
        %5139 = vmatprep.subr.mxu0 0.0
        %5140 = vmatpush1.msra.mxu0 0.0
        %5141 = vmatprep.subr.mxu0 0.0
        %5142 = vmatpush1.msra.mxu0 0.0
        %5143 = vmatprep.subr.mxu0 0.0
        %5144 = vmatpush1.msra.mxu0 0.0
        %5145 = vmatprep.subr.mxu0 0.0
        %5146 = vmatpush1.msra.mxu0 0.0
        %5147 = vmatprep.mubr.f32.mxu0 0.0
        %5148 = vmatmul.mubr.f32.gmra.mrb[0].mxu0 %v5070
        %v5149 = vpop.f32.mrb[0].mxu0
        %v5150 = vadd.f32 0.0, %v5149
        %v5151 = vpop.f32.mrb[0].mxu0
        %5152 = vmatprep.mubr.f32.mxu0 0.0
        %5153 = vmatmul.mubr.f32.gmra.mrb[0].mxu0 %v5073
        %v5154 = vpop.f32.mrb[0].mxu0
        %v5155 = vadd.f32 0.0, %v5154
        %v5156 = vpop.f32.mrb[0].mxu0
        %5157 = vmatprep.mubr.f32.mxu0 0.0
        %5158 = vmatmul.mubr.f32.gmra.mrb[0].mxu0 %v5076
        %v5159 = vpop.f32.mrb[0].mxu0
        %v5160 = vadd.f32 0.0, %v5159
        %v5161 = vpop.f32.mrb[0].mxu0
        %5162 = vmatprep.mubr.f32.mxu0 0.0
        %5163 = vmatmul.mubr.f32.gmra.mrb[0].mxu0 %v5079
        %v5164 = vpop.f32.mrb[0].mxu0
        %v5165 = vadd.f32 0.0, %v5164
        %v5166 = vpop.f32.mrb[0].mxu0
        %5167 = vdwg.mxu0
        %v5168 = vmul.f32 %v5150, %v870
        %v5169 = vmul.f32 %v5155, %v871
        %v5170 = vmul.f32 %v5160, %v872
        %v5171 = vmul.f32 %v5165, %v873
        %5172 = vmatprep.subr.mxu0 0.0
        %5173 = vmatpush1.msra.mxu0 %v5168
        %5174 = vmatprep.subr.mxu0 0.0
        %5175 = vmatpush1.msra.mxu0 %v5169
        %5176 = vmatprep.subr.mxu0 0.0
        %5177 = vmatpush1.msra.mxu0 %v5170
        %5178 = vmatprep.subr.mxu0 0.0
        %5179 = vmatpush1.msra.mxu0 %v5171
        %5180 = vmatprep.subr.mxu0 0.0
        %5181 = vmatpush1.msra.mxu0 0.0
        %5182 = vmatprep.subr.mxu0 0.0
        %5183 = vmatpush1.msra.mxu0 0.0
        %5184 = vmatprep.subr.mxu0 0.0
        %5185 = vmatpush1.msra.mxu0 0.0
        %5186 = vmatprep.subr.mxu0 0.0
        %5187 = vmatpush1.msra.mxu0 0.0
        %5188 = vmatprep.subr.mxu0 0.0
        %5189 = vmatpush1.msra.mxu0 0.0
        %5190 = vmatprep.subr.mxu0 0.0
        %5191 = vmatpush1.msra.mxu0 0.0
        %5192 = vmatprep.subr.mxu0 0.0
        %5193 = vmatpush1.msra.mxu0 0.0
        %5194 = vmatprep.subr.mxu0 0.0
        %5195 = vmatpush1.msra.mxu0 0.0
        %5196 = vmatprep.subr.mxu0 0.0
        %5197 = vmatpush1.msra.mxu0 0.0
        %5198 = vmatprep.subr.mxu0 0.0
        %5199 = vmatpush1.msra.mxu0 0.0
        %5200 = vmatprep.subr.mxu0 0.0
        %5201 = vmatpush1.msra.mxu0 0.0
        %5202 = vmatprep.subr.mxu0 0.0
        %5203 = vmatpush1.msra.mxu0 0.0
        %5204 = vmatprep.subr.mxu0 0.0
        %5205 = vmatpush1.msra.mxu0 0.0
        %5206 = vmatprep.subr.mxu0 0.0
        %5207 = vmatpush1.msra.mxu0 0.0
        %5208 = vmatprep.subr.mxu0 0.0
        %5209 = vmatpush1.msra.mxu0 0.0
        %5210 = vmatprep.subr.mxu0 0.0
        %5211 = vmatpush1.msra.mxu0 0.0
        %5212 = vmatprep.subr.mxu0 0.0
        %5213 = vmatpush1.msra.mxu0 0.0
        %5214 = vmatprep.subr.mxu0 0.0
        %5215 = vmatpush1.msra.mxu0 0.0
        %5216 = vmatprep.subr.mxu0 0.0
        %5217 = vmatpush1.msra.mxu0 0.0
        %5218 = vmatprep.subr.mxu0 0.0
        %5219 = vmatpush1.msra.mxu0 0.0
        %5220 = vmatprep.subr.mxu0 0.0
        %5221 = vmatpush1.msra.mxu0 0.0
        %5222 = vmatprep.subr.mxu0 0.0
        %5223 = vmatpush1.msra.mxu0 0.0
        %5224 = vmatprep.subr.mxu0 0.0
        %5225 = vmatpush1.msra.mxu0 0.0
        %5226 = vmatprep.subr.mxu0 0.0
        %5227 = vmatpush1.msra.mxu0 0.0
        %5228 = vmatprep.subr.mxu0 0.0
        %5229 = vmatpush1.msra.mxu0 0.0
        %5230 = vmatprep.subr.mxu0 0.0
        %5231 = vmatpush1.msra.mxu0 0.0
        %5232 = vmatprep.subr.mxu0 0.0
        %5233 = vmatpush1.msra.mxu0 0.0
        %5234 = vmatprep.subr.mxu0 0.0
        %5235 = vmatpush1.msra.mxu0 0.0
        %5236 = vmatprep.mubr.f32.mxu0 0.0
        %5237 = vmatmul.mubr.f32.gmra.mrb[0].mxu0 %v1831
        %v5238 = vpop.f32.mrb[0].mxu0
        %v5239 = vadd.f32 0.0, %v5238
        %v5240 = vpop.f32.mrb[0].mxu0
        %5241 = vdwg.mxu0
        %5242 = vst.msk [vmem:[#allocation3] sm:$0xff] %vm959, %v5239
        %5243 = vst.msk [vmem:[#allocation2 - $0x4] sm:$0xf0] %vm1904, %v4631
        %5244 = vst.msk [vmem:[#allocation2 + $0x4] sm:$0xff] %vm1254, %v4558
        %5246 = vrot.lane.b32.xlu0 %v4461, 96
        %v5247 = vpop.permute.xlu0 %5246
        %5249 = vst.msk [vmem:[#allocation2 + $0xc] sm:$0xff] %vm1254, %v5247
        %v5250 = vld [vmem:[#allocation2] sm:$0xff]
        %v5251 = vld [vmem:[#allocation2 + $0x8] sm:$0xff]
        %v5252 = vld [vmem:[#allocation2 + $0x10] sm:$0xf]
        %5253 = vmatprep.subr.mxu0 0.0
        %5254 = vmatpush1.msra.mxu0 %v4461
        %5255 = vmatprep.subr.mxu0 0.0
        %5256 = vmatpush1.msra.mxu0 0.0
        %5257 = vmatprep.subr.mxu0 0.0
        %5258 = vmatpush1.msra.mxu0 0.0
        %5259 = vmatprep.subr.mxu0 0.0
        %5260 = vmatpush1.msra.mxu0 0.0
        %5261 = vmatprep.subr.mxu0 0.0
        %5262 = vmatpush1.msra.mxu0 0.0
        %5263 = vmatprep.subr.mxu0 0.0
        %5264 = vmatpush1.msra.mxu0 0.0
        %5265 = vmatprep.subr.mxu0 0.0
        %5266 = vmatpush1.msra.mxu0 0.0
        %5267 = vmatprep.subr.mxu0 0.0
        %5268 = vmatpush1.msra.mxu0 0.0
        %5269 = vmatprep.subr.mxu0 0.0
        %5270 = vmatpush1.msra.mxu0 0.0
        %5271 = vmatprep.subr.mxu0 0.0
        %5272 = vmatpush1.msra.mxu0 0.0
        %5273 = vmatprep.subr.mxu0 0.0
        %5274 = vmatpush1.msra.mxu0 0.0
        %5275 = vmatprep.subr.mxu0 0.0
        %5276 = vmatpush1.msra.mxu0 0.0
        %5277 = vmatprep.subr.mxu0 0.0
        %5278 = vmatpush1.msra.mxu0 0.0
        %5279 = vmatprep.subr.mxu0 0.0
        %5280 = vmatpush1.msra.mxu0 0.0
        %5281 = vmatprep.subr.mxu0 0.0
        %5282 = vmatpush1.msra.mxu0 0.0
        %5283 = vmatprep.subr.mxu0 0.0
        %5284 = vmatpush1.msra.mxu0 0.0
        %5285 = vmatprep.subr.mxu0 0.0
        %5286 = vmatpush1.msra.mxu0 0.0
        %5287 = vmatprep.subr.mxu0 0.0
        %5288 = vmatpush1.msra.mxu0 0.0
        %5289 = vmatprep.subr.mxu0 0.0
        %5290 = vmatpush1.msra.mxu0 0.0
        %5291 = vmatprep.subr.mxu0 0.0
        %5292 = vmatpush1.msra.mxu0 0.0
        %5293 = vmatprep.subr.mxu0 0.0
        %5294 = vmatpush1.msra.mxu0 0.0
        %5295 = vmatprep.subr.mxu0 0.0
        %5296 = vmatpush1.msra.mxu0 0.0
        %5297 = vmatprep.subr.mxu0 0.0
        %5298 = vmatpush1.msra.mxu0 0.0
        %5299 = vmatprep.subr.mxu0 0.0
        %5300 = vmatpush1.msra.mxu0 0.0
        %5301 = vmatprep.subr.mxu0 0.0
        %5302 = vmatpush1.msra.mxu0 0.0
        %5303 = vmatprep.subr.mxu0 0.0
        %5304 = vmatpush1.msra.mxu0 0.0
        %5305 = vmatprep.subr.mxu0 0.0
        %5306 = vmatpush1.msra.mxu0 0.0
        %5307 = vmatprep.subr.mxu0 0.0
        %5308 = vmatpush1.msra.mxu0 0.0
        %5309 = vmatprep.subr.mxu0 0.0
        %5310 = vmatpush1.msra.mxu0 0.0
        %5311 = vmatprep.subr.mxu0 0.0
        %5312 = vmatpush1.msra.mxu0 0.0
        %5313 = vmatprep.subr.mxu0 0.0
        %5314 = vmatpush1.msra.mxu0 0.0
        %5315 = vmatprep.subr.mxu0 0.0
        %5316 = vmatpush1.msra.mxu0 0.0
        %5317 = vmatprep.mubr.f32.mxu0 0.0
        %5318 = vmatmul.mubr.f32.gmra.mrb[0].mxu0 %v1266
        %v5319 = vpop.f32.mrb[0].mxu0
        %v5320 = vadd.f32 0.0, %v5319
        %v5321 = vpop.f32.mrb[0].mxu0
        %5322 = vmatprep.mubr.f32.mxu0 0.0
        %5323 = vmatmul.mubr.f32.gmra.mrb[0].mxu0 %v1269
        %v5324 = vpop.f32.mrb[0].mxu0
        %v5325 = vadd.f32 0.0, %v5324
        %v5326 = vpop.f32.mrb[0].mxu0
        %5327 = vmatprep.mubr.f32.mxu0 0.0
        %5328 = vmatmul.mubr.f32.gmra.mrb[0].mxu0 %v1272
        %v5329 = vpop.f32.mrb[0].mxu0
        %v5330 = vadd.f32 0.0, %v5329
        %v5331 = vpop.f32.mrb[0].mxu0
        %5332 = vmatprep.mubr.f32.mxu0 0.0
        %5333 = vmatmul.mubr.f32.gmra.mrb[0].mxu0 %v1275
        %v5334 = vpop.f32.mrb[0].mxu0
        %v5335 = vadd.f32 0.0, %v5334
        %v5336 = vpop.f32.mrb[0].mxu0
        %5337 = vdwg.mxu0
        %v5338 = vmul.f32 %v5320, %v870
        %v5339 = vmul.f32 %v5325, %v871
        %v5340 = vmul.f32 %v5330, %v872
        %v5341 = vmul.f32 %v5335, %v873
        %v5343 = vsel %vm959, %v5338, 0
        %v5346 = vsel %vm959, %v5339, 0
        %v5349 = vsel %vm959, %v5340, 0
        %v5352 = vsel %vm959, %v5341, 0
        %v5355 = vsel %vm959, %v5250, 0
        %v5358 = vsel %vm959, %v5251, 0
        %v5361 = vsel %vm959, %v5252, 0
        %5363 = vmatprep.subr.mxu0 0.0
        %5364 = vmatpush1.xpose.msra.mxu0 %v5355
        %5365 = vmatprep.subr.mxu0 0.0
        %5366 = vmatpush1.xpose.msra.mxu0 %v5358
        %5367 = vmatprep.subr.mxu0 0.0
        %5368 = vmatpush1.xpose.msra.mxu0 %v5361
        %5369 = vmatprep.subr.mxu0 0.0
        %5370 = vmatpush1.xpose.msra.mxu0 0.0
        %5371 = vmatprep.subr.mxu0 0.0
        %5372 = vmatpush1.xpose.msra.mxu0 0.0
        %5373 = vmatprep.subr.mxu0 0.0
        %5374 = vmatpush1.xpose.msra.mxu0 0.0
        %5375 = vmatprep.subr.mxu0 0.0
        %5376 = vmatpush1.xpose.msra.mxu0 0.0
        %5377 = vmatprep.subr.mxu0 0.0
        %5378 = vmatpush1.xpose.msra.mxu0 0.0
        %5379 = vmatprep.subr.mxu0 0.0
        %5380 = vmatpush1.xpose.msra.mxu0 0.0
        %5381 = vmatprep.subr.mxu0 0.0
        %5382 = vmatpush1.xpose.msra.mxu0 0.0
        %5383 = vmatprep.subr.mxu0 0.0
        %5384 = vmatpush1.xpose.msra.mxu0 0.0
        %5385 = vmatprep.subr.mxu0 0.0
        %5386 = vmatpush1.xpose.msra.mxu0 0.0
        %5387 = vmatprep.subr.mxu0 0.0
        %5388 = vmatpush1.xpose.msra.mxu0 0.0
        %5389 = vmatprep.subr.mxu0 0.0
        %5390 = vmatpush1.xpose.msra.mxu0 0.0
        %5391 = vmatprep.subr.mxu0 0.0
        %5392 = vmatpush1.xpose.msra.mxu0 0.0
        %5393 = vmatprep.subr.mxu0 0.0
        %5394 = vmatpush1.xpose.msra.mxu0 0.0
        %5395 = vmatprep.subr.mxu0 0.0
        %5396 = vmatpush1.xpose.msra.mxu0 0.0
        %5397 = vmatprep.subr.mxu0 0.0
        %5398 = vmatpush1.xpose.msra.mxu0 0.0
        %5399 = vmatprep.subr.mxu0 0.0
        %5400 = vmatpush1.xpose.msra.mxu0 0.0
        %5401 = vmatprep.subr.mxu0 0.0
        %5402 = vmatpush1.xpose.msra.mxu0 0.0
        %5403 = vmatprep.subr.mxu0 0.0
        %5404 = vmatpush1.xpose.msra.mxu0 0.0
        %5405 = vmatprep.subr.mxu0 0.0
        %5406 = vmatpush1.xpose.msra.mxu0 0.0
        %5407 = vmatprep.subr.mxu0 0.0
        %5408 = vmatpush1.xpose.msra.mxu0 0.0
        %5409 = vmatprep.subr.mxu0 0.0
        %5410 = vmatpush1.xpose.msra.mxu0 0.0
        %5411 = vmatprep.subr.mxu0 0.0
        %5412 = vmatpush1.xpose.msra.mxu0 0.0
        %5413 = vmatprep.subr.mxu0 0.0
        %5414 = vmatpush1.xpose.msra.mxu0 0.0
        %5415 = vmatprep.subr.mxu0 0.0
        %5416 = vmatpush1.xpose.msra.mxu0 0.0
        %5417 = vmatprep.subr.mxu0 0.0
        %5418 = vmatpush1.xpose.msra.mxu0 0.0
        %5419 = vmatprep.subr.mxu0 0.0
        %5420 = vmatpush1.xpose.msra.mxu0 0.0
        %5421 = vmatprep.subr.mxu0 0.0
        %5422 = vmatpush1.xpose.msra.mxu0 0.0
        %5423 = vmatprep.subr.mxu0 0.0
        %5424 = vmatpush1.xpose.msra.mxu0 0.0
        %5425 = vmatprep.subr.mxu0 0.0
        %5426 = vmatpush1.xpose.msra.mxu0 0.0
        %5427 = vmatprep.mubr.f32.mxu0 0.0
        %5428 = vmatmul.mubr.f32.gmra.mrb[0].mxu0 %v5343
        %v5429 = vpop.f32.mrb[0].mxu0
        %v5430 = vadd.f32 0.0, %v5429
        %v5431 = vpop.f32.mrb[0].mxu0
        %5432 = vmatprep.mubr.f32.mxu0 0.0
        %5433 = vmatmul.mubr.f32.gmra.mrb[0].mxu0 %v5346
        %v5434 = vpop.f32.mrb[0].mxu0
        %v5435 = vadd.f32 0.0, %v5434
        %v5436 = vpop.f32.mrb[0].mxu0
        %5437 = vmatprep.mubr.f32.mxu0 0.0
        %5438 = vmatmul.mubr.f32.gmra.mrb[0].mxu0 %v5349
        %v5439 = vpop.f32.mrb[0].mxu0
        %v5440 = vadd.f32 0.0, %v5439
        %v5441 = vpop.f32.mrb[0].mxu0
        %5442 = vmatprep.mubr.f32.mxu0 0.0
        %5443 = vmatmul.mubr.f32.gmra.mrb[0].mxu0 %v5352
        %v5444 = vpop.f32.mrb[0].mxu0
        %v5445 = vadd.f32 0.0, %v5444
        %v5446 = vpop.f32.mrb[0].mxu0
        %5447 = vdwg.mxu0
        %v5448 = vmul.f32 %v5430, 0.35355338
        %v5449 = vmul.f32 %v5435, 0.35355338
        %v5450 = vmul.f32 %v5440, 0.35355338
        %v5451 = vmul.f32 %v5445, 0.35355338
        %5452 = vmatprep.subr.mxu0 0.0
        %5453 = vmatpush1.msra.mxu0 %v875
        %5454 = vmatprep.subr.mxu0 0.0
        %5455 = vmatpush1.msra.mxu0 %v876
        %5456 = vmatprep.subr.mxu0 0.0
        %5457 = vmatpush1.msra.mxu0 %v877
        %5458 = vmatprep.subr.mxu0 0.0
        %5459 = vmatpush1.msra.mxu0 %v878
        %5460 = vmatprep.subr.mxu0 0.0
        %5461 = vmatpush1.msra.mxu0 0.0
        %5462 = vmatprep.subr.mxu0 0.0
        %5463 = vmatpush1.msra.mxu0 0.0
        %5464 = vmatprep.subr.mxu0 0.0
        %5465 = vmatpush1.msra.mxu0 0.0
        %5466 = vmatprep.subr.mxu0 0.0
        %5467 = vmatpush1.msra.mxu0 0.0
        %5468 = vmatprep.subr.mxu0 0.0
        %5469 = vmatpush1.msra.mxu0 0.0
        %5470 = vmatprep.subr.mxu0 0.0
        %5471 = vmatpush1.msra.mxu0 0.0
        %5472 = vmatprep.subr.mxu0 0.0
        %5473 = vmatpush1.msra.mxu0 0.0
        %5474 = vmatprep.subr.mxu0 0.0
        %5475 = vmatpush1.msra.mxu0 0.0
        %5476 = vmatprep.subr.mxu0 0.0
        %5477 = vmatpush1.msra.mxu0 0.0
        %5478 = vmatprep.subr.mxu0 0.0
        %5479 = vmatpush1.msra.mxu0 0.0
        %5480 = vmatprep.subr.mxu0 0.0
        %5481 = vmatpush1.msra.mxu0 0.0
        %5482 = vmatprep.subr.mxu0 0.0
        %5483 = vmatpush1.msra.mxu0 0.0
        %5484 = vmatprep.subr.mxu0 0.0
        %5485 = vmatpush1.msra.mxu0 0.0
        %5486 = vmatprep.subr.mxu0 0.0
        %5487 = vmatpush1.msra.mxu0 0.0
        %5488 = vmatprep.subr.mxu0 0.0
        %5489 = vmatpush1.msra.mxu0 0.0
        %5490 = vmatprep.subr.mxu0 0.0
        %5491 = vmatpush1.msra.mxu0 0.0
        %5492 = vmatprep.subr.mxu0 0.0
        %5493 = vmatpush1.msra.mxu0 0.0
        %5494 = vmatprep.subr.mxu0 0.0
        %5495 = vmatpush1.msra.mxu0 0.0
        %5496 = vmatprep.subr.mxu0 0.0
        %5497 = vmatpush1.msra.mxu0 0.0
        %5498 = vmatprep.subr.mxu0 0.0
        %5499 = vmatpush1.msra.mxu0 0.0
        %5500 = vmatprep.subr.mxu0 0.0
        %5501 = vmatpush1.msra.mxu0 0.0
        %5502 = vmatprep.subr.mxu0 0.0
        %5503 = vmatpush1.msra.mxu0 0.0
        %5504 = vmatprep.subr.mxu0 0.0
        %5505 = vmatpush1.msra.mxu0 0.0
        %5506 = vmatprep.subr.mxu0 0.0
        %5507 = vmatpush1.msra.mxu0 0.0
        %5508 = vmatprep.subr.mxu0 0.0
        %5509 = vmatpush1.msra.mxu0 0.0
        %5510 = vmatprep.subr.mxu0 0.0
        %5511 = vmatpush1.msra.mxu0 0.0
        %5512 = vmatprep.subr.mxu0 0.0
        %5513 = vmatpush1.msra.mxu0 0.0
        %5514 = vmatprep.subr.mxu0 0.0
        %5515 = vmatpush1.msra.mxu0 0.0
        %5516 = vmatprep.mubr.f32.mxu0 0.0
        %5517 = vmatmul.mubr.f32.gmra.mrb[0].mxu0 %v5343
        %v5518 = vpop.f32.mrb[0].mxu0
        %v5519 = vadd.f32 0.0, %v5518
        %v5520 = vpop.f32.mrb[0].mxu0
        %5521 = vmatprep.mubr.f32.mxu0 0.0
        %5522 = vmatmul.mubr.f32.gmra.mrb[0].mxu0 %v5346
        %v5523 = vpop.f32.mrb[0].mxu0
        %v5524 = vadd.f32 0.0, %v5523
        %v5525 = vpop.f32.mrb[0].mxu0
        %5526 = vmatprep.mubr.f32.mxu0 0.0
        %5527 = vmatmul.mubr.f32.gmra.mrb[0].mxu0 %v5349
        %v5528 = vpop.f32.mrb[0].mxu0
        %v5529 = vadd.f32 0.0, %v5528
        %v5530 = vpop.f32.mrb[0].mxu0
        %5531 = vmatprep.mubr.f32.mxu0 0.0
        %5532 = vmatmul.mubr.f32.gmra.mrb[0].mxu0 %v5352
        %v5533 = vpop.f32.mrb[0].mxu0
        %v5534 = vadd.f32 0.0, %v5533
        %v5535 = vpop.f32.mrb[0].mxu0
        %5536 = vdwg.mxu0
        %5541 = vrot.lane.b32.xlu0 %v5519, 4
        %v5542 = vpop.permute.xlu0 %5541
        %5543 = vrot.lane.b32.xlu0 %v5524, 4
        %v5544 = vpop.permute.xlu0 %5543
        %5545 = vrot.lane.b32.xlu0 %v5529, 4
        %v5546 = vpop.permute.xlu0 %5545
        %5547 = vrot.lane.b32.xlu0 %v5534, 4
        %v5548 = vpop.permute.xlu0 %5547
        %v5553 = vsel %vm1565, %v5519, %v5542
        %v5554 = vsel %vm1566, %v5524, %v5544
        %v5555 = vsel %vm1567, %v5529, %v5546
        %v5556 = vsel %vm1568, %v5534, %v5548
        %5561 = vrot.lane.b32.xlu0 %v5553, 2
        %v5562 = vpop.permute.xlu0 %5561
        %5563 = vrot.lane.b32.xlu0 %v5554, 2
        %v5564 = vpop.permute.xlu0 %5563
        %5565 = vrot.lane.b32.xlu0 %v5555, 2
        %v5566 = vpop.permute.xlu0 %5565
        %5567 = vrot.lane.b32.xlu0 %v5556, 2
        %v5568 = vpop.permute.xlu0 %5567
        %v5573 = vsel %vm1593, %v5553, %v5562
        %v5574 = vsel %vm1594, %v5554, %v5564
        %v5575 = vsel %vm1595, %v5555, %v5566
        %v5576 = vsel %vm1596, %v5556, %v5568
        %5581 = vrot.lane.b32.xlu0 %v5573, 1
        %v5582 = vpop.permute.xlu0 %5581
        %5583 = vrot.lane.b32.xlu0 %v5574, 1
        %v5584 = vpop.permute.xlu0 %5583
        %5585 = vrot.lane.b32.xlu0 %v5575, 1
        %v5586 = vpop.permute.xlu0 %5585
        %5587 = vrot.lane.b32.xlu0 %v5576, 1
        %v5588 = vpop.permute.xlu0 %5587
        %v5593 = vsel %vm1621, %v5573, %v5582
        %v5594 = vsel %vm1622, %v5574, %v5584
        %v5595 = vsel %vm1623, %v5575, %v5586
        %v5596 = vsel %vm1624, %v5576, %v5588
        %5601 = vrot.lane.b32.xlu0 %v5593, 121
        %v5602 = vpop.permute.xlu0 %5601
        %5603 = vrot.lane.b32.xlu0 %v5594, 121
        %v5604 = vpop.permute.xlu0 %5603
        %5605 = vrot.lane.b32.xlu0 %v5595, 121
        %v5606 = vpop.permute.xlu0 %5605
        %5607 = vrot.lane.b32.xlu0 %v5596, 121
        %v5608 = vpop.permute.xlu0 %5607
        %v5613 = vadd.f32 %v5448, %v5602
        %v5614 = vadd.f32 %v5449, %v5604
        %v5615 = vadd.f32 %v5450, %v5606
        %v5616 = vadd.f32 %v5451, %v5608
        %v5617 = vadd.f32 %v5613, %v884
        %v5618 = vadd.f32 %v5614, %v885
        %v5619 = vadd.f32 %v5615, %v886
        %v5620 = vadd.f32 %v5616, %v887
        %v5621 = vsel %vm1669, %v5617, -inf
        %5622 = vmax.xlane.f32.xlu0 %v5621
        %v5623 = vpop.xlane.xlu0 %5622
        %v5624 = vsel %vm1669, %v5618, -inf
        %5625 = vmax.xlane.f32.xlu0 %v5624
        %v5626 = vpop.xlane.xlu0 %5625
        %v5627 = vsel %vm1669, %v5619, -inf
        %5628 = vmax.xlane.f32.xlu0 %v5627
        %v5629 = vpop.xlane.xlu0 %5628
        %v5630 = vsel %vm1669, %v5620, -inf
        %5631 = vmax.xlane.f32.xlu0 %v5630
        %v5632 = vpop.xlane.xlu0 %5631
        %v5633 = vsub.f32 %v5617, %v5623
        %v5634 = vsub.f32 %v5618, %v5626
        %v5635 = vsub.f32 %v5619, %v5629
        %v5636 = vsub.f32 %v5620, %v5632
        %v5637 = vmul.f32 %v5633, 1.442695
        %v5638 = vpow.pop %v5637
        %v5639 = vmul.f32 %v5634, 1.442695
        %v5640 = vpow.pop %v5639
        %v5641 = vmul.f32 %v5635, 1.442695
        %v5642 = vpow.pop %v5641
        %v5643 = vmul.f32 %v5636, 1.442695
        %v5644 = vpow.pop %v5643
        %v5645 = vsel %vm1669, %v5638, 0.0
        %5646 = vadd.xlane.f32.xlu0 %v5645
        %v5647 = vpop.xlane.xlu0 %5646
        %v5648 = vsel %vm1669, %v5640, 0.0
        %5649 = vadd.xlane.f32.xlu0 %v5648
        %v5650 = vpop.xlane.xlu0 %5649
        %v5651 = vsel %vm1669, %v5642, 0.0
        %5652 = vadd.xlane.f32.xlu0 %v5651
        %v5653 = vpop.xlane.xlu0 %5652
        %v5654 = vsel %vm1669, %v5644, 0.0
        %5655 = vadd.xlane.f32.xlu0 %v5654
        %v5656 = vpop.xlane.xlu0 %5655
        %v5657 = vrcp.pop %v5647
        %v5658 = vrcp.pop %v5650
        %v5659 = vrcp.pop %v5653
        %v5660 = vrcp.pop %v5656
        %v5661 = vmul.f32 %v5638, %v5657
        %v5662 = vmul.f32 %v5640, %v5658
        %v5663 = vmul.f32 %v5642, %v5659
        %v5664 = vmul.f32 %v5644, %v5660
        %s5665 = scalar_lea.vmem %s789, 96 [#allocation6]
        %5666 = vst.msk [vmem:[%s5665] sm:$0xff] %vm1669, %v5661
        %5667 = vst.msk [vmem:[%s5665 + $0x8] sm:$0xff] %vm1669, %v5662
        %5668 = vst.msk [vmem:[%s5665 + $0x10] sm:$0xff] %vm1669, %v5663
        %5669 = vst.msk [vmem:[%s5665 + $0x18] sm:$0xff] %vm1669, %v5664
        %5670 = vrot.lane.b32.xlu0 %v5250, 96
        %v5671 = vpop.permute.xlu0 %5670
        %5672 = vrot.lane.b32.xlu0 %v5251, 96
        %v5673 = vpop.permute.xlu0 %5672
        %5674 = vrot.lane.b32.xlu0 %v5252, 96
        %v5675 = vpop.permute.xlu0 %5674
        %v5679 = vsel %vm1669, %v5661, 0
        %v5682 = vsel %vm1669, %v5662, 0
        %v5685 = vsel %vm1669, %v5663, 0
        %v5688 = vsel %vm1669, %v5664, 0
        %v5690 = vsel %vm1738, %v5675, 0
        %5692 = vmatprep.subr.mxu0 0.0
        %5693 = vmatpush1.msra.mxu0 %v5671
        %5694 = vmatprep.subr.mxu0 0.0
        %5695 = vmatpush1.msra.mxu0 %v5673
        %5696 = vmatprep.subr.mxu0 0.0
        %5697 = vmatpush1.msra.mxu0 %v5690
        %5698 = vmatprep.subr.mxu0 0.0
        %5699 = vmatpush1.msra.mxu0 0.0
        %5700 = vmatprep.subr.mxu0 0.0
        %5701 = vmatpush1.msra.mxu0 0.0
        %5702 = vmatprep.subr.mxu0 0.0
        %5703 = vmatpush1.msra.mxu0 0.0
        %5704 = vmatprep.subr.mxu0 0.0
        %5705 = vmatpush1.msra.mxu0 0.0
        %5706 = vmatprep.subr.mxu0 0.0
        %5707 = vmatpush1.msra.mxu0 0.0
        %5708 = vmatprep.subr.mxu0 0.0
        %5709 = vmatpush1.msra.mxu0 0.0
        %5710 = vmatprep.subr.mxu0 0.0
        %5711 = vmatpush1.msra.mxu0 0.0
        %5712 = vmatprep.subr.mxu0 0.0
        %5713 = vmatpush1.msra.mxu0 0.0
        %5714 = vmatprep.subr.mxu0 0.0
        %5715 = vmatpush1.msra.mxu0 0.0
        %5716 = vmatprep.subr.mxu0 0.0
        %5717 = vmatpush1.msra.mxu0 0.0
        %5718 = vmatprep.subr.mxu0 0.0
        %5719 = vmatpush1.msra.mxu0 0.0
        %5720 = vmatprep.subr.mxu0 0.0
        %5721 = vmatpush1.msra.mxu0 0.0
        %5722 = vmatprep.subr.mxu0 0.0
        %5723 = vmatpush1.msra.mxu0 0.0
        %5724 = vmatprep.subr.mxu0 0.0
        %5725 = vmatpush1.msra.mxu0 0.0
        %5726 = vmatprep.subr.mxu0 0.0
        %5727 = vmatpush1.msra.mxu0 0.0
        %5728 = vmatprep.subr.mxu0 0.0
        %5729 = vmatpush1.msra.mxu0 0.0
        %5730 = vmatprep.subr.mxu0 0.0
        %5731 = vmatpush1.msra.mxu0 0.0
        %5732 = vmatprep.subr.mxu0 0.0
        %5733 = vmatpush1.msra.mxu0 0.0
        %5734 = vmatprep.subr.mxu0 0.0
        %5735 = vmatpush1.msra.mxu0 0.0
        %5736 = vmatprep.subr.mxu0 0.0
        %5737 = vmatpush1.msra.mxu0 0.0
        %5738 = vmatprep.subr.mxu0 0.0
        %5739 = vmatpush1.msra.mxu0 0.0
        %5740 = vmatprep.subr.mxu0 0.0
        %5741 = vmatpush1.msra.mxu0 0.0
        %5742 = vmatprep.subr.mxu0 0.0
        %5743 = vmatpush1.msra.mxu0 0.0
        %5744 = vmatprep.subr.mxu0 0.0
        %5745 = vmatpush1.msra.mxu0 0.0
        %5746 = vmatprep.subr.mxu0 0.0
        %5747 = vmatpush1.msra.mxu0 0.0
        %5748 = vmatprep.subr.mxu0 0.0
        %5749 = vmatpush1.msra.mxu0 0.0
        %5750 = vmatprep.subr.mxu0 0.0
        %5751 = vmatpush1.msra.mxu0 0.0
        %5752 = vmatprep.subr.mxu0 0.0
        %5753 = vmatpush1.msra.mxu0 0.0
        %5754 = vmatprep.subr.mxu0 0.0
        %5755 = vmatpush1.msra.mxu0 0.0
        %5756 = vmatprep.mubr.f32.mxu0 0.0
        %5757 = vmatmul.mubr.f32.gmra.mrb[0].mxu0 %v5679
        %v5758 = vpop.f32.mrb[0].mxu0
        %v5759 = vadd.f32 0.0, %v5758
        %v5760 = vpop.f32.mrb[0].mxu0
        %5761 = vmatprep.mubr.f32.mxu0 0.0
        %5762 = vmatmul.mubr.f32.gmra.mrb[0].mxu0 %v5682
        %v5763 = vpop.f32.mrb[0].mxu0
        %v5764 = vadd.f32 0.0, %v5763
        %v5765 = vpop.f32.mrb[0].mxu0
        %5766 = vmatprep.mubr.f32.mxu0 0.0
        %5767 = vmatmul.mubr.f32.gmra.mrb[0].mxu0 %v5685
        %v5768 = vpop.f32.mrb[0].mxu0
        %v5769 = vadd.f32 0.0, %v5768
        %v5770 = vpop.f32.mrb[0].mxu0
        %5771 = vmatprep.mubr.f32.mxu0 0.0
        %5772 = vmatmul.mubr.f32.gmra.mrb[0].mxu0 %v5688
        %v5773 = vpop.f32.mrb[0].mxu0
        %v5774 = vadd.f32 0.0, %v5773
        %v5775 = vpop.f32.mrb[0].mxu0
        %5776 = vdwg.mxu0
        %v5777 = vmul.f32 %v5759, %v870
        %v5778 = vmul.f32 %v5764, %v871
        %v5779 = vmul.f32 %v5769, %v872
        %v5780 = vmul.f32 %v5774, %v873
        %5781 = vmatprep.subr.mxu0 0.0
        %5782 = vmatpush1.msra.mxu0 %v5777
        %5783 = vmatprep.subr.mxu0 0.0
        %5784 = vmatpush1.msra.mxu0 %v5778
        %5785 = vmatprep.subr.mxu0 0.0
        %5786 = vmatpush1.msra.mxu0 %v5779
        %5787 = vmatprep.subr.mxu0 0.0
        %5788 = vmatpush1.msra.mxu0 %v5780
        %5789 = vmatprep.subr.mxu0 0.0
        %5790 = vmatpush1.msra.mxu0 0.0
        %5791 = vmatprep.subr.mxu0 0.0
        %5792 = vmatpush1.msra.mxu0 0.0
        %5793 = vmatprep.subr.mxu0 0.0
        %5794 = vmatpush1.msra.mxu0 0.0
        %5795 = vmatprep.subr.mxu0 0.0
        %5796 = vmatpush1.msra.mxu0 0.0
        %5797 = vmatprep.subr.mxu0 0.0
        %5798 = vmatpush1.msra.mxu0 0.0
        %5799 = vmatprep.subr.mxu0 0.0
        %5800 = vmatpush1.msra.mxu0 0.0
        %5801 = vmatprep.subr.mxu0 0.0
        %5802 = vmatpush1.msra.mxu0 0.0
        %5803 = vmatprep.subr.mxu0 0.0
        %5804 = vmatpush1.msra.mxu0 0.0
        %5805 = vmatprep.subr.mxu0 0.0
        %5806 = vmatpush1.msra.mxu0 0.0
        %5807 = vmatprep.subr.mxu0 0.0
        %5808 = vmatpush1.msra.mxu0 0.0
        %5809 = vmatprep.subr.mxu0 0.0
        %5810 = vmatpush1.msra.mxu0 0.0
        %5811 = vmatprep.subr.mxu0 0.0
        %5812 = vmatpush1.msra.mxu0 0.0
        %5813 = vmatprep.subr.mxu0 0.0
        %5814 = vmatpush1.msra.mxu0 0.0
        %5815 = vmatprep.subr.mxu0 0.0
        %5816 = vmatpush1.msra.mxu0 0.0
        %5817 = vmatprep.subr.mxu0 0.0
        %5818 = vmatpush1.msra.mxu0 0.0
        %5819 = vmatprep.subr.mxu0 0.0
        %5820 = vmatpush1.msra.mxu0 0.0
        %5821 = vmatprep.subr.mxu0 0.0
        %5822 = vmatpush1.msra.mxu0 0.0
        %5823 = vmatprep.subr.mxu0 0.0
        %5824 = vmatpush1.msra.mxu0 0.0
        %5825 = vmatprep.subr.mxu0 0.0
        %5826 = vmatpush1.msra.mxu0 0.0
        %5827 = vmatprep.subr.mxu0 0.0
        %5828 = vmatpush1.msra.mxu0 0.0
        %5829 = vmatprep.subr.mxu0 0.0
        %5830 = vmatpush1.msra.mxu0 0.0
        %5831 = vmatprep.subr.mxu0 0.0
        %5832 = vmatpush1.msra.mxu0 0.0
        %5833 = vmatprep.subr.mxu0 0.0
        %5834 = vmatpush1.msra.mxu0 0.0
        %5835 = vmatprep.subr.mxu0 0.0
        %5836 = vmatpush1.msra.mxu0 0.0
        %5837 = vmatprep.subr.mxu0 0.0
        %5838 = vmatpush1.msra.mxu0 0.0
        %5839 = vmatprep.subr.mxu0 0.0
        %5840 = vmatpush1.msra.mxu0 0.0
        %5841 = vmatprep.subr.mxu0 0.0
        %5842 = vmatpush1.msra.mxu0 0.0
        %5843 = vmatprep.subr.mxu0 0.0
        %5844 = vmatpush1.msra.mxu0 0.0
        %5845 = vmatprep.mubr.f32.mxu0 0.0
        %5846 = vmatmul.mubr.f32.gmra.mrb[0].mxu0 %v1831
        %v5847 = vpop.f32.mrb[0].mxu0
        %v5848 = vadd.f32 0.0, %v5847
        %v5849 = vpop.f32.mrb[0].mxu0
        %5850 = vdwg.mxu0
        %5851 = vst.msk [vmem:[#allocation3 + $0x8] sm:$0xff] %vm959, %v5848
        %v5852 = vld [vmem:[#allocation3] sm:$0xff]
        %v5853 = vld [vmem:[#allocation3 + $0x8] sm:$0xff]
        %5854 = vrot.lane.b32.xlu0 %v4301, 32
        %v5855 = vpop.permute.xlu0 %5854
        %5856 = vrot.lane.b32.xlu0 %v4302, 32
        %v5857 = vpop.permute.xlu0 %5856
        %5858 = vrot.lane.b32.xlu0 %v4303, 32
        %v5859 = vpop.permute.xlu0 %5858
        %5860 = vrot.lane.b32.xlu0 %v4304, 32
        %v5861 = vpop.permute.xlu0 %5860
        %v5867 = vsel %vm959, %v5852, 0
        %v5870 = vsel %vm959, %v5853, 0
        %5872 = vmatprep.subr.mxu0 0.0
        %5873 = vmatpush1.msra.mxu0 %v5855
        %5874 = vmatprep.subr.mxu0 0.0
        %5875 = vmatpush1.msra.mxu0 %v5857
        %5876 = vmatprep.subr.mxu0 0.0
        %5877 = vmatpush1.msra.mxu0 %v5859
        %5878 = vmatprep.subr.mxu0 0.0
        %5879 = vmatpush1.msra.mxu0 %v5861
        %5880 = vmatprep.subr.mxu0 0.0
        %5881 = vmatpush1.msra.mxu0 0.0
        %5882 = vmatprep.subr.mxu0 0.0
        %5883 = vmatpush1.msra.mxu0 0.0
        %5884 = vmatprep.subr.mxu0 0.0
        %5885 = vmatpush1.msra.mxu0 0.0
        %5886 = vmatprep.subr.mxu0 0.0
        %5887 = vmatpush1.msra.mxu0 0.0
        %5888 = vmatprep.subr.mxu0 0.0
        %5889 = vmatpush1.msra.mxu0 0.0
        %5890 = vmatprep.subr.mxu0 0.0
        %5891 = vmatpush1.msra.mxu0 0.0
        %5892 = vmatprep.subr.mxu0 0.0
        %5893 = vmatpush1.msra.mxu0 0.0
        %5894 = vmatprep.subr.mxu0 0.0
        %5895 = vmatpush1.msra.mxu0 0.0
        %5896 = vmatprep.subr.mxu0 0.0
        %5897 = vmatpush1.msra.mxu0 0.0
        %5898 = vmatprep.subr.mxu0 0.0
        %5899 = vmatpush1.msra.mxu0 0.0
        %5900 = vmatprep.subr.mxu0 0.0
        %5901 = vmatpush1.msra.mxu0 0.0
        %5902 = vmatprep.subr.mxu0 0.0
        %5903 = vmatpush1.msra.mxu0 0.0
        %5904 = vmatprep.subr.mxu0 0.0
        %5905 = vmatpush1.msra.mxu0 0.0
        %5906 = vmatprep.subr.mxu0 0.0
        %5907 = vmatpush1.msra.mxu0 0.0
        %5908 = vmatprep.subr.mxu0 0.0
        %5909 = vmatpush1.msra.mxu0 0.0
        %5910 = vmatprep.subr.mxu0 0.0
        %5911 = vmatpush1.msra.mxu0 0.0
        %5912 = vmatprep.subr.mxu0 0.0
        %5913 = vmatpush1.msra.mxu0 0.0
        %5914 = vmatprep.subr.mxu0 0.0
        %5915 = vmatpush1.msra.mxu0 0.0
        %5916 = vmatprep.subr.mxu0 0.0
        %5917 = vmatpush1.msra.mxu0 0.0
        %5918 = vmatprep.subr.mxu0 0.0
        %5919 = vmatpush1.msra.mxu0 0.0
        %5920 = vmatprep.subr.mxu0 0.0
        %5921 = vmatpush1.msra.mxu0 0.0
        %5922 = vmatprep.subr.mxu0 0.0
        %5923 = vmatpush1.msra.mxu0 0.0
        %5924 = vmatprep.subr.mxu0 0.0
        %5925 = vmatpush1.msra.mxu0 0.0
        %5926 = vmatprep.subr.mxu0 0.0
        %5927 = vmatpush1.msra.mxu0 0.0
        %5928 = vmatprep.subr.mxu0 0.0
        %5929 = vmatpush1.msra.mxu0 0.0
        %5930 = vmatprep.subr.mxu0 0.0
        %5931 = vmatpush1.msra.mxu0 0.0
        %5932 = vmatprep.subr.mxu0 0.0
        %5933 = vmatpush1.msra.mxu0 0.0
        %5934 = vmatprep.subr.mxu0 0.0
        %5935 = vmatpush1.msra.mxu0 0.0
        %5936 = vmatprep.mubr.f32.mxu0 0.0
        %5937 = vmatmul.mubr.f32.gmra.mrb[0].mxu0 %v5867
        %v5938 = vpop.f32.mrb[0].mxu0
        %v5939 = vadd.f32 %v4378, %v5938
        %v5940 = vpop.f32.mrb[0].mxu0
        %5941 = vmatprep.mubr.f32.mxu0 0.0
        %5942 = vmatmul.mubr.f32.gmra.mrb[0].mxu0 %v5870
        %v5943 = vpop.f32.mrb[0].mxu0
        %v5944 = vadd.f32 %v4379, %v5943
        %v5945 = vpop.f32.mrb[0].mxu0
        %5946 = vdwg.mxu0
        %v5947 = vsel %vm959, %v5939, 0.0
        %5948 = vadd.xlane.f32.xlu0 %v5947
        %v5949 = vpop.xlane.xlu0 %5948
        %v5950 = vsel %vm959, %v5944, 0.0
        %5951 = vadd.xlane.f32.xlu0 %v5950
        %v5952 = vpop.xlane.xlu0 %5951
        %v5953 = vmul.f32 %v5949, %v966
        %v5954 = vmul.f32 %v5952, %v966
        %v5955 = vsub.f32 %v5939, %v5953
        %v5956 = vsub.f32 %v5944, %v5954
        %v5957 = vmul.f32 %v5955, %v5955
        %v5958 = vmul.f32 %v5956, %v5956
        %v5959 = vsel %vm959, %v5957, 0.0
        %5960 = vadd.xlane.f32.xlu0 %v5959
        %v5961 = vpop.xlane.xlu0 %5960
        %v5962 = vsel %vm959, %v5958, 0.0
        %5963 = vadd.xlane.f32.xlu0 %v5962
        %v5964 = vpop.xlane.xlu0 %5963
        %v5965 = vmul.f32 %v5961, %v966
        %v5966 = vmul.f32 %v5964, %v966
        %v5967 = vadd.f32 %v5965, 1e-05
        %v5968 = vadd.f32 %v5966, 1e-05
        %v5969 = vrsqrt.pop %v5967
        %v5970 = vrsqrt.pop %v5968
        %v5971 = vmul.f32 %v5955, %v5969
        %v5972 = vmul.f32 %v5956, %v5970
        %v5973 = vlaneseq
        %v5974 = vshrl.u32 %v5973, 7
        %v5975 = vsub.s32 0, %v5974
        %v5976 = vrot.slane %v4313, %v5975
        %v5977 = vmul.f32 %v5971, %v5976
        %v5978 = vmul.f32 %v5972, %v5976
        %v5979 = vlaneseq
        %v5980 = vshrl.u32 %v5979, 7
        %v5981 = vsub.s32 0, %v5980
        %v5982 = vrot.slane %v4314, %v5981
        %v5983 = vadd.f32 %v5977, %v5982
        %v5984 = vadd.f32 %v5978, %v5982
        %v5985 = vadd.f32 %v5983, %v2871
        %v5986 = vadd.f32 %v5984, %v2872
        %v5987 = vsel %vm959, %v5985, 0.0
        %5988 = vadd.xlane.f32.xlu0 %v5987
        %v5989 = vpop.xlane.xlu0 %5988
        %v5990 = vsel %vm959, %v5986, 0.0
        %5991 = vadd.xlane.f32.xlu0 %v5990
        %v5992 = vpop.xlane.xlu0 %5991
        %v5993 = vmul.f32 %v5989, %v966
        %v5994 = vmul.f32 %v5992, %v966
        %v5995 = vsub.f32 %v5985, %v5993
        %v5996 = vsub.f32 %v5986, %v5994
        %v5997 = vmul.f32 %v5995, %v5995
        %v5998 = vmul.f32 %v5996, %v5996
        %v5999 = vsel %vm959, %v5997, 0.0
        %6000 = vadd.xlane.f32.xlu0 %v5999
        %v6001 = vpop.xlane.xlu0 %6000
        %v6002 = vsel %vm959, %v5998, 0.0
        %6003 = vadd.xlane.f32.xlu0 %v6002
        %v6004 = vpop.xlane.xlu0 %6003
        %v6005 = vmul.f32 %v6001, %v966
        %v6006 = vmul.f32 %v6004, %v966
        %v6007 = vadd.f32 %v6005, 1e-05
        %v6008 = vadd.f32 %v6006, 1e-05
        %v6009 = vrsqrt.pop %v6007
        %v6010 = vrsqrt.pop %v6008
        %v6011 = vmul.f32 %v5995, %v6009
        %v6012 = vmul.f32 %v5996, %v6010
        %v6013 = vlaneseq
        %v6014 = vshrl.u32 %v6013, 7
        %v6015 = vsub.s32 0, %v6014
        %v6016 = vrot.slane %v4315, %v6015
        %v6017 = vmul.f32 %v6011, %v6016
        %v6018 = vmul.f32 %v6012, %v6016
        %v6019 = vlaneseq
        %v6020 = vshrl.u32 %v6019, 7
        %v6021 = vsub.s32 0, %v6020
        %v6022 = vrot.slane %v4316, %v6021
        %v6023 = vadd.f32 %v6017, %v6022
        %v6024 = vadd.f32 %v6018, %v6022
        %v6026 = vlaneseq
        %v6027 = vshrl.u32 %v6026, 7
        %v6028 = vsub.s32 0, %v6027
        %v6029 = vrot.slane %v4323, %v6028
        %v6032 = vsel %vm959, %v6023, 0
        %v6035 = vsel %vm959, %v6024, 0
        %6037 = vmatprep.subr.mxu0 0.0
        %6038 = vmatpush1.msra.mxu0 %v4318
        %6039 = vmatprep.subr.mxu0 0.0
        %6040 = vmatpush1.msra.mxu0 %v4319
        %6041 = vmatprep.subr.mxu0 0.0
        %6042 = vmatpush1.msra.mxu0 %v4320
        %6043 = vmatprep.subr.mxu0 0.0
        %6044 = vmatpush1.msra.mxu0 %v4321
        %6045 = vmatprep.subr.mxu0 0.0
        %6046 = vmatpush1.msra.mxu0 0.0
        %6047 = vmatprep.subr.mxu0 0.0
        %6048 = vmatpush1.msra.mxu0 0.0
        %6049 = vmatprep.subr.mxu0 0.0
        %6050 = vmatpush1.msra.mxu0 0.0
        %6051 = vmatprep.subr.mxu0 0.0
        %6052 = vmatpush1.msra.mxu0 0.0
        %6053 = vmatprep.subr.mxu0 0.0
        %6054 = vmatpush1.msra.mxu0 0.0
        %6055 = vmatprep.subr.mxu0 0.0
        %6056 = vmatpush1.msra.mxu0 0.0
        %6057 = vmatprep.subr.mxu0 0.0
        %6058 = vmatpush1.msra.mxu0 0.0
        %6059 = vmatprep.subr.mxu0 0.0
        %6060 = vmatpush1.msra.mxu0 0.0
        %6061 = vmatprep.subr.mxu0 0.0
        %6062 = vmatpush1.msra.mxu0 0.0
        %6063 = vmatprep.subr.mxu0 0.0
        %6064 = vmatpush1.msra.mxu0 0.0
        %6065 = vmatprep.subr.mxu0 0.0
        %6066 = vmatpush1.msra.mxu0 0.0
        %6067 = vmatprep.subr.mxu0 0.0
        %6068 = vmatpush1.msra.mxu0 0.0
        %6069 = vmatprep.subr.mxu0 0.0
        %6070 = vmatpush1.msra.mxu0 0.0
        %6071 = vmatprep.subr.mxu0 0.0
        %6072 = vmatpush1.msra.mxu0 0.0
        %6073 = vmatprep.subr.mxu0 0.0
        %6074 = vmatpush1.msra.mxu0 0.0
        %6075 = vmatprep.subr.mxu0 0.0
        %6076 = vmatpush1.msra.mxu0 0.0
        %6077 = vmatprep.subr.mxu0 0.0
        %6078 = vmatpush1.msra.mxu0 0.0
        %6079 = vmatprep.subr.mxu0 0.0
        %6080 = vmatpush1.msra.mxu0 0.0
        %6081 = vmatprep.subr.mxu0 0.0
        %6082 = vmatpush1.msra.mxu0 0.0
        %6083 = vmatprep.subr.mxu0 0.0
        %6084 = vmatpush1.msra.mxu0 0.0
        %6085 = vmatprep.subr.mxu0 0.0
        %6086 = vmatpush1.msra.mxu0 0.0
        %6087 = vmatprep.subr.mxu0 0.0
        %6088 = vmatpush1.msra.mxu0 0.0
        %6089 = vmatprep.subr.mxu0 0.0
        %6090 = vmatpush1.msra.mxu0 0.0
        %6091 = vmatprep.subr.mxu0 0.0
        %6092 = vmatpush1.msra.mxu0 0.0
        %6093 = vmatprep.subr.mxu0 0.0
        %6094 = vmatpush1.msra.mxu0 0.0
        %6095 = vmatprep.subr.mxu0 0.0
        %6096 = vmatpush1.msra.mxu0 0.0
        %6097 = vmatprep.subr.mxu0 0.0
        %6098 = vmatpush1.msra.mxu0 0.0
        %6099 = vmatprep.subr.mxu0 0.0
        %6100 = vmatpush1.msra.mxu0 0.0
        %6101 = vmatprep.mubr.f32.mxu0 0.0
        %6102 = vmatmul.mubr.f32.gmra.mrb[0].mxu0 %v6032
        %v6103 = vpop.f32.mrb[0].mxu0
        %v6104 = vadd.f32 %v6029, %v6103
        %v6105 = vpop.f32.mrb[0].mxu0
        %6106 = vmatprep.mubr.f32.mxu0 0.0
        %6107 = vmatmul.mubr.f32.gmra.mrb[0].mxu0 %v6035
        %v6108 = vpop.f32.mrb[0].mxu0
        %v6109 = vadd.f32 %v6029, %v6108
        %v6110 = vpop.f32.mrb[0].mxu0
        %6111 = vdwg.mxu0
        %v6112 = vmul.f32 %v6104, 0.5
        %v6113 = vmul.f32 %v6109, 0.5
        %v6114 = vmul.f32 %v6104, 0.70710677
        %v6115 = vmul.f32 %v6109, 0.70710677
        %v6116 = verf.f32.pop %v6114
        %v6117 = verf.f32.pop %v6115
        %v6118 = vadd.f32 %v6116, 1.0
        %v6119 = vadd.f32 %v6117, 1.0
        %v6120 = vmul.f32 %v6112, %v6118
        %v6121 = vmul.f32 %v6113, %v6119
        %v6123 = vlaneseq
        %v6124 = vshrl.u32 %v6123, 7
        %v6125 = vsub.s32 0, %v6124
        %v6126 = vrot.slane %v4334, %v6125
        %v6129 = vsel %vm1254, %v6120, 0
        %v6132 = vsel %vm1254, %v6121, 0
        %6134 = vmatprep.subr.mxu0 0.0
        %6135 = vmatpush1.msra.mxu0 %v4325
        %6136 = vmatprep.subr.mxu0 0.0
        %6137 = vmatpush1.msra.mxu0 %v4326
        %6138 = vmatprep.subr.mxu0 0.0
        %6139 = vmatpush1.msra.mxu0 %v4327
        %6140 = vmatprep.subr.mxu0 0.0
        %6141 = vmatpush1.msra.mxu0 %v4328
        %6142 = vmatprep.subr.mxu0 0.0
        %6143 = vmatpush1.msra.mxu0 %v4329
        %6144 = vmatprep.subr.mxu0 0.0
        %6145 = vmatpush1.msra.mxu0 %v4330
        %6146 = vmatprep.subr.mxu0 0.0
        %6147 = vmatpush1.msra.mxu0 %v4331
        %6148 = vmatprep.subr.mxu0 0.0
        %6149 = vmatpush1.msra.mxu0 %v4332
        %6150 = vmatprep.subr.mxu0 0.0
        %6151 = vmatpush1.msra.mxu0 0.0
        %6152 = vmatprep.subr.mxu0 0.0
        %6153 = vmatpush1.msra.mxu0 0.0
        %6154 = vmatprep.subr.mxu0 0.0
        %6155 = vmatpush1.msra.mxu0 0.0
        %6156 = vmatprep.subr.mxu0 0.0
        %6157 = vmatpush1.msra.mxu0 0.0
        %6158 = vmatprep.subr.mxu0 0.0
        %6159 = vmatpush1.msra.mxu0 0.0
        %6160 = vmatprep.subr.mxu0 0.0
        %6161 = vmatpush1.msra.mxu0 0.0
        %6162 = vmatprep.subr.mxu0 0.0
        %6163 = vmatpush1.msra.mxu0 0.0
        %6164 = vmatprep.subr.mxu0 0.0
        %6165 = vmatpush1.msra.mxu0 0.0
        %6166 = vmatprep.subr.mxu0 0.0
        %6167 = vmatpush1.msra.mxu0 0.0
        %6168 = vmatprep.subr.mxu0 0.0
        %6169 = vmatpush1.msra.mxu0 0.0
        %6170 = vmatprep.subr.mxu0 0.0
        %6171 = vmatpush1.msra.mxu0 0.0
        %6172 = vmatprep.subr.mxu0 0.0
        %6173 = vmatpush1.msra.mxu0 0.0
        %6174 = vmatprep.subr.mxu0 0.0
        %6175 = vmatpush1.msra.mxu0 0.0
        %6176 = vmatprep.subr.mxu0 0.0
        %6177 = vmatpush1.msra.mxu0 0.0
        %6178 = vmatprep.subr.mxu0 0.0
        %6179 = vmatpush1.msra.mxu0 0.0
        %6180 = vmatprep.subr.mxu0 0.0
        %6181 = vmatpush1.msra.mxu0 0.0
        %6182 = vmatprep.subr.mxu0 0.0
        %6183 = vmatpush1.msra.mxu0 0.0
        %6184 = vmatprep.subr.mxu0 0.0
        %6185 = vmatpush1.msra.mxu0 0.0
        %6186 = vmatprep.subr.mxu0 0.0
        %6187 = vmatpush1.msra.mxu0 0.0
        %6188 = vmatprep.subr.mxu0 0.0
        %6189 = vmatpush1.msra.mxu0 0.0
        %6190 = vmatprep.subr.mxu0 0.0
        %6191 = vmatpush1.msra.mxu0 0.0
        %6192 = vmatprep.subr.mxu0 0.0
        %6193 = vmatpush1.msra.mxu0 0.0
        %6194 = vmatprep.subr.mxu0 0.0
        %6195 = vmatpush1.msra.mxu0 0.0
        %6196 = vmatprep.subr.mxu0 0.0
        %6197 = vmatpush1.msra.mxu0 0.0
        %6198 = vmatprep.mubr.f32.mxu0 0.0
        %6199 = vmatmul.mubr.f32.gmra.mrb[0].mxu0 %v6129
        %v6200 = vpop.f32.mrb[0].mxu0
        %v6201 = vadd.f32 %v6126, %v6200
        %v6202 = vpop.f32.mrb[0].mxu0
        %6203 = vmatprep.mubr.f32.mxu0 0.0
        %6204 = vmatmul.mubr.f32.gmra.mrb[0].mxu0 %v6132
        %v6205 = vpop.f32.mrb[0].mxu0
        %v6206 = vadd.f32 %v6126, %v6205
        %v6207 = vpop.f32.mrb[0].mxu0
        %6208 = vdwg.mxu0
        %v6209 = vadd.f32 %v6201, %v5985
        %v6210 = vadd.f32 %v6206, %v5986
        %v6212 = vsel %vm959, %v5983, 0
        %v6215 = vsel %vm959, %v5984, 0
        %6217 = vmatprep.subr.mxu0 0.0
        %6218 = vmatpush1.msra.mxu0 %v4306
        %6219 = vmatprep.subr.mxu0 0.0
        %6220 = vmatpush1.msra.mxu0 %v4307
        %6221 = vmatprep.subr.mxu0 0.0
        %6222 = vmatpush1.msra.mxu0 %v4308
        %6223 = vmatprep.subr.mxu0 0.0
        %6224 = vmatpush1.msra.mxu0 %v4309
        %6225 = vmatprep.subr.mxu0 0.0
        %6226 = vmatpush1.msra.mxu0 0.0
        %6227 = vmatprep.subr.mxu0 0.0
        %6228 = vmatpush1.msra.mxu0 0.0
        %6229 = vmatprep.subr.mxu0 0.0
        %6230 = vmatpush1.msra.mxu0 0.0
        %6231 = vmatprep.subr.mxu0 0.0
        %6232 = vmatpush1.msra.mxu0 0.0
        %6233 = vmatprep.subr.mxu0 0.0
        %6234 = vmatpush1.msra.mxu0 0.0
        %6235 = vmatprep.subr.mxu0 0.0
        %6236 = vmatpush1.msra.mxu0 0.0
        %6237 = vmatprep.subr.mxu0 0.0
        %6238 = vmatpush1.msra.mxu0 0.0
        %6239 = vmatprep.subr.mxu0 0.0
        %6240 = vmatpush1.msra.mxu0 0.0
        %6241 = vmatprep.subr.mxu0 0.0
        %6242 = vmatpush1.msra.mxu0 0.0
        %6243 = vmatprep.subr.mxu0 0.0
        %6244 = vmatpush1.msra.mxu0 0.0
        %6245 = vmatprep.subr.mxu0 0.0
        %6246 = vmatpush1.msra.mxu0 0.0
        %6247 = vmatprep.subr.mxu0 0.0
        %6248 = vmatpush1.msra.mxu0 0.0
        %6249 = vmatprep.subr.mxu0 0.0
        %6250 = vmatpush1.msra.mxu0 0.0
        %6251 = vmatprep.subr.mxu0 0.0
        %6252 = vmatpush1.msra.mxu0 0.0
        %6253 = vmatprep.subr.mxu0 0.0
        %6254 = vmatpush1.msra.mxu0 0.0
        %6255 = vmatprep.subr.mxu0 0.0
        %6256 = vmatpush1.msra.mxu0 0.0
        %6257 = vmatprep.subr.mxu0 0.0
        %6258 = vmatpush1.msra.mxu0 0.0
        %6259 = vmatprep.subr.mxu0 0.0
        %6260 = vmatpush1.msra.mxu0 0.0
        %6261 = vmatprep.subr.mxu0 0.0
        %6262 = vmatpush1.msra.mxu0 0.0
        %6263 = vmatprep.subr.mxu0 0.0
        %6264 = vmatpush1.msra.mxu0 0.0
        %6265 = vmatprep.subr.mxu0 0.0
        %6266 = vmatpush1.msra.mxu0 0.0
        %6267 = vmatprep.subr.mxu0 0.0
        %6268 = vmatpush1.msra.mxu0 0.0
        %6269 = vmatprep.subr.mxu0 0.0
        %6270 = vmatpush1.msra.mxu0 0.0
        %6271 = vmatprep.subr.mxu0 0.0
        %6272 = vmatpush1.msra.mxu0 0.0
        %6273 = vmatprep.subr.mxu0 0.0
        %6274 = vmatpush1.msra.mxu0 0.0
        %6275 = vmatprep.subr.mxu0 0.0
        %6276 = vmatpush1.msra.mxu0 0.0
        %6277 = vmatprep.subr.mxu0 0.0
        %6278 = vmatpush1.msra.mxu0 0.0
        %6279 = vmatprep.subr.mxu0 0.0
        %6280 = vmatpush1.msra.mxu0 0.0
        %6281 = vmatprep.mubr.f32.mxu0 0.0
        %6282 = vmatmul.mubr.f32.gmra.mrb[0].mxu0 %v6212
        %v6283 = vpop.f32.mrb[0].mxu0
        %v6284 = vadd.f32 0.0, %v6283
        %v6285 = vpop.f32.mrb[0].mxu0
        %6286 = vmatprep.mubr.f32.mxu0 0.0
        %6287 = vmatmul.mubr.f32.gmra.mrb[0].mxu0 %v6215
        %v6288 = vpop.f32.mrb[0].mxu0
        %v6289 = vadd.f32 0.0, %v6288
        %v6290 = vpop.f32.mrb[0].mxu0
        %6291 = vdwg.mxu0
        %6296 = vrot.lane.b32.xlu0 %v4306, 96
        %v6297 = vpop.permute.xlu0 %6296
        %6298 = vrot.lane.b32.xlu0 %v4307, 96
        %v6299 = vpop.permute.xlu0 %6298
        %6300 = vrot.lane.b32.xlu0 %v4308, 96
        %v6301 = vpop.permute.xlu0 %6300
        %6302 = vrot.lane.b32.xlu0 %v4309, 96
        %v6303 = vpop.permute.xlu0 %6302
        %6308 = vmatprep.subr.mxu0 0.0
        %6309 = vmatpush1.msra.mxu0 %v6297
        %6310 = vmatprep.subr.mxu0 0.0
        %6311 = vmatpush1.msra.mxu0 %v6299
        %6312 = vmatprep.subr.mxu0 0.0
        %6313 = vmatpush1.msra.mxu0 %v6301
        %6314 = vmatprep.subr.mxu0 0.0
        %6315 = vmatpush1.msra.mxu0 %v6303
        %6316 = vmatprep.subr.mxu0 0.0
        %6317 = vmatpush1.msra.mxu0 0.0
        %6318 = vmatprep.subr.mxu0 0.0
        %6319 = vmatpush1.msra.mxu0 0.0
        %6320 = vmatprep.subr.mxu0 0.0
        %6321 = vmatpush1.msra.mxu0 0.0
        %6322 = vmatprep.subr.mxu0 0.0
        %6323 = vmatpush1.msra.mxu0 0.0
        %6324 = vmatprep.subr.mxu0 0.0
        %6325 = vmatpush1.msra.mxu0 0.0
        %6326 = vmatprep.subr.mxu0 0.0
        %6327 = vmatpush1.msra.mxu0 0.0
        %6328 = vmatprep.subr.mxu0 0.0
        %6329 = vmatpush1.msra.mxu0 0.0
        %6330 = vmatprep.subr.mxu0 0.0
        %6331 = vmatpush1.msra.mxu0 0.0
        %6332 = vmatprep.subr.mxu0 0.0
        %6333 = vmatpush1.msra.mxu0 0.0
        %6334 = vmatprep.subr.mxu0 0.0
        %6335 = vmatpush1.msra.mxu0 0.0
        %6336 = vmatprep.subr.mxu0 0.0
        %6337 = vmatpush1.msra.mxu0 0.0
        %6338 = vmatprep.subr.mxu0 0.0
        %6339 = vmatpush1.msra.mxu0 0.0
        %6340 = vmatprep.subr.mxu0 0.0
        %6341 = vmatpush1.msra.mxu0 0.0
        %6342 = vmatprep.subr.mxu0 0.0
        %6343 = vmatpush1.msra.mxu0 0.0
        %6344 = vmatprep.subr.mxu0 0.0
        %6345 = vmatpush1.msra.mxu0 0.0
        %6346 = vmatprep.subr.mxu0 0.0
        %6347 = vmatpush1.msra.mxu0 0.0
        %6348 = vmatprep.subr.mxu0 0.0
        %6349 = vmatpush1.msra.mxu0 0.0
        %6350 = vmatprep.subr.mxu0 0.0
        %6351 = vmatpush1.msra.mxu0 0.0
        %6352 = vmatprep.subr.mxu0 0.0
        %6353 = vmatpush1.msra.mxu0 0.0
        %6354 = vmatprep.subr.mxu0 0.0
        %6355 = vmatpush1.msra.mxu0 0.0
        %6356 = vmatprep.subr.mxu0 0.0
        %6357 = vmatpush1.msra.mxu0 0.0
        %6358 = vmatprep.subr.mxu0 0.0
        %6359 = vmatpush1.msra.mxu0 0.0
        %6360 = vmatprep.subr.mxu0 0.0
        %6361 = vmatpush1.msra.mxu0 0.0
        %6362 = vmatprep.subr.mxu0 0.0
        %6363 = vmatpush1.msra.mxu0 0.0
        %6364 = vmatprep.subr.mxu0 0.0
        %6365 = vmatpush1.msra.mxu0 0.0
        %6366 = vmatprep.subr.mxu0 0.0
        %6367 = vmatpush1.msra.mxu0 0.0
        %6368 = vmatprep.subr.mxu0 0.0
        %6369 = vmatpush1.msra.mxu0 0.0
        %6370 = vmatprep.subr.mxu0 0.0
        %6371 = vmatpush1.msra.mxu0 0.0
        %6372 = vmatprep.mubr.f32.mxu0 0.0
        %6373 = vmatmul.mubr.f32.gmra.mrb[0].mxu0 %v4481
        %v6374 = vpop.f32.mrb[0].mxu0
        %v6375 = vadd.f32 0.0, %v6374
        %v6376 = vpop.f32.mrb[0].mxu0
        %6377 = vmatprep.mubr.f32.mxu0 0.0
        %6378 = vmatmul.mubr.f32.gmra.mrb[0].mxu0 %v4484
        %v6379 = vpop.f32.mrb[0].mxu0
        %v6380 = vadd.f32 0.0, %v6379
        %v6381 = vpop.f32.mrb[0].mxu0
        %6382 = vdwg.mxu0
        %v6384 = vsel %vm959, %v4341, 0
        %6386 = vmatprep.subr.mxu0 0.0
        %6387 = vmatpush1.msra.mxu0 %v6297
        %6388 = vmatprep.subr.mxu0 0.0
        %6389 = vmatpush1.msra.mxu0 %v6299
        %6390 = vmatprep.subr.mxu0 0.0
        %6391 = vmatpush1.msra.mxu0 %v6301
        %6392 = vmatprep.subr.mxu0 0.0
        %6393 = vmatpush1.msra.mxu0 %v6303
        %6394 = vmatprep.subr.mxu0 0.0
        %6395 = vmatpush1.msra.mxu0 0.0
        %6396 = vmatprep.subr.mxu0 0.0
        %6397 = vmatpush1.msra.mxu0 0.0
        %6398 = vmatprep.subr.mxu0 0.0
        %6399 = vmatpush1.msra.mxu0 0.0
        %6400 = vmatprep.subr.mxu0 0.0
        %6401 = vmatpush1.msra.mxu0 0.0
        %6402 = vmatprep.subr.mxu0 0.0
        %6403 = vmatpush1.msra.mxu0 0.0
        %6404 = vmatprep.subr.mxu0 0.0
        %6405 = vmatpush1.msra.mxu0 0.0
        %6406 = vmatprep.subr.mxu0 0.0
        %6407 = vmatpush1.msra.mxu0 0.0
        %6408 = vmatprep.subr.mxu0 0.0
        %6409 = vmatpush1.msra.mxu0 0.0
        %6410 = vmatprep.subr.mxu0 0.0
        %6411 = vmatpush1.msra.mxu0 0.0
        %6412 = vmatprep.subr.mxu0 0.0
        %6413 = vmatpush1.msra.mxu0 0.0
        %6414 = vmatprep.subr.mxu0 0.0
        %6415 = vmatpush1.msra.mxu0 0.0
        %6416 = vmatprep.subr.mxu0 0.0
        %6417 = vmatpush1.msra.mxu0 0.0
        %6418 = vmatprep.subr.mxu0 0.0
        %6419 = vmatpush1.msra.mxu0 0.0
        %6420 = vmatprep.subr.mxu0 0.0
        %6421 = vmatpush1.msra.mxu0 0.0
        %6422 = vmatprep.subr.mxu0 0.0
        %6423 = vmatpush1.msra.mxu0 0.0
        %6424 = vmatprep.subr.mxu0 0.0
        %6425 = vmatpush1.msra.mxu0 0.0
        %6426 = vmatprep.subr.mxu0 0.0
        %6427 = vmatpush1.msra.mxu0 0.0
        %6428 = vmatprep.subr.mxu0 0.0
        %6429 = vmatpush1.msra.mxu0 0.0
        %6430 = vmatprep.subr.mxu0 0.0
        %6431 = vmatpush1.msra.mxu0 0.0
        %6432 = vmatprep.subr.mxu0 0.0
        %6433 = vmatpush1.msra.mxu0 0.0
        %6434 = vmatprep.subr.mxu0 0.0
        %6435 = vmatpush1.msra.mxu0 0.0
        %6436 = vmatprep.subr.mxu0 0.0
        %6437 = vmatpush1.msra.mxu0 0.0
        %6438 = vmatprep.subr.mxu0 0.0
        %6439 = vmatpush1.msra.mxu0 0.0
        %6440 = vmatprep.subr.mxu0 0.0
        %6441 = vmatpush1.msra.mxu0 0.0
        %6442 = vmatprep.subr.mxu0 0.0
        %6443 = vmatpush1.msra.mxu0 0.0
        %6444 = vmatprep.subr.mxu0 0.0
        %6445 = vmatpush1.msra.mxu0 0.0
        %6446 = vmatprep.subr.mxu0 0.0
        %6447 = vmatpush1.msra.mxu0 0.0
        %6448 = vmatprep.subr.mxu0 0.0
        %6449 = vmatpush1.msra.mxu0 0.0
        %6450 = vmatprep.mubr.f32.mxu0 0.0
        %6451 = vmatmul.mubr.f32.gmra.mrb[0].mxu0 %v6384
        %v6452 = vpop.f32.mrb[0].mxu0
        %v6453 = vadd.f32 0.0, %v6452
        %v6454 = vpop.f32.mrb[0].mxu0
        %6455 = vdwg.mxu0
        %6456 = vmatprep.subr.mxu0 0.0
        %6457 = vmatpush1.msra.mxu0 %v6284
        %6458 = vmatprep.subr.mxu0 0.0
        %6459 = vmatpush1.msra.mxu0 0.0
        %6460 = vmatprep.subr.mxu0 0.0
        %6461 = vmatpush1.msra.mxu0 0.0
        %6462 = vmatprep.subr.mxu0 0.0
        %6463 = vmatpush1.msra.mxu0 0.0
        %6464 = vmatprep.subr.mxu0 0.0
        %6465 = vmatpush1.msra.mxu0 0.0
        %6466 = vmatprep.subr.mxu0 0.0
        %6467 = vmatpush1.msra.mxu0 0.0
        %6468 = vmatprep.subr.mxu0 0.0
        %6469 = vmatpush1.msra.mxu0 0.0
        %6470 = vmatprep.subr.mxu0 0.0
        %6471 = vmatpush1.msra.mxu0 0.0
        %6472 = vmatprep.subr.mxu0 0.0
        %6473 = vmatpush1.msra.mxu0 0.0
        %6474 = vmatprep.subr.mxu0 0.0
        %6475 = vmatpush1.msra.mxu0 0.0
        %6476 = vmatprep.subr.mxu0 0.0
        %6477 = vmatpush1.msra.mxu0 0.0
        %6478 = vmatprep.subr.mxu0 0.0
        %6479 = vmatpush1.msra.mxu0 0.0
        %6480 = vmatprep.subr.mxu0 0.0
        %6481 = vmatpush1.msra.mxu0 0.0
        %6482 = vmatprep.subr.mxu0 0.0
        %6483 = vmatpush1.msra.mxu0 0.0
        %6484 = vmatprep.subr.mxu0 0.0
        %6485 = vmatpush1.msra.mxu0 0.0
        %6486 = vmatprep.subr.mxu0 0.0
        %6487 = vmatpush1.msra.mxu0 0.0
        %6488 = vmatprep.subr.mxu0 0.0
        %6489 = vmatpush1.msra.mxu0 0.0
        %6490 = vmatprep.subr.mxu0 0.0
        %6491 = vmatpush1.msra.mxu0 0.0
        %6492 = vmatprep.subr.mxu0 0.0
        %6493 = vmatpush1.msra.mxu0 0.0
        %6494 = vmatprep.subr.mxu0 0.0
        %6495 = vmatpush1.msra.mxu0 0.0
        %6496 = vmatprep.subr.mxu0 0.0
        %6497 = vmatpush1.msra.mxu0 0.0
        %6498 = vmatprep.subr.mxu0 0.0
        %6499 = vmatpush1.msra.mxu0 0.0
        %6500 = vmatprep.subr.mxu0 0.0
        %6501 = vmatpush1.msra.mxu0 0.0
        %6502 = vmatprep.subr.mxu0 0.0
        %6503 = vmatpush1.msra.mxu0 0.0
        %6504 = vmatprep.subr.mxu0 0.0
        %6505 = vmatpush1.msra.mxu0 0.0
        %6506 = vmatprep.subr.mxu0 0.0
        %6507 = vmatpush1.msra.mxu0 0.0
        %6508 = vmatprep.subr.mxu0 0.0
        %6509 = vmatpush1.msra.mxu0 0.0
        %6510 = vmatprep.subr.mxu0 0.0
        %6511 = vmatpush1.msra.mxu0 0.0
        %6512 = vmatprep.subr.mxu0 0.0
        %6513 = vmatpush1.msra.mxu0 0.0
        %6514 = vmatprep.subr.mxu0 0.0
        %6515 = vmatpush1.msra.mxu0 0.0
        %6516 = vmatprep.subr.mxu0 0.0
        %6517 = vmatpush1.msra.mxu0 0.0
        %6518 = vmatprep.subr.mxu0 0.0
        %6519 = vmatpush1.msra.mxu0 0.0
        %6520 = vmatprep.mubr.f32.mxu0 0.0
        %6521 = vmatmul.mubr.f32.gmra.mrb[0].mxu0 %v1266
        %v6522 = vpop.f32.mrb[0].mxu0
        %v6523 = vadd.f32 0.0, %v6522
        %v6524 = vpop.f32.mrb[0].mxu0
        %6525 = vmatprep.mubr.f32.mxu0 0.0
        %6526 = vmatmul.mubr.f32.gmra.mrb[0].mxu0 %v1269
        %v6527 = vpop.f32.mrb[0].mxu0
        %v6528 = vadd.f32 0.0, %v6527
        %v6529 = vpop.f32.mrb[0].mxu0
        %6530 = vmatprep.mubr.f32.mxu0 0.0
        %6531 = vmatmul.mubr.f32.gmra.mrb[0].mxu0 %v1272
        %v6532 = vpop.f32.mrb[0].mxu0
        %v6533 = vadd.f32 0.0, %v6532
        %v6534 = vpop.f32.mrb[0].mxu0
        %6535 = vmatprep.mubr.f32.mxu0 0.0
        %6536 = vmatmul.mubr.f32.gmra.mrb[0].mxu0 %v1275
        %v6537 = vpop.f32.mrb[0].mxu0
        %v6538 = vadd.f32 0.0, %v6537
        %v6539 = vpop.f32.mrb[0].mxu0
        %6540 = vdwg.mxu0
        %v6541 = vmul.f32 %v6523, %v870
        %v6542 = vmul.f32 %v6528, %v871
        %v6543 = vmul.f32 %v6533, %v872
        %v6544 = vmul.f32 %v6538, %v873
        %v6546 = vsel %vm959, %v6541, 0
        %v6549 = vsel %vm959, %v6542, 0
        %v6552 = vsel %vm959, %v6543, 0
        %v6555 = vsel %vm959, %v6544, 0
        %v6558 = vsel %vm959, %v6375, 0
        %6560 = vmatprep.subr.mxu0 0.0
        %6561 = vmatpush1.xpose.msra.mxu0 %v6558
        %6562 = vmatprep.subr.mxu0 0.0
        %6563 = vmatpush1.xpose.msra.mxu0 0.0
        %6564 = vmatprep.subr.mxu0 0.0
        %6565 = vmatpush1.xpose.msra.mxu0 0.0
        %6566 = vmatprep.subr.mxu0 0.0
        %6567 = vmatpush1.xpose.msra.mxu0 0.0
        %6568 = vmatprep.subr.mxu0 0.0
        %6569 = vmatpush1.xpose.msra.mxu0 0.0
        %6570 = vmatprep.subr.mxu0 0.0
        %6571 = vmatpush1.xpose.msra.mxu0 0.0
        %6572 = vmatprep.subr.mxu0 0.0
        %6573 = vmatpush1.xpose.msra.mxu0 0.0
        %6574 = vmatprep.subr.mxu0 0.0
        %6575 = vmatpush1.xpose.msra.mxu0 0.0
        %6576 = vmatprep.subr.mxu0 0.0
        %6577 = vmatpush1.xpose.msra.mxu0 0.0
        %6578 = vmatprep.subr.mxu0 0.0
        %6579 = vmatpush1.xpose.msra.mxu0 0.0
        %6580 = vmatprep.subr.mxu0 0.0
        %6581 = vmatpush1.xpose.msra.mxu0 0.0
        %6582 = vmatprep.subr.mxu0 0.0
        %6583 = vmatpush1.xpose.msra.mxu0 0.0
        %6584 = vmatprep.subr.mxu0 0.0
        %6585 = vmatpush1.xpose.msra.mxu0 0.0
        %6586 = vmatprep.subr.mxu0 0.0
        %6587 = vmatpush1.xpose.msra.mxu0 0.0
        %6588 = vmatprep.subr.mxu0 0.0
        %6589 = vmatpush1.xpose.msra.mxu0 0.0
        %6590 = vmatprep.subr.mxu0 0.0
        %6591 = vmatpush1.xpose.msra.mxu0 0.0
        %6592 = vmatprep.subr.mxu0 0.0
        %6593 = vmatpush1.xpose.msra.mxu0 0.0
        %6594 = vmatprep.subr.mxu0 0.0
        %6595 = vmatpush1.xpose.msra.mxu0 0.0
        %6596 = vmatprep.subr.mxu0 0.0
        %6597 = vmatpush1.xpose.msra.mxu0 0.0
        %6598 = vmatprep.subr.mxu0 0.0
        %6599 = vmatpush1.xpose.msra.mxu0 0.0
        %6600 = vmatprep.subr.mxu0 0.0
        %6601 = vmatpush1.xpose.msra.mxu0 0.0
        %6602 = vmatprep.subr.mxu0 0.0
        %6603 = vmatpush1.xpose.msra.mxu0 0.0
        %6604 = vmatprep.subr.mxu0 0.0
        %6605 = vmatpush1.xpose.msra.mxu0 0.0
        %6606 = vmatprep.subr.mxu0 0.0
        %6607 = vmatpush1.xpose.msra.mxu0 0.0
        %6608 = vmatprep.subr.mxu0 0.0
        %6609 = vmatpush1.xpose.msra.mxu0 0.0
        %6610 = vmatprep.subr.mxu0 0.0
        %6611 = vmatpush1.xpose.msra.mxu0 0.0
        %6612 = vmatprep.subr.mxu0 0.0
        %6613 = vmatpush1.xpose.msra.mxu0 0.0
        %6614 = vmatprep.subr.mxu0 0.0
        %6615 = vmatpush1.xpose.msra.mxu0 0.0
        %6616 = vmatprep.subr.mxu0 0.0
        %6617 = vmatpush1.xpose.msra.mxu0 0.0
        %6618 = vmatprep.subr.mxu0 0.0
        %6619 = vmatpush1.xpose.msra.mxu0 0.0
        %6620 = vmatprep.subr.mxu0 0.0
        %6621 = vmatpush1.xpose.msra.mxu0 0.0
        %6622 = vmatprep.subr.mxu0 0.0
        %6623 = vmatpush1.xpose.msra.mxu0 0.0
        %6624 = vmatprep.mubr.f32.mxu0 0.0
        %6625 = vmatmul.mubr.f32.gmra.mrb[0].mxu0 %v6546
        %v6626 = vpop.f32.mrb[0].mxu0
        %v6627 = vadd.f32 0.0, %v6626
        %v6628 = vpop.f32.mrb[0].mxu0
        %6629 = vmatprep.mubr.f32.mxu0 0.0
        %6630 = vmatmul.mubr.f32.gmra.mrb[0].mxu0 %v6549
        %v6631 = vpop.f32.mrb[0].mxu0
        %v6632 = vadd.f32 0.0, %v6631
        %v6633 = vpop.f32.mrb[0].mxu0
        %6634 = vmatprep.mubr.f32.mxu0 0.0
        %6635 = vmatmul.mubr.f32.gmra.mrb[0].mxu0 %v6552
        %v6636 = vpop.f32.mrb[0].mxu0
        %v6637 = vadd.f32 0.0, %v6636
        %v6638 = vpop.f32.mrb[0].mxu0
        %6639 = vmatprep.mubr.f32.mxu0 0.0
        %6640 = vmatmul.mubr.f32.gmra.mrb[0].mxu0 %v6555
        %v6641 = vpop.f32.mrb[0].mxu0
        %v6642 = vadd.f32 0.0, %v6641
        %v6643 = vpop.f32.mrb[0].mxu0
        %6644 = vdwg.mxu0
        %v6645 = vmul.f32 %v6627, 0.35355338
        %v6646 = vmul.f32 %v6632, 0.35355338
        %v6647 = vmul.f32 %v6637, 0.35355338
        %v6648 = vmul.f32 %v6642, 0.35355338
        %v6649 = vsel %vm1264, %v6645, -inf
        %6650 = vmax.xlane.f32.xlu0 %v6649
        %v6651 = vpop.xlane.xlu0 %6650
        %v6652 = vsel %vm1264, %v6646, -inf
        %6653 = vmax.xlane.f32.xlu0 %v6652
        %v6654 = vpop.xlane.xlu0 %6653
        %v6655 = vsel %vm1264, %v6647, -inf
        %6656 = vmax.xlane.f32.xlu0 %v6655
        %v6657 = vpop.xlane.xlu0 %6656
        %v6658 = vsel %vm1264, %v6648, -inf
        %6659 = vmax.xlane.f32.xlu0 %v6658
        %v6660 = vpop.xlane.xlu0 %6659
        %v6661 = vsub.f32 %v6645, %v6651
        %v6662 = vsub.f32 %v6646, %v6654
        %v6663 = vsub.f32 %v6647, %v6657
        %v6664 = vsub.f32 %v6648, %v6660
        %v6665 = vmul.f32 %v6661, 1.442695
        %v6666 = vpow.pop %v6665
        %v6667 = vmul.f32 %v6662, 1.442695
        %v6668 = vpow.pop %v6667
        %v6669 = vmul.f32 %v6663, 1.442695
        %v6670 = vpow.pop %v6669
        %v6671 = vmul.f32 %v6664, 1.442695
        %v6672 = vpow.pop %v6671
        %v6673 = vsel %vm1264, %v6666, 0.0
        %6674 = vadd.xlane.f32.xlu0 %v6673
        %v6675 = vpop.xlane.xlu0 %6674
        %v6676 = vsel %vm1264, %v6668, 0.0
        %6677 = vadd.xlane.f32.xlu0 %v6676
        %v6678 = vpop.xlane.xlu0 %6677
        %v6679 = vsel %vm1264, %v6670, 0.0
        %6680 = vadd.xlane.f32.xlu0 %v6679
        %v6681 = vpop.xlane.xlu0 %6680
        %v6682 = vsel %vm1264, %v6672, 0.0
        %6683 = vadd.xlane.f32.xlu0 %v6682
        %v6684 = vpop.xlane.xlu0 %6683
        %v6685 = vrcp.pop %v6675
        %v6686 = vrcp.pop %v6678
        %v6687 = vrcp.pop %v6681
        %v6688 = vrcp.pop %v6684
        %v6689 = vmul.f32 %v6666, %v6685
        %v6690 = vmul.f32 %v6668, %v6686
        %v6691 = vmul.f32 %v6670, %v6687
        %v6692 = vmul.f32 %v6672, %v6688
        %6693 = vrot.lane.b32.xlu0 %v6375, 96
        %v6694 = vpop.permute.xlu0 %6693
        %v6697 = vsel %vm1264, %v6689, 0
        %v6700 = vsel %vm1264, %v6690, 0
        %v6703 = vsel %vm1264, %v6691, 0
        %v6706 = vsel %vm1264, %v6692, 0
        %6708 = vmatprep.subr.mxu0 0.0
        %6709 = vmatpush1.msra.mxu0 %v6694
        %6710 = vmatprep.subr.mxu0 0.0
        %6711 = vmatpush1.msra.mxu0 0.0
        %6712 = vmatprep.subr.mxu0 0.0
        %6713 = vmatpush1.msra.mxu0 0.0
        %6714 = vmatprep.subr.mxu0 0.0
        %6715 = vmatpush1.msra.mxu0 0.0
        %6716 = vmatprep.subr.mxu0 0.0
        %6717 = vmatpush1.msra.mxu0 0.0
        %6718 = vmatprep.subr.mxu0 0.0
        %6719 = vmatpush1.msra.mxu0 0.0
        %6720 = vmatprep.subr.mxu0 0.0
        %6721 = vmatpush1.msra.mxu0 0.0
        %6722 = vmatprep.subr.mxu0 0.0
        %6723 = vmatpush1.msra.mxu0 0.0
        %6724 = vmatprep.subr.mxu0 0.0
        %6725 = vmatpush1.msra.mxu0 0.0
        %6726 = vmatprep.subr.mxu0 0.0
        %6727 = vmatpush1.msra.mxu0 0.0
        %6728 = vmatprep.subr.mxu0 0.0
        %6729 = vmatpush1.msra.mxu0 0.0
        %6730 = vmatprep.subr.mxu0 0.0
        %6731 = vmatpush1.msra.mxu0 0.0
        %6732 = vmatprep.subr.mxu0 0.0
        %6733 = vmatpush1.msra.mxu0 0.0
        %6734 = vmatprep.subr.mxu0 0.0
        %6735 = vmatpush1.msra.mxu0 0.0
        %6736 = vmatprep.subr.mxu0 0.0
        %6737 = vmatpush1.msra.mxu0 0.0
        %6738 = vmatprep.subr.mxu0 0.0
        %6739 = vmatpush1.msra.mxu0 0.0
        %6740 = vmatprep.subr.mxu0 0.0
        %6741 = vmatpush1.msra.mxu0 0.0
        %6742 = vmatprep.subr.mxu0 0.0
        %6743 = vmatpush1.msra.mxu0 0.0
        %6744 = vmatprep.subr.mxu0 0.0
        %6745 = vmatpush1.msra.mxu0 0.0
        %6746 = vmatprep.subr.mxu0 0.0
        %6747 = vmatpush1.msra.mxu0 0.0
        %6748 = vmatprep.subr.mxu0 0.0
        %6749 = vmatpush1.msra.mxu0 0.0
        %6750 = vmatprep.subr.mxu0 0.0
        %6751 = vmatpush1.msra.mxu0 0.0
        %6752 = vmatprep.subr.mxu0 0.0
        %6753 = vmatpush1.msra.mxu0 0.0
        %6754 = vmatprep.subr.mxu0 0.0
        %6755 = vmatpush1.msra.mxu0 0.0
        %6756 = vmatprep.subr.mxu0 0.0
        %6757 = vmatpush1.msra.mxu0 0.0
        %6758 = vmatprep.subr.mxu0 0.0
        %6759 = vmatpush1.msra.mxu0 0.0
        %6760 = vmatprep.subr.mxu0 0.0
        %6761 = vmatpush1.msra.mxu0 0.0
        %6762 = vmatprep.subr.mxu0 0.0
        %6763 = vmatpush1.msra.mxu0 0.0
        %6764 = vmatprep.subr.mxu0 0.0
        %6765 = vmatpush1.msra.mxu0 0.0
        %6766 = vmatprep.subr.mxu0 0.0
        %6767 = vmatpush1.msra.mxu0 0.0
        %6768 = vmatprep.subr.mxu0 0.0
        %6769 = vmatpush1.msra.mxu0 0.0
        %6770 = vmatprep.subr.mxu0 0.0
        %6771 = vmatpush1.msra.mxu0 0.0
        %6772 = vmatprep.mubr.f32.mxu0 0.0
        %6773 = vmatmul.mubr.f32.gmra.mrb[0].mxu0 %v6697
        %v6774 = vpop.f32.mrb[0].mxu0
        %v6775 = vadd.f32 0.0, %v6774
        %v6776 = vpop.f32.mrb[0].mxu0
        %6777 = vmatprep.mubr.f32.mxu0 0.0
        %6778 = vmatmul.mubr.f32.gmra.mrb[0].mxu0 %v6700
        %v6779 = vpop.f32.mrb[0].mxu0
        %v6780 = vadd.f32 0.0, %v6779
        %v6781 = vpop.f32.mrb[0].mxu0
        %6782 = vmatprep.mubr.f32.mxu0 0.0
        %6783 = vmatmul.mubr.f32.gmra.mrb[0].mxu0 %v6703
        %v6784 = vpop.f32.mrb[0].mxu0
        %v6785 = vadd.f32 0.0, %v6784
        %v6786 = vpop.f32.mrb[0].mxu0
        %6787 = vmatprep.mubr.f32.mxu0 0.0
        %6788 = vmatmul.mubr.f32.gmra.mrb[0].mxu0 %v6706
        %v6789 = vpop.f32.mrb[0].mxu0
        %v6790 = vadd.f32 0.0, %v6789
        %v6791 = vpop.f32.mrb[0].mxu0
        %6792 = vdwg.mxu0
        %v6794 = vsel %vm959, %v6453, 0
        %6796 = vmatprep.subr.mxu0 0.0
        %6797 = vmatpush1.xpose.msra.mxu0 %v6794
        %6798 = vmatprep.subr.mxu0 0.0
        %6799 = vmatpush1.xpose.msra.mxu0 0.0
        %6800 = vmatprep.subr.mxu0 0.0
        %6801 = vmatpush1.xpose.msra.mxu0 0.0
        %6802 = vmatprep.subr.mxu0 0.0
        %6803 = vmatpush1.xpose.msra.mxu0 0.0
        %6804 = vmatprep.subr.mxu0 0.0
        %6805 = vmatpush1.xpose.msra.mxu0 0.0
        %6806 = vmatprep.subr.mxu0 0.0
        %6807 = vmatpush1.xpose.msra.mxu0 0.0
        %6808 = vmatprep.subr.mxu0 0.0
        %6809 = vmatpush1.xpose.msra.mxu0 0.0
        %6810 = vmatprep.subr.mxu0 0.0
        %6811 = vmatpush1.xpose.msra.mxu0 0.0
        %6812 = vmatprep.subr.mxu0 0.0
        %6813 = vmatpush1.xpose.msra.mxu0 0.0
        %6814 = vmatprep.subr.mxu0 0.0
        %6815 = vmatpush1.xpose.msra.mxu0 0.0
        %6816 = vmatprep.subr.mxu0 0.0
        %6817 = vmatpush1.xpose.msra.mxu0 0.0
        %6818 = vmatprep.subr.mxu0 0.0
        %6819 = vmatpush1.xpose.msra.mxu0 0.0
        %6820 = vmatprep.subr.mxu0 0.0
        %6821 = vmatpush1.xpose.msra.mxu0 0.0
        %6822 = vmatprep.subr.mxu0 0.0
        %6823 = vmatpush1.xpose.msra.mxu0 0.0
        %6824 = vmatprep.subr.mxu0 0.0
        %6825 = vmatpush1.xpose.msra.mxu0 0.0
        %6826 = vmatprep.subr.mxu0 0.0
        %6827 = vmatpush1.xpose.msra.mxu0 0.0
        %6828 = vmatprep.subr.mxu0 0.0
        %6829 = vmatpush1.xpose.msra.mxu0 0.0
        %6830 = vmatprep.subr.mxu0 0.0
        %6831 = vmatpush1.xpose.msra.mxu0 0.0
        %6832 = vmatprep.subr.mxu0 0.0
        %6833 = vmatpush1.xpose.msra.mxu0 0.0
        %6834 = vmatprep.subr.mxu0 0.0
        %6835 = vmatpush1.xpose.msra.mxu0 0.0
        %6836 = vmatprep.subr.mxu0 0.0
        %6837 = vmatpush1.xpose.msra.mxu0 0.0
        %6838 = vmatprep.subr.mxu0 0.0
        %6839 = vmatpush1.xpose.msra.mxu0 0.0
        %6840 = vmatprep.subr.mxu0 0.0
        %6841 = vmatpush1.xpose.msra.mxu0 0.0
        %6842 = vmatprep.subr.mxu0 0.0
        %6843 = vmatpush1.xpose.msra.mxu0 0.0
        %6844 = vmatprep.subr.mxu0 0.0
        %6845 = vmatpush1.xpose.msra.mxu0 0.0
        %6846 = vmatprep.subr.mxu0 0.0
        %6847 = vmatpush1.xpose.msra.mxu0 0.0
        %6848 = vmatprep.subr.mxu0 0.0
        %6849 = vmatpush1.xpose.msra.mxu0 0.0
        %6850 = vmatprep.subr.mxu0 0.0
        %6851 = vmatpush1.xpose.msra.mxu0 0.0
        %6852 = vmatprep.subr.mxu0 0.0
        %6853 = vmatpush1.xpose.msra.mxu0 0.0
        %6854 = vmatprep.subr.mxu0 0.0
        %6855 = vmatpush1.xpose.msra.mxu0 0.0
        %6856 = vmatprep.subr.mxu0 0.0
        %6857 = vmatpush1.xpose.msra.mxu0 0.0
        %6858 = vmatprep.subr.mxu0 0.0
        %6859 = vmatpush1.xpose.msra.mxu0 0.0
        %6860 = vmatprep.mubr.f32.mxu0 0.0
        %6861 = vmatmul.mubr.f32.gmra.mrb[0].mxu0 %v6546
        %v6862 = vpop.f32.mrb[0].mxu0
        %v6863 = vadd.f32 0.0, %v6862
        %v6864 = vpop.f32.mrb[0].mxu0
        %6865 = vmatprep.mubr.f32.mxu0 0.0
        %6866 = vmatmul.mubr.f32.gmra.mrb[0].mxu0 %v6549
        %v6867 = vpop.f32.mrb[0].mxu0
        %v6868 = vadd.f32 0.0, %v6867
        %v6869 = vpop.f32.mrb[0].mxu0
        %6870 = vmatprep.mubr.f32.mxu0 0.0
        %6871 = vmatmul.mubr.f32.gmra.mrb[0].mxu0 %v6552
        %v6872 = vpop.f32.mrb[0].mxu0
        %v6873 = vadd.f32 0.0, %v6872
        %v6874 = vpop.f32.mrb[0].mxu0
        %6875 = vmatprep.mubr.f32.mxu0 0.0
        %6876 = vmatmul.mubr.f32.gmra.mrb[0].mxu0 %v6555
        %v6877 = vpop.f32.mrb[0].mxu0
        %v6878 = vadd.f32 0.0, %v6877
        %v6879 = vpop.f32.mrb[0].mxu0
        %6880 = vdwg.mxu0
        %v6881 = vmul.f32 %v6863, 0.35355338
        %v6882 = vmul.f32 %v6868, 0.35355338
        %v6883 = vmul.f32 %v6873, 0.35355338
        %v6884 = vmul.f32 %v6878, 0.35355338
        %v6885 = vsel %vm3547, %v6881, -inf
        %6886 = vmax.xlane.f32.xlu0 %v6885
        %v6887 = vpop.xlane.xlu0 %6886
        %v6888 = vsel %vm3547, %v6882, -inf
        %6889 = vmax.xlane.f32.xlu0 %v6888
        %v6890 = vpop.xlane.xlu0 %6889
        %v6891 = vsel %vm3547, %v6883, -inf
        %6892 = vmax.xlane.f32.xlu0 %v6891
        %v6893 = vpop.xlane.xlu0 %6892
        %v6894 = vsel %vm3547, %v6884, -inf
        %6895 = vmax.xlane.f32.xlu0 %v6894
        %v6896 = vpop.xlane.xlu0 %6895
        %v6897 = vsub.f32 %v6881, %v6887
        %v6898 = vsub.f32 %v6882, %v6890
        %v6899 = vsub.f32 %v6883, %v6893
        %v6900 = vsub.f32 %v6884, %v6896
        %v6901 = vmul.f32 %v6897, 1.442695
        %v6902 = vpow.pop %v6901
        %v6903 = vmul.f32 %v6898, 1.442695
        %v6904 = vpow.pop %v6903
        %v6905 = vmul.f32 %v6899, 1.442695
        %v6906 = vpow.pop %v6905
        %v6907 = vmul.f32 %v6900, 1.442695
        %v6908 = vpow.pop %v6907
        %v6909 = vsel %vm3547, %v6902, 0.0
        %6910 = vadd.xlane.f32.xlu0 %v6909
        %v6911 = vpop.xlane.xlu0 %6910
        %v6912 = vsel %vm3547, %v6904, 0.0
        %6913 = vadd.xlane.f32.xlu0 %v6912
        %v6914 = vpop.xlane.xlu0 %6913
        %v6915 = vsel %vm3547, %v6906, 0.0
        %6916 = vadd.xlane.f32.xlu0 %v6915
        %v6917 = vpop.xlane.xlu0 %6916
        %v6918 = vsel %vm3547, %v6908, 0.0
        %6919 = vadd.xlane.f32.xlu0 %v6918
        %v6920 = vpop.xlane.xlu0 %6919
        %v6921 = vrcp.pop %v6911
        %v6922 = vrcp.pop %v6914
        %v6923 = vrcp.pop %v6917
        %v6924 = vrcp.pop %v6920
        %v6925 = vmul.f32 %v6902, %v6921
        %v6926 = vmul.f32 %v6904, %v6922
        %v6927 = vmul.f32 %v6906, %v6923
        %v6928 = vmul.f32 %v6908, %v6924
        %6929 = vrot.lane.b32.xlu0 %v6453, 96
        %v6930 = vpop.permute.xlu0 %6929
        %v6932 = vsel %vm3547, %v6925, 0
        %v6935 = vsel %vm3547, %v6926, 0
        %v6938 = vsel %vm3547, %v6927, 0
        %v6941 = vsel %vm3547, %v6928, 0
        %v6943 = vsel %vm3606, %v6930, 0
        %6945 = vmatprep.subr.mxu0 0.0
        %6946 = vmatpush1.msra.mxu0 %v6943
        %6947 = vmatprep.subr.mxu0 0.0
        %6948 = vmatpush1.msra.mxu0 0.0
        %6949 = vmatprep.subr.mxu0 0.0
        %6950 = vmatpush1.msra.mxu0 0.0
        %6951 = vmatprep.subr.mxu0 0.0
        %6952 = vmatpush1.msra.mxu0 0.0
        %6953 = vmatprep.subr.mxu0 0.0
        %6954 = vmatpush1.msra.mxu0 0.0
        %6955 = vmatprep.subr.mxu0 0.0
        %6956 = vmatpush1.msra.mxu0 0.0
        %6957 = vmatprep.subr.mxu0 0.0
        %6958 = vmatpush1.msra.mxu0 0.0
        %6959 = vmatprep.subr.mxu0 0.0
        %6960 = vmatpush1.msra.mxu0 0.0
        %6961 = vmatprep.subr.mxu0 0.0
        %6962 = vmatpush1.msra.mxu0 0.0
        %6963 = vmatprep.subr.mxu0 0.0
        %6964 = vmatpush1.msra.mxu0 0.0
        %6965 = vmatprep.subr.mxu0 0.0
        %6966 = vmatpush1.msra.mxu0 0.0
        %6967 = vmatprep.subr.mxu0 0.0
        %6968 = vmatpush1.msra.mxu0 0.0
        %6969 = vmatprep.subr.mxu0 0.0
        %6970 = vmatpush1.msra.mxu0 0.0
        %6971 = vmatprep.subr.mxu0 0.0
        %6972 = vmatpush1.msra.mxu0 0.0
        %6973 = vmatprep.subr.mxu0 0.0
        %6974 = vmatpush1.msra.mxu0 0.0
        %6975 = vmatprep.subr.mxu0 0.0
        %6976 = vmatpush1.msra.mxu0 0.0
        %6977 = vmatprep.subr.mxu0 0.0
        %6978 = vmatpush1.msra.mxu0 0.0
        %6979 = vmatprep.subr.mxu0 0.0
        %6980 = vmatpush1.msra.mxu0 0.0
        %6981 = vmatprep.subr.mxu0 0.0
        %6982 = vmatpush1.msra.mxu0 0.0
        %6983 = vmatprep.subr.mxu0 0.0
        %6984 = vmatpush1.msra.mxu0 0.0
        %6985 = vmatprep.subr.mxu0 0.0
        %6986 = vmatpush1.msra.mxu0 0.0
        %6987 = vmatprep.subr.mxu0 0.0
        %6988 = vmatpush1.msra.mxu0 0.0
        %6989 = vmatprep.subr.mxu0 0.0
        %6990 = vmatpush1.msra.mxu0 0.0
        %6991 = vmatprep.subr.mxu0 0.0
        %6992 = vmatpush1.msra.mxu0 0.0
        %6993 = vmatprep.subr.mxu0 0.0
        %6994 = vmatpush1.msra.mxu0 0.0
        %6995 = vmatprep.subr.mxu0 0.0
        %6996 = vmatpush1.msra.mxu0 0.0
        %6997 = vmatprep.subr.mxu0 0.0
        %6998 = vmatpush1.msra.mxu0 0.0
        %6999 = vmatprep.subr.mxu0 0.0
        %7000 = vmatpush1.msra.mxu0 0.0
        %7001 = vmatprep.subr.mxu0 0.0
        %7002 = vmatpush1.msra.mxu0 0.0
        %7003 = vmatprep.subr.mxu0 0.0
        %7004 = vmatpush1.msra.mxu0 0.0
        %7005 = vmatprep.subr.mxu0 0.0
        %7006 = vmatpush1.msra.mxu0 0.0
        %7007 = vmatprep.subr.mxu0 0.0
        %7008 = vmatpush1.msra.mxu0 0.0
        %7009 = vmatprep.mubr.f32.mxu0 0.0
        %7010 = vmatmul.mubr.f32.gmra.mrb[0].mxu0 %v6932
        %v7011 = vpop.f32.mrb[0].mxu0
        %v7012 = vadd.f32 0.0, %v7011
        %v7013 = vpop.f32.mrb[0].mxu0
        %7014 = vmatprep.mubr.f32.mxu0 0.0
        %7015 = vmatmul.mubr.f32.gmra.mrb[0].mxu0 %v6935
        %v7016 = vpop.f32.mrb[0].mxu0
        %v7017 = vadd.f32 0.0, %v7016
        %v7018 = vpop.f32.mrb[0].mxu0
        %7019 = vmatprep.mubr.f32.mxu0 0.0
        %7020 = vmatmul.mubr.f32.gmra.mrb[0].mxu0 %v6938
        %v7021 = vpop.f32.mrb[0].mxu0
        %v7022 = vadd.f32 0.0, %v7021
        %v7023 = vpop.f32.mrb[0].mxu0
        %7024 = vmatprep.mubr.f32.mxu0 0.0
        %7025 = vmatmul.mubr.f32.gmra.mrb[0].mxu0 %v6941
        %v7026 = vpop.f32.mrb[0].mxu0
        %v7027 = vadd.f32 0.0, %v7026
        %v7028 = vpop.f32.mrb[0].mxu0
        %7029 = vdwg.mxu0
        %v7030 = vsub.f32 %v6775, %v7012
        %v7031 = vsub.f32 %v6780, %v7017
        %v7032 = vsub.f32 %v6785, %v7022
        %v7033 = vsub.f32 %v6790, %v7027
        %v7034 = vmul.f32 %v7030, %v870
        %v7035 = vmul.f32 %v7031, %v871
        %v7036 = vmul.f32 %v7032, %v872
        %v7037 = vmul.f32 %v7033, %v873
        %v7038 = vmul.f32 %v7034, %v7034
        %v7039 = vmul.f32 %v7035, %v7035
        %v7040 = vmul.f32 %v7036, %v7036
        %v7041 = vmul.f32 %v7037, %v7037
        %v7042 = vadd.f32 %v4296, %v7038
        %v7043 = vadd.f32 %v4297, %v7039
        %v7044 = vadd.f32 %v4298, %v7040
        %v7045 = vadd.f32 %v4299, %v7041
        %7046 = vmatprep.subr.mxu0 0.0
        %7047 = vmatpush1.msra.mxu0 %v6289
        %7048 = vmatprep.subr.mxu0 0.0
        %7049 = vmatpush1.msra.mxu0 0.0
        %7050 = vmatprep.subr.mxu0 0.0
        %7051 = vmatpush1.msra.mxu0 0.0
        %7052 = vmatprep.subr.mxu0 0.0
        %7053 = vmatpush1.msra.mxu0 0.0
        %7054 = vmatprep.subr.mxu0 0.0
        %7055 = vmatpush1.msra.mxu0 0.0
        %7056 = vmatprep.subr.mxu0 0.0
        %7057 = vmatpush1.msra.mxu0 0.0
        %7058 = vmatprep.subr.mxu0 0.0
        %7059 = vmatpush1.msra.mxu0 0.0
        %7060 = vmatprep.subr.mxu0 0.0
        %7061 = vmatpush1.msra.mxu0 0.0
        %7062 = vmatprep.subr.mxu0 0.0
        %7063 = vmatpush1.msra.mxu0 0.0
        %7064 = vmatprep.subr.mxu0 0.0
        %7065 = vmatpush1.msra.mxu0 0.0
        %7066 = vmatprep.subr.mxu0 0.0
        %7067 = vmatpush1.msra.mxu0 0.0
        %7068 = vmatprep.subr.mxu0 0.0
        %7069 = vmatpush1.msra.mxu0 0.0
        %7070 = vmatprep.subr.mxu0 0.0
        %7071 = vmatpush1.msra.mxu0 0.0
        %7072 = vmatprep.subr.mxu0 0.0
        %7073 = vmatpush1.msra.mxu0 0.0
        %7074 = vmatprep.subr.mxu0 0.0
        %7075 = vmatpush1.msra.mxu0 0.0
        %7076 = vmatprep.subr.mxu0 0.0
        %7077 = vmatpush1.msra.mxu0 0.0
        %7078 = vmatprep.subr.mxu0 0.0
        %7079 = vmatpush1.msra.mxu0 0.0
        %7080 = vmatprep.subr.mxu0 0.0
        %7081 = vmatpush1.msra.mxu0 0.0
        %7082 = vmatprep.subr.mxu0 0.0
        %7083 = vmatpush1.msra.mxu0 0.0
        %7084 = vmatprep.subr.mxu0 0.0
        %7085 = vmatpush1.msra.mxu0 0.0
        %7086 = vmatprep.subr.mxu0 0.0
        %7087 = vmatpush1.msra.mxu0 0.0
        %7088 = vmatprep.subr.mxu0 0.0
        %7089 = vmatpush1.msra.mxu0 0.0
        %7090 = vmatprep.subr.mxu0 0.0
        %7091 = vmatpush1.msra.mxu0 0.0
        %7092 = vmatprep.subr.mxu0 0.0
        %7093 = vmatpush1.msra.mxu0 0.0
        %7094 = vmatprep.subr.mxu0 0.0
        %7095 = vmatpush1.msra.mxu0 0.0
        %7096 = vmatprep.subr.mxu0 0.0
        %7097 = vmatpush1.msra.mxu0 0.0
        %7098 = vmatprep.subr.mxu0 0.0
        %7099 = vmatpush1.msra.mxu0 0.0
        %7100 = vmatprep.subr.mxu0 0.0
        %7101 = vmatpush1.msra.mxu0 0.0
        %7102 = vmatprep.subr.mxu0 0.0
        %7103 = vmatpush1.msra.mxu0 0.0
        %7104 = vmatprep.subr.mxu0 0.0
        %7105 = vmatpush1.msra.mxu0 0.0
        %7106 = vmatprep.subr.mxu0 0.0
        %7107 = vmatpush1.msra.mxu0 0.0
        %7108 = vmatprep.subr.mxu0 0.0
        %7109 = vmatpush1.msra.mxu0 0.0
        %7110 = vmatprep.mubr.f32.mxu0 0.0
        %7111 = vmatmul.mubr.f32.gmra.mrb[0].mxu0 %v1266
        %v7112 = vpop.f32.mrb[0].mxu0
        %v7113 = vadd.f32 0.0, %v7112
        %v7114 = vpop.f32.mrb[0].mxu0
        %7115 = vmatprep.mubr.f32.mxu0 0.0
        %7116 = vmatmul.mubr.f32.gmra.mrb[0].mxu0 %v1269
        %v7117 = vpop.f32.mrb[0].mxu0
        %v7118 = vadd.f32 0.0, %v7117
        %v7119 = vpop.f32.mrb[0].mxu0
        %7120 = vmatprep.mubr.f32.mxu0 0.0
        %7121 = vmatmul.mubr.f32.gmra.mrb[0].mxu0 %v1272
        %v7122 = vpop.f32.mrb[0].mxu0
        %v7123 = vadd.f32 0.0, %v7122
        %v7124 = vpop.f32.mrb[0].mxu0
        %7125 = vmatprep.mubr.f32.mxu0 0.0
        %7126 = vmatmul.mubr.f32.gmra.mrb[0].mxu0 %v1275
        %v7127 = vpop.f32.mrb[0].mxu0
        %v7128 = vadd.f32 0.0, %v7127
        %v7129 = vpop.f32.mrb[0].mxu0
        %7130 = vdwg.mxu0
        %v7131 = vmul.f32 %v7113, %v870
        %v7132 = vmul.f32 %v7118, %v871
        %v7133 = vmul.f32 %v7123, %v872
        %v7134 = vmul.f32 %v7128, %v873
        %v7136 = vsel %vm959, %v7131, 0
        %v7139 = vsel %vm959, %v7132, 0
        %v7142 = vsel %vm959, %v7133, 0
        %v7145 = vsel %vm959, %v7134, 0
        %v7148 = vsel %vm959, %v6380, 0
        %7150 = vmatprep.subr.mxu0 0.0
        %7151 = vmatpush1.xpose.msra.mxu0 %v7148
        %7152 = vmatprep.subr.mxu0 0.0
        %7153 = vmatpush1.xpose.msra.mxu0 0.0
        %7154 = vmatprep.subr.mxu0 0.0
        %7155 = vmatpush1.xpose.msra.mxu0 0.0
        %7156 = vmatprep.subr.mxu0 0.0
        %7157 = vmatpush1.xpose.msra.mxu0 0.0
        %7158 = vmatprep.subr.mxu0 0.0
        %7159 = vmatpush1.xpose.msra.mxu0 0.0
        %7160 = vmatprep.subr.mxu0 0.0
        %7161 = vmatpush1.xpose.msra.mxu0 0.0
        %7162 = vmatprep.subr.mxu0 0.0
        %7163 = vmatpush1.xpose.msra.mxu0 0.0
        %7164 = vmatprep.subr.mxu0 0.0
        %7165 = vmatpush1.xpose.msra.mxu0 0.0
        %7166 = vmatprep.subr.mxu0 0.0
        %7167 = vmatpush1.xpose.msra.mxu0 0.0
        %7168 = vmatprep.subr.mxu0 0.0
        %7169 = vmatpush1.xpose.msra.mxu0 0.0
        %7170 = vmatprep.subr.mxu0 0.0
        %7171 = vmatpush1.xpose.msra.mxu0 0.0
        %7172 = vmatprep.subr.mxu0 0.0
        %7173 = vmatpush1.xpose.msra.mxu0 0.0
        %7174 = vmatprep.subr.mxu0 0.0
        %7175 = vmatpush1.xpose.msra.mxu0 0.0
        %7176 = vmatprep.subr.mxu0 0.0
        %7177 = vmatpush1.xpose.msra.mxu0 0.0
        %7178 = vmatprep.subr.mxu0 0.0
        %7179 = vmatpush1.xpose.msra.mxu0 0.0
        %7180 = vmatprep.subr.mxu0 0.0
        %7181 = vmatpush1.xpose.msra.mxu0 0.0
        %7182 = vmatprep.subr.mxu0 0.0
        %7183 = vmatpush1.xpose.msra.mxu0 0.0
        %7184 = vmatprep.subr.mxu0 0.0
        %7185 = vmatpush1.xpose.msra.mxu0 0.0
        %7186 = vmatprep.subr.mxu0 0.0
        %7187 = vmatpush1.xpose.msra.mxu0 0.0
        %7188 = vmatprep.subr.mxu0 0.0
        %7189 = vmatpush1.xpose.msra.mxu0 0.0
        %7190 = vmatprep.subr.mxu0 0.0
        %7191 = vmatpush1.xpose.msra.mxu0 0.0
        %7192 = vmatprep.subr.mxu0 0.0
        %7193 = vmatpush1.xpose.msra.mxu0 0.0
        %7194 = vmatprep.subr.mxu0 0.0
        %7195 = vmatpush1.xpose.msra.mxu0 0.0
        %7196 = vmatprep.subr.mxu0 0.0
        %7197 = vmatpush1.xpose.msra.mxu0 0.0
        %7198 = vmatprep.subr.mxu0 0.0
        %7199 = vmatpush1.xpose.msra.mxu0 0.0
        %7200 = vmatprep.subr.mxu0 0.0
        %7201 = vmatpush1.xpose.msra.mxu0 0.0
        %7202 = vmatprep.subr.mxu0 0.0
        %7203 = vmatpush1.xpose.msra.mxu0 0.0
        %7204 = vmatprep.subr.mxu0 0.0
        %7205 = vmatpush1.xpose.msra.mxu0 0.0
        %7206 = vmatprep.subr.mxu0 0.0
        %7207 = vmatpush1.xpose.msra.mxu0 0.0
        %7208 = vmatprep.subr.mxu0 0.0
        %7209 = vmatpush1.xpose.msra.mxu0 0.0
        %7210 = vmatprep.subr.mxu0 0.0
        %7211 = vmatpush1.xpose.msra.mxu0 0.0
        %7212 = vmatprep.subr.mxu0 0.0
        %7213 = vmatpush1.xpose.msra.mxu0 0.0
        %7214 = vmatprep.mubr.f32.mxu0 0.0
        %7215 = vmatmul.mubr.f32.gmra.mrb[0].mxu0 %v7136
        %v7216 = vpop.f32.mrb[0].mxu0
        %v7217 = vadd.f32 0.0, %v7216
        %v7218 = vpop.f32.mrb[0].mxu0
        %7219 = vmatprep.mubr.f32.mxu0 0.0
        %7220 = vmatmul.mubr.f32.gmra.mrb[0].mxu0 %v7139
        %v7221 = vpop.f32.mrb[0].mxu0
        %v7222 = vadd.f32 0.0, %v7221
        %v7223 = vpop.f32.mrb[0].mxu0
        %7224 = vmatprep.mubr.f32.mxu0 0.0
        %7225 = vmatmul.mubr.f32.gmra.mrb[0].mxu0 %v7142
        %v7226 = vpop.f32.mrb[0].mxu0
        %v7227 = vadd.f32 0.0, %v7226
        %v7228 = vpop.f32.mrb[0].mxu0
        %7229 = vmatprep.mubr.f32.mxu0 0.0
        %7230 = vmatmul.mubr.f32.gmra.mrb[0].mxu0 %v7145
        %v7231 = vpop.f32.mrb[0].mxu0
        %v7232 = vadd.f32 0.0, %v7231
        %v7233 = vpop.f32.mrb[0].mxu0
        %7234 = vdwg.mxu0
        %v7235 = vmul.f32 %v7217, 0.35355338
        %v7236 = vmul.f32 %v7222, 0.35355338
        %v7237 = vmul.f32 %v7227, 0.35355338
        %v7238 = vmul.f32 %v7232, 0.35355338
        %v7239 = vsel %vm1264, %v7235, -inf
        %7240 = vmax.xlane.f32.xlu0 %v7239
        %v7241 = vpop.xlane.xlu0 %7240
        %v7242 = vsel %vm1264, %v7236, -inf
        %7243 = vmax.xlane.f32.xlu0 %v7242
        %v7244 = vpop.xlane.xlu0 %7243
        %v7245 = vsel %vm1264, %v7237, -inf
        %7246 = vmax.xlane.f32.xlu0 %v7245
        %v7247 = vpop.xlane.xlu0 %7246
        %v7248 = vsel %vm1264, %v7238, -inf
        %7249 = vmax.xlane.f32.xlu0 %v7248
        %v7250 = vpop.xlane.xlu0 %7249
        %v7251 = vsub.f32 %v7235, %v7241
        %v7252 = vsub.f32 %v7236, %v7244
        %v7253 = vsub.f32 %v7237, %v7247
        %v7254 = vsub.f32 %v7238, %v7250
        %v7255 = vmul.f32 %v7251, 1.442695
        %v7256 = vpow.pop %v7255
        %v7257 = vmul.f32 %v7252, 1.442695
        %v7258 = vpow.pop %v7257
        %v7259 = vmul.f32 %v7253, 1.442695
        %v7260 = vpow.pop %v7259
        %v7261 = vmul.f32 %v7254, 1.442695
        %v7262 = vpow.pop %v7261
        %v7263 = vsel %vm1264, %v7256, 0.0
        %7264 = vadd.xlane.f32.xlu0 %v7263
        %v7265 = vpop.xlane.xlu0 %7264
        %v7266 = vsel %vm1264, %v7258, 0.0
        %7267 = vadd.xlane.f32.xlu0 %v7266
        %v7268 = vpop.xlane.xlu0 %7267
        %v7269 = vsel %vm1264, %v7260, 0.0
        %7270 = vadd.xlane.f32.xlu0 %v7269
        %v7271 = vpop.xlane.xlu0 %7270
        %v7272 = vsel %vm1264, %v7262, 0.0
        %7273 = vadd.xlane.f32.xlu0 %v7272
        %v7274 = vpop.xlane.xlu0 %7273
        %v7275 = vrcp.pop %v7265
        %v7276 = vrcp.pop %v7268
        %v7277 = vrcp.pop %v7271
        %v7278 = vrcp.pop %v7274
        %v7279 = vmul.f32 %v7256, %v7275
        %v7280 = vmul.f32 %v7258, %v7276
        %v7281 = vmul.f32 %v7260, %v7277
        %v7282 = vmul.f32 %v7262, %v7278
        %7283 = vrot.lane.b32.xlu0 %v6380, 96
        %v7284 = vpop.permute.xlu0 %7283
        %v7287 = vsel %vm1264, %v7279, 0
        %v7290 = vsel %vm1264, %v7280, 0
        %v7293 = vsel %vm1264, %v7281, 0
        %v7296 = vsel %vm1264, %v7282, 0
        %7298 = vmatprep.subr.mxu0 0.0
        %7299 = vmatpush1.msra.mxu0 %v7284
        %7300 = vmatprep.subr.mxu0 0.0
        %7301 = vmatpush1.msra.mxu0 0.0
        %7302 = vmatprep.subr.mxu0 0.0
        %7303 = vmatpush1.msra.mxu0 0.0
        %7304 = vmatprep.subr.mxu0 0.0
        %7305 = vmatpush1.msra.mxu0 0.0
        %7306 = vmatprep.subr.mxu0 0.0
        %7307 = vmatpush1.msra.mxu0 0.0
        %7308 = vmatprep.subr.mxu0 0.0
        %7309 = vmatpush1.msra.mxu0 0.0
        %7310 = vmatprep.subr.mxu0 0.0
        %7311 = vmatpush1.msra.mxu0 0.0
        %7312 = vmatprep.subr.mxu0 0.0
        %7313 = vmatpush1.msra.mxu0 0.0
        %7314 = vmatprep.subr.mxu0 0.0
        %7315 = vmatpush1.msra.mxu0 0.0
        %7316 = vmatprep.subr.mxu0 0.0
        %7317 = vmatpush1.msra.mxu0 0.0
        %7318 = vmatprep.subr.mxu0 0.0
        %7319 = vmatpush1.msra.mxu0 0.0
        %7320 = vmatprep.subr.mxu0 0.0
        %7321 = vmatpush1.msra.mxu0 0.0
        %7322 = vmatprep.subr.mxu0 0.0
        %7323 = vmatpush1.msra.mxu0 0.0
        %7324 = vmatprep.subr.mxu0 0.0
        %7325 = vmatpush1.msra.mxu0 0.0
        %7326 = vmatprep.subr.mxu0 0.0
        %7327 = vmatpush1.msra.mxu0 0.0
        %7328 = vmatprep.subr.mxu0 0.0
        %7329 = vmatpush1.msra.mxu0 0.0
        %7330 = vmatprep.subr.mxu0 0.0
        %7331 = vmatpush1.msra.mxu0 0.0
        %7332 = vmatprep.subr.mxu0 0.0
        %7333 = vmatpush1.msra.mxu0 0.0
        %7334 = vmatprep.subr.mxu0 0.0
        %7335 = vmatpush1.msra.mxu0 0.0
        %7336 = vmatprep.subr.mxu0 0.0
        %7337 = vmatpush1.msra.mxu0 0.0
        %7338 = vmatprep.subr.mxu0 0.0
        %7339 = vmatpush1.msra.mxu0 0.0
        %7340 = vmatprep.subr.mxu0 0.0
        %7341 = vmatpush1.msra.mxu0 0.0
        %7342 = vmatprep.subr.mxu0 0.0
        %7343 = vmatpush1.msra.mxu0 0.0
        %7344 = vmatprep.subr.mxu0 0.0
        %7345 = vmatpush1.msra.mxu0 0.0
        %7346 = vmatprep.subr.mxu0 0.0
        %7347 = vmatpush1.msra.mxu0 0.0
        %7348 = vmatprep.subr.mxu0 0.0
        %7349 = vmatpush1.msra.mxu0 0.0
        %7350 = vmatprep.subr.mxu0 0.0
        %7351 = vmatpush1.msra.mxu0 0.0
        %7352 = vmatprep.subr.mxu0 0.0
        %7353 = vmatpush1.msra.mxu0 0.0
        %7354 = vmatprep.subr.mxu0 0.0
        %7355 = vmatpush1.msra.mxu0 0.0
        %7356 = vmatprep.subr.mxu0 0.0
        %7357 = vmatpush1.msra.mxu0 0.0
        %7358 = vmatprep.subr.mxu0 0.0
        %7359 = vmatpush1.msra.mxu0 0.0
        %7360 = vmatprep.subr.mxu0 0.0
        %7361 = vmatpush1.msra.mxu0 0.0
        %7362 = vmatprep.mubr.f32.mxu0 0.0
        %7363 = vmatmul.mubr.f32.gmra.mrb[0].mxu0 %v7287
        %v7364 = vpop.f32.mrb[0].mxu0
        %v7365 = vadd.f32 0.0, %v7364
        %v7366 = vpop.f32.mrb[0].mxu0
        %7367 = vmatprep.mubr.f32.mxu0 0.0
        %7368 = vmatmul.mubr.f32.gmra.mrb[0].mxu0 %v7290
        %v7369 = vpop.f32.mrb[0].mxu0
        %v7370 = vadd.f32 0.0, %v7369
        %v7371 = vpop.f32.mrb[0].mxu0
        %7372 = vmatprep.mubr.f32.mxu0 0.0
        %7373 = vmatmul.mubr.f32.gmra.mrb[0].mxu0 %v7293
        %v7374 = vpop.f32.mrb[0].mxu0
        %v7375 = vadd.f32 0.0, %v7374
        %v7376 = vpop.f32.mrb[0].mxu0
        %7377 = vmatprep.mubr.f32.mxu0 0.0
        %7378 = vmatmul.mubr.f32.gmra.mrb[0].mxu0 %v7296
        %v7379 = vpop.f32.mrb[0].mxu0
        %v7380 = vadd.f32 0.0, %v7379
        %v7381 = vpop.f32.mrb[0].mxu0
        %7382 = vdwg.mxu0
        %v7383 = vrot.slane %v6453, 2
        %v7384 = vsel %vm959, %v7383, 0
        %7386 = vmatprep.subr.mxu0 0.0
        %7387 = vmatpush1.xpose.msra.mxu0 %v7384
        %7388 = vmatprep.subr.mxu0 0.0
        %7389 = vmatpush1.xpose.msra.mxu0 0.0
        %7390 = vmatprep.subr.mxu0 0.0
        %7391 = vmatpush1.xpose.msra.mxu0 0.0
        %7392 = vmatprep.subr.mxu0 0.0
        %7393 = vmatpush1.xpose.msra.mxu0 0.0
        %7394 = vmatprep.subr.mxu0 0.0
        %7395 = vmatpush1.xpose.msra.mxu0 0.0
        %7396 = vmatprep.subr.mxu0 0.0
        %7397 = vmatpush1.xpose.msra.mxu0 0.0
        %7398 = vmatprep.subr.mxu0 0.0
        %7399 = vmatpush1.xpose.msra.mxu0 0.0
        %7400 = vmatprep.subr.mxu0 0.0
        %7401 = vmatpush1.xpose.msra.mxu0 0.0
        %7402 = vmatprep.subr.mxu0 0.0
        %7403 = vmatpush1.xpose.msra.mxu0 0.0
        %7404 = vmatprep.subr.mxu0 0.0
        %7405 = vmatpush1.xpose.msra.mxu0 0.0
        %7406 = vmatprep.subr.mxu0 0.0
        %7407 = vmatpush1.xpose.msra.mxu0 0.0
        %7408 = vmatprep.subr.mxu0 0.0
        %7409 = vmatpush1.xpose.msra.mxu0 0.0
        %7410 = vmatprep.subr.mxu0 0.0
        %7411 = vmatpush1.xpose.msra.mxu0 0.0
        %7412 = vmatprep.subr.mxu0 0.0
        %7413 = vmatpush1.xpose.msra.mxu0 0.0
        %7414 = vmatprep.subr.mxu0 0.0
        %7415 = vmatpush1.xpose.msra.mxu0 0.0
        %7416 = vmatprep.subr.mxu0 0.0
        %7417 = vmatpush1.xpose.msra.mxu0 0.0
        %7418 = vmatprep.subr.mxu0 0.0
        %7419 = vmatpush1.xpose.msra.mxu0 0.0
        %7420 = vmatprep.subr.mxu0 0.0
        %7421 = vmatpush1.xpose.msra.mxu0 0.0
        %7422 = vmatprep.subr.mxu0 0.0
        %7423 = vmatpush1.xpose.msra.mxu0 0.0
        %7424 = vmatprep.subr.mxu0 0.0
        %7425 = vmatpush1.xpose.msra.mxu0 0.0
        %7426 = vmatprep.subr.mxu0 0.0
        %7427 = vmatpush1.xpose.msra.mxu0 0.0
        %7428 = vmatprep.subr.mxu0 0.0
        %7429 = vmatpush1.xpose.msra.mxu0 0.0
        %7430 = vmatprep.subr.mxu0 0.0
        %7431 = vmatpush1.xpose.msra.mxu0 0.0
        %7432 = vmatprep.subr.mxu0 0.0
        %7433 = vmatpush1.xpose.msra.mxu0 0.0
        %7434 = vmatprep.subr.mxu0 0.0
        %7435 = vmatpush1.xpose.msra.mxu0 0.0
        %7436 = vmatprep.subr.mxu0 0.0
        %7437 = vmatpush1.xpose.msra.mxu0 0.0
        %7438 = vmatprep.subr.mxu0 0.0
        %7439 = vmatpush1.xpose.msra.mxu0 0.0
        %7440 = vmatprep.subr.mxu0 0.0
        %7441 = vmatpush1.xpose.msra.mxu0 0.0
        %7442 = vmatprep.subr.mxu0 0.0
        %7443 = vmatpush1.xpose.msra.mxu0 0.0
        %7444 = vmatprep.subr.mxu0 0.0
        %7445 = vmatpush1.xpose.msra.mxu0 0.0
        %7446 = vmatprep.subr.mxu0 0.0
        %7447 = vmatpush1.xpose.msra.mxu0 0.0
        %7448 = vmatprep.subr.mxu0 0.0
        %7449 = vmatpush1.xpose.msra.mxu0 0.0
        %7450 = vmatprep.mubr.f32.mxu0 0.0
        %7451 = vmatmul.mubr.f32.gmra.mrb[0].mxu0 %v7136
        %v7452 = vpop.f32.mrb[0].mxu0
        %v7453 = vadd.f32 0.0, %v7452
        %v7454 = vpop.f32.mrb[0].mxu0
        %7455 = vmatprep.mubr.f32.mxu0 0.0
        %7456 = vmatmul.mubr.f32.gmra.mrb[0].mxu0 %v7139
        %v7457 = vpop.f32.mrb[0].mxu0
        %v7458 = vadd.f32 0.0, %v7457
        %v7459 = vpop.f32.mrb[0].mxu0
        %7460 = vmatprep.mubr.f32.mxu0 0.0
        %7461 = vmatmul.mubr.f32.gmra.mrb[0].mxu0 %v7142
        %v7462 = vpop.f32.mrb[0].mxu0
        %v7463 = vadd.f32 0.0, %v7462
        %v7464 = vpop.f32.mrb[0].mxu0
        %7465 = vmatprep.mubr.f32.mxu0 0.0
        %7466 = vmatmul.mubr.f32.gmra.mrb[0].mxu0 %v7145
        %v7467 = vpop.f32.mrb[0].mxu0
        %v7468 = vadd.f32 0.0, %v7467
        %v7469 = vpop.f32.mrb[0].mxu0
        %7470 = vdwg.mxu0
        %v7471 = vmul.f32 %v7453, 0.35355338
        %v7472 = vmul.f32 %v7458, 0.35355338
        %v7473 = vmul.f32 %v7463, 0.35355338
        %v7474 = vmul.f32 %v7468, 0.35355338
        %v7475 = vsel %vm3547, %v7471, -inf
        %7476 = vmax.xlane.f32.xlu0 %v7475
        %v7477 = vpop.xlane.xlu0 %7476
        %v7478 = vsel %vm3547, %v7472, -inf
        %7479 = vmax.xlane.f32.xlu0 %v7478
        %v7480 = vpop.xlane.xlu0 %7479
        %v7481 = vsel %vm3547, %v7473, -inf
        %7482 = vmax.xlane.f32.xlu0 %v7481
        %v7483 = vpop.xlane.xlu0 %7482
        %v7484 = vsel %vm3547, %v7474, -inf
        %7485 = vmax.xlane.f32.xlu0 %v7484
        %v7486 = vpop.xlane.xlu0 %7485
        %v7487 = vsub.f32 %v7471, %v7477
        %v7488 = vsub.f32 %v7472, %v7480
        %v7489 = vsub.f32 %v7473, %v7483
        %v7490 = vsub.f32 %v7474, %v7486
        %v7491 = vmul.f32 %v7487, 1.442695
        %v7492 = vpow.pop %v7491
        %v7493 = vmul.f32 %v7488, 1.442695
        %v7494 = vpow.pop %v7493
        %v7495 = vmul.f32 %v7489, 1.442695
        %v7496 = vpow.pop %v7495
        %v7497 = vmul.f32 %v7490, 1.442695
        %v7498 = vpow.pop %v7497
        %v7499 = vsel %vm3547, %v7492, 0.0
        %7500 = vadd.xlane.f32.xlu0 %v7499
        %v7501 = vpop.xlane.xlu0 %7500
        %v7502 = vsel %vm3547, %v7494, 0.0
        %7503 = vadd.xlane.f32.xlu0 %v7502
        %v7504 = vpop.xlane.xlu0 %7503
        %v7505 = vsel %vm3547, %v7496, 0.0
        %7506 = vadd.xlane.f32.xlu0 %v7505
        %v7507 = vpop.xlane.xlu0 %7506
        %v7508 = vsel %vm3547, %v7498, 0.0
        %7509 = vadd.xlane.f32.xlu0 %v7508
        %v7510 = vpop.xlane.xlu0 %7509
        %v7511 = vrcp.pop %v7501
        %v7512 = vrcp.pop %v7504
        %v7513 = vrcp.pop %v7507
        %v7514 = vrcp.pop %v7510
        %v7515 = vmul.f32 %v7492, %v7511
        %v7516 = vmul.f32 %v7494, %v7512
        %v7517 = vmul.f32 %v7496, %v7513
        %v7518 = vmul.f32 %v7498, %v7514
        %7519 = vrot.lane.b32.xlu0 %v7383, 96
        %v7520 = vpop.permute.xlu0 %7519
        %v7522 = vsel %vm3547, %v7515, 0
        %v7525 = vsel %vm3547, %v7516, 0
        %v7528 = vsel %vm3547, %v7517, 0
        %v7531 = vsel %vm3547, %v7518, 0
        %v7533 = vsel %vm3606, %v7520, 0
        %7535 = vmatprep.subr.mxu0 0.0
        %7536 = vmatpush1.msra.mxu0 %v7533
        %7537 = vmatprep.subr.mxu0 0.0
        %7538 = vmatpush1.msra.mxu0 0.0
        %7539 = vmatprep.subr.mxu0 0.0
        %7540 = vmatpush1.msra.mxu0 0.0
        %7541 = vmatprep.subr.mxu0 0.0
        %7542 = vmatpush1.msra.mxu0 0.0
        %7543 = vmatprep.subr.mxu0 0.0
        %7544 = vmatpush1.msra.mxu0 0.0
        %7545 = vmatprep.subr.mxu0 0.0
        %7546 = vmatpush1.msra.mxu0 0.0
        %7547 = vmatprep.subr.mxu0 0.0
        %7548 = vmatpush1.msra.mxu0 0.0
        %7549 = vmatprep.subr.mxu0 0.0
        %7550 = vmatpush1.msra.mxu0 0.0
        %7551 = vmatprep.subr.mxu0 0.0
        %7552 = vmatpush1.msra.mxu0 0.0
        %7553 = vmatprep.subr.mxu0 0.0
        %7554 = vmatpush1.msra.mxu0 0.0
        %7555 = vmatprep.subr.mxu0 0.0
        %7556 = vmatpush1.msra.mxu0 0.0
        %7557 = vmatprep.subr.mxu0 0.0
        %7558 = vmatpush1.msra.mxu0 0.0
        %7559 = vmatprep.subr.mxu0 0.0
        %7560 = vmatpush1.msra.mxu0 0.0
        %7561 = vmatprep.subr.mxu0 0.0
        %7562 = vmatpush1.msra.mxu0 0.0
        %7563 = vmatprep.subr.mxu0 0.0
        %7564 = vmatpush1.msra.mxu0 0.0
        %7565 = vmatprep.subr.mxu0 0.0
        %7566 = vmatpush1.msra.mxu0 0.0
        %7567 = vmatprep.subr.mxu0 0.0
        %7568 = vmatpush1.msra.mxu0 0.0
        %7569 = vmatprep.subr.mxu0 0.0
        %7570 = vmatpush1.msra.mxu0 0.0
        %7571 = vmatprep.subr.mxu0 0.0
        %7572 = vmatpush1.msra.mxu0 0.0
        %7573 = vmatprep.subr.mxu0 0.0
        %7574 = vmatpush1.msra.mxu0 0.0
        %7575 = vmatprep.subr.mxu0 0.0
        %7576 = vmatpush1.msra.mxu0 0.0
        %7577 = vmatprep.subr.mxu0 0.0
        %7578 = vmatpush1.msra.mxu0 0.0
        %7579 = vmatprep.subr.mxu0 0.0
        %7580 = vmatpush1.msra.mxu0 0.0
        %7581 = vmatprep.subr.mxu0 0.0
        %7582 = vmatpush1.msra.mxu0 0.0
        %7583 = vmatprep.subr.mxu0 0.0
        %7584 = vmatpush1.msra.mxu0 0.0
        %7585 = vmatprep.subr.mxu0 0.0
        %7586 = vmatpush1.msra.mxu0 0.0
        %7587 = vmatprep.subr.mxu0 0.0
        %7588 = vmatpush1.msra.mxu0 0.0
        %7589 = vmatprep.subr.mxu0 0.0
        %7590 = vmatpush1.msra.mxu0 0.0
        %7591 = vmatprep.subr.mxu0 0.0
        %7592 = vmatpush1.msra.mxu0 0.0
        %7593 = vmatprep.subr.mxu0 0.0
        %7594 = vmatpush1.msra.mxu0 0.0
        %7595 = vmatprep.subr.mxu0 0.0
        %7596 = vmatpush1.msra.mxu0 0.0
        %7597 = vmatprep.subr.mxu0 0.0
        %7598 = vmatpush1.msra.mxu0 0.0
        %7599 = vmatprep.mubr.f32.mxu0 0.0
        %7600 = vmatmul.mubr.f32.gmra.mrb[0].mxu0 %v7522
        %v7601 = vpop.f32.mrb[0].mxu0
        %v7602 = vadd.f32 0.0, %v7601
        %v7603 = vpop.f32.mrb[0].mxu0
        %7604 = vmatprep.mubr.f32.mxu0 0.0
        %7605 = vmatmul.mubr.f32.gmra.mrb[0].mxu0 %v7525
        %v7606 = vpop.f32.mrb[0].mxu0
        %v7607 = vadd.f32 0.0, %v7606
        %v7608 = vpop.f32.mrb[0].mxu0
        %7609 = vmatprep.mubr.f32.mxu0 0.0
        %7610 = vmatmul.mubr.f32.gmra.mrb[0].mxu0 %v7528
        %v7611 = vpop.f32.mrb[0].mxu0
        %v7612 = vadd.f32 0.0, %v7611
        %v7613 = vpop.f32.mrb[0].mxu0
        %7614 = vmatprep.mubr.f32.mxu0 0.0
        %7615 = vmatmul.mubr.f32.gmra.mrb[0].mxu0 %v7531
        %v7616 = vpop.f32.mrb[0].mxu0
        %v7617 = vadd.f32 0.0, %v7616
        %v7618 = vpop.f32.mrb[0].mxu0
        %7619 = vdwg.mxu0
        %v7620 = vsub.f32 %v7365, %v7602
        %v7621 = vsub.f32 %v7370, %v7607
        %v7622 = vsub.f32 %v7375, %v7612
        %v7623 = vsub.f32 %v7380, %v7617
        %v7624 = vmul.f32 %v7620, %v870
        %v7625 = vmul.f32 %v7621, %v871
        %v7626 = vmul.f32 %v7622, %v872
        %v7627 = vmul.f32 %v7623, %v873
        %v7628 = vmul.f32 %v7624, %v7624
        %v7629 = vmul.f32 %v7625, %v7625
        %v7630 = vmul.f32 %v7626, %v7626
        %v7631 = vmul.f32 %v7627, %v7627
        %v7632 = vadd.f32 %v7042, %v7628
        %v7633 = vadd.f32 %v7043, %v7629
        %v7634 = vadd.f32 %v7044, %v7630
        %v7635 = vadd.f32 %v7045, %v7631
        %7636 = vst.msk [vmem:[%s862] sm:$0xff] %vm959, %v6209
        %7637 = vst.msk [vmem:[%s862 + $0x8] sm:$0xff] %vm959, %v6210
        %v7638 = vsel %vm959, %v7632, 0.0
        %7639 = vadd.xlane.f32.xlu0 %v7638
        %v7640 = vpop.xlane.xlu0 %7639
        %v7641 = vsel %vm959, %v7633, 0.0
        %7642 = vadd.xlane.f32.xlu0 %v7641
        %v7643 = vpop.xlane.xlu0 %7642
        %v7644 = vsel %vm959, %v7634, 0.0
        %7645 = vadd.xlane.f32.xlu0 %v7644
        %v7646 = vpop.xlane.xlu0 %7645
        %v7647 = vsel %vm959, %v7635, 0.0
        %7648 = vadd.xlane.f32.xlu0 %v7647
        %v7649 = vpop.xlane.xlu0 %7648
        %v7650 = vadd.f32 %v7640, %v7643
        %v7651 = vadd.f32 %v7650, %v7646
        %v7652 = vadd.f32 %v7651, %v7649
        %v7653 = vrot.slane %v7652, 4
        %v7654 = vadd.f32 %v7652, %v7653
        %v7655 = vrot.slane %v7654, 2
        %v7656 = vadd.f32 %v7654, %v7655
        %v7657 = vrot.slane %v7656, 1
        %v7658 = vadd.f32 %v7656, %v7657
        %v7659 = vmul.f32 %v7658, 0.0009765625
        %vm7660 = vcmask 0
        %7661 = vst.msk [vmem:[%s865] sm:$0x1] %vm7660, %v7659
        %p7662 = scmp.lt.s32.totalorder %s37, 3
        %s7663 = scalar_select %p7662, %s37, 3
        %s7664 = smul.addr %s7663, 2
        %s7665 = smul.addr %s7664, 8
        %s7666 = scalar_lea.vmem %s16, %s7665
        %s7667 = sand.u32 %s472, 1
        %s7668 = scalar_lea.sflag [#allocation5], %s7667
        %s7669 = sand.u32 %s472, 1
        %s7670 = smul.addr %s7669, 32
        %s7671 = scalar_lea.vmem [#allocation4], %s7670
        %s7672 = sand.u32 %s498, 1
        %s7673 = scalar_lea.sflag [#allocation7], %s7672
        %s7674 = sand.u32 %s498, 1
        %s7675 = smul.addr %s7674, 128
        %s7676 = scalar_lea.vmem [#allocation6], %s7675
        %p7677 = scmp.lt.s32.totalorder %s37, 3
        %s7678 = scalar_select %p7677, %s37, 3
        %s7679 = scalar_lea.vmem %s19, %s7678
        // Predicated region
        $region85: #{compressive_encoder.1} parent=83 // pred_check
          %p7680 = pneg %p456
        $region86: #{compressive_encoder.1} parent=83 // pred_check_branch
          %7682 = sbr.rel (%p7680) target = $region88
        $region87: #{compressive_encoder.1} parent=83 // pred_region
          _
        $region88: #{compressive_encoder.1} parent=83 // pred_fallthru
          _
        // Predicated region
        $region89: #{compressive_encoder.1} parent=83 // pred_check
          %p7683 = pneg %p482
        $region90: #{compressive_encoder.1} parent=83 // pred_check_branch
          %7685 = sbr.rel (%p7683) target = $region92
        $region91: #{compressive_encoder.1} parent=83 // pred_region
          %s7687 = ssub.s32 512, 512
          %7688 = vsyncadd %s7668, %s7687
          %s7689 = smul.addr %s37, 4
          %s7690 = smul.addr %s7689, 128
          %s7691 = scalar_lea.hbm %s17, %s7690
          %s7692 = sshll.u32 %s7671, 4
          %s7693 = int_to_ptr.vmem [resolvable:$true] %s7692
          %7698 = dma.vmem_to_hbm [thread:$0]  %s7693, 512, %s7691, %s7668, 128, 128, 8
        $region92: #{compressive_encoder.1} parent=83 // pred_fallthru
          _
        // Predicated region
        $region93: #{compressive_encoder.1} parent=83 // pred_check
          %p7699 = pneg %p508
        $region94: #{compressive_encoder.1} parent=83 // pred_check_branch
          %7701 = sbr.rel (%p7699) target = $region96
        $region95: #{compressive_encoder.1} parent=83 // pred_region
          %s7703 = ssub.s32 2048, 2048
          %7704 = vsyncadd %s7673, %s7703
          %s7705 = smul.addr %s37, 16
          %s7706 = smul.addr %s7705, 128
          %s7707 = scalar_lea.hbm %s18, %s7706
          %s7708 = sshll.u32 %s7676, 4
          %s7709 = int_to_ptr.vmem [resolvable:$true] %s7708
          %7714 = dma.vmem_to_hbm [thread:$0]  %s7709, 2048, %s7707, %s7673, 128, 128, 8
        $region96: #{compressive_encoder.1} parent=83 // pred_fallthru
          _
        // Predicated region
        $region97: #{compressive_encoder.1} parent=83 // pred_check
          %p7715 = pneg %p534
        $region98: #{compressive_encoder.1} parent=83 // pred_check_branch
          %7717 = sbr.rel (%p7715) target = $region100
        $region99: #{compressive_encoder.1} parent=83 // pred_region
          _
        $region100: #{compressive_encoder.1} parent=83 // pred_fallthru
          _
      $region84: #{compressive_encoder.1} parent=5 // pred_fallthru
        _
      %p7718 = scmp.le.s32.totalorder 2, %s32
      // Predicated region
      $region101: #{compressive_encoder.1} parent=5 // pred_check
        %p7719 = pneg %p7718
      $region102: #{compressive_encoder.1} parent=5 // pred_check_branch
        %7721 = sbr.rel (%p7719) target = $region104
      $region103: #{compressive_encoder.1} parent=5 // pred_region
        %s7722 = ssub.s32 %s32, 2
        // Predicated region
        $region105: #{compressive_encoder.1} parent=103 // pred_check
          %p7723 = pneg %p462
        $region106: #{compressive_encoder.1} parent=103 // pred_check_branch
          %7725 = sbr.rel (%p7723) target = $region108
        $region107: #{compressive_encoder.1} parent=103 // pred_region
          %p7726 = scmp.lt.s32.totalorder %s38, 3
          %s7727 = scalar_select %p7726, %s38, 3
          %s7728 = smul.addr %s7727, 2
          %s7729 = smul.addr %s7728, 8
          %s7730 = scalar_lea.vmem %s16, %s7729
        $region108: #{compressive_encoder.1} parent=103 // pred_fallthru
          _
        // Predicated region
        $region109: #{compressive_encoder.1} parent=103 // pred_check
          %p7731 = pneg %p488
        $region110: #{compressive_encoder.1} parent=103 // pred_check_branch
          %7733 = sbr.rel (%p7731) target = $region112
        $region111: #{compressive_encoder.1} parent=103 // pred_region
          %s7734 = sand.u32 %s473, 1
          %s7735 = scalar_lea.sflag [#allocation5], %s7734
          %s7736 = sand.u32 %s473, 1
          %s7737 = smul.addr %s7736, 32
          %s7738 = scalar_lea.vmem [#allocation4], %s7737
          %7739 = dma.done %s7735, 512
        $region112: #{compressive_encoder.1} parent=103 // pred_fallthru
          _
        // Predicated region
        $region113: #{compressive_encoder.1} parent=103 // pred_check
          %p7740 = pneg %p514
        $region114: #{compressive_encoder.1} parent=103 // pred_check_branch
          %7742 = sbr.rel (%p7740) target = $region116
        $region115: #{compressive_encoder.1} parent=103 // pred_region
          %s7743 = sand.u32 %s499, 1
          %s7744 = scalar_lea.sflag [#allocation7], %s7743
          %s7745 = sand.u32 %s499, 1
          %s7746 = smul.addr %s7745, 128
          %s7747 = scalar_lea.vmem [#allocation6], %s7746
          %7748 = dma.done %s7744, 2048
        $region116: #{compressive_encoder.1} parent=103 // pred_fallthru
          _
        // Predicated region
        $region117: #{compressive_encoder.1} parent=103 // pred_check
          %p7749 = pneg %p540
        $region118: #{compressive_encoder.1} parent=103 // pred_check_branch
          %7751 = sbr.rel (%p7749) target = $region120
        $region119: #{compressive_encoder.1} parent=103 // pred_region
          %p7752 = scmp.lt.s32.totalorder %s38, 3
          %s7753 = scalar_select %p7752, %s38, 3
          %s7754 = scalar_lea.vmem %s19, %s7753
        $region120: #{compressive_encoder.1} parent=103 // pred_fallthru
          _
      $region104: #{compressive_encoder.1} parent=5 // pred_fallthru
        _
    $region6: #{compressive_encoder.1} parent=1 // loop_footer
      %s36 = sadd.s32 1, %s32
    $region7: #{compressive_encoder.1} parent=1 // loop_footer_branch
      %31 = sbr.rel target = $region3
    $region8: #{compressive_encoder.1} parent=1 // loop_exit
      _
    %7755 = vsyncpa [#allocation5], 1
    %s7756 = scalar_lea.sflag [#allocation5], 1
    %7757 = vsyncpa %s7756, 1
    %7758 = vsyncpa [#allocation7], 1
    %s7759 = scalar_lea.sflag [#allocation7], 1
    %7760 = vsyncpa %s7759, 1

</llo_original>
